<compile_context>
chip_gen: v7x
topology: tpu7x:2x2x1
jax: 0.10.0
libtpu: 0.0.40
codegen_flags: <defaults>
</compile_context>

<pallas_src>
import functools
import math

import jax
import jax.numpy as jnp
from jax.experimental import pallas as pl
from jax.experimental.pallas import tpu as pltpu


# ------------------------- TPU generation detection ---------------------------

def _device_kind():
    try:
        return jax.devices()[0].device_kind.lower()
    except Exception:
        return ""


_KIND = _device_kind()
_IS_V7X = ("v7" in _KIND) or ("7x" in _KIND)
_IS_V5V6 = ("v5" in _KIND) or ("v6" in _KIND)

# VMEM cap: raise toward physical on v5e/v6e (128 MiB), stay under 64 MiB on
# v7x, and leave the compiler default on unknown parts.
_VMEM_LIMIT = 96 * 2**20 if _IS_V5V6 else (48 * 2**20 if _IS_V7X else None)

# Flash tile targets: big KV blocks on v5e/v6e (mem/overhead-bound, lots of
# VMEM); smaller tq on v7x so B * (S // tq) gives >= 2 parallel grid steps for
# the two TensorCores.
_FLASH_TQ, _FLASH_TKV = (128, 256) if _IS_V7X else (256, 512)

# Set True for serving: moves the softmax-denominator divide to the EUP
# (pl.reciprocal approx). Kept False so the f32 parity checks below stay tight.
APPROX_RECIPROCAL = False


def _params(dim_sem):
    return pltpu.CompilerParams(dimension_semantics=dim_sem,
                                vmem_limit_bytes=_VMEM_LIMIT)


# ----------------------------- tile helpers -----------------------------------

def _tile_lane(dim, target):
    """Tile for a lane (last) dim: a multiple of 128 or the full dim."""
    t = target
    while t >= 128:
        if dim % t == 0:
            return t
        t //= 2
    return dim


def _tile_sublane(dim, target):
    """Tile for a sublane (2nd-to-last) dim: a multiple of 8 or the full dim."""
    t = target
    while t >= 8:
        if dim % t == 0:
            return t
        t //= 2
    return dim


# ----------------------------- projection GEMMs -------------------------------

def _matmul_bias_kernel(x_ref, w_ref, b_ref, o_ref, acc_ref):
    """out[i,j] = sum_k x[i,k] @ w[k,j] + b[j]; K is the last grid axis."""
    kk = pl.program_id(2)

    @pl.when(kk == 0)
    def _():
        acc_ref[...] = jnp.zeros_like(acc_ref)

    # Inputs stay in their storage dtype; accumulate in f32 on the MXU.
    acc_ref[...] += jnp.dot(x_ref[...], w_ref[...],
                            preferred_element_type=jnp.float32)

    @pl.when(kk == pl.num_programs(2) - 1)
    def _():
        o_ref[...] = (acc_ref[...] + b_ref[...].astype(jnp.float32)
                      ).astype(o_ref.dtype)


def pallas_linear(x2d, w, b, *, tm_t=512, tn_t=256, tk_t=256):
    """x2d: (M, K) @ w: (K, N) + b: (N,) -> (M, N), tiled, f32 accumulation."""
    M, K = x2d.shape
    N = w.shape[1]
    tm = _tile_sublane(M, tm_t)
    tn = _tile_lane(N, tn_t)
    tk = _tile_lane(K, tk_t)
    grid = (M // tm, N // tn, K // tk)
    return pl.pallas_call(
        _matmul_bias_kernel,
        out_shape=jax.ShapeDtypeStruct((M, N), x2d.dtype),
        grid_spec=pltpu.PrefetchScalarGridSpec(
            num_scalar_prefetch=0,
            grid=grid,
            in_specs=[
                pl.BlockSpec((tm, tk), lambda i, j, kk: (i, kk)),
                pl.BlockSpec((tk, tn), lambda i, j, kk: (kk, j)),
                pl.BlockSpec((1, tn), lambda i, j, kk: (0, j)),
            ],
            out_specs=pl.BlockSpec((tm, tn), lambda i, j, kk: (i, j)),
            scratch_shapes=[pltpu.VMEM((tm, tn), jnp.float32)],
        ),
        compiler_params=_params(("parallel", "parallel", "arbitrary")),
    )(x2d, w, b.reshape(1, N))


def _qkv_matmul_kernel(x_ref, w_ref, b_ref, o_ref, acc_ref):
    """Fused QKV GEMM: x is read ONCE per (i, j, kk) tile and multiplied against
    all three weight slabs inside one step (no q/k/v grid axis)."""
    kk = pl.program_id(2)

    @pl.when(kk == 0)
    def _():
        acc_ref[...] = jnp.zeros_like(acc_ref)

    x = x_ref[...]                                  # (tm, tk), storage dtype
    for s in range(3):                              # static unroll: q, k, v
        acc_ref[s] += jnp.dot(x, w_ref[s], preferred_element_type=jnp.float32)

    @pl.when(kk == pl.num_programs(2) - 1)
    def _():
        o_ref[...] = (acc_ref[...] + b_ref[...].astype(jnp.float32)
                      ).astype(o_ref.dtype)


def pallas_fused_qkv(x2d, w3, b3, *, tm_t=512, tn_t=256, tk_t=256):
    """x2d: (M, K); w3: (3, K, E); b3: (3, 1, E) -> (3, M, E) in one launch."""
    M, K = x2d.shape
    E = w3.shape[2]
    tm = _tile_sublane(M, tm_t)
    tn = _tile_lane(E, tn_t)
    tk = _tile_lane(K, tk_t)
    grid = (M // tm, E // tn, K // tk)
    return pl.pallas_call(
        _qkv_matmul_kernel,
        out_shape=jax.ShapeDtypeStruct((3, M, E), x2d.dtype),
        grid_spec=pltpu.PrefetchScalarGridSpec(
            num_scalar_prefetch=0,
            grid=grid,
            in_specs=[
                pl.BlockSpec((tm, tk), lambda i, j, kk: (i, kk)),
                pl.BlockSpec((3, tk, tn), lambda i, j, kk: (0, kk, j)),
                pl.BlockSpec((3, 1, tn), lambda i, j, kk: (0, 0, j)),
            ],
            out_specs=pl.BlockSpec((3, tm, tn), lambda i, j, kk: (0, i, j)),
            scratch_shapes=[pltpu.VMEM((3, tm, tn), jnp.float32)],
        ),
        compiler_params=_params(("parallel", "parallel", "arbitrary")),
    )(x2d, w3, b3)


# ------------------ flash attention with fused output projection --------------

def _flash_attn_kernel(q_ref, k_ref, v_ref, wo_ref, bo_ref, o_ref,
                       m_sc, l_sc, acc_sc, qh_sc,
                       *, num_heads, head_dim, scale):
    """Online-softmax attention over KV blocks, heads batched, wo/bo fused.

    Kernel-visible blocks (leading size-1 dims squeezed by the BlockSpec):
      q_ref: (tq, E)   k_ref/v_ref: (tkv, E)   wo_ref: (E, E)   bo_ref: (1, E)
      o_ref: (tq, E)
    Scratch:
      m_sc/l_sc: (H, tq, 1) f32   acc_sc: (H, tq, D) f32
      qh_sc: (H, tq, D) storage dtype -- pre-scaled head-batched q, built once
             per q block (q is resident across the KV axis).
    """
    ki = pl.program_id(2)
    H, D = num_heads, head_dim

    @pl.when(ki == 0)
    def _init():
        m_sc[...] = jnp.full_like(m_sc, -jnp.inf)
        l_sc[...] = jnp.zeros_like(l_sc)
        acc_sc[...] = jnp.zeros_like(acc_sc)
        q = q_ref[...] * scale                      # fold 1/sqrt(D) into q
        qh_sc[...] = jnp.stack([q[:, h * D:(h + 1) * D] for h in range(H)])

    # Blocks stay in their storage dtype (no full-tile f32 copies); the MXU
    # accumulates in f32 via preferred_element_type.
    k = k_ref[...]                                                    # (tkv, E)
    v = v_ref[...]                                                    # (tkv, E)
    kh = jnp.stack([k[:, h * D:(h + 1) * D] for h in range(H)])       # (H, tkv, D)
    vh = jnp.stack([v[:, h * D:(h + 1) * D] for h in range(H)])       # (H, tkv, D)
    qh = qh_sc[...]                                                   # (H, tq, D)

    # All heads in one batched MXU call each (fewer, back-to-back pushes).
    s = jnp.einsum("hqd,hkd->hqk", qh, kh,
                   preferred_element_type=jnp.float32)                # (H, tq, tkv)

    m_prev = m_sc[...]                                                # (H, tq, 1)
    m_new = jnp.maximum(m_prev, jnp.max(s, axis=-1, keepdims=True))
    alpha = jnp.exp(m_prev - m_new)
    p = jnp.exp(s - m_new)                                            # (H, tq, tkv)
    l_sc[...] = alpha * l_sc[...] + jnp.sum(p, axis=-1, keepdims=True)
    pv = jnp.einsum("hqk,hkd->hqd", p.astype(v.dtype), vh,
                    preferred_element_type=jnp.float32)               # (H, tq, D)
    acc_sc[...] = alpha * acc_sc[...] + pv
    m_sc[...] = m_new

    @pl.when(ki == pl.num_programs(2) - 1)
    def _finalize():
        inv_l = pl.reciprocal(l_sc[...], approx=APPROX_RECIPROCAL)    # (H, tq, 1)
        # Fused head-merge + output projection:
        #   out = sum_h (acc_h / l_h) @ wo[h*D:(h+1)*D, :] + bo
        # accumulated into one lane-dense (tq, E) block -- no concatenate and no
        # HBM round trip for the attention output.
        out = bo_ref[...].astype(jnp.float32)                         # (1, E)
        for h in range(H):                                            # static unroll
            norm_h = acc_sc[h] * inv_l[h]                             # (tq, D) f32
            wo_h = wo_ref[h * D:(h + 1) * D, :]                       # (D, E) resident
            out = out + jnp.dot(norm_h.astype(wo_h.dtype), wo_h,
                                preferred_element_type=jnp.float32)
        o_ref[...] = out.astype(o_ref.dtype)


def _flash_call(qkv_arrays, q_spec, k_spec, v_spec, *, B, Sq, Skv, E, dtype,
                wo, bo, num_heads, tq, tkv):
    D = E // num_heads
    grid = (B, Sq // tq, Skv // tkv)
    kernel = functools.partial(_flash_attn_kernel, num_heads=num_heads,
                               head_dim=D, scale=1.0 / math.sqrt(D))
    # wo/bo are kept resident in VMEM across the whole grid (E is modest).
    wo_spec = pl.BlockSpec((E, E), lambda b, qi, ki: (0, 0))
    bo_spec = pl.BlockSpec((1, E), lambda b, qi, ki: (0, 0))
    o_spec = pl.BlockSpec((pl.Squeezed(), tq, E), lambda b, qi, ki: (b, qi, 0))
    return pl.pallas_call(
        kernel,
        out_shape=jax.ShapeDtypeStruct((B, Sq, E), dtype),
        grid_spec=pltpu.PrefetchScalarGridSpec(
            num_scalar_prefetch=0,
            grid=grid,
            in_specs=[q_spec, k_spec, v_spec, wo_spec, bo_spec],
            out_specs=o_spec,
            scratch_shapes=[
                pltpu.VMEM((num_heads, tq, 1), jnp.float32),   # running max
                pltpu.VMEM((num_heads, tq, 1), jnp.float32),   # running denom
                pltpu.VMEM((num_heads, tq, D), jnp.float32),   # running PV acc
                pltpu.VMEM((num_heads, tq, D), dtype),         # cached scaled q heads
            ],
        ),
        compiler_params=_params(("parallel", "parallel", "arbitrary")),
    )(*qkv_arrays, wo, bo.reshape(1, E))


def pallas_flash_mha_stacked(qkv, wo, bo, *, num_heads, tq_t=None, tkv_t=None):
    """qkv: (3, B, S, E) stacked projections -> (B, S, E) = attn(q,k,v) @ wo + bo."""
    _, B, S, E = qkv.shape
    tq = _tile_sublane(S, tq_t or _FLASH_TQ)
    tkv = _tile_sublane(S, tkv_t or _FLASH_TKV)
    q_spec = pl.BlockSpec((pl.Squeezed(), pl.Squeezed(), tq, E),
                          lambda b, qi, ki: (0, b, qi, 0))
    k_spec = pl.BlockSpec((pl.Squeezed(), pl.Squeezed(), tkv, E),
                          lambda b, qi, ki: (1, b, ki, 0))
    v_spec = pl.BlockSpec((pl.Squeezed(), pl.Squeezed(), tkv, E),
                          lambda b, qi, ki: (2, b, ki, 0))
    return _flash_call((qkv, qkv, qkv), q_spec, k_spec, v_spec,
                       B=B, Sq=S, Skv=S, E=E, dtype=qkv.dtype,
                       wo=wo, bo=bo, num_heads=num_heads, tq=tq, tkv=tkv)


def pallas_flash_mha(q, k, v, wo, bo, *, num_heads, tq_t=None, tkv_t=None):
    """q: (B, Sq, E); k, v: (B, Skv, E) -> (B, Sq, E) with wo/bo fused."""
    B, Sq, E = q.shape
    Skv = k.shape[1]
    assert k.shape == v.shape and k.shape[0] == B and k.shape[2] == E
    tq = _tile_sublane(Sq, tq_t or _FLASH_TQ)
    tkv = _tile_sublane(Skv, tkv_t or _FLASH_TKV)
    q_spec = pl.BlockSpec((pl.Squeezed(), tq, E), lambda b, qi, ki: (b, qi, 0))
    k_spec = pl.BlockSpec((pl.Squeezed(), tkv, E), lambda b, qi, ki: (b, ki, 0))
    v_spec = pl.BlockSpec((pl.Squeezed(), tkv, E), lambda b, qi, ki: (b, ki, 0))
    return _flash_call((q, k, v), q_spec, k_spec, v_spec,
                       B=B, Sq=Sq, Skv=Skv, E=E, dtype=q.dtype,
                       wo=wo, bo=bo, num_heads=num_heads, tq=tq, tkv=tkv)


# ----------------------------- forward -----------------------------------------

def mha_forward(params, q_inp, k_inp=None, v_inp=None, num_heads=4,
                flash_tq_t=None, flash_tkv_t=None):
    """Eval-mode MHA forward (mask=None path; dropout is identity in eval).

    bf16 path: pass bf16 activations/params -- the kernels feed the MXU in the
    storage dtype and accumulate in f32 (f32 is used here because the parity
    checks assert f32 numerics).
    """
    self_attention = (k_inp is None) and (v_inp is None)
    if k_inp is None:
        k_inp = q_inp
    if v_inp is None:
        v_inp = q_inp
    B, S, E = q_inp.shape
    assert E % num_heads == 0

    if self_attention:
        # One fused GEMM for Q/K/V (x streamed once), then flash attention with
        # the output projection fused; activations stay (B, S, E) end-to-end.
        w3 = jnp.stack([params["wq"], params["wk"], params["wv"]])            # (3, E, E)
        b3 = jnp.stack([params["bq"], params["bk"], params["bv"]])[:, None, :]
        qkv = pallas_fused_qkv(q_inp.reshape(B * S, E), w3, b3)               # (3, B*S, E)
        qkv = qkv.reshape(3, B, S, E)                                         # free view
        return pallas_flash_mha_stacked(qkv, params["wo"], params["bo"],
                                        num_heads=num_heads,
                                        tq_t=flash_tq_t, tkv_t=flash_tkv_t)

    # Cross-attention path: k/v may have a different source length than q.
    assert k_inp.shape == v_inp.shape, "k and v must share a source length"
    Skv = k_inp.shape[1]
    q = pallas_linear(q_inp.reshape(B * S, E), params["wq"], params["bq"]).reshape(B, S, E)
    k = pallas_linear(k_inp.reshape(B * Skv, E), params["wk"], params["bk"]).reshape(B, Skv, E)
    v = pallas_linear(v_inp.reshape(B * Skv, E), params["wv"], params["bv"]).reshape(B, Skv, E)
    return pallas_flash_mha(q, k, v, params["wo"], params["bo"],
                            num_heads=num_heads,
                            tq_t=flash_tq_t, tkv_t=flash_tkv_t)


# ----------------------------- parameter init ----------------------------------

def xavier_uniform(key, fan_in, fan_out, dtype=jnp.float32):
    limit = math.sqrt(6.0 / (fan_in + fan_out))
    # stored as (in, out) so x @ W matches PyTorch's x @ W_pt.T
    return jax.random.uniform(key, (fan_in, fan_out), dtype, -limit, limit)


def init_mha_params(key, embed_dims):
    keys = jax.random.split(key, 8)
    E = embed_dims
    bound = 1.0 / math.sqrt(E)  # PyTorch default Linear bias init
    return {
        "wq": xavier_uniform(keys[0], E, E),
        "bq": jax.random.uniform(keys[1], (E,), jnp.float32, -bound, bound),
        "wk": xavier_uniform(keys[2], E, E),
        "bk": jax.random.uniform(keys[3], (E,), jnp.float32, -bound, bound),
        "wv": xavier_uniform(keys[4], E, E),
        "bv": jax.random.uniform(keys[5], (E,), jnp.float32, -bound, bound),
        "wo": xavier_uniform(keys[6], E, E),
        "bo": jax.random.uniform(keys[7], (E,), jnp.float32, -bound, bound),
    }


# ----------------------------- reference ---------------------------------------

def ref_mha(params, q_inp, k_inp=None, v_inp=None, num_heads=4):
    if k_inp is None:
        k_inp = q_inp
    if v_inp is None:
        v_inp = q_inp
    B, Sq, E = q_inp.shape
    Skv = k_inp.shape[1]
    D = E // num_heads
    q = q_inp @ params["wq"] + params["bq"]
    k = k_inp @ params["wk"] + params["bk"]
    v = v_inp @ params["wv"] + params["bv"]

    def sh(t, S):
        return t.reshape(B, S, num_heads, D).transpose(0, 2, 1, 3)

    qh, kh, vh = sh(q, Sq), sh(k, Skv), sh(v, Skv)
    scores = jnp.einsum("bhqd,bhkd->bhqk", qh, kh) / jnp.sqrt(jnp.float32(D))
    attn = jax.nn.softmax(scores, axis=-1)
    o = jnp.einsum("bhqk,bhkd->bhqd", attn, vh)
    o = o.transpose(0, 2, 1, 3).reshape(B, Sq, E)
    return o @ params["wo"] + params["bo"]


# ----------------------------- main ---------------------------------------------

if __name__ == "__main__":
    # Use the most precise matmul algorithm on the reference side so the parity
    # checks are meaningful against the kernels' f32 MXU accumulation.
    jax.config.update("jax_default_matmul_precision", "highest")

    # 1) Small self-attention config matching the module's toy use
    #    (batch=2, seq=8, embed=32, 4 heads).
    B, S, E, H = 2, 8, 32, 4
    kp, kx = jax.random.split(jax.random.PRNGKey(0))
    params = init_mha_params(kp, E)
    x = jax.random.normal(kx, (B, S, E), dtype=jnp.float32)

    fwd = jax.jit(functools.partial(mha_forward, num_heads=H))
    out = fwd(params, x)
    jax.block_until_ready(out)
    expected = ref_mha(params, x, num_heads=H)
    assert out.shape == (B, S, E)
    assert jnp.allclose(out, expected, atol=1e-4, rtol=1e-4), "small self-attn mismatch"

    # 2) Medium self-attention: multiple q blocks and a multi-step online-softmax
    #    KV loop (flash grid (B, 2, 2) with the 128/128 tile override).
    B2, S2, E2, H2 = 2, 256, 128, 4
    kp2, kx2 = jax.random.split(jax.random.PRNGKey(1))
    params2 = init_mha_params(kp2, E2)
    x2 = jax.random.normal(kx2, (B2, S2, E2), dtype=jnp.float32)

    fwd2 = jax.jit(functools.partial(mha_forward, num_heads=H2,
                                     flash_tq_t=128, flash_tkv_t=128))
    out2 = fwd2(params2, x2)
    jax.block_until_ready(out2)
    expected2 = ref_mha(params2, x2, num_heads=H2)
    assert out2.shape == (B2, S2, E2)
    assert jnp.allclose(out2, expected2, atol=2e-4, rtol=2e-4), "medium self-attn mismatch"

    # 3) Cross-attention with a different source length (separate KV path).
    kv_key = jax.random.PRNGKey(2)
    kv_inp = jax.random.normal(kv_key, (B, 16, E), dtype=jnp.float32)
    fwd3 = jax.jit(functools.partial(mha_forward, num_heads=H))
    out3 = fwd3(params, x, kv_inp, kv_inp)
    jax.block_until_ready(out3)
    expected3 = ref_mha(params, x, kv_inp, kv_inp, num_heads=H)
    assert out3.shape == (B, S, E)
    assert jnp.allclose(out3, expected3, atol=1e-4, rtol=1e-4), "cross-attn mismatch"

    print("KERNEL_OK")
</pallas_src>

<mosaic_0001>
module attributes {stable_mosaic.version = 11 : i64} {
  func.func @_qkv_matmul_kernel(%arg0: i32, %arg1: i32, %arg2: i32, %arg3: memref<16x32xf32, #tpu.memory_space<vmem>>, %arg4: memref<3x32x32xf32, #tpu.memory_space<vmem>>, %arg5: memref<3x1x32xf32, #tpu.memory_space<vmem>>, %arg6: memref<3x16x32xf32, #tpu.memory_space<vmem>>, %arg7: memref<3x16x32xf32, #tpu.memory_space<vmem>>) attributes {dimension_semantics = [#tpu.dimension_semantics<parallel>, #tpu.dimension_semantics<parallel>, #tpu.dimension_semantics<arbitrary>], iteration_bounds = array<i64: 1, 1, 1>, scalar_prefetch = 0 : i64, scratch_operands = 1 : i64, tpu.core_type = #tpu.core_type<tc>, window_params = [{transform_indices = @transform_0, window_bounds = array<i64: 16, 32>}, {transform_indices = @transform_1, window_bounds = array<i64: 3, 32, 32>}, {transform_indices = @transform_2, window_bounds = array<i64: 3, 1, 32>}, {transform_indices = @transform_3, window_bounds = array<i64: 3, 16, 32>}]} {
    %c0_i32 = arith.constant 0 : i32
    %0 = arith.cmpi eq, %arg2, %c0_i32 : i32
    %1 = arith.extui %0 : i1 to i32
    %c0_i32_0 = arith.constant 0 : i32
    %2 = arith.cmpi ne, %1, %c0_i32_0 : i32
    scf.if %2 {
      %cst_31 = arith.constant 0.000000e+00 : f32
      %34 = vector.broadcast %cst_31 : f32 to vector<3x16x32xf32>
      %c0_32 = arith.constant 0 : index
      %c0_33 = arith.constant 0 : index
      %c0_34 = arith.constant 0 : index
      %35 = vector.load %arg7[%c0_32, %c0_33, %c0_34] : memref<3x16x32xf32, #tpu.memory_space<vmem>>, vector<3x16x32xf32>
      tpu.vector_store %arg7[%c0_32, %c0_33, %c0_34], %34 {strides = array<i32>} : memref<3x16x32xf32, #tpu.memory_space<vmem>>, vector<3x16x32xf32>,
    } else {
    }
    %c0 = arith.constant 0 : index
    %c0_1 = arith.constant 0 : index
    %3 = vector.load %arg3[%c0, %c0_1] : memref<16x32xf32, #tpu.memory_space<vmem>>, vector<16x32xf32>
    %c0_2 = arith.constant 0 : index
    %c0_3 = arith.constant 0 : index
    %c0_4 = arith.constant 0 : index
    %4 = vector.load %arg7[%c0_2, %c0_3, %c0_4] : memref<3x16x32xf32, #tpu.memory_space<vmem>>, vector<1x16x32xf32>
    %5 = vector.shape_cast %4 : vector<1x16x32xf32> to vector<16x32xf32>
    %c0_5 = arith.constant 0 : index
    %c0_6 = arith.constant 0 : index
    %c0_7 = arith.constant 0 : index
    %6 = vector.load %arg4[%c0_5, %c0_6, %c0_7] : memref<3x32x32xf32, #tpu.memory_space<vmem>>, vector<1x32x32xf32>
    %7 = vector.shape_cast %6 : vector<1x32x32xf32> to vector<32x32xf32>
    %cst = arith.constant dense<0.000000e+00> : vector<16x32xf32>
    %8 = tpu.matmul %3, %7, %cst {dimension_numbers = #tpu.dot_dimension_numbers<[1], [0], [0], [1], [0, 0, 1, 1], [], []>, precision = #tpu.contract_precision<fp32>} : vector<16x32xf32>, vector<32x32xf32>, vector<16x32xf32> -> vector<16x32xf32>
    %9 = arith.addf %5, %8 : vector<16x32xf32>
    %c0_8 = arith.constant 0 : index
    %c0_9 = arith.constant 0 : index
    %c0_10 = arith.constant 0 : index
    %10 = vector.load %arg7[%c0_8, %c0_9, %c0_10] : memref<3x16x32xf32, #tpu.memory_space<vmem>>, vector<1x16x32xf32>
    %11 = vector.shape_cast %10 : vector<1x16x32xf32> to vector<16x32xf32>
    %12 = vector.shape_cast %9 : vector<16x32xf32> to vector<1x16x32xf32>
    tpu.vector_store %arg7[%c0_8, %c0_9, %c0_10], %12 {strides = array<i32>} : memref<3x16x32xf32, #tpu.memory_space<vmem>>, vector<1x16x32xf32>,
    %c1 = arith.constant 1 : index
    %c0_11 = arith.constant 0 : index
    %c0_12 = arith.constant 0 : index
    %13 = vector.load %arg7[%c1, %c0_11, %c0_12] : memref<3x16x32xf32, #tpu.memory_space<vmem>>, vector<1x16x32xf32>
    %14 = vector.shape_cast %13 : vector<1x16x32xf32> to vector<16x32xf32>
    %c1_13 = arith.constant 1 : index
    %c0_14 = arith.constant 0 : index
    %c0_15 = arith.constant 0 : index
    %15 = vector.load %arg4[%c1_13, %c0_14, %c0_15] : memref<3x32x32xf32, #tpu.memory_space<vmem>>, vector<1x32x32xf32>
    %16 = vector.shape_cast %15 : vector<1x32x32xf32> to vector<32x32xf32>
    %cst_16 = arith.constant dense<0.000000e+00> : vector<16x32xf32>
    %17 = tpu.matmul %3, %16, %cst_16 {dimension_numbers = #tpu.dot_dimension_numbers<[1], [0], [0], [1], [0, 0, 1, 1], [], []>, precision = #tpu.contract_precision<fp32>} : vector<16x32xf32>, vector<32x32xf32>, vector<16x32xf32> -> vector<16x32xf32>
    %18 = arith.addf %14, %17 : vector<16x32xf32>
    %c1_17 = arith.constant 1 : index
    %c0_18 = arith.constant 0 : index
    %c0_19 = arith.constant 0 : index
    %19 = vector.load %arg7[%c1_17, %c0_18, %c0_19] : memref<3x16x32xf32, #tpu.memory_space<vmem>>, vector<1x16x32xf32>
    %20 = vector.shape_cast %19 : vector<1x16x32xf32> to vector<16x32xf32>
    %21 = vector.shape_cast %18 : vector<16x32xf32> to vector<1x16x32xf32>
    tpu.vector_store %arg7[%c1_17, %c0_18, %c0_19], %21 {strides = array<i32>} : memref<3x16x32xf32, #tpu.memory_space<vmem>>, vector<1x16x32xf32>,
    %c2 = arith.constant 2 : index
    %c0_20 = arith.constant 0 : index
    %c0_21 = arith.constant 0 : index
    %22 = vector.load %arg7[%c2, %c0_20, %c0_21] : memref<3x16x32xf32, #tpu.memory_space<vmem>>, vector<1x16x32xf32>
    %23 = vector.shape_cast %22 : vector<1x16x32xf32> to vector<16x32xf32>
    %c2_22 = arith.constant 2 : index
    %c0_23 = arith.constant 0 : index
    %c0_24 = arith.constant 0 : index
    %24 = vector.load %arg4[%c2_22, %c0_23, %c0_24] : memref<3x32x32xf32, #tpu.memory_space<vmem>>, vector<1x32x32xf32>
    %25 = vector.shape_cast %24 : vector<1x32x32xf32> to vector<32x32xf32>
    %cst_25 = arith.constant dense<0.000000e+00> : vector<16x32xf32>
    %26 = tpu.matmul %3, %25, %cst_25 {dimension_numbers = #tpu.dot_dimension_numbers<[1], [0], [0], [1], [0, 0, 1, 1], [], []>, precision = #tpu.contract_precision<fp32>} : vector<16x32xf32>, vector<32x32xf32>, vector<16x32xf32> -> vector<16x32xf32>
    %27 = arith.addf %23, %26 : vector<16x32xf32>
    %c2_26 = arith.constant 2 : index
    %c0_27 = arith.constant 0 : index
    %c0_28 = arith.constant 0 : index
    %28 = vector.load %arg7[%c2_26, %c0_27, %c0_28] : memref<3x16x32xf32, #tpu.memory_space<vmem>>, vector<1x16x32xf32>
    %29 = vector.shape_cast %28 : vector<1x16x32xf32> to vector<16x32xf32>
    %30 = vector.shape_cast %27 : vector<16x32xf32> to vector<1x16x32xf32>
    tpu.vector_store %arg7[%c2_26, %c0_27, %c0_28], %30 {strides = array<i32>} : memref<3x16x32xf32, #tpu.memory_space<vmem>>, vector<1x16x32xf32>,
    %c0_i32_29 = arith.constant 0 : i32
    %31 = arith.cmpi eq, %arg2, %c0_i32_29 : i32
    %32 = arith.extui %31 : i1 to i32
    %c0_i32_30 = arith.constant 0 : i32
    %33 = arith.cmpi ne, %32, %c0_i32_30 : i32
    scf.if %33 {
      %c0_31 = arith.constant 0 : index
      %c0_32 = arith.constant 0 : index
      %c0_33 = arith.constant 0 : index
      %34 = vector.load %arg7[%c0_31, %c0_32, %c0_33] : memref<3x16x32xf32, #tpu.memory_space<vmem>>, vector<3x16x32xf32>
      %c0_34 = arith.constant 0 : index
      %c0_35 = arith.constant 0 : index
      %c0_36 = arith.constant 0 : index
      %35 = vector.load %arg5[%c0_34, %c0_35, %c0_36] : memref<3x1x32xf32, #tpu.memory_space<vmem>>, vector<3x1x32xf32>
      %36 = vector.broadcast %35 : vector<3x1x32xf32> to vector<3x16x32xf32>
      %37 = arith.addf %34, %36 : vector<3x16x32xf32>
      %c0_37 = arith.constant 0 : index
      %c0_38 = arith.constant 0 : index
      %c0_39 = arith.constant 0 : index
      %38 = vector.load %arg6[%c0_37, %c0_38, %c0_39] : memref<3x16x32xf32, #tpu.memory_space<vmem>>, vector<3x16x32xf32>
      tpu.vector_store %arg6[%c0_37, %c0_38, %c0_39], %37 {strides = array<i32>} : memref<3x16x32xf32, #tpu.memory_space<vmem>>, vector<3x16x32xf32>,
    } else {
    }
    return
  }
  func.func @transform_0(%arg0: i32, %arg1: i32, %arg2: i32) -> (i32, i32) {
    %c0_i32 = arith.constant 0 : i32
    return %arg0, %arg2 : i32, i32
  }
  func.func @transform_1(%arg0: i32, %arg1: i32, %arg2: i32) -> (i32, i32, i32) {
    %c0_i32 = arith.constant 0 : i32
    %c0_i32_0 = arith.constant 0 : i32
    return %c0_i32, %arg2, %arg1 : i32, i32, i32
  }
  func.func @transform_2(%arg0: i32, %arg1: i32, %arg2: i32) -> (i32, i32, i32) {
    %c0_i32 = arith.constant 0 : i32
    %c0_i32_0 = arith.constant 0 : i32
    %c0_i32_1 = arith.constant 0 : i32
    return %c0_i32, %c0_i32_0, %arg1 : i32, i32, i32
  }
  func.func @transform_3(%arg0: i32, %arg1: i32, %arg2: i32) -> (i32, i32, i32) {
    %c0_i32 = arith.constant 0 : i32
    %c0_i32_0 = arith.constant 0 : i32
    return %c0_i32, %arg0, %arg1 : i32, i32, i32
  }
}

module attributes {stable_mosaic.version = 11 : i64} {
  func.func @_flash_attn_kernel(%arg0: i32, %arg1: i32, %arg2: i32, %arg3: memref<1x1x8x32xf32, #tpu.memory_space<vmem>>, %arg4: memref<1x1x8x32xf32, #tpu.memory_space<vmem>>, %arg5: memref<1x1x8x32xf32, #tpu.memory_space<vmem>>, %arg6: memref<32x32xf32, #tpu.memory_space<vmem>>, %arg7: memref<1x32xf32, #tpu.memory_space<vmem>>, %arg8: memref<1x8x32xf32, #tpu.memory_space<vmem>>, %arg9: memref<4x8x1xf32, #tpu.memory_space<vmem>>, %arg10: memref<4x8x1xf32, #tpu.memory_space<vmem>>, %arg11: memref<4x8x8xf32, #tpu.memory_space<vmem>>, %arg12: memref<4x8x8xf32, #tpu.memory_space<vmem>>) attributes {dimension_semantics = [#tpu.dimension_semantics<parallel>, #tpu.dimension_semantics<parallel>, #tpu.dimension_semantics<arbitrary>], iteration_bounds = array<i64: 2, 1, 1>, scalar_prefetch = 0 : i64, scratch_operands = 4 : i64, tpu.core_type = #tpu.core_type<tc>, window_params = [{transform_indices = @transform_0, window_bounds = array<i64: 1, 1, 8, 32>}, {transform_indices = @transform_1, window_bounds = array<i64: 1, 1, 8, 32>}, {transform_indices = @transform_2, window_bounds = array<i64: 1, 1, 8, 32>}, {pipeline_mode = #tpu.pipeline_mode<synchronous>, transform_indices = @transform_3, window_bounds = array<i64: 32, 32>}, {pipeline_mode = #tpu.pipeline_mode<synchronous>, transform_indices = @transform_4, window_bounds = array<i64: 1, 32>}, {transform_indices = @transform_5, window_bounds = array<i64: 1, 8, 32>}]} {
    %c0_i32 = arith.constant 0 : i32
    %0 = arith.cmpi eq, %arg2, %c0_i32 : i32
    %1 = arith.extui %0 : i1 to i32
    %c0_i32_0 = arith.constant 0 : i32
    %2 = arith.cmpi ne, %1, %c0_i32_0 : i32
    scf.if %2 {
      %cst_34 = arith.constant 0xFF800000 : f32
      %52 = vector.broadcast %cst_34 : f32 to vector<4x8x1xf32>
      %c0_35 = arith.constant 0 : index
      %c0_36 = arith.constant 0 : index
      %c0_37 = arith.constant 0 : index
      %53 = vector.load %arg9[%c0_35, %c0_36, %c0_37] : memref<4x8x1xf32, #tpu.memory_space<vmem>>, vector<4x8x1xf32>
      tpu.vector_store %arg9[%c0_35, %c0_36, %c0_37], %52 {strides = array<i32>} : memref<4x8x1xf32, #tpu.memory_space<vmem>>, vector<4x8x1xf32>,
      %cst_38 = arith.constant 0.000000e+00 : f32
      %54 = vector.broadcast %cst_38 : f32 to vector<4x8x1xf32>
      %c0_39 = arith.constant 0 : index
      %c0_40 = arith.constant 0 : index
      %c0_41 = arith.constant 0 : index
      %55 = vector.load %arg10[%c0_39, %c0_40, %c0_41] : memref<4x8x1xf32, #tpu.memory_space<vmem>>, vector<4x8x1xf32>
      tpu.vector_store %arg10[%c0_39, %c0_40, %c0_41], %54 {strides = array<i32>} : memref<4x8x1xf32, #tpu.memory_space<vmem>>, vector<4x8x1xf32>,
      %cst_42 = arith.constant 0.000000e+00 : f32
      %56 = vector.broadcast %cst_42 : f32 to vector<4x8x8xf32>
      %c0_43 = arith.constant 0 : index
      %c0_44 = arith.constant 0 : index
      %c0_45 = arith.constant 0 : index
      %57 = vector.load %arg11[%c0_43, %c0_44, %c0_45] : memref<4x8x8xf32, #tpu.memory_space<vmem>>, vector<4x8x8xf32>
      tpu.vector_store %arg11[%c0_43, %c0_44, %c0_45], %56 {strides = array<i32>} : memref<4x8x8xf32, #tpu.memory_space<vmem>>, vector<4x8x8xf32>,
      %c0_46 = arith.constant 0 : index
      %c0_47 = arith.constant 0 : index
      %c0_48 = arith.constant 0 : index
      %c0_49 = arith.constant 0 : index
      %58 = vector.load %arg3[%c0_46, %c0_47, %c0_48, %c0_49] : memref<1x1x8x32xf32, #tpu.memory_space<vmem>>, vector<1x1x8x32xf32>
      %59 = vector.shape_cast %58 : vector<1x1x8x32xf32> to vector<8x32xf32>
      %cst_50 = arith.constant 0.353553385 : f32
      %60 = vector.broadcast %cst_50 : f32 to vector<8x32xf32>
      %61 = arith.mulf %59, %60 : vector<8x32xf32>
      %62 = vector.extract_strided_slice %61 {offsets = [0, 0], sizes = [8, 8], strides = [1, 1]} : vector<8x32xf32> to vector<8x8xf32>
      %63 = vector.extract_strided_slice %61 {offsets = [0, 8], sizes = [8, 8], strides = [1, 1]} : vector<8x32xf32> to vector<8x8xf32>
      %64 = vector.extract_strided_slice %61 {offsets = [0, 16], sizes = [8, 8], strides = [1, 1]} : vector<8x32xf32> to vector<8x8xf32>
      %65 = vector.extract_strided_slice %61 {offsets = [0, 24], sizes = [8, 8], strides = [1, 1]} : vector<8x32xf32> to vector<8x8xf32>
      %66 = vector.shape_cast %62 : vector<8x8xf32> to vector<1x8x8xf32>
      %67 = vector.shape_cast %63 : vector<8x8xf32> to vector<1x8x8xf32>
      %68 = vector.shape_cast %64 : vector<8x8xf32> to vector<1x8x8xf32>
      %69 = vector.shape_cast %65 : vector<8x8xf32> to vector<1x8x8xf32>
      %70 = tpu.concatenate %66, %67, %68, %69 in 0 : vector<1x8x8xf32>, vector<1x8x8xf32>, vector<1x8x8xf32>, vector<1x8x8xf32> -> vector<4x8x8xf32>
      %c0_51 = arith.constant 0 : index
      %c0_52 = arith.constant 0 : index
      %c0_53 = arith.constant 0 : index
      %71 = vector.load %arg12[%c0_51, %c0_52, %c0_53] : memref<4x8x8xf32, #tpu.memory_space<vmem>>, vector<4x8x8xf32>
      tpu.vector_store %arg12[%c0_51, %c0_52, %c0_53], %70 {strides = array<i32>} : memref<4x8x8xf32, #tpu.memory_space<vmem>>, vector<4x8x8xf32>,
    } else {
    }
    %c0 = arith.constant 0 : index
    %c0_1 = arith.constant 0 : index
    %c0_2 = arith.constant 0 : index
    %c0_3 = arith.constant 0 : index
    %3 = vector.load %arg4[%c0, %c0_1, %c0_2, %c0_3] : memref<1x1x8x32xf32, #tpu.memory_space<vmem>>, vector<1x1x8x32xf32>
    %4 = vector.shape_cast %3 : vector<1x1x8x32xf32> to vector<8x32xf32>
    %c0_4 = arith.constant 0 : index
    %c0_5 = arith.constant 0 : index
    %c0_6 = arith.constant 0 : index
    %c0_7 = arith.constant 0 : index
    %5 = vector.load %arg5[%c0_4, %c0_5, %c0_6, %c0_7] : memref<1x1x8x32xf32, #tpu.memory_space<vmem>>, vector<1x1x8x32xf32>
    %6 = vector.shape_cast %5 : vector<1x1x8x32xf32> to vector<8x32xf32>
    %7 = vector.extract_strided_slice %4 {offsets = [0, 0], sizes = [8, 8], strides = [1, 1]} : vector<8x32xf32> to vector<8x8xf32>
    %8 = vector.extract_strided_slice %4 {offsets = [0, 8], sizes = [8, 8], strides = [1, 1]} : vector<8x32xf32> to vector<8x8xf32>
    %9 = vector.extract_strided_slice %4 {offsets = [0, 16], sizes = [8, 8], strides = [1, 1]} : vector<8x32xf32> to vector<8x8xf32>
    %10 = vector.extract_strided_slice %4 {offsets = [0, 24], sizes = [8, 8], strides = [1, 1]} : vector<8x32xf32> to vector<8x8xf32>
    %11 = vector.shape_cast %7 : vector<8x8xf32> to vector<1x8x8xf32>
    %12 = vector.shape_cast %8 : vector<8x8xf32> to vector<1x8x8xf32>
    %13 = vector.shape_cast %9 : vector<8x8xf32> to vector<1x8x8xf32>
    %14 = vector.shape_cast %10 : vector<8x8xf32> to vector<1x8x8xf32>
    %15 = tpu.concatenate %11, %12, %13, %14 in 0 : vector<1x8x8xf32>, vector<1x8x8xf32>, vector<1x8x8xf32>, vector<1x8x8xf32> -> vector<4x8x8xf32>
    %16 = vector.extract_strided_slice %6 {offsets = [0, 0], sizes = [8, 8], strides = [1, 1]} : vector<8x32xf32> to vector<8x8xf32>
    %17 = vector.extract_strided_slice %6 {offsets = [0, 8], sizes = [8, 8], strides = [1, 1]} : vector<8x32xf32> to vector<8x8xf32>
    %18 = vector.extract_strided_slice %6 {offsets = [0, 16], sizes = [8, 8], strides = [1, 1]} : vector<8x32xf32> to vector<8x8xf32>
    %19 = vector.extract_strided_slice %6 {offsets = [0, 24], sizes = [8, 8], strides = [1, 1]} : vector<8x32xf32> to vector<8x8xf32>
    %20 = vector.shape_cast %16 : vector<8x8xf32> to vector<1x8x8xf32>
    %21 = vector.shape_cast %17 : vector<8x8xf32> to vector<1x8x8xf32>
    %22 = vector.shape_cast %18 : vector<8x8xf32> to vector<1x8x8xf32>
    %23 = vector.shape_cast %19 : vector<8x8xf32> to vector<1x8x8xf32>
    %24 = tpu.concatenate %20, %21, %22, %23 in 0 : vector<1x8x8xf32>, vector<1x8x8xf32>, vector<1x8x8xf32>, vector<1x8x8xf32> -> vector<4x8x8xf32>
    %c0_8 = arith.constant 0 : index
    %c0_9 = arith.constant 0 : index
    %c0_10 = arith.constant 0 : index
    %25 = vector.load %arg12[%c0_8, %c0_9, %c0_10] : memref<4x8x8xf32, #tpu.memory_space<vmem>>, vector<4x8x8xf32>
    "tpu.trace_start"() <{level = 10 : i32, message = "hqd,hkd->hqk"}> : () -> ()
    %cst = arith.constant dense<0.000000e+00> : vector<4x8x8xf32>
    %26 = tpu.matmul %25, %15, %cst {dimension_numbers = #tpu.dot_dimension_numbers<[2], [2], [1], [1], [0, 0, 0, 1, 1, 1], [0], [0]>, precision = #tpu.contract_precision<fp32>} : vector<4x8x8xf32>, vector<4x8x8xf32>, vector<4x8x8xf32> -> vector<4x8x8xf32>
    "tpu.trace_stop"() : () -> ()
    %c0_11 = arith.constant 0 : index
    %c0_12 = arith.constant 0 : index
    %c0_13 = arith.constant 0 : index
    %27 = vector.load %arg9[%c0_11, %c0_12, %c0_13] : memref<4x8x1xf32, #tpu.memory_space<vmem>>, vector<4x8x1xf32>
    %cst_14 = arith.constant dense<0xFF800000> : vector<4x8xf32>
    %28 = vector.multi_reduction <maximumf>, %26, %cst_14 [2] : vector<4x8x8xf32> to vector<4x8xf32>
    %29 = vector.shape_cast %28 : vector<4x8xf32> to vector<4x8x1xf32>
    %30 = arith.maximumf %27, %29 : vector<4x8x1xf32>
    %31 = arith.subf %27, %30 : vector<4x8x1xf32>
    %32 = math.exp %31 : vector<4x8x1xf32>
    %33 = vector.broadcast %30 : vector<4x8x1xf32> to vector<4x8x8xf32>
    %34 = arith.subf %26, %33 : vector<4x8x8xf32>
    %35 = math.exp %34 : vector<4x8x8xf32>
    %c0_15 = arith.constant 0 : index
    %c0_16 = arith.constant 0 : index
    %c0_17 = arith.constant 0 : index
    %36 = vector.load %arg10[%c0_15, %c0_16, %c0_17] : memref<4x8x1xf32, #tpu.memory_space<vmem>>, vector<4x8x1xf32>
    %37 = arith.mulf %32, %36 : vector<4x8x1xf32>
    %cst_18 = arith.constant dense<0.000000e+00> : vector<4x8xf32>
    %38 = vector.multi_reduction <add>, %35, %cst_18 [2] : vector<4x8x8xf32> to vector<4x8xf32>
    %39 = vector.shape_cast %38 : vector<4x8xf32> to vector<4x8x1xf32>
    %40 = arith.addf %37, %39 : vector<4x8x1xf32>
    %c0_19 = arith.constant 0 : index
    %c0_20 = arith.constant 0 : index
    %c0_21 = arith.constant 0 : index
    %41 = vector.load %arg10[%c0_19, %c0_20, %c0_21] : memref<4x8x1xf32, #tpu.memory_space<vmem>>, vector<4x8x1xf32>
    tpu.vector_store %arg10[%c0_19, %c0_20, %c0_21], %40 {strides = array<i32>} : memref<4x8x1xf32, #tpu.memory_space<vmem>>, vector<4x8x1xf32>,
    "tpu.trace_start"() <{level = 10 : i32, message = "hqk,hkd->hqd"}> : () -> ()
    %cst_22 = arith.constant dense<0.000000e+00> : vector<4x8x8xf32>
    %42 = tpu.matmul %35, %24, %cst_22 {dimension_numbers = #tpu.dot_dimension_numbers<[2], [1], [1], [2], [0, 0, 0, 1, 1, 2], [0], [0]>, precision = #tpu.contract_precision<fp32>} : vector<4x8x8xf32>, vector<4x8x8xf32>, vector<4x8x8xf32> -> vector<4x8x8xf32>
    "tpu.trace_stop"() : () -> ()
    %c0_23 = arith.constant 0 : index
    %c0_24 = arith.constant 0 : index
    %c0_25 = arith.constant 0 : index
    %43 = vector.load %arg11[%c0_23, %c0_24, %c0_25] : memref<4x8x8xf32, #tpu.memory_space<vmem>>, vector<4x8x8xf32>
    %44 = vector.broadcast %32 : vector<4x8x1xf32> to vector<4x8x8xf32>
    %45 = arith.mulf %44, %43 : vector<4x8x8xf32>
    %46 = arith.addf %45, %42 : vector<4x8x8xf32>
    %c0_26 = arith.constant 0 : index
    %c0_27 = arith.constant 0 : index
    %c0_28 = arith.constant 0 : index
    %47 = vector.load %arg11[%c0_26, %c0_27, %c0_28] : memref<4x8x8xf32, #tpu.memory_space<vmem>>, vector<4x8x8xf32>
    tpu.vector_store %arg11[%c0_26, %c0_27, %c0_28], %46 {strides = array<i32>} : memref<4x8x8xf32, #tpu.memory_space<vmem>>, vector<4x8x8xf32>,
    %c0_29 = arith.constant 0 : index
    %c0_30 = arith.constant 0 : index
    %c0_31 = arith.constant 0 : index
    %48 = vector.load %arg9[%c0_29, %c0_30, %c0_31] : memref<4x8x1xf32, #tpu.memory_space<vmem>>, vector<4x8x1xf32>
    tpu.vector_store %arg9[%c0_29, %c0_30, %c0_31], %30 {strides = array<i32>} : memref<4x8x1xf32, #tpu.memory_space<vmem>>, vector<4x8x1xf32>,
    %c0_i32_32 = arith.constant 0 : i32
    %49 = arith.cmpi eq, %arg2, %c0_i32_32 : i32
    %50 = arith.extui %49 : i1 to i32
    %c0_i32_33 = arith.constant 0 : i32
    %51 = arith.cmpi ne, %50, %c0_i32_33 : i32
    scf.if %51 {
      %c0_34 = arith.constant 0 : index
      %c0_35 = arith.constant 0 : index
      %c0_36 = arith.constant 0 : index
      %52 = vector.load %arg10[%c0_34, %c0_35, %c0_36] : memref<4x8x1xf32, #tpu.memory_space<vmem>>, vector<4x8x1xf32>
      %53 = tpu.reciprocal %52 : vector<4x8x1xf32> -> vector<4x8x1xf32>
      %c0_37 = arith.constant 0 : index
      %c0_38 = arith.constant 0 : index
      %54 = vector.load %arg7[%c0_37, %c0_38] : memref<1x32xf32, #tpu.memory_space<vmem>>, vector<1x32xf32>
      %c0_39 = arith.constant 0 : index
      %c0_40 = arith.constant 0 : index
      %c0_41 = arith.constant 0 : index
      %55 = vector.load %arg11[%c0_39, %c0_40, %c0_41] : memref<4x8x8xf32, #tpu.memory_space<vmem>>, vector<1x8x8xf32>
      %56 = vector.shape_cast %55 : vector<1x8x8xf32> to vector<8x8xf32>
      %57 = vector.extract_strided_slice %53 {offsets = [0, 0, 0], sizes = [1, 8, 1], strides = [1, 1, 1]} : vector<4x8x1xf32> to vector<1x8x1xf32>
      %58 = vector.shape_cast %57 : vector<1x8x1xf32> to vector<8x1xf32>
      %59 = vector.broadcast %58 : vector<8x1xf32> to vector<8x8xf32>
      %60 = arith.mulf %56, %59 : vector<8x8xf32>
      %c0_42 = arith.constant 0 : index
      %c0_43 = arith.constant 0 : index
      %61 = vector.load %arg6[%c0_42, %c0_43] : memref<32x32xf32, #tpu.memory_space<vmem>>, vector<8x32xf32>
      %cst_44 = arith.constant dense<0.000000e+00> : vector<8x32xf32>
      %62 = tpu.matmul %60, %61, %cst_44 {dimension_numbers = #tpu.dot_dimension_numbers<[1], [0], [0], [1], [0, 0, 1, 1], [], []>, precision = #tpu.contract_precision<fp32>} : vector<8x8xf32>, vector<8x32xf32>, vector<8x32xf32> -> vector<8x32xf32>
      %63 = vector.broadcast %54 : vector<1x32xf32> to vector<8x32xf32>
      %64 = arith.addf %63, %62 : vector<8x32xf32>
      %c1 = arith.constant 1 : index
      %c0_45 = arith.constant 0 : index
      %c0_46 = arith.constant 0 : index
      %65 = vector.load %arg11[%c1, %c0_45, %c0_46] : memref<4x8x8xf32, #tpu.memory_space<vmem>>, vector<1x8x8xf32>
      %66 = vector.shape_cast %65 : vector<1x8x8xf32> to vector<8x8xf32>
      %67 = vector.extract_strided_slice %53 {offsets = [1, 0, 0], sizes = [1, 8, 1], strides = [1, 1, 1]} : vector<4x8x1xf32> to vector<1x8x1xf32>
      %68 = vector.shape_cast %67 : vector<1x8x1xf32> to vector<8x1xf32>
      %69 = vector.broadcast %68 : vector<8x1xf32> to vector<8x8xf32>
      %70 = arith.mulf %66, %69 : vector<8x8xf32>
      %c8 = arith.constant 8 : index
      %c0_47 = arith.constant 0 : index
      %71 = vector.load %arg6[%c8, %c0_47] : memref<32x32xf32, #tpu.memory_space<vmem>>, vector<8x32xf32>
      %cst_48 = arith.constant dense<0.000000e+00> : vector<8x32xf32>
      %72 = tpu.matmul %70, %71, %cst_48 {dimension_numbers = #tpu.dot_dimension_numbers<[1], [0], [0], [1], [0, 0, 1, 1], [], []>, precision = #tpu.contract_precision<fp32>} : vector<8x8xf32>, vector<8x32xf32>, vector<8x32xf32> -> vector<8x32xf32>
      %73 = arith.addf %64, %72 : vector<8x32xf32>
      %c2 = arith.constant 2 : index
      %c0_49 = arith.constant 0 : index
      %c0_50 = arith.constant 0 : index
      %74 = vector.load %arg11[%c2, %c0_49, %c0_50] : memref<4x8x8xf32, #tpu.memory_space<vmem>>, vector<1x8x8xf32>
      %75 = vector.shape_cast %74 : vector<1x8x8xf32> to vector<8x8xf32>
      %76 = vector.extract_strided_slice %53 {offsets = [2, 0, 0], sizes = [1, 8, 1], strides = [1, 1, 1]} : vector<4x8x1xf32> to vector<1x8x1xf32>
      %77 = vector.shape_cast %76 : vector<1x8x1xf32> to vector<8x1xf32>
      %78 = vector.broadcast %77 : vector<8x1xf32> to vector<8x8xf32>
      %79 = arith.mulf %75, %78 : vector<8x8xf32>
      %c16 = arith.constant 16 : index
      %c0_51 = arith.constant 0 : index
      %80 = vector.load %arg6[%c16, %c0_51] : memref<32x32xf32, #tpu.memory_space<vmem>>, vector<8x32xf32>
      %cst_52 = arith.constant dense<0.000000e+00> : vector<8x32xf32>
      %81 = tpu.matmul %79, %80, %cst_52 {dimension_numbers = #tpu.dot_dimension_numbers<[1], [0], [0], [1], [0, 0, 1, 1], [], []>, precision = #tpu.contract_precision<fp32>} : vector<8x8xf32>, vector<8x32xf32>, vector<8x32xf32> -> vector<8x32xf32>
      %82 = arith.addf %73, %81 : vector<8x32xf32>
      %c3 = arith.constant 3 : index
      %c0_53 = arith.constant 0 : index
      %c0_54 = arith.constant 0 : index
      %83 = vector.load %arg11[%c3, %c0_53, %c0_54] : memref<4x8x8xf32, #tpu.memory_space<vmem>>, vector<1x8x8xf32>
      %84 = vector.shape_cast %83 : vector<1x8x8xf32> to vector<8x8xf32>
      %85 = vector.extract_strided_slice %53 {offsets = [3, 0, 0], sizes = [1, 8, 1], strides = [1, 1, 1]} : vector<4x8x1xf32> to vector<1x8x1xf32>
      %86 = vector.shape_cast %85 : vector<1x8x1xf32> to vector<8x1xf32>
      %87 = vector.broadcast %86 : vector<8x1xf32> to vector<8x8xf32>
      %88 = arith.mulf %84, %87 : vector<8x8xf32>
      %c24 = arith.constant 24 : index
      %c0_55 = arith.constant 0 : index
      %89 = vector.load %arg6[%c24, %c0_55] : memref<32x32xf32, #tpu.memory_space<vmem>>, vector<8x32xf32>
      %cst_56 = arith.constant dense<0.000000e+00> : vector<8x32xf32>
      %90 = tpu.matmul %88, %89, %cst_56 {dimension_numbers = #tpu.dot_dimension_numbers<[1], [0], [0], [1], [0, 0, 1, 1], [], []>, precision = #tpu.contract_precision<fp32>} : vector<8x8xf32>, vector<8x32xf32>, vector<8x32xf32> -> vector<8x32xf32>
      %91 = arith.addf %82, %90 : vector<8x32xf32>
      %c0_57 = arith.constant 0 : index
      %c0_58 = arith.constant 0 : index
      %c0_59 = arith.constant 0 : index
      %92 = vector.load %arg8[%c0_57, %c0_58, %c0_59] : memref<1x8x32xf32, #tpu.memory_space<vmem>>, vector<1x8x32xf32>
      %93 = vector.shape_cast %92 : vector<1x8x32xf32> to vector<8x32xf32>
      %94 = vector.shape_cast %91 : vector<8x32xf32> to vector<1x8x32xf32>
      tpu.vector_store %arg8[%c0_57, %c0_58, %c0_59], %94 {strides = array<i32>} : memref<1x8x32xf32, #tpu.memory_space<vmem>>, vector<1x8x32xf32>,
    } else {
    }
    return
  }
  func.func @transform_0(%arg0: i32, %arg1: i32, %arg2: i32) -> (i32, i32, i32, i32) {
    %c0_i32 = arith.constant 0 : i32
    %c0_i32_0 = arith.constant 0 : i32
    %c0_i32_1 = arith.constant 0 : i32
    return %c0_i32, %arg0, %arg1, %c0_i32_0 : i32, i32, i32, i32
  }
  func.func @transform_1(%arg0: i32, %arg1: i32, %arg2: i32) -> (i32, i32, i32, i32) {
    %c1_i32 = arith.constant 1 : i32
    %c0_i32 = arith.constant 0 : i32
    %c0_i32_0 = arith.constant 0 : i32
    return %c1_i32, %arg0, %arg2, %c0_i32 : i32, i32, i32, i32
  }
  func.func @transform_2(%arg0: i32, %arg1: i32, %arg2: i32) -> (i32, i32, i32, i32) {
    %c2_i32 = arith.constant 2 : i32
    %c0_i32 = arith.constant 0 : i32
    %c0_i32_0 = arith.constant 0 : i32
    return %c2_i32, %arg0, %arg2, %c0_i32 : i32, i32, i32, i32
  }
  func.func @transform_3(%arg0: i32, %arg1: i32, %arg2: i32) -> (i32, i32) {
    %c0_i32 = arith.constant 0 : i32
    %c0_i32_0 = arith.constant 0 : i32
    %c0_i32_1 = arith.constant 0 : i32
    return %c0_i32, %c0_i32_0 : i32, i32
  }
  func.func @transform_4(%arg0: i32, %arg1: i32, %arg2: i32) -> (i32, i32) {
    %c0_i32 = arith.constant 0 : i32
    %c0_i32_0 = arith.constant 0 : i32
    %c0_i32_1 = arith.constant 0 : i32
    return %c0_i32, %c0_i32_0 : i32, i32
  }
  func.func @transform_5(%arg0: i32, %arg1: i32, %arg2: i32) -> (i32, i32, i32) {
    %c0_i32 = arith.constant 0 : i32
    %c0_i32_0 = arith.constant 0 : i32
    return %arg0, %arg1, %c0_i32 : i32, i32, i32
  }
}

</mosaic_0001>

<llo_original>
// kernel: mha_forward.2
$region0: #{mha_forward.2}
  #allocation0 [shape = 'u32[]', space=smem, size = 0x4, offset = 0x4, fixed_abs, tag = 'smem constant byte address 0x4 - core index']
  #allocation1 [shape = 'u32[144,128]{1,0:T(1,128)}', space=vmem, size = 0x12000, scoped, tag = 'internal scratch']
  #allocation2 [shape = 'f32[3,16,32]{2,1,0:T(8,128)}', space=vmem, size = 0x6000, scoped, tag = 'scratch operand']
  %s0 = inlined_call_operand.vmem [shape: f32[16,32], index: 0, kind: input, shape index: {}]
  %s1 = inlined_call_operand.vmem [shape: f32[3,32,32], index: 1, kind: input, shape index: {}]
  %s2 = inlined_call_operand.vmem [shape: f32[3,1,32], index: 2, kind: input, shape index: {}]
  %s3 = inlined_call_operand.vmem [shape: f32[3,16,32], index: 3, kind: output, shape index: {}]
  %s4 = sld [smem:[#allocation0]]
  $region30: #{mha_forward.2} parent=0
    _
  %s6 = ssub.s32 1, %s4
  %s7 = scalar_select 0, %s6, %s4
  // Predicated region
  $region2: #{mha_forward.2} parent=0 // pred_check
    _
  $region3: #{mha_forward.2} parent=0 // pred_check_branch
    %9 = sbr.rel (0) target = $region5
  $region4: #{mha_forward.2} parent=0 // pred_region
    _
  $region5: #{mha_forward.2} parent=0 // pred_fallthru
    _
  // Predicated region
  $region6: #{mha_forward.2} parent=0 // pred_check
    _
  $region7: #{mha_forward.2} parent=0 // pred_check_branch
    %11 = sbr.rel (0) target = $region9
  $region8: #{mha_forward.2} parent=0 // pred_region
    _
  $region9: #{mha_forward.2} parent=0 // pred_fallthru
    _
  // Predicated region
  $region10: #{mha_forward.2} parent=0 // pred_check
    _
  $region11: #{mha_forward.2} parent=0 // pred_check_branch
    %13 = sbr.rel (0) target = $region13
  $region12: #{mha_forward.2} parent=0 // pred_region
    _
  $region13: #{mha_forward.2} parent=0 // pred_fallthru
    _
  %p14 = scmp.eq.s32.totalorder 0, 0
  // Predicated region
  $region14: #{mha_forward.2} parent=0 // pred_check
    %p15 = pneg %p14
  $region15: #{mha_forward.2} parent=0 // pred_check_branch
    %17 = sbr.rel (%p15) target = $region17
  $region16: #{mha_forward.2} parent=0 // pred_region
    %vm18 = vcmask 261120
    %19 = vst.msk [vmem:[#allocation2] sm:$0xff] %vm18, 0.0
    %20 = vst.msk [vmem:[#allocation2 + $0x8] sm:$0xff] %vm18, 0.0
    %21 = vst.msk [vmem:[#allocation2 + $0x10] sm:$0xff] %vm18, 0.0
    %22 = vst.msk [vmem:[#allocation2 + $0x18] sm:$0xff] %vm18, 0.0
    %23 = vst.msk [vmem:[#allocation2 + $0x20] sm:$0xff] %vm18, 0.0
    %24 = vst.msk [vmem:[#allocation2 + $0x28] sm:$0xff] %vm18, 0.0
  $region17: #{mha_forward.2} parent=0 // pred_fallthru
    _
  %v25 = vld [vmem:[%s0] sm:$0xff]
  %v26 = vld [vmem:[%s0 + $0x8] sm:$0xff]
  %v27 = vld [vmem:[#allocation2] sm:$0xff]
  %v28 = vld [vmem:[#allocation2 + $0x8] sm:$0xff]
  %v29 = vld [vmem:[%s1] sm:$0xff]
  %v30 = vld [vmem:[%s1 + $0x8] sm:$0xff]
  %v31 = vld [vmem:[%s1 + $0x10] sm:$0xff]
  %v32 = vld [vmem:[%s1 + $0x18] sm:$0xff]
  %vm33 = vcmask 261120
  %v35 = vsel %vm33, %v25, 0
  %v38 = vsel %vm33, %v26, 0
  %40 = vmatprep.subr.mxu0 0.0
  %v41 = vand.u32 %v29, 4294901760
  %42 = vmatpush1.msra.mxu0 %v41
  %43 = vmatprep.subr.mxu0 0.0
  %v44 = vand.u32 %v30, 4294901760
  %45 = vmatpush1.msra.mxu0 %v44
  %46 = vmatprep.subr.mxu0 0.0
  %v47 = vand.u32 %v31, 4294901760
  %48 = vmatpush1.msra.mxu0 %v47
  %49 = vmatprep.subr.mxu0 0.0
  %v50 = vand.u32 %v32, 4294901760
  %51 = vmatpush1.msra.mxu0 %v50
  %52 = vmatprep.subr.mxu0 0.0
  %53 = vmatpush1.msra.mxu0 0.0
  %54 = vmatprep.subr.mxu0 0.0
  %55 = vmatpush1.msra.mxu0 0.0
  %56 = vmatprep.subr.mxu0 0.0
  %57 = vmatpush1.msra.mxu0 0.0
  %58 = vmatprep.subr.mxu0 0.0
  %59 = vmatpush1.msra.mxu0 0.0
  %60 = vmatprep.subr.mxu0 0.0
  %61 = vmatpush1.msra.mxu0 0.0
  %62 = vmatprep.subr.mxu0 0.0
  %63 = vmatpush1.msra.mxu0 0.0
  %64 = vmatprep.subr.mxu0 0.0
  %65 = vmatpush1.msra.mxu0 0.0
  %66 = vmatprep.subr.mxu0 0.0
  %67 = vmatpush1.msra.mxu0 0.0
  %68 = vmatprep.subr.mxu0 0.0
  %69 = vmatpush1.msra.mxu0 0.0
  %70 = vmatprep.subr.mxu0 0.0
  %71 = vmatpush1.msra.mxu0 0.0
  %72 = vmatprep.subr.mxu0 0.0
  %73 = vmatpush1.msra.mxu0 0.0
  %74 = vmatprep.subr.mxu0 0.0
  %75 = vmatpush1.msra.mxu0 0.0
  %76 = vmatprep.subr.mxu0 0.0
  %77 = vmatpush1.msra.mxu0 0.0
  %78 = vmatprep.subr.mxu0 0.0
  %79 = vmatpush1.msra.mxu0 0.0
  %80 = vmatprep.subr.mxu0 0.0
  %81 = vmatpush1.msra.mxu0 0.0
  %82 = vmatprep.subr.mxu0 0.0
  %83 = vmatpush1.msra.mxu0 0.0
  %84 = vmatprep.subr.mxu0 0.0
  %85 = vmatpush1.msra.mxu0 0.0
  %86 = vmatprep.subr.mxu0 0.0
  %87 = vmatpush1.msra.mxu0 0.0
  %88 = vmatprep.subr.mxu0 0.0
  %89 = vmatpush1.msra.mxu0 0.0
  %90 = vmatprep.subr.mxu0 0.0
  %91 = vmatpush1.msra.mxu0 0.0
  %92 = vmatprep.subr.mxu0 0.0
  %93 = vmatpush1.msra.mxu0 0.0
  %94 = vmatprep.subr.mxu0 0.0
  %95 = vmatpush1.msra.mxu0 0.0
  %96 = vmatprep.subr.mxu0 0.0
  %97 = vmatpush1.msra.mxu0 0.0
  %98 = vmatprep.subr.mxu0 0.0
  %99 = vmatpush1.msra.mxu0 0.0
  %100 = vmatprep.subr.mxu0 0.0
  %101 = vmatpush1.msra.mxu0 0.0
  %102 = vmatprep.subr.mxu0 0.0
  %103 = vmatpush1.msra.mxu0 0.0
  %104 = vmatprep.subr.mxu0 0.0
  %105 = vmatpush1.msra.mxu0 0.0
  %106 = vmatprep.subr.mxu0 0.0
  %107 = vmatpush1.msra.mxu0 0.0
  %108 = vmatprep.mubr.f32.mxu0 0.0
  %v109 = vand.u32 %v35, 4294901760
  %v110 = vsub.f32 %v35, %v109
  %v111 = vand.u32 %v110, 4294901760
  %v112 = vsub.f32 %v110, %v111
  %v113 = vand.u32 %v112, 4294901760
  %114 = vmatmul.mubr.f32.gmra.mrb[0].mxu0 %v113
  %v115 = vpop.f32.mrb[0].mxu0
  %v116 = vadd.f32 0.0, %v115
  %v117 = vpop.f32.mrb[0].mxu0
  %118 = vmatprep.mubr.f32.mxu0 0.0
  %v119 = vand.u32 %v38, 4294901760
  %v120 = vsub.f32 %v38, %v119
  %v121 = vand.u32 %v120, 4294901760
  %v122 = vsub.f32 %v120, %v121
  %v123 = vand.u32 %v122, 4294901760
  %124 = vmatmul.mubr.f32.gmra.mrb[0].mxu0 %v123
  %v125 = vpop.f32.mrb[0].mxu0
  %v126 = vadd.f32 0.0, %v125
  %v127 = vpop.f32.mrb[0].mxu0
  %128 = vdwg.mxu0
  %129 = vmatprep.subr.mxu0 0.0
  %v130 = vand.u32 %v29, 4294901760
  %v131 = vsub.f32 %v29, %v130
  %v132 = vand.u32 %v131, 4294901760
  %v133 = vsub.f32 %v131, %v132
  %v134 = vand.u32 %v133, 4294901760
  %135 = vmatpush1.msra.mxu0 %v134
  %136 = vmatprep.subr.mxu0 0.0
  %v137 = vand.u32 %v30, 4294901760
  %v138 = vsub.f32 %v30, %v137
  %v139 = vand.u32 %v138, 4294901760
  %v140 = vsub.f32 %v138, %v139
  %v141 = vand.u32 %v140, 4294901760
  %142 = vmatpush1.msra.mxu0 %v141
  %143 = vmatprep.subr.mxu0 0.0
  %v144 = vand.u32 %v31, 4294901760
  %v145 = vsub.f32 %v31, %v144
  %v146 = vand.u32 %v145, 4294901760
  %v147 = vsub.f32 %v145, %v146
  %v148 = vand.u32 %v147, 4294901760
  %149 = vmatpush1.msra.mxu0 %v148
  %150 = vmatprep.subr.mxu0 0.0
  %v151 = vand.u32 %v32, 4294901760
  %v152 = vsub.f32 %v32, %v151
  %v153 = vand.u32 %v152, 4294901760
  %v154 = vsub.f32 %v152, %v153
  %v155 = vand.u32 %v154, 4294901760
  %156 = vmatpush1.msra.mxu0 %v155
  %157 = vmatprep.subr.mxu0 0.0
  %158 = vmatpush1.msra.mxu0 0.0
  %159 = vmatprep.subr.mxu0 0.0
  %160 = vmatpush1.msra.mxu0 0.0
  %161 = vmatprep.subr.mxu0 0.0
  %162 = vmatpush1.msra.mxu0 0.0
  %163 = vmatprep.subr.mxu0 0.0
  %164 = vmatpush1.msra.mxu0 0.0
  %165 = vmatprep.subr.mxu0 0.0
  %166 = vmatpush1.msra.mxu0 0.0
  %167 = vmatprep.subr.mxu0 0.0
  %168 = vmatpush1.msra.mxu0 0.0
  %169 = vmatprep.subr.mxu0 0.0
  %170 = vmatpush1.msra.mxu0 0.0
  %171 = vmatprep.subr.mxu0 0.0
  %172 = vmatpush1.msra.mxu0 0.0
  %173 = vmatprep.subr.mxu0 0.0
  %174 = vmatpush1.msra.mxu0 0.0
  %175 = vmatprep.subr.mxu0 0.0
  %176 = vmatpush1.msra.mxu0 0.0
  %177 = vmatprep.subr.mxu0 0.0
  %178 = vmatpush1.msra.mxu0 0.0
  %179 = vmatprep.subr.mxu0 0.0
  %180 = vmatpush1.msra.mxu0 0.0
  %181 = vmatprep.subr.mxu0 0.0
  %182 = vmatpush1.msra.mxu0 0.0
  %183 = vmatprep.subr.mxu0 0.0
  %184 = vmatpush1.msra.mxu0 0.0
  %185 = vmatprep.subr.mxu0 0.0
  %186 = vmatpush1.msra.mxu0 0.0
  %187 = vmatprep.subr.mxu0 0.0
  %188 = vmatpush1.msra.mxu0 0.0
  %189 = vmatprep.subr.mxu0 0.0
  %190 = vmatpush1.msra.mxu0 0.0
  %191 = vmatprep.subr.mxu0 0.0
  %192 = vmatpush1.msra.mxu0 0.0
  %193 = vmatprep.subr.mxu0 0.0
  %194 = vmatpush1.msra.mxu0 0.0
  %195 = vmatprep.subr.mxu0 0.0
  %196 = vmatpush1.msra.mxu0 0.0
  %197 = vmatprep.subr.mxu0 0.0
  %198 = vmatpush1.msra.mxu0 0.0
  %199 = vmatprep.subr.mxu0 0.0
  %200 = vmatpush1.msra.mxu0 0.0
  %201 = vmatprep.subr.mxu0 0.0
  %202 = vmatpush1.msra.mxu0 0.0
  %203 = vmatprep.subr.mxu0 0.0
  %204 = vmatpush1.msra.mxu0 0.0
  %205 = vmatprep.subr.mxu0 0.0
  %206 = vmatpush1.msra.mxu0 0.0
  %207 = vmatprep.subr.mxu0 0.0
  %208 = vmatpush1.msra.mxu0 0.0
  %209 = vmatprep.subr.mxu0 0.0
  %210 = vmatpush1.msra.mxu0 0.0
  %211 = vmatprep.subr.mxu0 0.0
  %212 = vmatpush1.msra.mxu0 0.0
  %213 = vmatprep.mubr.f32.mxu0 0.0
  %v214 = vand.u32 %v35, 4294901760
  %215 = vmatmul.mubr.f32.gmra.mrb[0].mxu0 %v214
  %v216 = vpop.f32.mrb[0].mxu0
  %v217 = vadd.f32 %v116, %v216
  %v218 = vpop.f32.mrb[0].mxu0
  %219 = vmatprep.mubr.f32.mxu0 0.0
  %v220 = vand.u32 %v38, 4294901760
  %221 = vmatmul.mubr.f32.gmra.mrb[0].mxu0 %v220
  %v222 = vpop.f32.mrb[0].mxu0
  %v223 = vadd.f32 %v126, %v222
  %v224 = vpop.f32.mrb[0].mxu0
  %225 = vdwg.mxu0
  %226 = vmatprep.subr.mxu0 0.0
  %v227 = vand.u32 %v29, 4294901760
  %v228 = vsub.f32 %v29, %v227
  %229 = vmatpush1.msra.mxu0 %v228
  %230 = vmatprep.subr.mxu0 0.0
  %v231 = vand.u32 %v30, 4294901760
  %v232 = vsub.f32 %v30, %v231
  %233 = vmatpush1.msra.mxu0 %v232
  %234 = vmatprep.subr.mxu0 0.0
  %v235 = vand.u32 %v31, 4294901760
  %v236 = vsub.f32 %v31, %v235
  %237 = vmatpush1.msra.mxu0 %v236
  %238 = vmatprep.subr.mxu0 0.0
  %v239 = vand.u32 %v32, 4294901760
  %v240 = vsub.f32 %v32, %v239
  %241 = vmatpush1.msra.mxu0 %v240
  %242 = vmatprep.subr.mxu0 0.0
  %243 = vmatpush1.msra.mxu0 0.0
  %244 = vmatprep.subr.mxu0 0.0
  %245 = vmatpush1.msra.mxu0 0.0
  %246 = vmatprep.subr.mxu0 0.0
  %247 = vmatpush1.msra.mxu0 0.0
  %248 = vmatprep.subr.mxu0 0.0
  %249 = vmatpush1.msra.mxu0 0.0
  %250 = vmatprep.subr.mxu0 0.0
  %251 = vmatpush1.msra.mxu0 0.0
  %252 = vmatprep.subr.mxu0 0.0
  %253 = vmatpush1.msra.mxu0 0.0
  %254 = vmatprep.subr.mxu0 0.0
  %255 = vmatpush1.msra.mxu0 0.0
  %256 = vmatprep.subr.mxu0 0.0
  %257 = vmatpush1.msra.mxu0 0.0
  %258 = vmatprep.subr.mxu0 0.0
  %259 = vmatpush1.msra.mxu0 0.0
  %260 = vmatprep.subr.mxu0 0.0
  %261 = vmatpush1.msra.mxu0 0.0
  %262 = vmatprep.subr.mxu0 0.0
  %263 = vmatpush1.msra.mxu0 0.0
  %264 = vmatprep.subr.mxu0 0.0
  %265 = vmatpush1.msra.mxu0 0.0
  %266 = vmatprep.subr.mxu0 0.0
  %267 = vmatpush1.msra.mxu0 0.0
  %268 = vmatprep.subr.mxu0 0.0
  %269 = vmatpush1.msra.mxu0 0.0
  %270 = vmatprep.subr.mxu0 0.0
  %271 = vmatpush1.msra.mxu0 0.0
  %272 = vmatprep.subr.mxu0 0.0
  %273 = vmatpush1.msra.mxu0 0.0
  %274 = vmatprep.subr.mxu0 0.0
  %275 = vmatpush1.msra.mxu0 0.0
  %276 = vmatprep.subr.mxu0 0.0
  %277 = vmatpush1.msra.mxu0 0.0
  %278 = vmatprep.subr.mxu0 0.0
  %279 = vmatpush1.msra.mxu0 0.0
  %280 = vmatprep.subr.mxu0 0.0
  %281 = vmatpush1.msra.mxu0 0.0
  %282 = vmatprep.subr.mxu0 0.0
  %283 = vmatpush1.msra.mxu0 0.0
  %284 = vmatprep.subr.mxu0 0.0
  %285 = vmatpush1.msra.mxu0 0.0
  %286 = vmatprep.subr.mxu0 0.0
  %287 = vmatpush1.msra.mxu0 0.0
  %288 = vmatprep.subr.mxu0 0.0
  %289 = vmatpush1.msra.mxu0 0.0
  %290 = vmatprep.subr.mxu0 0.0
  %291 = vmatpush1.msra.mxu0 0.0
  %292 = vmatprep.subr.mxu0 0.0
  %293 = vmatpush1.msra.mxu0 0.0
  %294 = vmatprep.subr.mxu0 0.0
  %295 = vmatpush1.msra.mxu0 0.0
  %296 = vmatprep.subr.mxu0 0.0
  %297 = vmatpush1.msra.mxu0 0.0
  %298 = vmatprep.mubr.f32.mxu0 0.0
  %v299 = vand.u32 %v35, 4294901760
  %v300 = vsub.f32 %v35, %v299
  %301 = vmatmul.mubr.f32.gmra.mrb[0].mxu0 %v300
  %v302 = vpop.f32.mrb[0].mxu0
  %v303 = vadd.f32 %v217, %v302
  %v304 = vpop.f32.mrb[0].mxu0
  %305 = vmatprep.mubr.f32.mxu0 0.0
  %v306 = vand.u32 %v38, 4294901760
  %v307 = vsub.f32 %v38, %v306
  %308 = vmatmul.mubr.f32.gmra.mrb[0].mxu0 %v307
  %v309 = vpop.f32.mrb[0].mxu0
  %v310 = vadd.f32 %v223, %v309
  %v311 = vpop.f32.mrb[0].mxu0
  %312 = vdwg.mxu0
  %313 = vmatprep.subr.mxu0 0.0
  %v314 = vand.u32 %v29, 4294901760
  %315 = vmatpush1.msra.mxu0 %v314
  %316 = vmatprep.subr.mxu0 0.0
  %v317 = vand.u32 %v30, 4294901760
  %318 = vmatpush1.msra.mxu0 %v317
  %319 = vmatprep.subr.mxu0 0.0
  %v320 = vand.u32 %v31, 4294901760
  %321 = vmatpush1.msra.mxu0 %v320
  %322 = vmatprep.subr.mxu0 0.0
  %v323 = vand.u32 %v32, 4294901760
  %324 = vmatpush1.msra.mxu0 %v323
  %325 = vmatprep.subr.mxu0 0.0
  %326 = vmatpush1.msra.mxu0 0.0
  %327 = vmatprep.subr.mxu0 0.0
  %328 = vmatpush1.msra.mxu0 0.0
  %329 = vmatprep.subr.mxu0 0.0
  %330 = vmatpush1.msra.mxu0 0.0
  %331 = vmatprep.subr.mxu0 0.0
  %332 = vmatpush1.msra.mxu0 0.0
  %333 = vmatprep.subr.mxu0 0.0
  %334 = vmatpush1.msra.mxu0 0.0
  %335 = vmatprep.subr.mxu0 0.0
  %336 = vmatpush1.msra.mxu0 0.0
  %337 = vmatprep.subr.mxu0 0.0
  %338 = vmatpush1.msra.mxu0 0.0
  %339 = vmatprep.subr.mxu0 0.0
  %340 = vmatpush1.msra.mxu0 0.0
  %341 = vmatprep.subr.mxu0 0.0
  %342 = vmatpush1.msra.mxu0 0.0
  %343 = vmatprep.subr.mxu0 0.0
  %344 = vmatpush1.msra.mxu0 0.0
  %345 = vmatprep.subr.mxu0 0.0
  %346 = vmatpush1.msra.mxu0 0.0
  %347 = vmatprep.subr.mxu0 0.0
  %348 = vmatpush1.msra.mxu0 0.0
  %349 = vmatprep.subr.mxu0 0.0
  %350 = vmatpush1.msra.mxu0 0.0
  %351 = vmatprep.subr.mxu0 0.0
  %352 = vmatpush1.msra.mxu0 0.0
  %353 = vmatprep.subr.mxu0 0.0
  %354 = vmatpush1.msra.mxu0 0.0
  %355 = vmatprep.subr.mxu0 0.0
  %356 = vmatpush1.msra.mxu0 0.0
  %357 = vmatprep.subr.mxu0 0.0
  %358 = vmatpush1.msra.mxu0 0.0
  %359 = vmatprep.subr.mxu0 0.0
  %360 = vmatpush1.msra.mxu0 0.0
  %361 = vmatprep.subr.mxu0 0.0
  %362 = vmatpush1.msra.mxu0 0.0
  %363 = vmatprep.subr.mxu0 0.0
  %364 = vmatpush1.msra.mxu0 0.0
  %365 = vmatprep.subr.mxu0 0.0
  %366 = vmatpush1.msra.mxu0 0.0
  %367 = vmatprep.subr.mxu0 0.0
  %368 = vmatpush1.msra.mxu0 0.0
  %369 = vmatprep.subr.mxu0 0.0
  %370 = vmatpush1.msra.mxu0 0.0
  %371 = vmatprep.subr.mxu0 0.0
  %372 = vmatpush1.msra.mxu0 0.0
  %373 = vmatprep.subr.mxu0 0.0
  %374 = vmatpush1.msra.mxu0 0.0
  %375 = vmatprep.subr.mxu0 0.0
  %376 = vmatpush1.msra.mxu0 0.0
  %377 = vmatprep.subr.mxu0 0.0
  %378 = vmatpush1.msra.mxu0 0.0
  %379 = vmatprep.subr.mxu0 0.0
  %380 = vmatpush1.msra.mxu0 0.0
  %381 = vmatprep.mubr.f32.mxu0 0.0
  %v382 = vand.u32 %v35, 4294901760
  %v383 = vsub.f32 %v35, %v382
  %v384 = vand.u32 %v383, 4294901760
  %385 = vmatmul.mubr.f32.gmra.mrb[0].mxu0 %v384
  %v386 = vpop.f32.mrb[0].mxu0
  %v387 = vadd.f32 %v303, %v386
  %v388 = vpop.f32.mrb[0].mxu0
  %389 = vmatprep.mubr.f32.mxu0 0.0
  %v390 = vand.u32 %v38, 4294901760
  %v391 = vsub.f32 %v38, %v390
  %v392 = vand.u32 %v391, 4294901760
  %393 = vmatmul.mubr.f32.gmra.mrb[0].mxu0 %v392
  %v394 = vpop.f32.mrb[0].mxu0
  %v395 = vadd.f32 %v310, %v394
  %v396 = vpop.f32.mrb[0].mxu0
  %397 = vdwg.mxu0
  %398 = vmatprep.subr.mxu0 0.0
  %v399 = vand.u32 %v29, 4294901760
  %v400 = vsub.f32 %v29, %v399
  %v401 = vand.u32 %v400, 4294901760
  %402 = vmatpush1.msra.mxu0 %v401
  %403 = vmatprep.subr.mxu0 0.0
  %v404 = vand.u32 %v30, 4294901760
  %v405 = vsub.f32 %v30, %v404
  %v406 = vand.u32 %v405, 4294901760
  %407 = vmatpush1.msra.mxu0 %v406
  %408 = vmatprep.subr.mxu0 0.0
  %v409 = vand.u32 %v31, 4294901760
  %v410 = vsub.f32 %v31, %v409
  %v411 = vand.u32 %v410, 4294901760
  %412 = vmatpush1.msra.mxu0 %v411
  %413 = vmatprep.subr.mxu0 0.0
  %v414 = vand.u32 %v32, 4294901760
  %v415 = vsub.f32 %v32, %v414
  %v416 = vand.u32 %v415, 4294901760
  %417 = vmatpush1.msra.mxu0 %v416
  %418 = vmatprep.subr.mxu0 0.0
  %419 = vmatpush1.msra.mxu0 0.0
  %420 = vmatprep.subr.mxu0 0.0
  %421 = vmatpush1.msra.mxu0 0.0
  %422 = vmatprep.subr.mxu0 0.0
  %423 = vmatpush1.msra.mxu0 0.0
  %424 = vmatprep.subr.mxu0 0.0
  %425 = vmatpush1.msra.mxu0 0.0
  %426 = vmatprep.subr.mxu0 0.0
  %427 = vmatpush1.msra.mxu0 0.0
  %428 = vmatprep.subr.mxu0 0.0
  %429 = vmatpush1.msra.mxu0 0.0
  %430 = vmatprep.subr.mxu0 0.0
  %431 = vmatpush1.msra.mxu0 0.0
  %432 = vmatprep.subr.mxu0 0.0
  %433 = vmatpush1.msra.mxu0 0.0
  %434 = vmatprep.subr.mxu0 0.0
  %435 = vmatpush1.msra.mxu0 0.0
  %436 = vmatprep.subr.mxu0 0.0
  %437 = vmatpush1.msra.mxu0 0.0
  %438 = vmatprep.subr.mxu0 0.0
  %439 = vmatpush1.msra.mxu0 0.0
  %440 = vmatprep.subr.mxu0 0.0
  %441 = vmatpush1.msra.mxu0 0.0
  %442 = vmatprep.subr.mxu0 0.0
  %443 = vmatpush1.msra.mxu0 0.0
  %444 = vmatprep.subr.mxu0 0.0
  %445 = vmatpush1.msra.mxu0 0.0
  %446 = vmatprep.subr.mxu0 0.0
  %447 = vmatpush1.msra.mxu0 0.0
  %448 = vmatprep.subr.mxu0 0.0
  %449 = vmatpush1.msra.mxu0 0.0
  %450 = vmatprep.subr.mxu0 0.0
  %451 = vmatpush1.msra.mxu0 0.0
  %452 = vmatprep.subr.mxu0 0.0
  %453 = vmatpush1.msra.mxu0 0.0
  %454 = vmatprep.subr.mxu0 0.0
  %455 = vmatpush1.msra.mxu0 0.0
  %456 = vmatprep.subr.mxu0 0.0
  %457 = vmatpush1.msra.mxu0 0.0
  %458 = vmatprep.subr.mxu0 0.0
  %459 = vmatpush1.msra.mxu0 0.0
  %460 = vmatprep.subr.mxu0 0.0
  %461 = vmatpush1.msra.mxu0 0.0
  %462 = vmatprep.subr.mxu0 0.0
  %463 = vmatpush1.msra.mxu0 0.0
  %464 = vmatprep.subr.mxu0 0.0
  %465 = vmatpush1.msra.mxu0 0.0
  %466 = vmatprep.subr.mxu0 0.0
  %467 = vmatpush1.msra.mxu0 0.0
  %468 = vmatprep.subr.mxu0 0.0
  %469 = vmatpush1.msra.mxu0 0.0
  %470 = vmatprep.subr.mxu0 0.0
  %471 = vmatpush1.msra.mxu0 0.0
  %472 = vmatprep.subr.mxu0 0.0
  %473 = vmatpush1.msra.mxu0 0.0
  %474 = vmatprep.mubr.f32.mxu0 0.0
  %v475 = vand.u32 %v35, 4294901760
  %476 = vmatmul.mubr.f32.gmra.mrb[0].mxu0 %v475
  %v477 = vpop.f32.mrb[0].mxu0
  %v478 = vadd.f32 %v387, %v477
  %v479 = vpop.f32.mrb[0].mxu0
  %480 = vmatprep.mubr.f32.mxu0 0.0
  %v481 = vand.u32 %v38, 4294901760
  %482 = vmatmul.mubr.f32.gmra.mrb[0].mxu0 %v481
  %v483 = vpop.f32.mrb[0].mxu0
  %v484 = vadd.f32 %v395, %v483
  %v485 = vpop.f32.mrb[0].mxu0
  %486 = vdwg.mxu0
  %487 = vmatprep.subr.mxu0 0.0
  %v488 = vand.u32 %v29, 4294901760
  %489 = vmatpush1.msra.mxu0 %v488
  %490 = vmatprep.subr.mxu0 0.0
  %v491 = vand.u32 %v30, 4294901760
  %492 = vmatpush1.msra.mxu0 %v491
  %493 = vmatprep.subr.mxu0 0.0
  %v494 = vand.u32 %v31, 4294901760
  %495 = vmatpush1.msra.mxu0 %v494
  %496 = vmatprep.subr.mxu0 0.0
  %v497 = vand.u32 %v32, 4294901760
  %498 = vmatpush1.msra.mxu0 %v497
  %499 = vmatprep.subr.mxu0 0.0
  %500 = vmatpush1.msra.mxu0 0.0
  %501 = vmatprep.subr.mxu0 0.0
  %502 = vmatpush1.msra.mxu0 0.0
  %503 = vmatprep.subr.mxu0 0.0
  %504 = vmatpush1.msra.mxu0 0.0
  %505 = vmatprep.subr.mxu0 0.0
  %506 = vmatpush1.msra.mxu0 0.0
  %507 = vmatprep.subr.mxu0 0.0
  %508 = vmatpush1.msra.mxu0 0.0
  %509 = vmatprep.subr.mxu0 0.0
  %510 = vmatpush1.msra.mxu0 0.0
  %511 = vmatprep.subr.mxu0 0.0
  %512 = vmatpush1.msra.mxu0 0.0
  %513 = vmatprep.subr.mxu0 0.0
  %514 = vmatpush1.msra.mxu0 0.0
  %515 = vmatprep.subr.mxu0 0.0
  %516 = vmatpush1.msra.mxu0 0.0
  %517 = vmatprep.subr.mxu0 0.0
  %518 = vmatpush1.msra.mxu0 0.0
  %519 = vmatprep.subr.mxu0 0.0
  %520 = vmatpush1.msra.mxu0 0.0
  %521 = vmatprep.subr.mxu0 0.0
  %522 = vmatpush1.msra.mxu0 0.0
  %523 = vmatprep.subr.mxu0 0.0
  %524 = vmatpush1.msra.mxu0 0.0
  %525 = vmatprep.subr.mxu0 0.0
  %526 = vmatpush1.msra.mxu0 0.0
  %527 = vmatprep.subr.mxu0 0.0
  %528 = vmatpush1.msra.mxu0 0.0
  %529 = vmatprep.subr.mxu0 0.0
  %530 = vmatpush1.msra.mxu0 0.0
  %531 = vmatprep.subr.mxu0 0.0
  %532 = vmatpush1.msra.mxu0 0.0
  %533 = vmatprep.subr.mxu0 0.0
  %534 = vmatpush1.msra.mxu0 0.0
  %535 = vmatprep.subr.mxu0 0.0
  %536 = vmatpush1.msra.mxu0 0.0
  %537 = vmatprep.subr.mxu0 0.0
  %538 = vmatpush1.msra.mxu0 0.0
  %539 = vmatprep.subr.mxu0 0.0
  %540 = vmatpush1.msra.mxu0 0.0
  %541 = vmatprep.subr.mxu0 0.0
  %542 = vmatpush1.msra.mxu0 0.0
  %543 = vmatprep.subr.mxu0 0.0
  %544 = vmatpush1.msra.mxu0 0.0
  %545 = vmatprep.subr.mxu0 0.0
  %546 = vmatpush1.msra.mxu0 0.0
  %547 = vmatprep.subr.mxu0 0.0
  %548 = vmatpush1.msra.mxu0 0.0
  %549 = vmatprep.subr.mxu0 0.0
  %550 = vmatpush1.msra.mxu0 0.0
  %551 = vmatprep.subr.mxu0 0.0
  %552 = vmatpush1.msra.mxu0 0.0
  %553 = vmatprep.subr.mxu0 0.0
  %554 = vmatpush1.msra.mxu0 0.0
  %555 = vmatprep.mubr.f32.mxu0 0.0
  %v556 = vand.u32 %v35, 4294901760
  %557 = vmatmul.mubr.f32.gmra.mrb[0].mxu0 %v556
  %v558 = vpop.f32.mrb[0].mxu0
  %v559 = vadd.f32 %v478, %v558
  %v560 = vpop.f32.mrb[0].mxu0
  %561 = vmatprep.mubr.f32.mxu0 0.0
  %v562 = vand.u32 %v38, 4294901760
  %563 = vmatmul.mubr.f32.gmra.mrb[0].mxu0 %v562
  %v564 = vpop.f32.mrb[0].mxu0
  %v565 = vadd.f32 %v484, %v564
  %v566 = vpop.f32.mrb[0].mxu0
  %567 = vdwg.mxu0
  %v568 = vadd.f32 %v27, %v559
  %v569 = vadd.f32 %v28, %v565
  %570 = vst.msk [vmem:[#allocation2] sm:$0xff] %vm33, %v568
  %571 = vst.msk [vmem:[#allocation2 + $0x8] sm:$0xff] %vm33, %v569
  %s572 = scalar_lea.vmem [#allocation2], 16
  %v573 = vld [vmem:[%s572] sm:$0xff]
  %v574 = vld [vmem:[%s572 + $0x8] sm:$0xff]
  %s575 = scalar_lea.vmem %s1, 32
  %v576 = vld [vmem:[%s575] sm:$0xff]
  %v577 = vld [vmem:[%s575 + $0x8] sm:$0xff]
  %v578 = vld [vmem:[%s575 + $0x10] sm:$0xff]
  %v579 = vld [vmem:[%s575 + $0x18] sm:$0xff]
  %580 = vmatprep.subr.mxu0 0.0
  %v581 = vand.u32 %v576, 4294901760
  %582 = vmatpush1.msra.mxu0 %v581
  %583 = vmatprep.subr.mxu0 0.0
  %v584 = vand.u32 %v577, 4294901760
  %585 = vmatpush1.msra.mxu0 %v584
  %586 = vmatprep.subr.mxu0 0.0
  %v587 = vand.u32 %v578, 4294901760
  %588 = vmatpush1.msra.mxu0 %v587
  %589 = vmatprep.subr.mxu0 0.0
  %v590 = vand.u32 %v579, 4294901760
  %591 = vmatpush1.msra.mxu0 %v590
  %592 = vmatprep.subr.mxu0 0.0
  %593 = vmatpush1.msra.mxu0 0.0
  %594 = vmatprep.subr.mxu0 0.0
  %595 = vmatpush1.msra.mxu0 0.0
  %596 = vmatprep.subr.mxu0 0.0
  %597 = vmatpush1.msra.mxu0 0.0
  %598 = vmatprep.subr.mxu0 0.0
  %599 = vmatpush1.msra.mxu0 0.0
  %600 = vmatprep.subr.mxu0 0.0
  %601 = vmatpush1.msra.mxu0 0.0
  %602 = vmatprep.subr.mxu0 0.0
  %603 = vmatpush1.msra.mxu0 0.0
  %604 = vmatprep.subr.mxu0 0.0
  %605 = vmatpush1.msra.mxu0 0.0
  %606 = vmatprep.subr.mxu0 0.0
  %607 = vmatpush1.msra.mxu0 0.0
  %608 = vmatprep.subr.mxu0 0.0
  %609 = vmatpush1.msra.mxu0 0.0
  %610 = vmatprep.subr.mxu0 0.0
  %611 = vmatpush1.msra.mxu0 0.0
  %612 = vmatprep.subr.mxu0 0.0
  %613 = vmatpush1.msra.mxu0 0.0
  %614 = vmatprep.subr.mxu0 0.0
  %615 = vmatpush1.msra.mxu0 0.0
  %616 = vmatprep.subr.mxu0 0.0
  %617 = vmatpush1.msra.mxu0 0.0
  %618 = vmatprep.subr.mxu0 0.0
  %619 = vmatpush1.msra.mxu0 0.0
  %620 = vmatprep.subr.mxu0 0.0
  %621 = vmatpush1.msra.mxu0 0.0
  %622 = vmatprep.subr.mxu0 0.0
  %623 = vmatpush1.msra.mxu0 0.0
  %624 = vmatprep.subr.mxu0 0.0
  %625 = vmatpush1.msra.mxu0 0.0
  %626 = vmatprep.subr.mxu0 0.0
  %627 = vmatpush1.msra.mxu0 0.0
  %628 = vmatprep.subr.mxu0 0.0
  %629 = vmatpush1.msra.mxu0 0.0
  %630 = vmatprep.subr.mxu0 0.0
  %631 = vmatpush1.msra.mxu0 0.0
  %632 = vmatprep.subr.mxu0 0.0
  %633 = vmatpush1.msra.mxu0 0.0
  %634 = vmatprep.subr.mxu0 0.0
  %635 = vmatpush1.msra.mxu0 0.0
  %636 = vmatprep.subr.mxu0 0.0
  %637 = vmatpush1.msra.mxu0 0.0
  %638 = vmatprep.subr.mxu0 0.0
  %639 = vmatpush1.msra.mxu0 0.0
  %640 = vmatprep.subr.mxu0 0.0
  %641 = vmatpush1.msra.mxu0 0.0
  %642 = vmatprep.subr.mxu0 0.0
  %643 = vmatpush1.msra.mxu0 0.0
  %644 = vmatprep.subr.mxu0 0.0
  %645 = vmatpush1.msra.mxu0 0.0
  %646 = vmatprep.subr.mxu0 0.0
  %647 = vmatpush1.msra.mxu0 0.0
  %648 = vmatprep.mubr.f32.mxu0 0.0
  %v649 = vand.u32 %v35, 4294901760
  %v650 = vsub.f32 %v35, %v649
  %v651 = vand.u32 %v650, 4294901760
  %v652 = vsub.f32 %v650, %v651
  %v653 = vand.u32 %v652, 4294901760
  %654 = vmatmul.mubr.f32.gmra.mrb[0].mxu0 %v653
  %v655 = vpop.f32.mrb[0].mxu0
  %v656 = vadd.f32 0.0, %v655
  %v657 = vpop.f32.mrb[0].mxu0
  %658 = vmatprep.mubr.f32.mxu0 0.0
  %v659 = vand.u32 %v38, 4294901760
  %v660 = vsub.f32 %v38, %v659
  %v661 = vand.u32 %v660, 4294901760
  %v662 = vsub.f32 %v660, %v661
  %v663 = vand.u32 %v662, 4294901760
  %664 = vmatmul.mubr.f32.gmra.mrb[0].mxu0 %v663
  %v665 = vpop.f32.mrb[0].mxu0
  %v666 = vadd.f32 0.0, %v665
  %v667 = vpop.f32.mrb[0].mxu0
  %668 = vdwg.mxu0
  %669 = vmatprep.subr.mxu0 0.0
  %v670 = vand.u32 %v576, 4294901760
  %v671 = vsub.f32 %v576, %v670
  %v672 = vand.u32 %v671, 4294901760
  %v673 = vsub.f32 %v671, %v672
  %v674 = vand.u32 %v673, 4294901760
  %675 = vmatpush1.msra.mxu0 %v674
  %676 = vmatprep.subr.mxu0 0.0
  %v677 = vand.u32 %v577, 4294901760
  %v678 = vsub.f32 %v577, %v677
  %v679 = vand.u32 %v678, 4294901760
  %v680 = vsub.f32 %v678, %v679
  %v681 = vand.u32 %v680, 4294901760
  %682 = vmatpush1.msra.mxu0 %v681
  %683 = vmatprep.subr.mxu0 0.0
  %v684 = vand.u32 %v578, 4294901760
  %v685 = vsub.f32 %v578, %v684
  %v686 = vand.u32 %v685, 4294901760
  %v687 = vsub.f32 %v685, %v686
  %v688 = vand.u32 %v687, 4294901760
  %689 = vmatpush1.msra.mxu0 %v688
  %690 = vmatprep.subr.mxu0 0.0
  %v691 = vand.u32 %v579, 4294901760
  %v692 = vsub.f32 %v579, %v691
  %v693 = vand.u32 %v692, 4294901760
  %v694 = vsub.f32 %v692, %v693
  %v695 = vand.u32 %v694, 4294901760
  %696 = vmatpush1.msra.mxu0 %v695
  %697 = vmatprep.subr.mxu0 0.0
  %698 = vmatpush1.msra.mxu0 0.0
  %699 = vmatprep.subr.mxu0 0.0
  %700 = vmatpush1.msra.mxu0 0.0
  %701 = vmatprep.subr.mxu0 0.0
  %702 = vmatpush1.msra.mxu0 0.0
  %703 = vmatprep.subr.mxu0 0.0
  %704 = vmatpush1.msra.mxu0 0.0
  %705 = vmatprep.subr.mxu0 0.0
  %706 = vmatpush1.msra.mxu0 0.0
  %707 = vmatprep.subr.mxu0 0.0
  %708 = vmatpush1.msra.mxu0 0.0
  %709 = vmatprep.subr.mxu0 0.0
  %710 = vmatpush1.msra.mxu0 0.0
  %711 = vmatprep.subr.mxu0 0.0
  %712 = vmatpush1.msra.mxu0 0.0
  %713 = vmatprep.subr.mxu0 0.0
  %714 = vmatpush1.msra.mxu0 0.0
  %715 = vmatprep.subr.mxu0 0.0
  %716 = vmatpush1.msra.mxu0 0.0
  %717 = vmatprep.subr.mxu0 0.0
  %718 = vmatpush1.msra.mxu0 0.0
  %719 = vmatprep.subr.mxu0 0.0
  %720 = vmatpush1.msra.mxu0 0.0
  %721 = vmatprep.subr.mxu0 0.0
  %722 = vmatpush1.msra.mxu0 0.0
  %723 = vmatprep.subr.mxu0 0.0
  %724 = vmatpush1.msra.mxu0 0.0
  %725 = vmatprep.subr.mxu0 0.0
  %726 = vmatpush1.msra.mxu0 0.0
  %727 = vmatprep.subr.mxu0 0.0
  %728 = vmatpush1.msra.mxu0 0.0
  %729 = vmatprep.subr.mxu0 0.0
  %730 = vmatpush1.msra.mxu0 0.0
  %731 = vmatprep.subr.mxu0 0.0
  %732 = vmatpush1.msra.mxu0 0.0
  %733 = vmatprep.subr.mxu0 0.0
  %734 = vmatpush1.msra.mxu0 0.0
  %735 = vmatprep.subr.mxu0 0.0
  %736 = vmatpush1.msra.mxu0 0.0
  %737 = vmatprep.subr.mxu0 0.0
  %738 = vmatpush1.msra.mxu0 0.0
  %739 = vmatprep.subr.mxu0 0.0
  %740 = vmatpush1.msra.mxu0 0.0
  %741 = vmatprep.subr.mxu0 0.0
  %742 = vmatpush1.msra.mxu0 0.0
  %743 = vmatprep.subr.mxu0 0.0
  %744 = vmatpush1.msra.mxu0 0.0
  %745 = vmatprep.subr.mxu0 0.0
  %746 = vmatpush1.msra.mxu0 0.0
  %747 = vmatprep.subr.mxu0 0.0
  %748 = vmatpush1.msra.mxu0 0.0
  %749 = vmatprep.subr.mxu0 0.0
  %750 = vmatpush1.msra.mxu0 0.0
  %751 = vmatprep.subr.mxu0 0.0
  %752 = vmatpush1.msra.mxu0 0.0
  %753 = vmatprep.mubr.f32.mxu0 0.0
  %v754 = vand.u32 %v35, 4294901760
  %755 = vmatmul.mubr.f32.gmra.mrb[0].mxu0 %v754
  %v756 = vpop.f32.mrb[0].mxu0
  %v757 = vadd.f32 %v656, %v756
  %v758 = vpop.f32.mrb[0].mxu0
  %759 = vmatprep.mubr.f32.mxu0 0.0
  %v760 = vand.u32 %v38, 4294901760
  %761 = vmatmul.mubr.f32.gmra.mrb[0].mxu0 %v760
  %v762 = vpop.f32.mrb[0].mxu0
  %v763 = vadd.f32 %v666, %v762
  %v764 = vpop.f32.mrb[0].mxu0
  %765 = vdwg.mxu0
  %766 = vmatprep.subr.mxu0 0.0
  %v767 = vand.u32 %v576, 4294901760
  %v768 = vsub.f32 %v576, %v767
  %769 = vmatpush1.msra.mxu0 %v768
  %770 = vmatprep.subr.mxu0 0.0
  %v771 = vand.u32 %v577, 4294901760
  %v772 = vsub.f32 %v577, %v771
  %773 = vmatpush1.msra.mxu0 %v772
  %774 = vmatprep.subr.mxu0 0.0
  %v775 = vand.u32 %v578, 4294901760
  %v776 = vsub.f32 %v578, %v775
  %777 = vmatpush1.msra.mxu0 %v776
  %778 = vmatprep.subr.mxu0 0.0
  %v779 = vand.u32 %v579, 4294901760
  %v780 = vsub.f32 %v579, %v779
  %781 = vmatpush1.msra.mxu0 %v780
  %782 = vmatprep.subr.mxu0 0.0
  %783 = vmatpush1.msra.mxu0 0.0
  %784 = vmatprep.subr.mxu0 0.0
  %785 = vmatpush1.msra.mxu0 0.0
  %786 = vmatprep.subr.mxu0 0.0
  %787 = vmatpush1.msra.mxu0 0.0
  %788 = vmatprep.subr.mxu0 0.0
  %789 = vmatpush1.msra.mxu0 0.0
  %790 = vmatprep.subr.mxu0 0.0
  %791 = vmatpush1.msra.mxu0 0.0
  %792 = vmatprep.subr.mxu0 0.0
  %793 = vmatpush1.msra.mxu0 0.0
  %794 = vmatprep.subr.mxu0 0.0
  %795 = vmatpush1.msra.mxu0 0.0
  %796 = vmatprep.subr.mxu0 0.0
  %797 = vmatpush1.msra.mxu0 0.0
  %798 = vmatprep.subr.mxu0 0.0
  %799 = vmatpush1.msra.mxu0 0.0
  %800 = vmatprep.subr.mxu0 0.0
  %801 = vmatpush1.msra.mxu0 0.0
  %802 = vmatprep.subr.mxu0 0.0
  %803 = vmatpush1.msra.mxu0 0.0
  %804 = vmatprep.subr.mxu0 0.0
  %805 = vmatpush1.msra.mxu0 0.0
  %806 = vmatprep.subr.mxu0 0.0
  %807 = vmatpush1.msra.mxu0 0.0
  %808 = vmatprep.subr.mxu0 0.0
  %809 = vmatpush1.msra.mxu0 0.0
  %810 = vmatprep.subr.mxu0 0.0
  %811 = vmatpush1.msra.mxu0 0.0
  %812 = vmatprep.subr.mxu0 0.0
  %813 = vmatpush1.msra.mxu0 0.0
  %814 = vmatprep.subr.mxu0 0.0
  %815 = vmatpush1.msra.mxu0 0.0
  %816 = vmatprep.subr.mxu0 0.0
  %817 = vmatpush1.msra.mxu0 0.0
  %818 = vmatprep.subr.mxu0 0.0
  %819 = vmatpush1.msra.mxu0 0.0
  %820 = vmatprep.subr.mxu0 0.0
  %821 = vmatpush1.msra.mxu0 0.0
  %822 = vmatprep.subr.mxu0 0.0
  %823 = vmatpush1.msra.mxu0 0.0
  %824 = vmatprep.subr.mxu0 0.0
  %825 = vmatpush1.msra.mxu0 0.0
  %826 = vmatprep.subr.mxu0 0.0
  %827 = vmatpush1.msra.mxu0 0.0
  %828 = vmatprep.subr.mxu0 0.0
  %829 = vmatpush1.msra.mxu0 0.0
  %830 = vmatprep.subr.mxu0 0.0
  %831 = vmatpush1.msra.mxu0 0.0
  %832 = vmatprep.subr.mxu0 0.0
  %833 = vmatpush1.msra.mxu0 0.0
  %834 = vmatprep.subr.mxu0 0.0
  %835 = vmatpush1.msra.mxu0 0.0
  %836 = vmatprep.subr.mxu0 0.0
  %837 = vmatpush1.msra.mxu0 0.0
  %838 = vmatprep.mubr.f32.mxu0 0.0
  %v839 = vand.u32 %v35, 4294901760
  %v840 = vsub.f32 %v35, %v839
  %841 = vmatmul.mubr.f32.gmra.mrb[0].mxu0 %v840
  %v842 = vpop.f32.mrb[0].mxu0
  %v843 = vadd.f32 %v757, %v842
  %v844 = vpop.f32.mrb[0].mxu0
  %845 = vmatprep.mubr.f32.mxu0 0.0
  %v846 = vand.u32 %v38, 4294901760
  %v847 = vsub.f32 %v38, %v846
  %848 = vmatmul.mubr.f32.gmra.mrb[0].mxu0 %v847
  %v849 = vpop.f32.mrb[0].mxu0
  %v850 = vadd.f32 %v763, %v849
  %v851 = vpop.f32.mrb[0].mxu0
  %852 = vdwg.mxu0
  %853 = vmatprep.subr.mxu0 0.0
  %v854 = vand.u32 %v576, 4294901760
  %855 = vmatpush1.msra.mxu0 %v854
  %856 = vmatprep.subr.mxu0 0.0
  %v857 = vand.u32 %v577, 4294901760
  %858 = vmatpush1.msra.mxu0 %v857
  %859 = vmatprep.subr.mxu0 0.0
  %v860 = vand.u32 %v578, 4294901760
  %861 = vmatpush1.msra.mxu0 %v860
  %862 = vmatprep.subr.mxu0 0.0
  %v863 = vand.u32 %v579, 4294901760
  %864 = vmatpush1.msra.mxu0 %v863
  %865 = vmatprep.subr.mxu0 0.0
  %866 = vmatpush1.msra.mxu0 0.0
  %867 = vmatprep.subr.mxu0 0.0
  %868 = vmatpush1.msra.mxu0 0.0
  %869 = vmatprep.subr.mxu0 0.0
  %870 = vmatpush1.msra.mxu0 0.0
  %871 = vmatprep.subr.mxu0 0.0
  %872 = vmatpush1.msra.mxu0 0.0
  %873 = vmatprep.subr.mxu0 0.0
  %874 = vmatpush1.msra.mxu0 0.0
  %875 = vmatprep.subr.mxu0 0.0
  %876 = vmatpush1.msra.mxu0 0.0
  %877 = vmatprep.subr.mxu0 0.0
  %878 = vmatpush1.msra.mxu0 0.0
  %879 = vmatprep.subr.mxu0 0.0
  %880 = vmatpush1.msra.mxu0 0.0
  %881 = vmatprep.subr.mxu0 0.0
  %882 = vmatpush1.msra.mxu0 0.0
  %883 = vmatprep.subr.mxu0 0.0
  %884 = vmatpush1.msra.mxu0 0.0
  %885 = vmatprep.subr.mxu0 0.0
  %886 = vmatpush1.msra.mxu0 0.0
  %887 = vmatprep.subr.mxu0 0.0
  %888 = vmatpush1.msra.mxu0 0.0
  %889 = vmatprep.subr.mxu0 0.0
  %890 = vmatpush1.msra.mxu0 0.0
  %891 = vmatprep.subr.mxu0 0.0
  %892 = vmatpush1.msra.mxu0 0.0
  %893 = vmatprep.subr.mxu0 0.0
  %894 = vmatpush1.msra.mxu0 0.0
  %895 = vmatprep.subr.mxu0 0.0
  %896 = vmatpush1.msra.mxu0 0.0
  %897 = vmatprep.subr.mxu0 0.0
  %898 = vmatpush1.msra.mxu0 0.0
  %899 = vmatprep.subr.mxu0 0.0
  %900 = vmatpush1.msra.mxu0 0.0
  %901 = vmatprep.subr.mxu0 0.0
  %902 = vmatpush1.msra.mxu0 0.0
  %903 = vmatprep.subr.mxu0 0.0
  %904 = vmatpush1.msra.mxu0 0.0
  %905 = vmatprep.subr.mxu0 0.0
  %906 = vmatpush1.msra.mxu0 0.0
  %907 = vmatprep.subr.mxu0 0.0
  %908 = vmatpush1.msra.mxu0 0.0
  %909 = vmatprep.subr.mxu0 0.0
  %910 = vmatpush1.msra.mxu0 0.0
  %911 = vmatprep.subr.mxu0 0.0
  %912 = vmatpush1.msra.mxu0 0.0
  %913 = vmatprep.subr.mxu0 0.0
  %914 = vmatpush1.msra.mxu0 0.0
  %915 = vmatprep.subr.mxu0 0.0
  %916 = vmatpush1.msra.mxu0 0.0
  %917 = vmatprep.subr.mxu0 0.0
  %918 = vmatpush1.msra.mxu0 0.0
  %919 = vmatprep.subr.mxu0 0.0
  %920 = vmatpush1.msra.mxu0 0.0
  %921 = vmatprep.mubr.f32.mxu0 0.0
  %v922 = vand.u32 %v35, 4294901760
  %v923 = vsub.f32 %v35, %v922
  %v924 = vand.u32 %v923, 4294901760
  %925 = vmatmul.mubr.f32.gmra.mrb[0].mxu0 %v924
  %v926 = vpop.f32.mrb[0].mxu0
  %v927 = vadd.f32 %v843, %v926
  %v928 = vpop.f32.mrb[0].mxu0
  %929 = vmatprep.mubr.f32.mxu0 0.0
  %v930 = vand.u32 %v38, 4294901760
  %v931 = vsub.f32 %v38, %v930
  %v932 = vand.u32 %v931, 4294901760
  %933 = vmatmul.mubr.f32.gmra.mrb[0].mxu0 %v932
  %v934 = vpop.f32.mrb[0].mxu0
  %v935 = vadd.f32 %v850, %v934
  %v936 = vpop.f32.mrb[0].mxu0
  %937 = vdwg.mxu0
  %938 = vmatprep.subr.mxu0 0.0
  %v939 = vand.u32 %v576, 4294901760
  %v940 = vsub.f32 %v576, %v939
  %v941 = vand.u32 %v940, 4294901760
  %942 = vmatpush1.msra.mxu0 %v941
  %943 = vmatprep.subr.mxu0 0.0
  %v944 = vand.u32 %v577, 4294901760
  %v945 = vsub.f32 %v577, %v944
  %v946 = vand.u32 %v945, 4294901760
  %947 = vmatpush1.msra.mxu0 %v946
  %948 = vmatprep.subr.mxu0 0.0
  %v949 = vand.u32 %v578, 4294901760
  %v950 = vsub.f32 %v578, %v949
  %v951 = vand.u32 %v950, 4294901760
  %952 = vmatpush1.msra.mxu0 %v951
  %953 = vmatprep.subr.mxu0 0.0
  %v954 = vand.u32 %v579, 4294901760
  %v955 = vsub.f32 %v579, %v954
  %v956 = vand.u32 %v955, 4294901760
  %957 = vmatpush1.msra.mxu0 %v956
  %958 = vmatprep.subr.mxu0 0.0
  %959 = vmatpush1.msra.mxu0 0.0
  %960 = vmatprep.subr.mxu0 0.0
  %961 = vmatpush1.msra.mxu0 0.0
  %962 = vmatprep.subr.mxu0 0.0
  %963 = vmatpush1.msra.mxu0 0.0
  %964 = vmatprep.subr.mxu0 0.0
  %965 = vmatpush1.msra.mxu0 0.0
  %966 = vmatprep.subr.mxu0 0.0
  %967 = vmatpush1.msra.mxu0 0.0
  %968 = vmatprep.subr.mxu0 0.0
  %969 = vmatpush1.msra.mxu0 0.0
  %970 = vmatprep.subr.mxu0 0.0
  %971 = vmatpush1.msra.mxu0 0.0
  %972 = vmatprep.subr.mxu0 0.0
  %973 = vmatpush1.msra.mxu0 0.0
  %974 = vmatprep.subr.mxu0 0.0
  %975 = vmatpush1.msra.mxu0 0.0
  %976 = vmatprep.subr.mxu0 0.0
  %977 = vmatpush1.msra.mxu0 0.0
  %978 = vmatprep.subr.mxu0 0.0
  %979 = vmatpush1.msra.mxu0 0.0
  %980 = vmatprep.subr.mxu0 0.0
  %981 = vmatpush1.msra.mxu0 0.0
  %982 = vmatprep.subr.mxu0 0.0
  %983 = vmatpush1.msra.mxu0 0.0
  %984 = vmatprep.subr.mxu0 0.0
  %985 = vmatpush1.msra.mxu0 0.0
  %986 = vmatprep.subr.mxu0 0.0
  %987 = vmatpush1.msra.mxu0 0.0
  %988 = vmatprep.subr.mxu0 0.0
  %989 = vmatpush1.msra.mxu0 0.0
  %990 = vmatprep.subr.mxu0 0.0
  %991 = vmatpush1.msra.mxu0 0.0
  %992 = vmatprep.subr.mxu0 0.0
  %993 = vmatpush1.msra.mxu0 0.0
  %994 = vmatprep.subr.mxu0 0.0
  %995 = vmatpush1.msra.mxu0 0.0
  %996 = vmatprep.subr.mxu0 0.0
  %997 = vmatpush1.msra.mxu0 0.0
  %998 = vmatprep.subr.mxu0 0.0
  %999 = vmatpush1.msra.mxu0 0.0
  %1000 = vmatprep.subr.mxu0 0.0
  %1001 = vmatpush1.msra.mxu0 0.0
  %1002 = vmatprep.subr.mxu0 0.0
  %1003 = vmatpush1.msra.mxu0 0.0
  %1004 = vmatprep.subr.mxu0 0.0
  %1005 = vmatpush1.msra.mxu0 0.0
  %1006 = vmatprep.subr.mxu0 0.0
  %1007 = vmatpush1.msra.mxu0 0.0
  %1008 = vmatprep.subr.mxu0 0.0
  %1009 = vmatpush1.msra.mxu0 0.0
  %1010 = vmatprep.subr.mxu0 0.0
  %1011 = vmatpush1.msra.mxu0 0.0
  %1012 = vmatprep.subr.mxu0 0.0
  %1013 = vmatpush1.msra.mxu0 0.0
  %1014 = vmatprep.mubr.f32.mxu0 0.0
  %v1015 = vand.u32 %v35, 4294901760
  %1016 = vmatmul.mubr.f32.gmra.mrb[0].mxu0 %v1015
  %v1017 = vpop.f32.mrb[0].mxu0
  %v1018 = vadd.f32 %v927, %v1017
  %v1019 = vpop.f32.mrb[0].mxu0
  %1020 = vmatprep.mubr.f32.mxu0 0.0
  %v1021 = vand.u32 %v38, 4294901760
  %1022 = vmatmul.mubr.f32.gmra.mrb[0].mxu0 %v1021
  %v1023 = vpop.f32.mrb[0].mxu0
  %v1024 = vadd.f32 %v935, %v1023
  %v1025 = vpop.f32.mrb[0].mxu0
  %1026 = vdwg.mxu0
  %1027 = vmatprep.subr.mxu0 0.0
  %v1028 = vand.u32 %v576, 4294901760
  %1029 = vmatpush1.msra.mxu0 %v1028
  %1030 = vmatprep.subr.mxu0 0.0
  %v1031 = vand.u32 %v577, 4294901760
  %1032 = vmatpush1.msra.mxu0 %v1031
  %1033 = vmatprep.subr.mxu0 0.0
  %v1034 = vand.u32 %v578, 4294901760
  %1035 = vmatpush1.msra.mxu0 %v1034
  %1036 = vmatprep.subr.mxu0 0.0
  %v1037 = vand.u32 %v579, 4294901760
  %1038 = vmatpush1.msra.mxu0 %v1037
  %1039 = vmatprep.subr.mxu0 0.0
  %1040 = vmatpush1.msra.mxu0 0.0
  %1041 = vmatprep.subr.mxu0 0.0
  %1042 = vmatpush1.msra.mxu0 0.0
  %1043 = vmatprep.subr.mxu0 0.0
  %1044 = vmatpush1.msra.mxu0 0.0
  %1045 = vmatprep.subr.mxu0 0.0
  %1046 = vmatpush1.msra.mxu0 0.0
  %1047 = vmatprep.subr.mxu0 0.0
  %1048 = vmatpush1.msra.mxu0 0.0
  %1049 = vmatprep.subr.mxu0 0.0
  %1050 = vmatpush1.msra.mxu0 0.0
  %1051 = vmatprep.subr.mxu0 0.0
  %1052 = vmatpush1.msra.mxu0 0.0
  %1053 = vmatprep.subr.mxu0 0.0
  %1054 = vmatpush1.msra.mxu0 0.0
  %1055 = vmatprep.subr.mxu0 0.0
  %1056 = vmatpush1.msra.mxu0 0.0
  %1057 = vmatprep.subr.mxu0 0.0
  %1058 = vmatpush1.msra.mxu0 0.0
  %1059 = vmatprep.subr.mxu0 0.0
  %1060 = vmatpush1.msra.mxu0 0.0
  %1061 = vmatprep.subr.mxu0 0.0
  %1062 = vmatpush1.msra.mxu0 0.0
  %1063 = vmatprep.subr.mxu0 0.0
  %1064 = vmatpush1.msra.mxu0 0.0
  %1065 = vmatprep.subr.mxu0 0.0
  %1066 = vmatpush1.msra.mxu0 0.0
  %1067 = vmatprep.subr.mxu0 0.0
  %1068 = vmatpush1.msra.mxu0 0.0
  %1069 = vmatprep.subr.mxu0 0.0
  %1070 = vmatpush1.msra.mxu0 0.0
  %1071 = vmatprep.subr.mxu0 0.0
  %1072 = vmatpush1.msra.mxu0 0.0
  %1073 = vmatprep.subr.mxu0 0.0
  %1074 = vmatpush1.msra.mxu0 0.0
  %1075 = vmatprep.subr.mxu0 0.0
  %1076 = vmatpush1.msra.mxu0 0.0
  %1077 = vmatprep.subr.mxu0 0.0
  %1078 = vmatpush1.msra.mxu0 0.0
  %1079 = vmatprep.subr.mxu0 0.0
  %1080 = vmatpush1.msra.mxu0 0.0
  %1081 = vmatprep.subr.mxu0 0.0
  %1082 = vmatpush1.msra.mxu0 0.0
  %1083 = vmatprep.subr.mxu0 0.0
  %1084 = vmatpush1.msra.mxu0 0.0
  %1085 = vmatprep.subr.mxu0 0.0
  %1086 = vmatpush1.msra.mxu0 0.0
  %1087 = vmatprep.subr.mxu0 0.0
  %1088 = vmatpush1.msra.mxu0 0.0
  %1089 = vmatprep.subr.mxu0 0.0
  %1090 = vmatpush1.msra.mxu0 0.0
  %1091 = vmatprep.subr.mxu0 0.0
  %1092 = vmatpush1.msra.mxu0 0.0
  %1093 = vmatprep.subr.mxu0 0.0
  %1094 = vmatpush1.msra.mxu0 0.0
  %1095 = vmatprep.mubr.f32.mxu0 0.0
  %v1096 = vand.u32 %v35, 4294901760
  %1097 = vmatmul.mubr.f32.gmra.mrb[0].mxu0 %v1096
  %v1098 = vpop.f32.mrb[0].mxu0
  %v1099 = vadd.f32 %v1018, %v1098
  %v1100 = vpop.f32.mrb[0].mxu0
  %1101 = vmatprep.mubr.f32.mxu0 0.0
  %v1102 = vand.u32 %v38, 4294901760
  %1103 = vmatmul.mubr.f32.gmra.mrb[0].mxu0 %v1102
  %v1104 = vpop.f32.mrb[0].mxu0
  %v1105 = vadd.f32 %v1024, %v1104
  %v1106 = vpop.f32.mrb[0].mxu0
  %1107 = vdwg.mxu0
  %v1108 = vadd.f32 %v573, %v1099
  %v1109 = vadd.f32 %v574, %v1105
  %1110 = vst.msk [vmem:[%s572] sm:$0xff] %vm33, %v1108
  %1111 = vst.msk [vmem:[%s572 + $0x8] sm:$0xff] %vm33, %v1109
  %s1112 = scalar_lea.vmem [#allocation2], 32
  %v1113 = vld [vmem:[%s1112] sm:$0xff]
  %v1114 = vld [vmem:[%s1112 + $0x8] sm:$0xff]
  %s1115 = scalar_lea.vmem %s1, 64
  %v1116 = vld [vmem:[%s1115] sm:$0xff]
  %v1117 = vld [vmem:[%s1115 + $0x8] sm:$0xff]
  %v1118 = vld [vmem:[%s1115 + $0x10] sm:$0xff]
  %v1119 = vld [vmem:[%s1115 + $0x18] sm:$0xff]
  %1120 = vmatprep.subr.mxu0 0.0
  %v1121 = vand.u32 %v1116, 4294901760
  %1122 = vmatpush1.msra.mxu0 %v1121
  %1123 = vmatprep.subr.mxu0 0.0
  %v1124 = vand.u32 %v1117, 4294901760
  %1125 = vmatpush1.msra.mxu0 %v1124
  %1126 = vmatprep.subr.mxu0 0.0
  %v1127 = vand.u32 %v1118, 4294901760
  %1128 = vmatpush1.msra.mxu0 %v1127
  %1129 = vmatprep.subr.mxu0 0.0
  %v1130 = vand.u32 %v1119, 4294901760
  %1131 = vmatpush1.msra.mxu0 %v1130
  %1132 = vmatprep.subr.mxu0 0.0
  %1133 = vmatpush1.msra.mxu0 0.0
  %1134 = vmatprep.subr.mxu0 0.0
  %1135 = vmatpush1.msra.mxu0 0.0
  %1136 = vmatprep.subr.mxu0 0.0
  %1137 = vmatpush1.msra.mxu0 0.0
  %1138 = vmatprep.subr.mxu0 0.0
  %1139 = vmatpush1.msra.mxu0 0.0
  %1140 = vmatprep.subr.mxu0 0.0
  %1141 = vmatpush1.msra.mxu0 0.0
  %1142 = vmatprep.subr.mxu0 0.0
  %1143 = vmatpush1.msra.mxu0 0.0
  %1144 = vmatprep.subr.mxu0 0.0
  %1145 = vmatpush1.msra.mxu0 0.0
  %1146 = vmatprep.subr.mxu0 0.0
  %1147 = vmatpush1.msra.mxu0 0.0
  %1148 = vmatprep.subr.mxu0 0.0
  %1149 = vmatpush1.msra.mxu0 0.0
  %1150 = vmatprep.subr.mxu0 0.0
  %1151 = vmatpush1.msra.mxu0 0.0
  %1152 = vmatprep.subr.mxu0 0.0
  %1153 = vmatpush1.msra.mxu0 0.0
  %1154 = vmatprep.subr.mxu0 0.0
  %1155 = vmatpush1.msra.mxu0 0.0
  %1156 = vmatprep.subr.mxu0 0.0
  %1157 = vmatpush1.msra.mxu0 0.0
  %1158 = vmatprep.subr.mxu0 0.0
  %1159 = vmatpush1.msra.mxu0 0.0
  %1160 = vmatprep.subr.mxu0 0.0
  %1161 = vmatpush1.msra.mxu0 0.0
  %1162 = vmatprep.subr.mxu0 0.0
  %1163 = vmatpush1.msra.mxu0 0.0
  %1164 = vmatprep.subr.mxu0 0.0
  %1165 = vmatpush1.msra.mxu0 0.0
  %1166 = vmatprep.subr.mxu0 0.0
  %1167 = vmatpush1.msra.mxu0 0.0
  %1168 = vmatprep.subr.mxu0 0.0
  %1169 = vmatpush1.msra.mxu0 0.0
  %1170 = vmatprep.subr.mxu0 0.0
  %1171 = vmatpush1.msra.mxu0 0.0
  %1172 = vmatprep.subr.mxu0 0.0
  %1173 = vmatpush1.msra.mxu0 0.0
  %1174 = vmatprep.subr.mxu0 0.0
  %1175 = vmatpush1.msra.mxu0 0.0
  %1176 = vmatprep.subr.mxu0 0.0
  %1177 = vmatpush1.msra.mxu0 0.0
  %1178 = vmatprep.subr.mxu0 0.0
  %1179 = vmatpush1.msra.mxu0 0.0
  %1180 = vmatprep.subr.mxu0 0.0
  %1181 = vmatpush1.msra.mxu0 0.0
  %1182 = vmatprep.subr.mxu0 0.0
  %1183 = vmatpush1.msra.mxu0 0.0
  %1184 = vmatprep.subr.mxu0 0.0
  %1185 = vmatpush1.msra.mxu0 0.0
  %1186 = vmatprep.subr.mxu0 0.0
  %1187 = vmatpush1.msra.mxu0 0.0
  %1188 = vmatprep.mubr.f32.mxu0 0.0
  %v1189 = vand.u32 %v35, 4294901760
  %v1190 = vsub.f32 %v35, %v1189
  %v1191 = vand.u32 %v1190, 4294901760
  %v1192 = vsub.f32 %v1190, %v1191
  %v1193 = vand.u32 %v1192, 4294901760
  %1194 = vmatmul.mubr.f32.gmra.mrb[0].mxu0 %v1193
  %v1195 = vpop.f32.mrb[0].mxu0
  %v1196 = vadd.f32 0.0, %v1195
  %v1197 = vpop.f32.mrb[0].mxu0
  %1198 = vmatprep.mubr.f32.mxu0 0.0
  %v1199 = vand.u32 %v38, 4294901760
  %v1200 = vsub.f32 %v38, %v1199
  %v1201 = vand.u32 %v1200, 4294901760
  %v1202 = vsub.f32 %v1200, %v1201
  %v1203 = vand.u32 %v1202, 4294901760
  %1204 = vmatmul.mubr.f32.gmra.mrb[0].mxu0 %v1203
  %v1205 = vpop.f32.mrb[0].mxu0
  %v1206 = vadd.f32 0.0, %v1205
  %v1207 = vpop.f32.mrb[0].mxu0
  %1208 = vdwg.mxu0
  %1209 = vmatprep.subr.mxu0 0.0
  %v1210 = vand.u32 %v1116, 4294901760
  %v1211 = vsub.f32 %v1116, %v1210
  %v1212 = vand.u32 %v1211, 4294901760
  %v1213 = vsub.f32 %v1211, %v1212
  %v1214 = vand.u32 %v1213, 4294901760
  %1215 = vmatpush1.msra.mxu0 %v1214
  %1216 = vmatprep.subr.mxu0 0.0
  %v1217 = vand.u32 %v1117, 4294901760
  %v1218 = vsub.f32 %v1117, %v1217
  %v1219 = vand.u32 %v1218, 4294901760
  %v1220 = vsub.f32 %v1218, %v1219
  %v1221 = vand.u32 %v1220, 4294901760
  %1222 = vmatpush1.msra.mxu0 %v1221
  %1223 = vmatprep.subr.mxu0 0.0
  %v1224 = vand.u32 %v1118, 4294901760
  %v1225 = vsub.f32 %v1118, %v1224
  %v1226 = vand.u32 %v1225, 4294901760
  %v1227 = vsub.f32 %v1225, %v1226
  %v1228 = vand.u32 %v1227, 4294901760
  %1229 = vmatpush1.msra.mxu0 %v1228
  %1230 = vmatprep.subr.mxu0 0.0
  %v1231 = vand.u32 %v1119, 4294901760
  %v1232 = vsub.f32 %v1119, %v1231
  %v1233 = vand.u32 %v1232, 4294901760
  %v1234 = vsub.f32 %v1232, %v1233
  %v1235 = vand.u32 %v1234, 4294901760
  %1236 = vmatpush1.msra.mxu0 %v1235
  %1237 = vmatprep.subr.mxu0 0.0
  %1238 = vmatpush1.msra.mxu0 0.0
  %1239 = vmatprep.subr.mxu0 0.0
  %1240 = vmatpush1.msra.mxu0 0.0
  %1241 = vmatprep.subr.mxu0 0.0
  %1242 = vmatpush1.msra.mxu0 0.0
  %1243 = vmatprep.subr.mxu0 0.0
  %1244 = vmatpush1.msra.mxu0 0.0
  %1245 = vmatprep.subr.mxu0 0.0
  %1246 = vmatpush1.msra.mxu0 0.0
  %1247 = vmatprep.subr.mxu0 0.0
  %1248 = vmatpush1.msra.mxu0 0.0
  %1249 = vmatprep.subr.mxu0 0.0
  %1250 = vmatpush1.msra.mxu0 0.0
  %1251 = vmatprep.subr.mxu0 0.0
  %1252 = vmatpush1.msra.mxu0 0.0
  %1253 = vmatprep.subr.mxu0 0.0
  %1254 = vmatpush1.msra.mxu0 0.0
  %1255 = vmatprep.subr.mxu0 0.0
  %1256 = vmatpush1.msra.mxu0 0.0
  %1257 = vmatprep.subr.mxu0 0.0
  %1258 = vmatpush1.msra.mxu0 0.0
  %1259 = vmatprep.subr.mxu0 0.0
  %1260 = vmatpush1.msra.mxu0 0.0
  %1261 = vmatprep.subr.mxu0 0.0
  %1262 = vmatpush1.msra.mxu0 0.0
  %1263 = vmatprep.subr.mxu0 0.0
  %1264 = vmatpush1.msra.mxu0 0.0
  %1265 = vmatprep.subr.mxu0 0.0
  %1266 = vmatpush1.msra.mxu0 0.0
  %1267 = vmatprep.subr.mxu0 0.0
  %1268 = vmatpush1.msra.mxu0 0.0
  %1269 = vmatprep.subr.mxu0 0.0
  %1270 = vmatpush1.msra.mxu0 0.0
  %1271 = vmatprep.subr.mxu0 0.0
  %1272 = vmatpush1.msra.mxu0 0.0
  %1273 = vmatprep.subr.mxu0 0.0
  %1274 = vmatpush1.msra.mxu0 0.0
  %1275 = vmatprep.subr.mxu0 0.0
  %1276 = vmatpush1.msra.mxu0 0.0
  %1277 = vmatprep.subr.mxu0 0.0
  %1278 = vmatpush1.msra.mxu0 0.0
  %1279 = vmatprep.subr.mxu0 0.0
  %1280 = vmatpush1.msra.mxu0 0.0
  %1281 = vmatprep.subr.mxu0 0.0
  %1282 = vmatpush1.msra.mxu0 0.0
  %1283 = vmatprep.subr.mxu0 0.0
  %1284 = vmatpush1.msra.mxu0 0.0
  %1285 = vmatprep.subr.mxu0 0.0
  %1286 = vmatpush1.msra.mxu0 0.0
  %1287 = vmatprep.subr.mxu0 0.0
  %1288 = vmatpush1.msra.mxu0 0.0
  %1289 = vmatprep.subr.mxu0 0.0
  %1290 = vmatpush1.msra.mxu0 0.0
  %1291 = vmatprep.subr.mxu0 0.0
  %1292 = vmatpush1.msra.mxu0 0.0
  %1293 = vmatprep.mubr.f32.mxu0 0.0
  %v1294 = vand.u32 %v35, 4294901760
  %1295 = vmatmul.mubr.f32.gmra.mrb[0].mxu0 %v1294
  %v1296 = vpop.f32.mrb[0].mxu0
  %v1297 = vadd.f32 %v1196, %v1296
  %v1298 = vpop.f32.mrb[0].mxu0
  %1299 = vmatprep.mubr.f32.mxu0 0.0
  %v1300 = vand.u32 %v38, 4294901760
  %1301 = vmatmul.mubr.f32.gmra.mrb[0].mxu0 %v1300
  %v1302 = vpop.f32.mrb[0].mxu0
  %v1303 = vadd.f32 %v1206, %v1302
  %v1304 = vpop.f32.mrb[0].mxu0
  %1305 = vdwg.mxu0
  %1306 = vmatprep.subr.mxu0 0.0
  %v1307 = vand.u32 %v1116, 4294901760
  %v1308 = vsub.f32 %v1116, %v1307
  %1309 = vmatpush1.msra.mxu0 %v1308
  %1310 = vmatprep.subr.mxu0 0.0
  %v1311 = vand.u32 %v1117, 4294901760
  %v1312 = vsub.f32 %v1117, %v1311
  %1313 = vmatpush1.msra.mxu0 %v1312
  %1314 = vmatprep.subr.mxu0 0.0
  %v1315 = vand.u32 %v1118, 4294901760
  %v1316 = vsub.f32 %v1118, %v1315
  %1317 = vmatpush1.msra.mxu0 %v1316
  %1318 = vmatprep.subr.mxu0 0.0
  %v1319 = vand.u32 %v1119, 4294901760
  %v1320 = vsub.f32 %v1119, %v1319
  %1321 = vmatpush1.msra.mxu0 %v1320
  %1322 = vmatprep.subr.mxu0 0.0
  %1323 = vmatpush1.msra.mxu0 0.0
  %1324 = vmatprep.subr.mxu0 0.0
  %1325 = vmatpush1.msra.mxu0 0.0
  %1326 = vmatprep.subr.mxu0 0.0
  %1327 = vmatpush1.msra.mxu0 0.0
  %1328 = vmatprep.subr.mxu0 0.0
  %1329 = vmatpush1.msra.mxu0 0.0
  %1330 = vmatprep.subr.mxu0 0.0
  %1331 = vmatpush1.msra.mxu0 0.0
  %1332 = vmatprep.subr.mxu0 0.0
  %1333 = vmatpush1.msra.mxu0 0.0
  %1334 = vmatprep.subr.mxu0 0.0
  %1335 = vmatpush1.msra.mxu0 0.0
  %1336 = vmatprep.subr.mxu0 0.0
  %1337 = vmatpush1.msra.mxu0 0.0
  %1338 = vmatprep.subr.mxu0 0.0
  %1339 = vmatpush1.msra.mxu0 0.0
  %1340 = vmatprep.subr.mxu0 0.0
  %1341 = vmatpush1.msra.mxu0 0.0
  %1342 = vmatprep.subr.mxu0 0.0
  %1343 = vmatpush1.msra.mxu0 0.0
  %1344 = vmatprep.subr.mxu0 0.0
  %1345 = vmatpush1.msra.mxu0 0.0
  %1346 = vmatprep.subr.mxu0 0.0
  %1347 = vmatpush1.msra.mxu0 0.0
  %1348 = vmatprep.subr.mxu0 0.0
  %1349 = vmatpush1.msra.mxu0 0.0
  %1350 = vmatprep.subr.mxu0 0.0
  %1351 = vmatpush1.msra.mxu0 0.0
  %1352 = vmatprep.subr.mxu0 0.0
  %1353 = vmatpush1.msra.mxu0 0.0
  %1354 = vmatprep.subr.mxu0 0.0
  %1355 = vmatpush1.msra.mxu0 0.0
  %1356 = vmatprep.subr.mxu0 0.0
  %1357 = vmatpush1.msra.mxu0 0.0
  %1358 = vmatprep.subr.mxu0 0.0
  %1359 = vmatpush1.msra.mxu0 0.0
  %1360 = vmatprep.subr.mxu0 0.0
  %1361 = vmatpush1.msra.mxu0 0.0
  %1362 = vmatprep.subr.mxu0 0.0
  %1363 = vmatpush1.msra.mxu0 0.0
  %1364 = vmatprep.subr.mxu0 0.0
  %1365 = vmatpush1.msra.mxu0 0.0
  %1366 = vmatprep.subr.mxu0 0.0
  %1367 = vmatpush1.msra.mxu0 0.0
  %1368 = vmatprep.subr.mxu0 0.0
  %1369 = vmatpush1.msra.mxu0 0.0
  %1370 = vmatprep.subr.mxu0 0.0
  %1371 = vmatpush1.msra.mxu0 0.0
  %1372 = vmatprep.subr.mxu0 0.0
  %1373 = vmatpush1.msra.mxu0 0.0
  %1374 = vmatprep.subr.mxu0 0.0
  %1375 = vmatpush1.msra.mxu0 0.0
  %1376 = vmatprep.subr.mxu0 0.0
  %1377 = vmatpush1.msra.mxu0 0.0
  %1378 = vmatprep.mubr.f32.mxu0 0.0
  %v1379 = vand.u32 %v35, 4294901760
  %v1380 = vsub.f32 %v35, %v1379
  %1381 = vmatmul.mubr.f32.gmra.mrb[0].mxu0 %v1380
  %v1382 = vpop.f32.mrb[0].mxu0
  %v1383 = vadd.f32 %v1297, %v1382
  %v1384 = vpop.f32.mrb[0].mxu0
  %1385 = vmatprep.mubr.f32.mxu0 0.0
  %v1386 = vand.u32 %v38, 4294901760
  %v1387 = vsub.f32 %v38, %v1386
  %1388 = vmatmul.mubr.f32.gmra.mrb[0].mxu0 %v1387
  %v1389 = vpop.f32.mrb[0].mxu0
  %v1390 = vadd.f32 %v1303, %v1389
  %v1391 = vpop.f32.mrb[0].mxu0
  %1392 = vdwg.mxu0
  %1393 = vmatprep.subr.mxu0 0.0
  %v1394 = vand.u32 %v1116, 4294901760
  %1395 = vmatpush1.msra.mxu0 %v1394
  %1396 = vmatprep.subr.mxu0 0.0
  %v1397 = vand.u32 %v1117, 4294901760
  %1398 = vmatpush1.msra.mxu0 %v1397
  %1399 = vmatprep.subr.mxu0 0.0
  %v1400 = vand.u32 %v1118, 4294901760
  %1401 = vmatpush1.msra.mxu0 %v1400
  %1402 = vmatprep.subr.mxu0 0.0
  %v1403 = vand.u32 %v1119, 4294901760
  %1404 = vmatpush1.msra.mxu0 %v1403
  %1405 = vmatprep.subr.mxu0 0.0
  %1406 = vmatpush1.msra.mxu0 0.0
  %1407 = vmatprep.subr.mxu0 0.0
  %1408 = vmatpush1.msra.mxu0 0.0
  %1409 = vmatprep.subr.mxu0 0.0
  %1410 = vmatpush1.msra.mxu0 0.0
  %1411 = vmatprep.subr.mxu0 0.0
  %1412 = vmatpush1.msra.mxu0 0.0
  %1413 = vmatprep.subr.mxu0 0.0
  %1414 = vmatpush1.msra.mxu0 0.0
  %1415 = vmatprep.subr.mxu0 0.0
  %1416 = vmatpush1.msra.mxu0 0.0
  %1417 = vmatprep.subr.mxu0 0.0
  %1418 = vmatpush1.msra.mxu0 0.0
  %1419 = vmatprep.subr.mxu0 0.0
  %1420 = vmatpush1.msra.mxu0 0.0
  %1421 = vmatprep.subr.mxu0 0.0
  %1422 = vmatpush1.msra.mxu0 0.0
  %1423 = vmatprep.subr.mxu0 0.0
  %1424 = vmatpush1.msra.mxu0 0.0
  %1425 = vmatprep.subr.mxu0 0.0
  %1426 = vmatpush1.msra.mxu0 0.0
  %1427 = vmatprep.subr.mxu0 0.0
  %1428 = vmatpush1.msra.mxu0 0.0
  %1429 = vmatprep.subr.mxu0 0.0
  %1430 = vmatpush1.msra.mxu0 0.0
  %1431 = vmatprep.subr.mxu0 0.0
  %1432 = vmatpush1.msra.mxu0 0.0
  %1433 = vmatprep.subr.mxu0 0.0
  %1434 = vmatpush1.msra.mxu0 0.0
  %1435 = vmatprep.subr.mxu0 0.0
  %1436 = vmatpush1.msra.mxu0 0.0
  %1437 = vmatprep.subr.mxu0 0.0
  %1438 = vmatpush1.msra.mxu0 0.0
  %1439 = vmatprep.subr.mxu0 0.0
  %1440 = vmatpush1.msra.mxu0 0.0
  %1441 = vmatprep.subr.mxu0 0.0
  %1442 = vmatpush1.msra.mxu0 0.0
  %1443 = vmatprep.subr.mxu0 0.0
  %1444 = vmatpush1.msra.mxu0 0.0
  %1445 = vmatprep.subr.mxu0 0.0
  %1446 = vmatpush1.msra.mxu0 0.0
  %1447 = vmatprep.subr.mxu0 0.0
  %1448 = vmatpush1.msra.mxu0 0.0
  %1449 = vmatprep.subr.mxu0 0.0
  %1450 = vmatpush1.msra.mxu0 0.0
  %1451 = vmatprep.subr.mxu0 0.0
  %1452 = vmatpush1.msra.mxu0 0.0
  %1453 = vmatprep.subr.mxu0 0.0
  %1454 = vmatpush1.msra.mxu0 0.0
  %1455 = vmatprep.subr.mxu0 0.0
  %1456 = vmatpush1.msra.mxu0 0.0
  %1457 = vmatprep.subr.mxu0 0.0
  %1458 = vmatpush1.msra.mxu0 0.0
  %1459 = vmatprep.subr.mxu0 0.0
  %1460 = vmatpush1.msra.mxu0 0.0
  %1461 = vmatprep.mubr.f32.mxu0 0.0
  %v1462 = vand.u32 %v35, 4294901760
  %v1463 = vsub.f32 %v35, %v1462
  %v1464 = vand.u32 %v1463, 4294901760
  %1465 = vmatmul.mubr.f32.gmra.mrb[0].mxu0 %v1464
  %v1466 = vpop.f32.mrb[0].mxu0
  %v1467 = vadd.f32 %v1383, %v1466
  %v1468 = vpop.f32.mrb[0].mxu0
  %1469 = vmatprep.mubr.f32.mxu0 0.0
  %v1470 = vand.u32 %v38, 4294901760
  %v1471 = vsub.f32 %v38, %v1470
  %v1472 = vand.u32 %v1471, 4294901760
  %1473 = vmatmul.mubr.f32.gmra.mrb[0].mxu0 %v1472
  %v1474 = vpop.f32.mrb[0].mxu0
  %v1475 = vadd.f32 %v1390, %v1474
  %v1476 = vpop.f32.mrb[0].mxu0
  %1477 = vdwg.mxu0
  %1478 = vmatprep.subr.mxu0 0.0
  %v1479 = vand.u32 %v1116, 4294901760
  %v1480 = vsub.f32 %v1116, %v1479
  %v1481 = vand.u32 %v1480, 4294901760
  %1482 = vmatpush1.msra.mxu0 %v1481
  %1483 = vmatprep.subr.mxu0 0.0
  %v1484 = vand.u32 %v1117, 4294901760
  %v1485 = vsub.f32 %v1117, %v1484
  %v1486 = vand.u32 %v1485, 4294901760
  %1487 = vmatpush1.msra.mxu0 %v1486
  %1488 = vmatprep.subr.mxu0 0.0
  %v1489 = vand.u32 %v1118, 4294901760
  %v1490 = vsub.f32 %v1118, %v1489
  %v1491 = vand.u32 %v1490, 4294901760
  %1492 = vmatpush1.msra.mxu0 %v1491
  %1493 = vmatprep.subr.mxu0 0.0
  %v1494 = vand.u32 %v1119, 4294901760
  %v1495 = vsub.f32 %v1119, %v1494
  %v1496 = vand.u32 %v1495, 4294901760
  %1497 = vmatpush1.msra.mxu0 %v1496
  %1498 = vmatprep.subr.mxu0 0.0
  %1499 = vmatpush1.msra.mxu0 0.0
  %1500 = vmatprep.subr.mxu0 0.0
  %1501 = vmatpush1.msra.mxu0 0.0
  %1502 = vmatprep.subr.mxu0 0.0
  %1503 = vmatpush1.msra.mxu0 0.0
  %1504 = vmatprep.subr.mxu0 0.0
  %1505 = vmatpush1.msra.mxu0 0.0
  %1506 = vmatprep.subr.mxu0 0.0
  %1507 = vmatpush1.msra.mxu0 0.0
  %1508 = vmatprep.subr.mxu0 0.0
  %1509 = vmatpush1.msra.mxu0 0.0
  %1510 = vmatprep.subr.mxu0 0.0
  %1511 = vmatpush1.msra.mxu0 0.0
  %1512 = vmatprep.subr.mxu0 0.0
  %1513 = vmatpush1.msra.mxu0 0.0
  %1514 = vmatprep.subr.mxu0 0.0
  %1515 = vmatpush1.msra.mxu0 0.0
  %1516 = vmatprep.subr.mxu0 0.0
  %1517 = vmatpush1.msra.mxu0 0.0
  %1518 = vmatprep.subr.mxu0 0.0
  %1519 = vmatpush1.msra.mxu0 0.0
  %1520 = vmatprep.subr.mxu0 0.0
  %1521 = vmatpush1.msra.mxu0 0.0
  %1522 = vmatprep.subr.mxu0 0.0
  %1523 = vmatpush1.msra.mxu0 0.0
  %1524 = vmatprep.subr.mxu0 0.0
  %1525 = vmatpush1.msra.mxu0 0.0
  %1526 = vmatprep.subr.mxu0 0.0
  %1527 = vmatpush1.msra.mxu0 0.0
  %1528 = vmatprep.subr.mxu0 0.0
  %1529 = vmatpush1.msra.mxu0 0.0
  %1530 = vmatprep.subr.mxu0 0.0
  %1531 = vmatpush1.msra.mxu0 0.0
  %1532 = vmatprep.subr.mxu0 0.0
  %1533 = vmatpush1.msra.mxu0 0.0
  %1534 = vmatprep.subr.mxu0 0.0
  %1535 = vmatpush1.msra.mxu0 0.0
  %1536 = vmatprep.subr.mxu0 0.0
  %1537 = vmatpush1.msra.mxu0 0.0
  %1538 = vmatprep.subr.mxu0 0.0
  %1539 = vmatpush1.msra.mxu0 0.0
  %1540 = vmatprep.subr.mxu0 0.0
  %1541 = vmatpush1.msra.mxu0 0.0
  %1542 = vmatprep.subr.mxu0 0.0
  %1543 = vmatpush1.msra.mxu0 0.0
  %1544 = vmatprep.subr.mxu0 0.0
  %1545 = vmatpush1.msra.mxu0 0.0
  %1546 = vmatprep.subr.mxu0 0.0
  %1547 = vmatpush1.msra.mxu0 0.0
  %1548 = vmatprep.subr.mxu0 0.0
  %1549 = vmatpush1.msra.mxu0 0.0
  %1550 = vmatprep.subr.mxu0 0.0
  %1551 = vmatpush1.msra.mxu0 0.0
  %1552 = vmatprep.subr.mxu0 0.0
  %1553 = vmatpush1.msra.mxu0 0.0
  %1554 = vmatprep.mubr.f32.mxu0 0.0
  %v1555 = vand.u32 %v35, 4294901760
  %1556 = vmatmul.mubr.f32.gmra.mrb[0].mxu0 %v1555
  %v1557 = vpop.f32.mrb[0].mxu0
  %v1558 = vadd.f32 %v1467, %v1557
  %v1559 = vpop.f32.mrb[0].mxu0
  %1560 = vmatprep.mubr.f32.mxu0 0.0
  %v1561 = vand.u32 %v38, 4294901760
  %1562 = vmatmul.mubr.f32.gmra.mrb[0].mxu0 %v1561
  %v1563 = vpop.f32.mrb[0].mxu0
  %v1564 = vadd.f32 %v1475, %v1563
  %v1565 = vpop.f32.mrb[0].mxu0
  %1566 = vdwg.mxu0
  %1567 = vmatprep.subr.mxu0 0.0
  %v1568 = vand.u32 %v1116, 4294901760
  %1569 = vmatpush1.msra.mxu0 %v1568
  %1570 = vmatprep.subr.mxu0 0.0
  %v1571 = vand.u32 %v1117, 4294901760
  %1572 = vmatpush1.msra.mxu0 %v1571
  %1573 = vmatprep.subr.mxu0 0.0
  %v1574 = vand.u32 %v1118, 4294901760
  %1575 = vmatpush1.msra.mxu0 %v1574
  %1576 = vmatprep.subr.mxu0 0.0
  %v1577 = vand.u32 %v1119, 4294901760
  %1578 = vmatpush1.msra.mxu0 %v1577
  %1579 = vmatprep.subr.mxu0 0.0
  %1580 = vmatpush1.msra.mxu0 0.0
  %1581 = vmatprep.subr.mxu0 0.0
  %1582 = vmatpush1.msra.mxu0 0.0
  %1583 = vmatprep.subr.mxu0 0.0
  %1584 = vmatpush1.msra.mxu0 0.0
  %1585 = vmatprep.subr.mxu0 0.0
  %1586 = vmatpush1.msra.mxu0 0.0
  %1587 = vmatprep.subr.mxu0 0.0
  %1588 = vmatpush1.msra.mxu0 0.0
  %1589 = vmatprep.subr.mxu0 0.0
  %1590 = vmatpush1.msra.mxu0 0.0
  %1591 = vmatprep.subr.mxu0 0.0
  %1592 = vmatpush1.msra.mxu0 0.0
  %1593 = vmatprep.subr.mxu0 0.0
  %1594 = vmatpush1.msra.mxu0 0.0
  %1595 = vmatprep.subr.mxu0 0.0
  %1596 = vmatpush1.msra.mxu0 0.0
  %1597 = vmatprep.subr.mxu0 0.0
  %1598 = vmatpush1.msra.mxu0 0.0
  %1599 = vmatprep.subr.mxu0 0.0
  %1600 = vmatpush1.msra.mxu0 0.0
  %1601 = vmatprep.subr.mxu0 0.0
  %1602 = vmatpush1.msra.mxu0 0.0
  %1603 = vmatprep.subr.mxu0 0.0
  %1604 = vmatpush1.msra.mxu0 0.0
  %1605 = vmatprep.subr.mxu0 0.0
  %1606 = vmatpush1.msra.mxu0 0.0
  %1607 = vmatprep.subr.mxu0 0.0
  %1608 = vmatpush1.msra.mxu0 0.0
  %1609 = vmatprep.subr.mxu0 0.0
  %1610 = vmatpush1.msra.mxu0 0.0
  %1611 = vmatprep.subr.mxu0 0.0
  %1612 = vmatpush1.msra.mxu0 0.0
  %1613 = vmatprep.subr.mxu0 0.0
  %1614 = vmatpush1.msra.mxu0 0.0
  %1615 = vmatprep.subr.mxu0 0.0
  %1616 = vmatpush1.msra.mxu0 0.0
  %1617 = vmatprep.subr.mxu0 0.0
  %1618 = vmatpush1.msra.mxu0 0.0
  %1619 = vmatprep.subr.mxu0 0.0
  %1620 = vmatpush1.msra.mxu0 0.0
  %1621 = vmatprep.subr.mxu0 0.0
  %1622 = vmatpush1.msra.mxu0 0.0
  %1623 = vmatprep.subr.mxu0 0.0
  %1624 = vmatpush1.msra.mxu0 0.0
  %1625 = vmatprep.subr.mxu0 0.0
  %1626 = vmatpush1.msra.mxu0 0.0
  %1627 = vmatprep.subr.mxu0 0.0
  %1628 = vmatpush1.msra.mxu0 0.0
  %1629 = vmatprep.subr.mxu0 0.0
  %1630 = vmatpush1.msra.mxu0 0.0
  %1631 = vmatprep.subr.mxu0 0.0
  %1632 = vmatpush1.msra.mxu0 0.0
  %1633 = vmatprep.subr.mxu0 0.0
  %1634 = vmatpush1.msra.mxu0 0.0
  %1635 = vmatprep.mubr.f32.mxu0 0.0
  %v1636 = vand.u32 %v35, 4294901760
  %1637 = vmatmul.mubr.f32.gmra.mrb[0].mxu0 %v1636
  %v1638 = vpop.f32.mrb[0].mxu0
  %v1639 = vadd.f32 %v1558, %v1638
  %v1640 = vpop.f32.mrb[0].mxu0
  %1641 = vmatprep.mubr.f32.mxu0 0.0
  %v1642 = vand.u32 %v38, 4294901760
  %1643 = vmatmul.mubr.f32.gmra.mrb[0].mxu0 %v1642
  %v1644 = vpop.f32.mrb[0].mxu0
  %v1645 = vadd.f32 %v1564, %v1644
  %v1646 = vpop.f32.mrb[0].mxu0
  %1647 = vdwg.mxu0
  %v1648 = vadd.f32 %v1113, %v1639
  %v1649 = vadd.f32 %v1114, %v1645
  %1650 = vst.msk [vmem:[%s1112] sm:$0xff] %vm33, %v1648
  %1651 = vst.msk [vmem:[%s1112 + $0x8] sm:$0xff] %vm33, %v1649
  // Predicated region
  $region18: #{mha_forward.2} parent=0 // pred_check
    %p1652 = pneg %p14
  $region19: #{mha_forward.2} parent=0 // pred_check_branch
    %1654 = sbr.rel (%p1652) target = $region21
  $region20: #{mha_forward.2} parent=0 // pred_region
    %v1655 = vld [vmem:[#allocation2] sm:$0xff]
    %v1656 = vld [vmem:[#allocation2 + $0x8] sm:$0xff]
    %v1657 = vld [vmem:[#allocation2 + $0x10] sm:$0xff]
    %v1658 = vld [vmem:[#allocation2 + $0x18] sm:$0xff]
    %v1659 = vld [vmem:[#allocation2 + $0x20] sm:$0xff]
    %v1660 = vld [vmem:[#allocation2 + $0x28] sm:$0xff]
    %v1661 = vld [vmem:[%s2] sm:$0x1]
    %v1662 = vld [vmem:[%s2 + $0x1] sm:$0x1]
    %v1663 = vld [vmem:[%s2 + $0x2] sm:$0x1]
    %v1667 = vlaneseq
    %v1668 = vshrl.u32 %v1667, 7
    %v1669 = vsub.s32 0, %v1668
    %v1670 = vrot.slane %v1661, %v1669
    %v1671 = vlaneseq
    %v1672 = vshrl.u32 %v1671, 7
    %v1673 = vsub.s32 0, %v1672
    %v1674 = vrot.slane %v1662, %v1673
    %v1675 = vlaneseq
    %v1676 = vshrl.u32 %v1675, 7
    %v1677 = vsub.s32 0, %v1676
    %v1678 = vrot.slane %v1663, %v1677
    %v1682 = vadd.f32 %v1655, %v1670
    %v1683 = vadd.f32 %v1656, %v1670
    %v1684 = vadd.f32 %v1657, %v1674
    %v1685 = vadd.f32 %v1658, %v1674
    %v1686 = vadd.f32 %v1659, %v1678
    %v1687 = vadd.f32 %v1660, %v1678
    %1688 = vst.msk [vmem:[%s3] sm:$0xff] %vm33, %v1682
    %1689 = vst.msk [vmem:[%s3 + $0x8] sm:$0xff] %vm33, %v1683
    %1690 = vst.msk [vmem:[%s3 + $0x10] sm:$0xff] %vm33, %v1684
    %1691 = vst.msk [vmem:[%s3 + $0x18] sm:$0xff] %vm33, %v1685
    %1692 = vst.msk [vmem:[%s3 + $0x20] sm:$0xff] %vm33, %v1686
    %1693 = vst.msk [vmem:[%s3 + $0x28] sm:$0xff] %vm33, %v1687
  $region21: #{mha_forward.2} parent=0 // pred_fallthru
    _
  // Predicated region
  $region22: #{mha_forward.2} parent=0 // pred_check
    _
  $region23: #{mha_forward.2} parent=0 // pred_check_branch
    %1695 = sbr.rel (0) target = $region25
  $region24: #{mha_forward.2} parent=0 // pred_region
    _
  $region25: #{mha_forward.2} parent=0 // pred_fallthru
    _
  // Predicated region
  $region26: #{mha_forward.2} parent=0 // pred_check
    _
  $region27: #{mha_forward.2} parent=0 // pred_check_branch
    %1697 = sbr.rel (0) target = $region29
  $region28: #{mha_forward.2} parent=0 // pred_region
    _
  $region29: #{mha_forward.2} parent=0 // pred_fallthru
    _

// kernel: mha_forward.3
$region0: #{mha_forward.3}
  #allocation0 [shape = 'u32[]', space=smem, size = 0x4, offset = 0x4, fixed_abs, tag = 'smem constant byte address 0x4 - core index']
  #allocation1 [shape = 'u32[144,128]{1,0:T(1,128)}', space=vmem, size = 0x12000, scoped, tag = 'internal scratch']
  #allocation2 [shape = 'f32[4,8,1]{2,1,0:T(8,128)}', space=vmem, size = 0x4000, scoped, tag = 'scratch operand']
  #allocation3 [shape = 'f32[4,8,1]{2,1,0:T(8,128)}', space=vmem, size = 0x4000, scoped, tag = 'scratch operand']
  #allocation4 [shape = 'f32[4,8,8]{2,1,0:T(8,128)}', space=vmem, size = 0x4000, scoped, tag = 'scratch operand']
  #allocation5 [shape = 'f32[4,8,8]{2,1,0:T(8,128)}', space=vmem, size = 0x4000, scoped, tag = 'scratch operand']
  %s0 = inlined_call_operand.vmem [shape: f32[3,2,8,32], index: 0, kind: input, shape index: {}, may-alias: {0,1,2}]
  %s1 = inlined_call_operand.vmem [shape: f32[3,2,8,32], index: 1, kind: input, shape index: {}, may-alias: {0,1,2}]
  %s2 = inlined_call_operand.vmem [shape: f32[3,2,8,32], index: 2, kind: input, shape index: {}, may-alias: {0,1,2}]
  %s3 = inlined_call_operand.vmem [shape: f32[32,32], index: 3, kind: input, shape index: {}]
  %s4 = inlined_call_operand.vmem [shape: f32[1,32], index: 4, kind: input, shape index: {}]
  %s5 = inlined_call_operand.hbm [shape: f32[2,8,32], index: 5, kind: output, shape index: {}]
  %s6 = sld [smem:[#allocation0]]
  $region61: #{mha_forward.3} parent=0
    _
  %s8 = ssub.s32 1, %s6
  %s9 = scalar_select 0, %s8, %s6
  $region1: #{mha_forward.3} parent=0
    #allocation6 [shape = 'u8[8192]{0}', space=vmem, size = 0x2000, scoped, tag = 'output window, operand 0']
    #allocation7 [shape = 's32[2]{0}', space=sflag, size = 0x8, scoped, tag = 'scoped memory for mha_forward.3']
    %10 = vsyncpa [#allocation7], 0
    %s11 = scalar_lea.sflag [#allocation7], 1
    %12 = vsyncpa %s11, 0
    loop: start=0, step=1, limit=4
    $region2: #{mha_forward.3} parent=1 // loop_pre_header
      _
    $region3: #{mha_forward.3} parent=1 // loop_header
      %s14 = sphi 0, %s18
      %p15 = scmp.ge.s32.totalorder %s14, 4
      %s21 = sphi 0, %s40
      %s22 = sphi 0, %s36
      %s23 = sphi 0, %s32
      %s24 = sphi 0, %s21
      %s25 = sphi 0, %s22
      %s26 = sphi 0, %s23
      %s27 = sphi 0, %s24
      %s28 = sphi 0, %s25
      %s29 = sphi 0, %s26
      %s45 = sphi 0, %s47
      %s48 = sphi 0, %s45
      %s49 = sphi 0, %s48
      %s65 = sphi 0, %s49
      %s73 = sphi 0, %s75
      %s76 = sphi 0, %s73
      %s77 = sphi 0, %s76
      %s93 = sphi 0, %s77
      %s101 = sphi 0, %s103
      %s104 = sphi 0, %s101
      %s105 = sphi 0, %s104
      %s121 = sphi 0, %s105
      %s125 = sphi 0, %s125
      %s127 = sphi 0, %s125
      %s128 = sphi 0, %s127
      %s142 = sphi 0, %s128
      %s146 = sphi 0, %s146
      %s148 = sphi 0, %s146
      %s149 = sphi 0, %s148
      %s163 = sphi 0, %s149
      %s171 = sphi 0, %s173
      %s174 = sphi 0, %s171
      %s175 = sphi 0, %s174
      %s191 = sphi 0, %s175
    $region4: #{mha_forward.3} parent=1 // loop_header_branch
      %17 = sbr.rel (%p15) target = $region8
    $region5: #{mha_forward.3} parent=1 // loop_body
      %s19 = ssub.s32 %s14, 1
      %s20 = ssub.s32 %s14, 2
      %s30 = sadd.s32 1, %s23
      %p31 = scmp.ge.s32.totalorder %s30, 1
      %s32 = scalar_select %p31, 0, %s30
      %s33 = sadd.s32 1, %s22
      %s34 = scalar_select %p31, %s33, %s22
      %p35 = scmp.ge.s32.totalorder %s34, 1
      %s36 = scalar_select %p35, 0, %s34
      %s37 = sadd.s32 1, %s21
      %s38 = scalar_select %p35, %s37, %s21
      %p39 = scmp.ge.s32.totalorder %s38, 2
      %s40 = scalar_select %p39, 0, %s38
      %s41 = ssub.s32 %s21, %s40
      %s42 = ssub.s32 %s22, %s36
      %s43 = sor.u32 %s41, %s42
      %p44 = scmp.eq.s32.totalorder %s43, 0
      %s46 = sadd.s32 %s45, 1
      %s47 = scalar_select %p44, %s45, %s46
      %p50 = pneg %p44
      %p51 = scmp.eq.s32.totalorder %s14, 1
      %p52 = por %p50, %p51
      %p53 = scmp.ne.s32.totalorder %s45, %s48
      %p54 = scmp.eq.s32.totalorder %s14, 0
      %p55 = por %p53, %p54
      %p56 = scmp.ne.s32.totalorder %s45, %s48
      %p57 = scmp.eq.s32.totalorder %s19, 1
      %p58 = por %p56, %p57
      %p59 = scmp.ne.s32.totalorder %s48, %s49
      %p60 = scmp.eq.s32.totalorder %s19, 0
      %p61 = por %p59, %p60
      %p62 = scmp.ne.s32.totalorder %s48, %s49
      %p63 = scmp.eq.s32.totalorder %s20, 1
      %p64 = por %p62, %p63
      %p66 = scmp.ne.s32.totalorder %s49, %s65
      %p67 = scmp.eq.s32.totalorder %s20, 0
      %p68 = por %p66, %p67
      %s69 = ssub.s32 %s21, %s40
      %s70 = ssub.s32 %s23, %s32
      %s71 = sor.u32 %s69, %s70
      %p72 = scmp.eq.s32.totalorder %s71, 0
      %s74 = sadd.s32 %s73, 1
      %s75 = scalar_select %p72, %s73, %s74
      %p78 = pneg %p72
      %p79 = scmp.eq.s32.totalorder %s14, 1
      %p80 = por %p78, %p79
      %p81 = scmp.ne.s32.totalorder %s73, %s76
      %p82 = scmp.eq.s32.totalorder %s14, 0
      %p83 = por %p81, %p82
      %p84 = scmp.ne.s32.totalorder %s73, %s76
      %p85 = scmp.eq.s32.totalorder %s19, 1
      %p86 = por %p84, %p85
      %p87 = scmp.ne.s32.totalorder %s76, %s77
      %p88 = scmp.eq.s32.totalorder %s19, 0
      %p89 = por %p87, %p88
      %p90 = scmp.ne.s32.totalorder %s76, %s77
      %p91 = scmp.eq.s32.totalorder %s20, 1
      %p92 = por %p90, %p91
      %p94 = scmp.ne.s32.totalorder %s77, %s93
      %p95 = scmp.eq.s32.totalorder %s20, 0
      %p96 = por %p94, %p95
      %s97 = ssub.s32 %s21, %s40
      %s98 = ssub.s32 %s23, %s32
      %s99 = sor.u32 %s97, %s98
      %p100 = scmp.eq.s32.totalorder %s99, 0
      %s102 = sadd.s32 %s101, 1
      %s103 = scalar_select %p100, %s101, %s102
      %p106 = pneg %p100
      %p107 = scmp.eq.s32.totalorder %s14, 1
      %p108 = por %p106, %p107
      %p109 = scmp.ne.s32.totalorder %s101, %s104
      %p110 = scmp.eq.s32.totalorder %s14, 0
      %p111 = por %p109, %p110
      %p112 = scmp.ne.s32.totalorder %s101, %s104
      %p113 = scmp.eq.s32.totalorder %s19, 1
      %p114 = por %p112, %p113
      %p115 = scmp.ne.s32.totalorder %s104, %s105
      %p116 = scmp.eq.s32.totalorder %s19, 0
      %p117 = por %p115, %p116
      %p118 = scmp.ne.s32.totalorder %s104, %s105
      %p119 = scmp.eq.s32.totalorder %s20, 1
      %p120 = por %p118, %p119
      %p122 = scmp.ne.s32.totalorder %s105, %s121
      %p123 = scmp.eq.s32.totalorder %s20, 0
      %p124 = por %p122, %p123
      %s126 = sadd.s32 %s125, 1
      %p129 = scmp.eq.s32.totalorder %s14, 1
      %p130 = scmp.ne.s32.totalorder %s125, %s127
      %p131 = scmp.eq.s32.totalorder %s14, 0
      %p132 = por %p130, %p131
      %p133 = scmp.ne.s32.totalorder %s125, %s127
      %p134 = scmp.eq.s32.totalorder %s19, 1
      %p135 = por %p133, %p134
      %p136 = scmp.ne.s32.totalorder %s127, %s128
      %p137 = scmp.eq.s32.totalorder %s19, 0
      %p138 = por %p136, %p137
      %p139 = scmp.ne.s32.totalorder %s127, %s128
      %p140 = scmp.eq.s32.totalorder %s20, 1
      %p141 = por %p139, %p140
      %p143 = scmp.ne.s32.totalorder %s128, %s142
      %p144 = scmp.eq.s32.totalorder %s20, 0
      %p145 = por %p143, %p144
      %s147 = sadd.s32 %s146, 1
      %p150 = scmp.eq.s32.totalorder %s14, 1
      %p151 = scmp.ne.s32.totalorder %s146, %s148
      %p152 = scmp.eq.s32.totalorder %s14, 0
      %p153 = por %p151, %p152
      %p154 = scmp.ne.s32.totalorder %s146, %s148
      %p155 = scmp.eq.s32.totalorder %s19, 1
      %p156 = por %p154, %p155
      %p157 = scmp.ne.s32.totalorder %s148, %s149
      %p158 = scmp.eq.s32.totalorder %s19, 0
      %p159 = por %p157, %p158
      %p160 = scmp.ne.s32.totalorder %s148, %s149
      %p161 = scmp.eq.s32.totalorder %s20, 1
      %p162 = por %p160, %p161
      %p164 = scmp.ne.s32.totalorder %s149, %s163
      %p165 = scmp.eq.s32.totalorder %s20, 0
      %p166 = por %p164, %p165
      %s167 = ssub.s32 %s21, %s40
      %s168 = ssub.s32 %s22, %s36
      %s169 = sor.u32 %s167, %s168
      %p170 = scmp.eq.s32.totalorder %s169, 0
      %s172 = sadd.s32 %s171, 1
      %s173 = scalar_select %p170, %s171, %s172
      %p176 = pneg %p170
      %p177 = scmp.eq.s32.totalorder %s14, 1
      %p178 = por %p176, %p177
      %p179 = scmp.ne.s32.totalorder %s171, %s174
      %p180 = scmp.eq.s32.totalorder %s14, 0
      %p181 = por %p179, %p180
      %p182 = scmp.ne.s32.totalorder %s171, %s174
      %p183 = scmp.eq.s32.totalorder %s19, 1
      %p184 = por %p182, %p183
      %p185 = scmp.ne.s32.totalorder %s174, %s175
      %p186 = scmp.eq.s32.totalorder %s19, 0
      %p187 = por %p185, %p186
      %p188 = scmp.ne.s32.totalorder %s174, %s175
      %p189 = scmp.eq.s32.totalorder %s20, 1
      %p190 = por %p188, %p189
      %p192 = scmp.ne.s32.totalorder %s175, %s191
      %p193 = scmp.eq.s32.totalorder %s20, 0
      %p194 = por %p192, %p193
      %p195 = scmp.le.s32.totalorder 1, %s14
      %p196 = scmp.lt.s32.totalorder %s14, 3
      %p197 = pnand %p195, %p196
      %p198 = pneg %p197
      // Predicated region
      $region9: #{mha_forward.3} parent=5 // pred_check
        _
      $region10: #{mha_forward.3} parent=5 // pred_check_branch
        %200 = sbr.rel (%p197) target = $region12
      $region11: #{mha_forward.3} parent=5 // pred_region
        %s201 = ssub.s32 %s14, 1
        // Predicated region
        $region13: #{mha_forward.3} parent=11 // pred_check
          %p202 = pneg %p138
        $region14: #{mha_forward.3} parent=11 // pred_check_branch
          %204 = sbr.rel (%p202) target = $region16
        $region15: #{mha_forward.3} parent=11 // pred_region
          _
        $region16: #{mha_forward.3} parent=11 // pred_fallthru
          _
        // Predicated region
        $region17: #{mha_forward.3} parent=11 // pred_check
          %p205 = pneg %p159
        $region18: #{mha_forward.3} parent=11 // pred_check_branch
          %207 = sbr.rel (%p205) target = $region20
        $region19: #{mha_forward.3} parent=11 // pred_region
          _
        $region20: #{mha_forward.3} parent=11 // pred_fallthru
          _
      $region12: #{mha_forward.3} parent=5 // pred_fallthru
        _
      %p208 = scmp.lt.s32.totalorder %s14, 2
      // Predicated region
      $region21: #{mha_forward.3} parent=5 // pred_check
        %p209 = pneg %p208
      $region22: #{mha_forward.3} parent=5 // pred_check_branch
        %211 = sbr.rel (%p209) target = $region24
      $region23: #{mha_forward.3} parent=5 // pred_region
        // Predicated region
        $region25: #{mha_forward.3} parent=23 // pred_check
          %p212 = pneg %p55
        $region26: #{mha_forward.3} parent=23 // pred_check_branch
          %214 = sbr.rel (%p212) target = $region28
        $region27: #{mha_forward.3} parent=23 // pred_region
          %p215 = scmp.lt.s32.totalorder %s21, 1
          %s216 = scalar_select %p215, %s21, 1
          %p217 = scmp.lt.s32.totalorder %s22, 0
          %s218 = scalar_select %p217, %s22, 0
          %s219 = sadd.s32 %s218, %s216
          %s220 = smul.addr %s219, 8
          %s221 = scalar_lea.vmem %s0, %s220
        $region28: #{mha_forward.3} parent=23 // pred_fallthru
          _
        // Predicated region
        $region29: #{mha_forward.3} parent=23 // pred_check
          %p222 = pneg %p83
        $region30: #{mha_forward.3} parent=23 // pred_check_branch
          %224 = sbr.rel (%p222) target = $region32
        $region31: #{mha_forward.3} parent=23 // pred_region
          %p225 = scmp.lt.s32.totalorder %s21, 1
          %s226 = scalar_select %p225, %s21, 1
          %p227 = scmp.lt.s32.totalorder %s23, 0
          %s228 = scalar_select %p227, %s23, 0
          %s229 = sadd.s32 %s228, %s226
          %s230 = sadd.s32 %s229, 2
          %s231 = smul.addr %s230, 8
          %s232 = scalar_lea.vmem %s1, %s231
        $region32: #{mha_forward.3} parent=23 // pred_fallthru
          _
        // Predicated region
        $region33: #{mha_forward.3} parent=23 // pred_check
          %p233 = pneg %p111
        $region34: #{mha_forward.3} parent=23 // pred_check_branch
          %235 = sbr.rel (%p233) target = $region36
        $region35: #{mha_forward.3} parent=23 // pred_region
          %p236 = scmp.lt.s32.totalorder %s21, 1
          %s237 = scalar_select %p236, %s21, 1
          %p238 = scmp.lt.s32.totalorder %s23, 0
          %s239 = scalar_select %p238, %s23, 0
          %s240 = sadd.s32 %s239, %s237
          %s241 = sadd.s32 %s240, 4
          %s242 = smul.addr %s241, 8
          %s243 = scalar_lea.vmem %s2, %s242
        $region36: #{mha_forward.3} parent=23 // pred_fallthru
          _
      $region24: #{mha_forward.3} parent=5 // pred_fallthru
        _
      %p244 = scmp.le.s32.totalorder 1, %s14
      %p245 = scmp.lt.s32.totalorder %s14, 3
      %p246 = pnand %p244, %p245
      %p247 = pneg %p246
      // Predicated region
      $region37: #{mha_forward.3} parent=5 // pred_check
        _
      $region38: #{mha_forward.3} parent=5 // pred_check_branch
        %249 = sbr.rel (%p246) target = $region40
      $region39: #{mha_forward.3} parent=5 // pred_region
        %s250 = ssub.s32 %s14, 1
        %p251 = scmp.lt.s32.totalorder %s24, 1
        %s252 = scalar_select %p251, %s24, 1
        %p253 = scmp.lt.s32.totalorder %s25, 0
        %s254 = scalar_select %p253, %s25, 0
        %s255 = sadd.s32 %s254, %s252
        %s256 = smul.addr %s255, 8
        %s257 = scalar_lea.vmem %s0, %s256
        %p258 = pneg %p61
        %p259 = pneg %p58
        %p260 = scmp.lt.s32.totalorder %s24, 1
        %s261 = scalar_select %p260, %s24, 1
        %p262 = scmp.lt.s32.totalorder %s26, 0
        %s263 = scalar_select %p262, %s26, 0
        %s264 = sadd.s32 %s263, %s261
        %s265 = sadd.s32 %s264, 2
        %s266 = smul.addr %s265, 8
        %s267 = scalar_lea.vmem %s1, %s266
        %p268 = pneg %p89
        %p269 = pneg %p86
        %p270 = scmp.lt.s32.totalorder %s24, 1
        %s271 = scalar_select %p270, %s24, 1
        %p272 = scmp.lt.s32.totalorder %s26, 0
        %s273 = scalar_select %p272, %s26, 0
        %s274 = sadd.s32 %s273, %s271
        %s275 = sadd.s32 %s274, 4
        %s276 = smul.addr %s275, 8
        %s277 = scalar_lea.vmem %s2, %s276
        %p278 = pneg %p117
        %p279 = pneg %p114
        %p280 = pneg %p138
        %p281 = pneg %p135
        %p282 = pneg %p159
        %p283 = pneg %p156
        %p284 = pneg %p187
        %p285 = pneg %p184
        %s286 = sand.u32 %s174, 1
        %s287 = scalar_lea.sflag [#allocation7], %s286
        %s288 = sand.u32 %s174, 1
        %s289 = smul.addr %s288, 8
        %s290 = scalar_lea.vmem [#allocation6], %s289
        %p291 = scmp.lt.s32.totalorder %s24, 1
        %s292 = scalar_select %p291, %s24, 1
        %p293 = scmp.lt.s32.totalorder %s25, 0
        %s294 = scalar_select %p293, %s25, 0
        %s295 = sadd.s32 %s294, %s292
        %s296 = smul.addr %s295, 8
        %s297 = scalar_lea.vmem %s0, %s296
        %p298 = scmp.lt.s32.totalorder %s24, 1
        %s299 = scalar_select %p298, %s24, 1
        %p300 = scmp.lt.s32.totalorder %s26, 0
        %s301 = scalar_select %p300, %s26, 0
        %s302 = sadd.s32 %s301, %s299
        %s303 = sadd.s32 %s302, 2
        %s304 = smul.addr %s303, 8
        %s305 = scalar_lea.vmem %s1, %s304
        %p306 = scmp.lt.s32.totalorder %s24, 1
        %s307 = scalar_select %p306, %s24, 1
        %p308 = scmp.lt.s32.totalorder %s26, 0
        %s309 = scalar_select %p308, %s26, 0
        %s310 = sadd.s32 %s309, %s307
        %s311 = sadd.s32 %s310, 4
        %s312 = smul.addr %s311, 8
        %s313 = scalar_lea.vmem %s2, %s312
        %p314 = scmp.eq.s32.totalorder %s26, 0
        // Predicated region
        $region41: #{mha_forward.3} parent=39 // pred_check
          %p315 = pneg %p314
        $region42: #{mha_forward.3} parent=39 // pred_check_branch
          %317 = sbr.rel (%p315) target = $region44
        $region43: #{mha_forward.3} parent=39 // pred_region
          %vm318 = vcmask 7168
          %319 = vst.msk [vmem:[#allocation2] sm:$0xff] %vm318, -inf
          %320 = vst.msk [vmem:[#allocation2 + $0x8] sm:$0xff] %vm318, -inf
          %321 = vst.msk [vmem:[#allocation2 + $0x10] sm:$0xff] %vm318, -inf
          %322 = vst.msk [vmem:[#allocation2 + $0x18] sm:$0xff] %vm318, -inf
          %323 = vst.msk [vmem:[#allocation3] sm:$0xff] %vm318, 0.0
          %324 = vst.msk [vmem:[#allocation3 + $0x8] sm:$0xff] %vm318, 0.0
          %325 = vst.msk [vmem:[#allocation3 + $0x10] sm:$0xff] %vm318, 0.0
          %326 = vst.msk [vmem:[#allocation3 + $0x18] sm:$0xff] %vm318, 0.0
          %vm327 = vcmask 64512
          %328 = vst.msk [vmem:[#allocation4] sm:$0xff] %vm327, 0.0
          %329 = vst.msk [vmem:[#allocation4 + $0x8] sm:$0xff] %vm327, 0.0
          %330 = vst.msk [vmem:[#allocation4 + $0x10] sm:$0xff] %vm327, 0.0
          %331 = vst.msk [vmem:[#allocation4 + $0x18] sm:$0xff] %vm327, 0.0
          %v332 = vld [vmem:[%s297] sm:$0xff]
          %v333 = vmul.f32 %v332, 0.35355338
          %335 = vrot.lane.b32.xlu0 %v333, 120
          %v336 = vpop.permute.xlu0 %335
          %338 = vrot.lane.b32.xlu0 %v333, 112
          %v339 = vpop.permute.xlu0 %338
          %341 = vrot.lane.b32.xlu0 %v333, 104
          %v342 = vpop.permute.xlu0 %341
          %344 = vst.msk [vmem:[#allocation5] sm:$0xff] %vm327, %v333
          %345 = vst.msk [vmem:[#allocation5 + $0x8] sm:$0xff] %vm327, %v336
          %346 = vst.msk [vmem:[#allocation5 + $0x10] sm:$0xff] %vm327, %v339
          %347 = vst.msk [vmem:[#allocation5 + $0x18] sm:$0xff] %vm327, %v342
        $region44: #{mha_forward.3} parent=39 // pred_fallthru
          _
        %v348 = vld [vmem:[%s305] sm:$0xff]
        %v349 = vld [vmem:[%s313] sm:$0xff]
        %351 = vrot.lane.b32.xlu0 %v348, 120
        %v352 = vpop.permute.xlu0 %351
        %353 = vrot.lane.b32.xlu0 %v348, 112
        %v354 = vpop.permute.xlu0 %353
        %355 = vrot.lane.b32.xlu0 %v348, 104
        %v356 = vpop.permute.xlu0 %355
        %358 = vrot.lane.b32.xlu0 %v349, 120
        %v359 = vpop.permute.xlu0 %358
        %361 = vrot.lane.b32.xlu0 %v349, 112
        %v362 = vpop.permute.xlu0 %361
        %364 = vrot.lane.b32.xlu0 %v349, 104
        %v365 = vpop.permute.xlu0 %364
        %v367 = vld [vmem:[#allocation5] sm:$0xff]
        %v368 = vld [vmem:[#allocation5 + $0x8] sm:$0xff]
        %v369 = vld [vmem:[#allocation5 + $0x10] sm:$0xff]
        %v370 = vld [vmem:[#allocation5 + $0x18] sm:$0xff]
        %vm371 = vcmask 64512
        %v373 = vsel %vm371, %v367, 0
        %v375 = vsel %vm371, %v348, 0
        %377 = vmatprep.subr.mxu0 0.0
        %v378 = vand.u32 %v375, 4294901760
        %379 = vmatpush1.xpose.msra.mxu0 %v378
        %380 = vmatprep.subr.mxu0 0.0
        %381 = vmatpush1.xpose.msra.mxu0 0.0
        %382 = vmatprep.subr.mxu0 0.0
        %383 = vmatpush1.xpose.msra.mxu0 0.0
        %384 = vmatprep.subr.mxu0 0.0
        %385 = vmatpush1.xpose.msra.mxu0 0.0
        %386 = vmatprep.subr.mxu0 0.0
        %387 = vmatpush1.xpose.msra.mxu0 0.0
        %388 = vmatprep.subr.mxu0 0.0
        %389 = vmatpush1.xpose.msra.mxu0 0.0
        %390 = vmatprep.subr.mxu0 0.0
        %391 = vmatpush1.xpose.msra.mxu0 0.0
        %392 = vmatprep.subr.mxu0 0.0
        %393 = vmatpush1.xpose.msra.mxu0 0.0
        %394 = vmatprep.subr.mxu0 0.0
        %395 = vmatpush1.xpose.msra.mxu0 0.0
        %396 = vmatprep.subr.mxu0 0.0
        %397 = vmatpush1.xpose.msra.mxu0 0.0
        %398 = vmatprep.subr.mxu0 0.0
        %399 = vmatpush1.xpose.msra.mxu0 0.0
        %400 = vmatprep.subr.mxu0 0.0
        %401 = vmatpush1.xpose.msra.mxu0 0.0
        %402 = vmatprep.subr.mxu0 0.0
        %403 = vmatpush1.xpose.msra.mxu0 0.0
        %404 = vmatprep.subr.mxu0 0.0
        %405 = vmatpush1.xpose.msra.mxu0 0.0
        %406 = vmatprep.subr.mxu0 0.0
        %407 = vmatpush1.xpose.msra.mxu0 0.0
        %408 = vmatprep.subr.mxu0 0.0
        %409 = vmatpush1.xpose.msra.mxu0 0.0
        %410 = vmatprep.subr.mxu0 0.0
        %411 = vmatpush1.xpose.msra.mxu0 0.0
        %412 = vmatprep.subr.mxu0 0.0
        %413 = vmatpush1.xpose.msra.mxu0 0.0
        %414 = vmatprep.subr.mxu0 0.0
        %415 = vmatpush1.xpose.msra.mxu0 0.0
        %416 = vmatprep.subr.mxu0 0.0
        %417 = vmatpush1.xpose.msra.mxu0 0.0
        %418 = vmatprep.subr.mxu0 0.0
        %419 = vmatpush1.xpose.msra.mxu0 0.0
        %420 = vmatprep.subr.mxu0 0.0
        %421 = vmatpush1.xpose.msra.mxu0 0.0
        %422 = vmatprep.subr.mxu0 0.0
        %423 = vmatpush1.xpose.msra.mxu0 0.0
        %424 = vmatprep.subr.mxu0 0.0
        %425 = vmatpush1.xpose.msra.mxu0 0.0
        %426 = vmatprep.subr.mxu0 0.0
        %427 = vmatpush1.xpose.msra.mxu0 0.0
        %428 = vmatprep.subr.mxu0 0.0
        %429 = vmatpush1.xpose.msra.mxu0 0.0
        %430 = vmatprep.subr.mxu0 0.0
        %431 = vmatpush1.xpose.msra.mxu0 0.0
        %432 = vmatprep.subr.mxu0 0.0
        %433 = vmatpush1.xpose.msra.mxu0 0.0
        %434 = vmatprep.subr.mxu0 0.0
        %435 = vmatpush1.xpose.msra.mxu0 0.0
        %436 = vmatprep.subr.mxu0 0.0
        %437 = vmatpush1.xpose.msra.mxu0 0.0
        %438 = vmatprep.subr.mxu0 0.0
        %439 = vmatpush1.xpose.msra.mxu0 0.0
        %440 = vmatprep.subr.mxu0 0.0
        %441 = vmatpush1.xpose.msra.mxu0 0.0
        %442 = vmatprep.mubr.f32.mxu0 0.0
        %v443 = vand.u32 %v373, 4294901760
        %v444 = vsub.f32 %v373, %v443
        %v445 = vand.u32 %v444, 4294901760
        %v446 = vsub.f32 %v444, %v445
        %v447 = vand.u32 %v446, 4294901760
        %448 = vmatmul.mubr.f32.gmra.mrb[0].mxu0 %v447
        %v449 = vpop.f32.mrb[0].mxu0
        %v450 = vadd.f32 0.0, %v449
        %v451 = vpop.f32.mrb[0].mxu0
        %452 = vdwg.mxu0
        %453 = vmatprep.subr.mxu0 0.0
        %v454 = vand.u32 %v375, 4294901760
        %v455 = vsub.f32 %v375, %v454
        %v456 = vand.u32 %v455, 4294901760
        %v457 = vsub.f32 %v455, %v456
        %v458 = vand.u32 %v457, 4294901760
        %459 = vmatpush1.xpose.msra.mxu0 %v458
        %460 = vmatprep.subr.mxu0 0.0
        %461 = vmatpush1.xpose.msra.mxu0 0.0
        %462 = vmatprep.subr.mxu0 0.0
        %463 = vmatpush1.xpose.msra.mxu0 0.0
        %464 = vmatprep.subr.mxu0 0.0
        %465 = vmatpush1.xpose.msra.mxu0 0.0
        %466 = vmatprep.subr.mxu0 0.0
        %467 = vmatpush1.xpose.msra.mxu0 0.0
        %468 = vmatprep.subr.mxu0 0.0
        %469 = vmatpush1.xpose.msra.mxu0 0.0
        %470 = vmatprep.subr.mxu0 0.0
        %471 = vmatpush1.xpose.msra.mxu0 0.0
        %472 = vmatprep.subr.mxu0 0.0
        %473 = vmatpush1.xpose.msra.mxu0 0.0
        %474 = vmatprep.subr.mxu0 0.0
        %475 = vmatpush1.xpose.msra.mxu0 0.0
        %476 = vmatprep.subr.mxu0 0.0
        %477 = vmatpush1.xpose.msra.mxu0 0.0
        %478 = vmatprep.subr.mxu0 0.0
        %479 = vmatpush1.xpose.msra.mxu0 0.0
        %480 = vmatprep.subr.mxu0 0.0
        %481 = vmatpush1.xpose.msra.mxu0 0.0
        %482 = vmatprep.subr.mxu0 0.0
        %483 = vmatpush1.xpose.msra.mxu0 0.0
        %484 = vmatprep.subr.mxu0 0.0
        %485 = vmatpush1.xpose.msra.mxu0 0.0
        %486 = vmatprep.subr.mxu0 0.0
        %487 = vmatpush1.xpose.msra.mxu0 0.0
        %488 = vmatprep.subr.mxu0 0.0
        %489 = vmatpush1.xpose.msra.mxu0 0.0
        %490 = vmatprep.subr.mxu0 0.0
        %491 = vmatpush1.xpose.msra.mxu0 0.0
        %492 = vmatprep.subr.mxu0 0.0
        %493 = vmatpush1.xpose.msra.mxu0 0.0
        %494 = vmatprep.subr.mxu0 0.0
        %495 = vmatpush1.xpose.msra.mxu0 0.0
        %496 = vmatprep.subr.mxu0 0.0
        %497 = vmatpush1.xpose.msra.mxu0 0.0
        %498 = vmatprep.subr.mxu0 0.0
        %499 = vmatpush1.xpose.msra.mxu0 0.0
        %500 = vmatprep.subr.mxu0 0.0
        %501 = vmatpush1.xpose.msra.mxu0 0.0
        %502 = vmatprep.subr.mxu0 0.0
        %503 = vmatpush1.xpose.msra.mxu0 0.0
        %504 = vmatprep.subr.mxu0 0.0
        %505 = vmatpush1.xpose.msra.mxu0 0.0
        %506 = vmatprep.subr.mxu0 0.0
        %507 = vmatpush1.xpose.msra.mxu0 0.0
        %508 = vmatprep.subr.mxu0 0.0
        %509 = vmatpush1.xpose.msra.mxu0 0.0
        %510 = vmatprep.subr.mxu0 0.0
        %511 = vmatpush1.xpose.msra.mxu0 0.0
        %512 = vmatprep.subr.mxu0 0.0
        %513 = vmatpush1.xpose.msra.mxu0 0.0
        %514 = vmatprep.subr.mxu0 0.0
        %515 = vmatpush1.xpose.msra.mxu0 0.0
        %516 = vmatprep.subr.mxu0 0.0
        %517 = vmatpush1.xpose.msra.mxu0 0.0
        %518 = vmatprep.subr.mxu0 0.0
        %519 = vmatpush1.xpose.msra.mxu0 0.0
        %520 = vmatprep.subr.mxu0 0.0
        %521 = vmatpush1.xpose.msra.mxu0 0.0
        %522 = vmatprep.mubr.f32.mxu0 0.0
        %v523 = vand.u32 %v373, 4294901760
        %524 = vmatmul.mubr.f32.gmra.mrb[0].mxu0 %v523
        %v525 = vpop.f32.mrb[0].mxu0
        %v526 = vadd.f32 %v450, %v525
        %v527 = vpop.f32.mrb[0].mxu0
        %528 = vdwg.mxu0
        %529 = vmatprep.subr.mxu0 0.0
        %v530 = vand.u32 %v375, 4294901760
        %v531 = vsub.f32 %v375, %v530
        %532 = vmatpush1.xpose.msra.mxu0 %v531
        %533 = vmatprep.subr.mxu0 0.0
        %534 = vmatpush1.xpose.msra.mxu0 0.0
        %535 = vmatprep.subr.mxu0 0.0
        %536 = vmatpush1.xpose.msra.mxu0 0.0
        %537 = vmatprep.subr.mxu0 0.0
        %538 = vmatpush1.xpose.msra.mxu0 0.0
        %539 = vmatprep.subr.mxu0 0.0
        %540 = vmatpush1.xpose.msra.mxu0 0.0
        %541 = vmatprep.subr.mxu0 0.0
        %542 = vmatpush1.xpose.msra.mxu0 0.0
        %543 = vmatprep.subr.mxu0 0.0
        %544 = vmatpush1.xpose.msra.mxu0 0.0
        %545 = vmatprep.subr.mxu0 0.0
        %546 = vmatpush1.xpose.msra.mxu0 0.0
        %547 = vmatprep.subr.mxu0 0.0
        %548 = vmatpush1.xpose.msra.mxu0 0.0
        %549 = vmatprep.subr.mxu0 0.0
        %550 = vmatpush1.xpose.msra.mxu0 0.0
        %551 = vmatprep.subr.mxu0 0.0
        %552 = vmatpush1.xpose.msra.mxu0 0.0
        %553 = vmatprep.subr.mxu0 0.0
        %554 = vmatpush1.xpose.msra.mxu0 0.0
        %555 = vmatprep.subr.mxu0 0.0
        %556 = vmatpush1.xpose.msra.mxu0 0.0
        %557 = vmatprep.subr.mxu0 0.0
        %558 = vmatpush1.xpose.msra.mxu0 0.0
        %559 = vmatprep.subr.mxu0 0.0
        %560 = vmatpush1.xpose.msra.mxu0 0.0
        %561 = vmatprep.subr.mxu0 0.0
        %562 = vmatpush1.xpose.msra.mxu0 0.0
        %563 = vmatprep.subr.mxu0 0.0
        %564 = vmatpush1.xpose.msra.mxu0 0.0
        %565 = vmatprep.subr.mxu0 0.0
        %566 = vmatpush1.xpose.msra.mxu0 0.0
        %567 = vmatprep.subr.mxu0 0.0
        %568 = vmatpush1.xpose.msra.mxu0 0.0
        %569 = vmatprep.subr.mxu0 0.0
        %570 = vmatpush1.xpose.msra.mxu0 0.0
        %571 = vmatprep.subr.mxu0 0.0
        %572 = vmatpush1.xpose.msra.mxu0 0.0
        %573 = vmatprep.subr.mxu0 0.0
        %574 = vmatpush1.xpose.msra.mxu0 0.0
        %575 = vmatprep.subr.mxu0 0.0
        %576 = vmatpush1.xpose.msra.mxu0 0.0
        %577 = vmatprep.subr.mxu0 0.0
        %578 = vmatpush1.xpose.msra.mxu0 0.0
        %579 = vmatprep.subr.mxu0 0.0
        %580 = vmatpush1.xpose.msra.mxu0 0.0
        %581 = vmatprep.subr.mxu0 0.0
        %582 = vmatpush1.xpose.msra.mxu0 0.0
        %583 = vmatprep.subr.mxu0 0.0
        %584 = vmatpush1.xpose.msra.mxu0 0.0
        %585 = vmatprep.subr.mxu0 0.0
        %586 = vmatpush1.xpose.msra.mxu0 0.0
        %587 = vmatprep.subr.mxu0 0.0
        %588 = vmatpush1.xpose.msra.mxu0 0.0
        %589 = vmatprep.subr.mxu0 0.0
        %590 = vmatpush1.xpose.msra.mxu0 0.0
        %591 = vmatprep.subr.mxu0 0.0
        %592 = vmatpush1.xpose.msra.mxu0 0.0
        %593 = vmatprep.subr.mxu0 0.0
        %594 = vmatpush1.xpose.msra.mxu0 0.0
        %595 = vmatprep.mubr.f32.mxu0 0.0
        %v596 = vand.u32 %v373, 4294901760
        %v597 = vsub.f32 %v373, %v596
        %598 = vmatmul.mubr.f32.gmra.mrb[0].mxu0 %v597
        %v599 = vpop.f32.mrb[0].mxu0
        %v600 = vadd.f32 %v526, %v599
        %v601 = vpop.f32.mrb[0].mxu0
        %602 = vdwg.mxu0
        %603 = vmatprep.subr.mxu0 0.0
        %v604 = vand.u32 %v375, 4294901760
        %605 = vmatpush1.xpose.msra.mxu0 %v604
        %606 = vmatprep.subr.mxu0 0.0
        %607 = vmatpush1.xpose.msra.mxu0 0.0
        %608 = vmatprep.subr.mxu0 0.0
        %609 = vmatpush1.xpose.msra.mxu0 0.0
        %610 = vmatprep.subr.mxu0 0.0
        %611 = vmatpush1.xpose.msra.mxu0 0.0
        %612 = vmatprep.subr.mxu0 0.0
        %613 = vmatpush1.xpose.msra.mxu0 0.0
        %614 = vmatprep.subr.mxu0 0.0
        %615 = vmatpush1.xpose.msra.mxu0 0.0
        %616 = vmatprep.subr.mxu0 0.0
        %617 = vmatpush1.xpose.msra.mxu0 0.0
        %618 = vmatprep.subr.mxu0 0.0
        %619 = vmatpush1.xpose.msra.mxu0 0.0
        %620 = vmatprep.subr.mxu0 0.0
        %621 = vmatpush1.xpose.msra.mxu0 0.0
        %622 = vmatprep.subr.mxu0 0.0
        %623 = vmatpush1.xpose.msra.mxu0 0.0
        %624 = vmatprep.subr.mxu0 0.0
        %625 = vmatpush1.xpose.msra.mxu0 0.0
        %626 = vmatprep.subr.mxu0 0.0
        %627 = vmatpush1.xpose.msra.mxu0 0.0
        %628 = vmatprep.subr.mxu0 0.0
        %629 = vmatpush1.xpose.msra.mxu0 0.0
        %630 = vmatprep.subr.mxu0 0.0
        %631 = vmatpush1.xpose.msra.mxu0 0.0
        %632 = vmatprep.subr.mxu0 0.0
        %633 = vmatpush1.xpose.msra.mxu0 0.0
        %634 = vmatprep.subr.mxu0 0.0
        %635 = vmatpush1.xpose.msra.mxu0 0.0
        %636 = vmatprep.subr.mxu0 0.0
        %637 = vmatpush1.xpose.msra.mxu0 0.0
        %638 = vmatprep.subr.mxu0 0.0
        %639 = vmatpush1.xpose.msra.mxu0 0.0
        %640 = vmatprep.subr.mxu0 0.0
        %641 = vmatpush1.xpose.msra.mxu0 0.0
        %642 = vmatprep.subr.mxu0 0.0
        %643 = vmatpush1.xpose.msra.mxu0 0.0
        %644 = vmatprep.subr.mxu0 0.0
        %645 = vmatpush1.xpose.msra.mxu0 0.0
        %646 = vmatprep.subr.mxu0 0.0
        %647 = vmatpush1.xpose.msra.mxu0 0.0
        %648 = vmatprep.subr.mxu0 0.0
        %649 = vmatpush1.xpose.msra.mxu0 0.0
        %650 = vmatprep.subr.mxu0 0.0
        %651 = vmatpush1.xpose.msra.mxu0 0.0
        %652 = vmatprep.subr.mxu0 0.0
        %653 = vmatpush1.xpose.msra.mxu0 0.0
        %654 = vmatprep.subr.mxu0 0.0
        %655 = vmatpush1.xpose.msra.mxu0 0.0
        %656 = vmatprep.subr.mxu0 0.0
        %657 = vmatpush1.xpose.msra.mxu0 0.0
        %658 = vmatprep.subr.mxu0 0.0
        %659 = vmatpush1.xpose.msra.mxu0 0.0
        %660 = vmatprep.subr.mxu0 0.0
        %661 = vmatpush1.xpose.msra.mxu0 0.0
        %662 = vmatprep.subr.mxu0 0.0
        %663 = vmatpush1.xpose.msra.mxu0 0.0
        %664 = vmatprep.subr.mxu0 0.0
        %665 = vmatpush1.xpose.msra.mxu0 0.0
        %666 = vmatprep.subr.mxu0 0.0
        %667 = vmatpush1.xpose.msra.mxu0 0.0
        %668 = vmatprep.mubr.f32.mxu0 0.0
        %v669 = vand.u32 %v373, 4294901760
        %v670 = vsub.f32 %v373, %v669
        %v671 = vand.u32 %v670, 4294901760
        %672 = vmatmul.mubr.f32.gmra.mrb[0].mxu0 %v671
        %v673 = vpop.f32.mrb[0].mxu0
        %v674 = vadd.f32 %v600, %v673
        %v675 = vpop.f32.mrb[0].mxu0
        %676 = vdwg.mxu0
        %677 = vmatprep.subr.mxu0 0.0
        %v678 = vand.u32 %v375, 4294901760
        %v679 = vsub.f32 %v375, %v678
        %v680 = vand.u32 %v679, 4294901760
        %681 = vmatpush1.xpose.msra.mxu0 %v680
        %682 = vmatprep.subr.mxu0 0.0
        %683 = vmatpush1.xpose.msra.mxu0 0.0
        %684 = vmatprep.subr.mxu0 0.0
        %685 = vmatpush1.xpose.msra.mxu0 0.0
        %686 = vmatprep.subr.mxu0 0.0
        %687 = vmatpush1.xpose.msra.mxu0 0.0
        %688 = vmatprep.subr.mxu0 0.0
        %689 = vmatpush1.xpose.msra.mxu0 0.0
        %690 = vmatprep.subr.mxu0 0.0
        %691 = vmatpush1.xpose.msra.mxu0 0.0
        %692 = vmatprep.subr.mxu0 0.0
        %693 = vmatpush1.xpose.msra.mxu0 0.0
        %694 = vmatprep.subr.mxu0 0.0
        %695 = vmatpush1.xpose.msra.mxu0 0.0
        %696 = vmatprep.subr.mxu0 0.0
        %697 = vmatpush1.xpose.msra.mxu0 0.0
        %698 = vmatprep.subr.mxu0 0.0
        %699 = vmatpush1.xpose.msra.mxu0 0.0
        %700 = vmatprep.subr.mxu0 0.0
        %701 = vmatpush1.xpose.msra.mxu0 0.0
        %702 = vmatprep.subr.mxu0 0.0
        %703 = vmatpush1.xpose.msra.mxu0 0.0
        %704 = vmatprep.subr.mxu0 0.0
        %705 = vmatpush1.xpose.msra.mxu0 0.0
        %706 = vmatprep.subr.mxu0 0.0
        %707 = vmatpush1.xpose.msra.mxu0 0.0
        %708 = vmatprep.subr.mxu0 0.0
        %709 = vmatpush1.xpose.msra.mxu0 0.0
        %710 = vmatprep.subr.mxu0 0.0
        %711 = vmatpush1.xpose.msra.mxu0 0.0
        %712 = vmatprep.subr.mxu0 0.0
        %713 = vmatpush1.xpose.msra.mxu0 0.0
        %714 = vmatprep.subr.mxu0 0.0
        %715 = vmatpush1.xpose.msra.mxu0 0.0
        %716 = vmatprep.subr.mxu0 0.0
        %717 = vmatpush1.xpose.msra.mxu0 0.0
        %718 = vmatprep.subr.mxu0 0.0
        %719 = vmatpush1.xpose.msra.mxu0 0.0
        %720 = vmatprep.subr.mxu0 0.0
        %721 = vmatpush1.xpose.msra.mxu0 0.0
        %722 = vmatprep.subr.mxu0 0.0
        %723 = vmatpush1.xpose.msra.mxu0 0.0
        %724 = vmatprep.subr.mxu0 0.0
        %725 = vmatpush1.xpose.msra.mxu0 0.0
        %726 = vmatprep.subr.mxu0 0.0
        %727 = vmatpush1.xpose.msra.mxu0 0.0
        %728 = vmatprep.subr.mxu0 0.0
        %729 = vmatpush1.xpose.msra.mxu0 0.0
        %730 = vmatprep.subr.mxu0 0.0
        %731 = vmatpush1.xpose.msra.mxu0 0.0
        %732 = vmatprep.subr.mxu0 0.0
        %733 = vmatpush1.xpose.msra.mxu0 0.0
        %734 = vmatprep.subr.mxu0 0.0
        %735 = vmatpush1.xpose.msra.mxu0 0.0
        %736 = vmatprep.subr.mxu0 0.0
        %737 = vmatpush1.xpose.msra.mxu0 0.0
        %738 = vmatprep.subr.mxu0 0.0
        %739 = vmatpush1.xpose.msra.mxu0 0.0
        %740 = vmatprep.subr.mxu0 0.0
        %741 = vmatpush1.xpose.msra.mxu0 0.0
        %742 = vmatprep.subr.mxu0 0.0
        %743 = vmatpush1.xpose.msra.mxu0 0.0
        %744 = vmatprep.mubr.f32.mxu0 0.0
        %v745 = vand.u32 %v373, 4294901760
        %746 = vmatmul.mubr.f32.gmra.mrb[0].mxu0 %v745
        %v747 = vpop.f32.mrb[0].mxu0
        %v748 = vadd.f32 %v674, %v747
        %v749 = vpop.f32.mrb[0].mxu0
        %750 = vdwg.mxu0
        %751 = vmatprep.subr.mxu0 0.0
        %v752 = vand.u32 %v375, 4294901760
        %753 = vmatpush1.xpose.msra.mxu0 %v752
        %754 = vmatprep.subr.mxu0 0.0
        %755 = vmatpush1.xpose.msra.mxu0 0.0
        %756 = vmatprep.subr.mxu0 0.0
        %757 = vmatpush1.xpose.msra.mxu0 0.0
        %758 = vmatprep.subr.mxu0 0.0
        %759 = vmatpush1.xpose.msra.mxu0 0.0
        %760 = vmatprep.subr.mxu0 0.0
        %761 = vmatpush1.xpose.msra.mxu0 0.0
        %762 = vmatprep.subr.mxu0 0.0
        %763 = vmatpush1.xpose.msra.mxu0 0.0
        %764 = vmatprep.subr.mxu0 0.0
        %765 = vmatpush1.xpose.msra.mxu0 0.0
        %766 = vmatprep.subr.mxu0 0.0
        %767 = vmatpush1.xpose.msra.mxu0 0.0
        %768 = vmatprep.subr.mxu0 0.0
        %769 = vmatpush1.xpose.msra.mxu0 0.0
        %770 = vmatprep.subr.mxu0 0.0
        %771 = vmatpush1.xpose.msra.mxu0 0.0
        %772 = vmatprep.subr.mxu0 0.0
        %773 = vmatpush1.xpose.msra.mxu0 0.0
        %774 = vmatprep.subr.mxu0 0.0
        %775 = vmatpush1.xpose.msra.mxu0 0.0
        %776 = vmatprep.subr.mxu0 0.0
        %777 = vmatpush1.xpose.msra.mxu0 0.0
        %778 = vmatprep.subr.mxu0 0.0
        %779 = vmatpush1.xpose.msra.mxu0 0.0
        %780 = vmatprep.subr.mxu0 0.0
        %781 = vmatpush1.xpose.msra.mxu0 0.0
        %782 = vmatprep.subr.mxu0 0.0
        %783 = vmatpush1.xpose.msra.mxu0 0.0
        %784 = vmatprep.subr.mxu0 0.0
        %785 = vmatpush1.xpose.msra.mxu0 0.0
        %786 = vmatprep.subr.mxu0 0.0
        %787 = vmatpush1.xpose.msra.mxu0 0.0
        %788 = vmatprep.subr.mxu0 0.0
        %789 = vmatpush1.xpose.msra.mxu0 0.0
        %790 = vmatprep.subr.mxu0 0.0
        %791 = vmatpush1.xpose.msra.mxu0 0.0
        %792 = vmatprep.subr.mxu0 0.0
        %793 = vmatpush1.xpose.msra.mxu0 0.0
        %794 = vmatprep.subr.mxu0 0.0
        %795 = vmatpush1.xpose.msra.mxu0 0.0
        %796 = vmatprep.subr.mxu0 0.0
        %797 = vmatpush1.xpose.msra.mxu0 0.0
        %798 = vmatprep.subr.mxu0 0.0
        %799 = vmatpush1.xpose.msra.mxu0 0.0
        %800 = vmatprep.subr.mxu0 0.0
        %801 = vmatpush1.xpose.msra.mxu0 0.0
        %802 = vmatprep.subr.mxu0 0.0
        %803 = vmatpush1.xpose.msra.mxu0 0.0
        %804 = vmatprep.subr.mxu0 0.0
        %805 = vmatpush1.xpose.msra.mxu0 0.0
        %806 = vmatprep.subr.mxu0 0.0
        %807 = vmatpush1.xpose.msra.mxu0 0.0
        %808 = vmatprep.subr.mxu0 0.0
        %809 = vmatpush1.xpose.msra.mxu0 0.0
        %810 = vmatprep.subr.mxu0 0.0
        %811 = vmatpush1.xpose.msra.mxu0 0.0
        %812 = vmatprep.subr.mxu0 0.0
        %813 = vmatpush1.xpose.msra.mxu0 0.0
        %814 = vmatprep.subr.mxu0 0.0
        %815 = vmatpush1.xpose.msra.mxu0 0.0
        %816 = vmatprep.mubr.f32.mxu0 0.0
        %v817 = vand.u32 %v373, 4294901760
        %818 = vmatmul.mubr.f32.gmra.mrb[0].mxu0 %v817
        %v819 = vpop.f32.mrb[0].mxu0
        %v820 = vadd.f32 %v748, %v819
        %v821 = vpop.f32.mrb[0].mxu0
        %822 = vdwg.mxu0
        %v824 = vsel %vm371, %v368, 0
        %v826 = vsel %vm371, %v352, 0
        %828 = vmatprep.subr.mxu0 0.0
        %v829 = vand.u32 %v826, 4294901760
        %830 = vmatpush1.xpose.msra.mxu0 %v829
        %831 = vmatprep.subr.mxu0 0.0
        %832 = vmatpush1.xpose.msra.mxu0 0.0
        %833 = vmatprep.subr.mxu0 0.0
        %834 = vmatpush1.xpose.msra.mxu0 0.0
        %835 = vmatprep.subr.mxu0 0.0
        %836 = vmatpush1.xpose.msra.mxu0 0.0
        %837 = vmatprep.subr.mxu0 0.0
        %838 = vmatpush1.xpose.msra.mxu0 0.0
        %839 = vmatprep.subr.mxu0 0.0
        %840 = vmatpush1.xpose.msra.mxu0 0.0
        %841 = vmatprep.subr.mxu0 0.0
        %842 = vmatpush1.xpose.msra.mxu0 0.0
        %843 = vmatprep.subr.mxu0 0.0
        %844 = vmatpush1.xpose.msra.mxu0 0.0
        %845 = vmatprep.subr.mxu0 0.0
        %846 = vmatpush1.xpose.msra.mxu0 0.0
        %847 = vmatprep.subr.mxu0 0.0
        %848 = vmatpush1.xpose.msra.mxu0 0.0
        %849 = vmatprep.subr.mxu0 0.0
        %850 = vmatpush1.xpose.msra.mxu0 0.0
        %851 = vmatprep.subr.mxu0 0.0
        %852 = vmatpush1.xpose.msra.mxu0 0.0
        %853 = vmatprep.subr.mxu0 0.0
        %854 = vmatpush1.xpose.msra.mxu0 0.0
        %855 = vmatprep.subr.mxu0 0.0
        %856 = vmatpush1.xpose.msra.mxu0 0.0
        %857 = vmatprep.subr.mxu0 0.0
        %858 = vmatpush1.xpose.msra.mxu0 0.0
        %859 = vmatprep.subr.mxu0 0.0
        %860 = vmatpush1.xpose.msra.mxu0 0.0
        %861 = vmatprep.subr.mxu0 0.0
        %862 = vmatpush1.xpose.msra.mxu0 0.0
        %863 = vmatprep.subr.mxu0 0.0
        %864 = vmatpush1.xpose.msra.mxu0 0.0
        %865 = vmatprep.subr.mxu0 0.0
        %866 = vmatpush1.xpose.msra.mxu0 0.0
        %867 = vmatprep.subr.mxu0 0.0
        %868 = vmatpush1.xpose.msra.mxu0 0.0
        %869 = vmatprep.subr.mxu0 0.0
        %870 = vmatpush1.xpose.msra.mxu0 0.0
        %871 = vmatprep.subr.mxu0 0.0
        %872 = vmatpush1.xpose.msra.mxu0 0.0
        %873 = vmatprep.subr.mxu0 0.0
        %874 = vmatpush1.xpose.msra.mxu0 0.0
        %875 = vmatprep.subr.mxu0 0.0
        %876 = vmatpush1.xpose.msra.mxu0 0.0
        %877 = vmatprep.subr.mxu0 0.0
        %878 = vmatpush1.xpose.msra.mxu0 0.0
        %879 = vmatprep.subr.mxu0 0.0
        %880 = vmatpush1.xpose.msra.mxu0 0.0
        %881 = vmatprep.subr.mxu0 0.0
        %882 = vmatpush1.xpose.msra.mxu0 0.0
        %883 = vmatprep.subr.mxu0 0.0
        %884 = vmatpush1.xpose.msra.mxu0 0.0
        %885 = vmatprep.subr.mxu0 0.0
        %886 = vmatpush1.xpose.msra.mxu0 0.0
        %887 = vmatprep.subr.mxu0 0.0
        %888 = vmatpush1.xpose.msra.mxu0 0.0
        %889 = vmatprep.subr.mxu0 0.0
        %890 = vmatpush1.xpose.msra.mxu0 0.0
        %891 = vmatprep.subr.mxu0 0.0
        %892 = vmatpush1.xpose.msra.mxu0 0.0
        %893 = vmatprep.mubr.f32.mxu0 0.0
        %v894 = vand.u32 %v824, 4294901760
        %v895 = vsub.f32 %v824, %v894
        %v896 = vand.u32 %v895, 4294901760
        %v897 = vsub.f32 %v895, %v896
        %v898 = vand.u32 %v897, 4294901760
        %899 = vmatmul.mubr.f32.gmra.mrb[0].mxu0 %v898
        %v900 = vpop.f32.mrb[0].mxu0
        %v901 = vadd.f32 0.0, %v900
        %v902 = vpop.f32.mrb[0].mxu0
        %903 = vdwg.mxu0
        %904 = vmatprep.subr.mxu0 0.0
        %v905 = vand.u32 %v826, 4294901760
        %v906 = vsub.f32 %v826, %v905
        %v907 = vand.u32 %v906, 4294901760
        %v908 = vsub.f32 %v906, %v907
        %v909 = vand.u32 %v908, 4294901760
        %910 = vmatpush1.xpose.msra.mxu0 %v909
        %911 = vmatprep.subr.mxu0 0.0
        %912 = vmatpush1.xpose.msra.mxu0 0.0
        %913 = vmatprep.subr.mxu0 0.0
        %914 = vmatpush1.xpose.msra.mxu0 0.0
        %915 = vmatprep.subr.mxu0 0.0
        %916 = vmatpush1.xpose.msra.mxu0 0.0
        %917 = vmatprep.subr.mxu0 0.0
        %918 = vmatpush1.xpose.msra.mxu0 0.0
        %919 = vmatprep.subr.mxu0 0.0
        %920 = vmatpush1.xpose.msra.mxu0 0.0
        %921 = vmatprep.subr.mxu0 0.0
        %922 = vmatpush1.xpose.msra.mxu0 0.0
        %923 = vmatprep.subr.mxu0 0.0
        %924 = vmatpush1.xpose.msra.mxu0 0.0
        %925 = vmatprep.subr.mxu0 0.0
        %926 = vmatpush1.xpose.msra.mxu0 0.0
        %927 = vmatprep.subr.mxu0 0.0
        %928 = vmatpush1.xpose.msra.mxu0 0.0
        %929 = vmatprep.subr.mxu0 0.0
        %930 = vmatpush1.xpose.msra.mxu0 0.0
        %931 = vmatprep.subr.mxu0 0.0
        %932 = vmatpush1.xpose.msra.mxu0 0.0
        %933 = vmatprep.subr.mxu0 0.0
        %934 = vmatpush1.xpose.msra.mxu0 0.0
        %935 = vmatprep.subr.mxu0 0.0
        %936 = vmatpush1.xpose.msra.mxu0 0.0
        %937 = vmatprep.subr.mxu0 0.0
        %938 = vmatpush1.xpose.msra.mxu0 0.0
        %939 = vmatprep.subr.mxu0 0.0
        %940 = vmatpush1.xpose.msra.mxu0 0.0
        %941 = vmatprep.subr.mxu0 0.0
        %942 = vmatpush1.xpose.msra.mxu0 0.0
        %943 = vmatprep.subr.mxu0 0.0
        %944 = vmatpush1.xpose.msra.mxu0 0.0
        %945 = vmatprep.subr.mxu0 0.0
        %946 = vmatpush1.xpose.msra.mxu0 0.0
        %947 = vmatprep.subr.mxu0 0.0
        %948 = vmatpush1.xpose.msra.mxu0 0.0
        %949 = vmatprep.subr.mxu0 0.0
        %950 = vmatpush1.xpose.msra.mxu0 0.0
        %951 = vmatprep.subr.mxu0 0.0
        %952 = vmatpush1.xpose.msra.mxu0 0.0
        %953 = vmatprep.subr.mxu0 0.0
        %954 = vmatpush1.xpose.msra.mxu0 0.0
        %955 = vmatprep.subr.mxu0 0.0
        %956 = vmatpush1.xpose.msra.mxu0 0.0
        %957 = vmatprep.subr.mxu0 0.0
        %958 = vmatpush1.xpose.msra.mxu0 0.0
        %959 = vmatprep.subr.mxu0 0.0
        %960 = vmatpush1.xpose.msra.mxu0 0.0
        %961 = vmatprep.subr.mxu0 0.0
        %962 = vmatpush1.xpose.msra.mxu0 0.0
        %963 = vmatprep.subr.mxu0 0.0
        %964 = vmatpush1.xpose.msra.mxu0 0.0
        %965 = vmatprep.subr.mxu0 0.0
        %966 = vmatpush1.xpose.msra.mxu0 0.0
        %967 = vmatprep.subr.mxu0 0.0
        %968 = vmatpush1.xpose.msra.mxu0 0.0
        %969 = vmatprep.subr.mxu0 0.0
        %970 = vmatpush1.xpose.msra.mxu0 0.0
        %971 = vmatprep.subr.mxu0 0.0
        %972 = vmatpush1.xpose.msra.mxu0 0.0
        %973 = vmatprep.mubr.f32.mxu0 0.0
        %v974 = vand.u32 %v824, 4294901760
        %975 = vmatmul.mubr.f32.gmra.mrb[0].mxu0 %v974
        %v976 = vpop.f32.mrb[0].mxu0
        %v977 = vadd.f32 %v901, %v976
        %v978 = vpop.f32.mrb[0].mxu0
        %979 = vdwg.mxu0
        %980 = vmatprep.subr.mxu0 0.0
        %v981 = vand.u32 %v826, 4294901760
        %v982 = vsub.f32 %v826, %v981
        %983 = vmatpush1.xpose.msra.mxu0 %v982
        %984 = vmatprep.subr.mxu0 0.0
        %985 = vmatpush1.xpose.msra.mxu0 0.0
        %986 = vmatprep.subr.mxu0 0.0
        %987 = vmatpush1.xpose.msra.mxu0 0.0
        %988 = vmatprep.subr.mxu0 0.0
        %989 = vmatpush1.xpose.msra.mxu0 0.0
        %990 = vmatprep.subr.mxu0 0.0
        %991 = vmatpush1.xpose.msra.mxu0 0.0
        %992 = vmatprep.subr.mxu0 0.0
        %993 = vmatpush1.xpose.msra.mxu0 0.0
        %994 = vmatprep.subr.mxu0 0.0
        %995 = vmatpush1.xpose.msra.mxu0 0.0
        %996 = vmatprep.subr.mxu0 0.0
        %997 = vmatpush1.xpose.msra.mxu0 0.0
        %998 = vmatprep.subr.mxu0 0.0
        %999 = vmatpush1.xpose.msra.mxu0 0.0
        %1000 = vmatprep.subr.mxu0 0.0
        %1001 = vmatpush1.xpose.msra.mxu0 0.0
        %1002 = vmatprep.subr.mxu0 0.0
        %1003 = vmatpush1.xpose.msra.mxu0 0.0
        %1004 = vmatprep.subr.mxu0 0.0
        %1005 = vmatpush1.xpose.msra.mxu0 0.0
        %1006 = vmatprep.subr.mxu0 0.0
        %1007 = vmatpush1.xpose.msra.mxu0 0.0
        %1008 = vmatprep.subr.mxu0 0.0
        %1009 = vmatpush1.xpose.msra.mxu0 0.0
        %1010 = vmatprep.subr.mxu0 0.0
        %1011 = vmatpush1.xpose.msra.mxu0 0.0
        %1012 = vmatprep.subr.mxu0 0.0
        %1013 = vmatpush1.xpose.msra.mxu0 0.0
        %1014 = vmatprep.subr.mxu0 0.0
        %1015 = vmatpush1.xpose.msra.mxu0 0.0
        %1016 = vmatprep.subr.mxu0 0.0
        %1017 = vmatpush1.xpose.msra.mxu0 0.0
        %1018 = vmatprep.subr.mxu0 0.0
        %1019 = vmatpush1.xpose.msra.mxu0 0.0
        %1020 = vmatprep.subr.mxu0 0.0
        %1021 = vmatpush1.xpose.msra.mxu0 0.0
        %1022 = vmatprep.subr.mxu0 0.0
        %1023 = vmatpush1.xpose.msra.mxu0 0.0
        %1024 = vmatprep.subr.mxu0 0.0
        %1025 = vmatpush1.xpose.msra.mxu0 0.0
        %1026 = vmatprep.subr.mxu0 0.0
        %1027 = vmatpush1.xpose.msra.mxu0 0.0
        %1028 = vmatprep.subr.mxu0 0.0
        %1029 = vmatpush1.xpose.msra.mxu0 0.0
        %1030 = vmatprep.subr.mxu0 0.0
        %1031 = vmatpush1.xpose.msra.mxu0 0.0
        %1032 = vmatprep.subr.mxu0 0.0
        %1033 = vmatpush1.xpose.msra.mxu0 0.0
        %1034 = vmatprep.subr.mxu0 0.0
        %1035 = vmatpush1.xpose.msra.mxu0 0.0
        %1036 = vmatprep.subr.mxu0 0.0
        %1037 = vmatpush1.xpose.msra.mxu0 0.0
        %1038 = vmatprep.subr.mxu0 0.0
        %1039 = vmatpush1.xpose.msra.mxu0 0.0
        %1040 = vmatprep.subr.mxu0 0.0
        %1041 = vmatpush1.xpose.msra.mxu0 0.0
        %1042 = vmatprep.subr.mxu0 0.0
        %1043 = vmatpush1.xpose.msra.mxu0 0.0
        %1044 = vmatprep.subr.mxu0 0.0
        %1045 = vmatpush1.xpose.msra.mxu0 0.0
        %1046 = vmatprep.mubr.f32.mxu0 0.0
        %v1047 = vand.u32 %v824, 4294901760
        %v1048 = vsub.f32 %v824, %v1047
        %1049 = vmatmul.mubr.f32.gmra.mrb[0].mxu0 %v1048
        %v1050 = vpop.f32.mrb[0].mxu0
        %v1051 = vadd.f32 %v977, %v1050
        %v1052 = vpop.f32.mrb[0].mxu0
        %1053 = vdwg.mxu0
        %1054 = vmatprep.subr.mxu0 0.0
        %v1055 = vand.u32 %v826, 4294901760
        %1056 = vmatpush1.xpose.msra.mxu0 %v1055
        %1057 = vmatprep.subr.mxu0 0.0
        %1058 = vmatpush1.xpose.msra.mxu0 0.0
        %1059 = vmatprep.subr.mxu0 0.0
        %1060 = vmatpush1.xpose.msra.mxu0 0.0
        %1061 = vmatprep.subr.mxu0 0.0
        %1062 = vmatpush1.xpose.msra.mxu0 0.0
        %1063 = vmatprep.subr.mxu0 0.0
        %1064 = vmatpush1.xpose.msra.mxu0 0.0
        %1065 = vmatprep.subr.mxu0 0.0
        %1066 = vmatpush1.xpose.msra.mxu0 0.0
        %1067 = vmatprep.subr.mxu0 0.0
        %1068 = vmatpush1.xpose.msra.mxu0 0.0
        %1069 = vmatprep.subr.mxu0 0.0
        %1070 = vmatpush1.xpose.msra.mxu0 0.0
        %1071 = vmatprep.subr.mxu0 0.0
        %1072 = vmatpush1.xpose.msra.mxu0 0.0
        %1073 = vmatprep.subr.mxu0 0.0
        %1074 = vmatpush1.xpose.msra.mxu0 0.0
        %1075 = vmatprep.subr.mxu0 0.0
        %1076 = vmatpush1.xpose.msra.mxu0 0.0
        %1077 = vmatprep.subr.mxu0 0.0
        %1078 = vmatpush1.xpose.msra.mxu0 0.0
        %1079 = vmatprep.subr.mxu0 0.0
        %1080 = vmatpush1.xpose.msra.mxu0 0.0
        %1081 = vmatprep.subr.mxu0 0.0
        %1082 = vmatpush1.xpose.msra.mxu0 0.0
        %1083 = vmatprep.subr.mxu0 0.0
        %1084 = vmatpush1.xpose.msra.mxu0 0.0
        %1085 = vmatprep.subr.mxu0 0.0
        %1086 = vmatpush1.xpose.msra.mxu0 0.0
        %1087 = vmatprep.subr.mxu0 0.0
        %1088 = vmatpush1.xpose.msra.mxu0 0.0
        %1089 = vmatprep.subr.mxu0 0.0
        %1090 = vmatpush1.xpose.msra.mxu0 0.0
        %1091 = vmatprep.subr.mxu0 0.0
        %1092 = vmatpush1.xpose.msra.mxu0 0.0
        %1093 = vmatprep.subr.mxu0 0.0
        %1094 = vmatpush1.xpose.msra.mxu0 0.0
        %1095 = vmatprep.subr.mxu0 0.0
        %1096 = vmatpush1.xpose.msra.mxu0 0.0
        %1097 = vmatprep.subr.mxu0 0.0
        %1098 = vmatpush1.xpose.msra.mxu0 0.0
        %1099 = vmatprep.subr.mxu0 0.0
        %1100 = vmatpush1.xpose.msra.mxu0 0.0
        %1101 = vmatprep.subr.mxu0 0.0
        %1102 = vmatpush1.xpose.msra.mxu0 0.0
        %1103 = vmatprep.subr.mxu0 0.0
        %1104 = vmatpush1.xpose.msra.mxu0 0.0
        %1105 = vmatprep.subr.mxu0 0.0
        %1106 = vmatpush1.xpose.msra.mxu0 0.0
        %1107 = vmatprep.subr.mxu0 0.0
        %1108 = vmatpush1.xpose.msra.mxu0 0.0
        %1109 = vmatprep.subr.mxu0 0.0
        %1110 = vmatpush1.xpose.msra.mxu0 0.0
        %1111 = vmatprep.subr.mxu0 0.0
        %1112 = vmatpush1.xpose.msra.mxu0 0.0
        %1113 = vmatprep.subr.mxu0 0.0
        %1114 = vmatpush1.xpose.msra.mxu0 0.0
        %1115 = vmatprep.subr.mxu0 0.0
        %1116 = vmatpush1.xpose.msra.mxu0 0.0
        %1117 = vmatprep.subr.mxu0 0.0
        %1118 = vmatpush1.xpose.msra.mxu0 0.0
        %1119 = vmatprep.mubr.f32.mxu0 0.0
        %v1120 = vand.u32 %v824, 4294901760
        %v1121 = vsub.f32 %v824, %v1120
        %v1122 = vand.u32 %v1121, 4294901760
        %1123 = vmatmul.mubr.f32.gmra.mrb[0].mxu0 %v1122
        %v1124 = vpop.f32.mrb[0].mxu0
        %v1125 = vadd.f32 %v1051, %v1124
        %v1126 = vpop.f32.mrb[0].mxu0
        %1127 = vdwg.mxu0
        %1128 = vmatprep.subr.mxu0 0.0
        %v1129 = vand.u32 %v826, 4294901760
        %v1130 = vsub.f32 %v826, %v1129
        %v1131 = vand.u32 %v1130, 4294901760
        %1132 = vmatpush1.xpose.msra.mxu0 %v1131
        %1133 = vmatprep.subr.mxu0 0.0
        %1134 = vmatpush1.xpose.msra.mxu0 0.0
        %1135 = vmatprep.subr.mxu0 0.0
        %1136 = vmatpush1.xpose.msra.mxu0 0.0
        %1137 = vmatprep.subr.mxu0 0.0
        %1138 = vmatpush1.xpose.msra.mxu0 0.0
        %1139 = vmatprep.subr.mxu0 0.0
        %1140 = vmatpush1.xpose.msra.mxu0 0.0
        %1141 = vmatprep.subr.mxu0 0.0
        %1142 = vmatpush1.xpose.msra.mxu0 0.0
        %1143 = vmatprep.subr.mxu0 0.0
        %1144 = vmatpush1.xpose.msra.mxu0 0.0
        %1145 = vmatprep.subr.mxu0 0.0
        %1146 = vmatpush1.xpose.msra.mxu0 0.0
        %1147 = vmatprep.subr.mxu0 0.0
        %1148 = vmatpush1.xpose.msra.mxu0 0.0
        %1149 = vmatprep.subr.mxu0 0.0
        %1150 = vmatpush1.xpose.msra.mxu0 0.0
        %1151 = vmatprep.subr.mxu0 0.0
        %1152 = vmatpush1.xpose.msra.mxu0 0.0
        %1153 = vmatprep.subr.mxu0 0.0
        %1154 = vmatpush1.xpose.msra.mxu0 0.0
        %1155 = vmatprep.subr.mxu0 0.0
        %1156 = vmatpush1.xpose.msra.mxu0 0.0
        %1157 = vmatprep.subr.mxu0 0.0
        %1158 = vmatpush1.xpose.msra.mxu0 0.0
        %1159 = vmatprep.subr.mxu0 0.0
        %1160 = vmatpush1.xpose.msra.mxu0 0.0
        %1161 = vmatprep.subr.mxu0 0.0
        %1162 = vmatpush1.xpose.msra.mxu0 0.0
        %1163 = vmatprep.subr.mxu0 0.0
        %1164 = vmatpush1.xpose.msra.mxu0 0.0
        %1165 = vmatprep.subr.mxu0 0.0
        %1166 = vmatpush1.xpose.msra.mxu0 0.0
        %1167 = vmatprep.subr.mxu0 0.0
        %1168 = vmatpush1.xpose.msra.mxu0 0.0
        %1169 = vmatprep.subr.mxu0 0.0
        %1170 = vmatpush1.xpose.msra.mxu0 0.0
        %1171 = vmatprep.subr.mxu0 0.0
        %1172 = vmatpush1.xpose.msra.mxu0 0.0
        %1173 = vmatprep.subr.mxu0 0.0
        %1174 = vmatpush1.xpose.msra.mxu0 0.0
        %1175 = vmatprep.subr.mxu0 0.0
        %1176 = vmatpush1.xpose.msra.mxu0 0.0
        %1177 = vmatprep.subr.mxu0 0.0
        %1178 = vmatpush1.xpose.msra.mxu0 0.0
        %1179 = vmatprep.subr.mxu0 0.0
        %1180 = vmatpush1.xpose.msra.mxu0 0.0
        %1181 = vmatprep.subr.mxu0 0.0
        %1182 = vmatpush1.xpose.msra.mxu0 0.0
        %1183 = vmatprep.subr.mxu0 0.0
        %1184 = vmatpush1.xpose.msra.mxu0 0.0
        %1185 = vmatprep.subr.mxu0 0.0
        %1186 = vmatpush1.xpose.msra.mxu0 0.0
        %1187 = vmatprep.subr.mxu0 0.0
        %1188 = vmatpush1.xpose.msra.mxu0 0.0
        %1189 = vmatprep.subr.mxu0 0.0
        %1190 = vmatpush1.xpose.msra.mxu0 0.0
        %1191 = vmatprep.subr.mxu0 0.0
        %1192 = vmatpush1.xpose.msra.mxu0 0.0
        %1193 = vmatprep.subr.mxu0 0.0
        %1194 = vmatpush1.xpose.msra.mxu0 0.0
        %1195 = vmatprep.mubr.f32.mxu0 0.0
        %v1196 = vand.u32 %v824, 4294901760
        %1197 = vmatmul.mubr.f32.gmra.mrb[0].mxu0 %v1196
        %v1198 = vpop.f32.mrb[0].mxu0
        %v1199 = vadd.f32 %v1125, %v1198
        %v1200 = vpop.f32.mrb[0].mxu0
        %1201 = vdwg.mxu0
        %1202 = vmatprep.subr.mxu0 0.0
        %v1203 = vand.u32 %v826, 4294901760
        %1204 = vmatpush1.xpose.msra.mxu0 %v1203
        %1205 = vmatprep.subr.mxu0 0.0
        %1206 = vmatpush1.xpose.msra.mxu0 0.0
        %1207 = vmatprep.subr.mxu0 0.0
        %1208 = vmatpush1.xpose.msra.mxu0 0.0
        %1209 = vmatprep.subr.mxu0 0.0
        %1210 = vmatpush1.xpose.msra.mxu0 0.0
        %1211 = vmatprep.subr.mxu0 0.0
        %1212 = vmatpush1.xpose.msra.mxu0 0.0
        %1213 = vmatprep.subr.mxu0 0.0
        %1214 = vmatpush1.xpose.msra.mxu0 0.0
        %1215 = vmatprep.subr.mxu0 0.0
        %1216 = vmatpush1.xpose.msra.mxu0 0.0
        %1217 = vmatprep.subr.mxu0 0.0
        %1218 = vmatpush1.xpose.msra.mxu0 0.0
        %1219 = vmatprep.subr.mxu0 0.0
        %1220 = vmatpush1.xpose.msra.mxu0 0.0
        %1221 = vmatprep.subr.mxu0 0.0
        %1222 = vmatpush1.xpose.msra.mxu0 0.0
        %1223 = vmatprep.subr.mxu0 0.0
        %1224 = vmatpush1.xpose.msra.mxu0 0.0
        %1225 = vmatprep.subr.mxu0 0.0
        %1226 = vmatpush1.xpose.msra.mxu0 0.0
        %1227 = vmatprep.subr.mxu0 0.0
        %1228 = vmatpush1.xpose.msra.mxu0 0.0
        %1229 = vmatprep.subr.mxu0 0.0
        %1230 = vmatpush1.xpose.msra.mxu0 0.0
        %1231 = vmatprep.subr.mxu0 0.0
        %1232 = vmatpush1.xpose.msra.mxu0 0.0
        %1233 = vmatprep.subr.mxu0 0.0
        %1234 = vmatpush1.xpose.msra.mxu0 0.0
        %1235 = vmatprep.subr.mxu0 0.0
        %1236 = vmatpush1.xpose.msra.mxu0 0.0
        %1237 = vmatprep.subr.mxu0 0.0
        %1238 = vmatpush1.xpose.msra.mxu0 0.0
        %1239 = vmatprep.subr.mxu0 0.0
        %1240 = vmatpush1.xpose.msra.mxu0 0.0
        %1241 = vmatprep.subr.mxu0 0.0
        %1242 = vmatpush1.xpose.msra.mxu0 0.0
        %1243 = vmatprep.subr.mxu0 0.0
        %1244 = vmatpush1.xpose.msra.mxu0 0.0
        %1245 = vmatprep.subr.mxu0 0.0
        %1246 = vmatpush1.xpose.msra.mxu0 0.0
        %1247 = vmatprep.subr.mxu0 0.0
        %1248 = vmatpush1.xpose.msra.mxu0 0.0
        %1249 = vmatprep.subr.mxu0 0.0
        %1250 = vmatpush1.xpose.msra.mxu0 0.0
        %1251 = vmatprep.subr.mxu0 0.0
        %1252 = vmatpush1.xpose.msra.mxu0 0.0
        %1253 = vmatprep.subr.mxu0 0.0
        %1254 = vmatpush1.xpose.msra.mxu0 0.0
        %1255 = vmatprep.subr.mxu0 0.0
        %1256 = vmatpush1.xpose.msra.mxu0 0.0
        %1257 = vmatprep.subr.mxu0 0.0
        %1258 = vmatpush1.xpose.msra.mxu0 0.0
        %1259 = vmatprep.subr.mxu0 0.0
        %1260 = vmatpush1.xpose.msra.mxu0 0.0
        %1261 = vmatprep.subr.mxu0 0.0
        %1262 = vmatpush1.xpose.msra.mxu0 0.0
        %1263 = vmatprep.subr.mxu0 0.0
        %1264 = vmatpush1.xpose.msra.mxu0 0.0
        %1265 = vmatprep.subr.mxu0 0.0
        %1266 = vmatpush1.xpose.msra.mxu0 0.0
        %1267 = vmatprep.mubr.f32.mxu0 0.0
        %v1268 = vand.u32 %v824, 4294901760
        %1269 = vmatmul.mubr.f32.gmra.mrb[0].mxu0 %v1268
        %v1270 = vpop.f32.mrb[0].mxu0
        %v1271 = vadd.f32 %v1199, %v1270
        %v1272 = vpop.f32.mrb[0].mxu0
        %1273 = vdwg.mxu0
        %v1275 = vsel %vm371, %v369, 0
        %v1277 = vsel %vm371, %v354, 0
        %1279 = vmatprep.subr.mxu0 0.0
        %v1280 = vand.u32 %v1277, 4294901760
        %1281 = vmatpush1.xpose.msra.mxu0 %v1280
        %1282 = vmatprep.subr.mxu0 0.0
        %1283 = vmatpush1.xpose.msra.mxu0 0.0
        %1284 = vmatprep.subr.mxu0 0.0
        %1285 = vmatpush1.xpose.msra.mxu0 0.0
        %1286 = vmatprep.subr.mxu0 0.0
        %1287 = vmatpush1.xpose.msra.mxu0 0.0
        %1288 = vmatprep.subr.mxu0 0.0
        %1289 = vmatpush1.xpose.msra.mxu0 0.0
        %1290 = vmatprep.subr.mxu0 0.0
        %1291 = vmatpush1.xpose.msra.mxu0 0.0
        %1292 = vmatprep.subr.mxu0 0.0
        %1293 = vmatpush1.xpose.msra.mxu0 0.0
        %1294 = vmatprep.subr.mxu0 0.0
        %1295 = vmatpush1.xpose.msra.mxu0 0.0
        %1296 = vmatprep.subr.mxu0 0.0
        %1297 = vmatpush1.xpose.msra.mxu0 0.0
        %1298 = vmatprep.subr.mxu0 0.0
        %1299 = vmatpush1.xpose.msra.mxu0 0.0
        %1300 = vmatprep.subr.mxu0 0.0
        %1301 = vmatpush1.xpose.msra.mxu0 0.0
        %1302 = vmatprep.subr.mxu0 0.0
        %1303 = vmatpush1.xpose.msra.mxu0 0.0
        %1304 = vmatprep.subr.mxu0 0.0
        %1305 = vmatpush1.xpose.msra.mxu0 0.0
        %1306 = vmatprep.subr.mxu0 0.0
        %1307 = vmatpush1.xpose.msra.mxu0 0.0
        %1308 = vmatprep.subr.mxu0 0.0
        %1309 = vmatpush1.xpose.msra.mxu0 0.0
        %1310 = vmatprep.subr.mxu0 0.0
        %1311 = vmatpush1.xpose.msra.mxu0 0.0
        %1312 = vmatprep.subr.mxu0 0.0
        %1313 = vmatpush1.xpose.msra.mxu0 0.0
        %1314 = vmatprep.subr.mxu0 0.0
        %1315 = vmatpush1.xpose.msra.mxu0 0.0
        %1316 = vmatprep.subr.mxu0 0.0
        %1317 = vmatpush1.xpose.msra.mxu0 0.0
        %1318 = vmatprep.subr.mxu0 0.0
        %1319 = vmatpush1.xpose.msra.mxu0 0.0
        %1320 = vmatprep.subr.mxu0 0.0
        %1321 = vmatpush1.xpose.msra.mxu0 0.0
        %1322 = vmatprep.subr.mxu0 0.0
        %1323 = vmatpush1.xpose.msra.mxu0 0.0
        %1324 = vmatprep.subr.mxu0 0.0
        %1325 = vmatpush1.xpose.msra.mxu0 0.0
        %1326 = vmatprep.subr.mxu0 0.0
        %1327 = vmatpush1.xpose.msra.mxu0 0.0
        %1328 = vmatprep.subr.mxu0 0.0
        %1329 = vmatpush1.xpose.msra.mxu0 0.0
        %1330 = vmatprep.subr.mxu0 0.0
        %1331 = vmatpush1.xpose.msra.mxu0 0.0
        %1332 = vmatprep.subr.mxu0 0.0
        %1333 = vmatpush1.xpose.msra.mxu0 0.0
        %1334 = vmatprep.subr.mxu0 0.0
        %1335 = vmatpush1.xpose.msra.mxu0 0.0
        %1336 = vmatprep.subr.mxu0 0.0
        %1337 = vmatpush1.xpose.msra.mxu0 0.0
        %1338 = vmatprep.subr.mxu0 0.0
        %1339 = vmatpush1.xpose.msra.mxu0 0.0
        %1340 = vmatprep.subr.mxu0 0.0
        %1341 = vmatpush1.xpose.msra.mxu0 0.0
        %1342 = vmatprep.subr.mxu0 0.0
        %1343 = vmatpush1.xpose.msra.mxu0 0.0
        %1344 = vmatprep.mubr.f32.mxu0 0.0
        %v1345 = vand.u32 %v1275, 4294901760
        %v1346 = vsub.f32 %v1275, %v1345
        %v1347 = vand.u32 %v1346, 4294901760
        %v1348 = vsub.f32 %v1346, %v1347
        %v1349 = vand.u32 %v1348, 4294901760
        %1350 = vmatmul.mubr.f32.gmra.mrb[0].mxu0 %v1349
        %v1351 = vpop.f32.mrb[0].mxu0
        %v1352 = vadd.f32 0.0, %v1351
        %v1353 = vpop.f32.mrb[0].mxu0
        %1354 = vdwg.mxu0
        %1355 = vmatprep.subr.mxu0 0.0
        %v1356 = vand.u32 %v1277, 4294901760
        %v1357 = vsub.f32 %v1277, %v1356
        %v1358 = vand.u32 %v1357, 4294901760
        %v1359 = vsub.f32 %v1357, %v1358
        %v1360 = vand.u32 %v1359, 4294901760
        %1361 = vmatpush1.xpose.msra.mxu0 %v1360
        %1362 = vmatprep.subr.mxu0 0.0
        %1363 = vmatpush1.xpose.msra.mxu0 0.0
        %1364 = vmatprep.subr.mxu0 0.0
        %1365 = vmatpush1.xpose.msra.mxu0 0.0
        %1366 = vmatprep.subr.mxu0 0.0
        %1367 = vmatpush1.xpose.msra.mxu0 0.0
        %1368 = vmatprep.subr.mxu0 0.0
        %1369 = vmatpush1.xpose.msra.mxu0 0.0
        %1370 = vmatprep.subr.mxu0 0.0
        %1371 = vmatpush1.xpose.msra.mxu0 0.0
        %1372 = vmatprep.subr.mxu0 0.0
        %1373 = vmatpush1.xpose.msra.mxu0 0.0
        %1374 = vmatprep.subr.mxu0 0.0
        %1375 = vmatpush1.xpose.msra.mxu0 0.0
        %1376 = vmatprep.subr.mxu0 0.0
        %1377 = vmatpush1.xpose.msra.mxu0 0.0
        %1378 = vmatprep.subr.mxu0 0.0
        %1379 = vmatpush1.xpose.msra.mxu0 0.0
        %1380 = vmatprep.subr.mxu0 0.0
        %1381 = vmatpush1.xpose.msra.mxu0 0.0
        %1382 = vmatprep.subr.mxu0 0.0
        %1383 = vmatpush1.xpose.msra.mxu0 0.0
        %1384 = vmatprep.subr.mxu0 0.0
        %1385 = vmatpush1.xpose.msra.mxu0 0.0
        %1386 = vmatprep.subr.mxu0 0.0
        %1387 = vmatpush1.xpose.msra.mxu0 0.0
        %1388 = vmatprep.subr.mxu0 0.0
        %1389 = vmatpush1.xpose.msra.mxu0 0.0
        %1390 = vmatprep.subr.mxu0 0.0
        %1391 = vmatpush1.xpose.msra.mxu0 0.0
        %1392 = vmatprep.subr.mxu0 0.0
        %1393 = vmatpush1.xpose.msra.mxu0 0.0
        %1394 = vmatprep.subr.mxu0 0.0
        %1395 = vmatpush1.xpose.msra.mxu0 0.0
        %1396 = vmatprep.subr.mxu0 0.0
        %1397 = vmatpush1.xpose.msra.mxu0 0.0
        %1398 = vmatprep.subr.mxu0 0.0
        %1399 = vmatpush1.xpose.msra.mxu0 0.0
        %1400 = vmatprep.subr.mxu0 0.0
        %1401 = vmatpush1.xpose.msra.mxu0 0.0
        %1402 = vmatprep.subr.mxu0 0.0
        %1403 = vmatpush1.xpose.msra.mxu0 0.0
        %1404 = vmatprep.subr.mxu0 0.0
        %1405 = vmatpush1.xpose.msra.mxu0 0.0
        %1406 = vmatprep.subr.mxu0 0.0
        %1407 = vmatpush1.xpose.msra.mxu0 0.0
        %1408 = vmatprep.subr.mxu0 0.0
        %1409 = vmatpush1.xpose.msra.mxu0 0.0
        %1410 = vmatprep.subr.mxu0 0.0
        %1411 = vmatpush1.xpose.msra.mxu0 0.0
        %1412 = vmatprep.subr.mxu0 0.0
        %1413 = vmatpush1.xpose.msra.mxu0 0.0
        %1414 = vmatprep.subr.mxu0 0.0
        %1415 = vmatpush1.xpose.msra.mxu0 0.0
        %1416 = vmatprep.subr.mxu0 0.0
        %1417 = vmatpush1.xpose.msra.mxu0 0.0
        %1418 = vmatprep.subr.mxu0 0.0
        %1419 = vmatpush1.xpose.msra.mxu0 0.0
        %1420 = vmatprep.subr.mxu0 0.0
        %1421 = vmatpush1.xpose.msra.mxu0 0.0
        %1422 = vmatprep.subr.mxu0 0.0
        %1423 = vmatpush1.xpose.msra.mxu0 0.0
        %1424 = vmatprep.mubr.f32.mxu0 0.0
        %v1425 = vand.u32 %v1275, 4294901760
        %1426 = vmatmul.mubr.f32.gmra.mrb[0].mxu0 %v1425
        %v1427 = vpop.f32.mrb[0].mxu0
        %v1428 = vadd.f32 %v1352, %v1427
        %v1429 = vpop.f32.mrb[0].mxu0
        %1430 = vdwg.mxu0
        %1431 = vmatprep.subr.mxu0 0.0
        %v1432 = vand.u32 %v1277, 4294901760
        %v1433 = vsub.f32 %v1277, %v1432
        %1434 = vmatpush1.xpose.msra.mxu0 %v1433
        %1435 = vmatprep.subr.mxu0 0.0
        %1436 = vmatpush1.xpose.msra.mxu0 0.0
        %1437 = vmatprep.subr.mxu0 0.0
        %1438 = vmatpush1.xpose.msra.mxu0 0.0
        %1439 = vmatprep.subr.mxu0 0.0
        %1440 = vmatpush1.xpose.msra.mxu0 0.0
        %1441 = vmatprep.subr.mxu0 0.0
        %1442 = vmatpush1.xpose.msra.mxu0 0.0
        %1443 = vmatprep.subr.mxu0 0.0
        %1444 = vmatpush1.xpose.msra.mxu0 0.0
        %1445 = vmatprep.subr.mxu0 0.0
        %1446 = vmatpush1.xpose.msra.mxu0 0.0
        %1447 = vmatprep.subr.mxu0 0.0
        %1448 = vmatpush1.xpose.msra.mxu0 0.0
        %1449 = vmatprep.subr.mxu0 0.0
        %1450 = vmatpush1.xpose.msra.mxu0 0.0
        %1451 = vmatprep.subr.mxu0 0.0
        %1452 = vmatpush1.xpose.msra.mxu0 0.0
        %1453 = vmatprep.subr.mxu0 0.0
        %1454 = vmatpush1.xpose.msra.mxu0 0.0
        %1455 = vmatprep.subr.mxu0 0.0
        %1456 = vmatpush1.xpose.msra.mxu0 0.0
        %1457 = vmatprep.subr.mxu0 0.0
        %1458 = vmatpush1.xpose.msra.mxu0 0.0
        %1459 = vmatprep.subr.mxu0 0.0
        %1460 = vmatpush1.xpose.msra.mxu0 0.0
        %1461 = vmatprep.subr.mxu0 0.0
        %1462 = vmatpush1.xpose.msra.mxu0 0.0
        %1463 = vmatprep.subr.mxu0 0.0
        %1464 = vmatpush1.xpose.msra.mxu0 0.0
        %1465 = vmatprep.subr.mxu0 0.0
        %1466 = vmatpush1.xpose.msra.mxu0 0.0
        %1467 = vmatprep.subr.mxu0 0.0
        %1468 = vmatpush1.xpose.msra.mxu0 0.0
        %1469 = vmatprep.subr.mxu0 0.0
        %1470 = vmatpush1.xpose.msra.mxu0 0.0
        %1471 = vmatprep.subr.mxu0 0.0
        %1472 = vmatpush1.xpose.msra.mxu0 0.0
        %1473 = vmatprep.subr.mxu0 0.0
        %1474 = vmatpush1.xpose.msra.mxu0 0.0
        %1475 = vmatprep.subr.mxu0 0.0
        %1476 = vmatpush1.xpose.msra.mxu0 0.0
        %1477 = vmatprep.subr.mxu0 0.0
        %1478 = vmatpush1.xpose.msra.mxu0 0.0
        %1479 = vmatprep.subr.mxu0 0.0
        %1480 = vmatpush1.xpose.msra.mxu0 0.0
        %1481 = vmatprep.subr.mxu0 0.0
        %1482 = vmatpush1.xpose.msra.mxu0 0.0
        %1483 = vmatprep.subr.mxu0 0.0
        %1484 = vmatpush1.xpose.msra.mxu0 0.0
        %1485 = vmatprep.subr.mxu0 0.0
        %1486 = vmatpush1.xpose.msra.mxu0 0.0
        %1487 = vmatprep.subr.mxu0 0.0
        %1488 = vmatpush1.xpose.msra.mxu0 0.0
        %1489 = vmatprep.subr.mxu0 0.0
        %1490 = vmatpush1.xpose.msra.mxu0 0.0
        %1491 = vmatprep.subr.mxu0 0.0
        %1492 = vmatpush1.xpose.msra.mxu0 0.0
        %1493 = vmatprep.subr.mxu0 0.0
        %1494 = vmatpush1.xpose.msra.mxu0 0.0
        %1495 = vmatprep.subr.mxu0 0.0
        %1496 = vmatpush1.xpose.msra.mxu0 0.0
        %1497 = vmatprep.mubr.f32.mxu0 0.0
        %v1498 = vand.u32 %v1275, 4294901760
        %v1499 = vsub.f32 %v1275, %v1498
        %1500 = vmatmul.mubr.f32.gmra.mrb[0].mxu0 %v1499
        %v1501 = vpop.f32.mrb[0].mxu0
        %v1502 = vadd.f32 %v1428, %v1501
        %v1503 = vpop.f32.mrb[0].mxu0
        %1504 = vdwg.mxu0
        %1505 = vmatprep.subr.mxu0 0.0
        %v1506 = vand.u32 %v1277, 4294901760
        %1507 = vmatpush1.xpose.msra.mxu0 %v1506
        %1508 = vmatprep.subr.mxu0 0.0
        %1509 = vmatpush1.xpose.msra.mxu0 0.0
        %1510 = vmatprep.subr.mxu0 0.0
        %1511 = vmatpush1.xpose.msra.mxu0 0.0
        %1512 = vmatprep.subr.mxu0 0.0
        %1513 = vmatpush1.xpose.msra.mxu0 0.0
        %1514 = vmatprep.subr.mxu0 0.0
        %1515 = vmatpush1.xpose.msra.mxu0 0.0
        %1516 = vmatprep.subr.mxu0 0.0
        %1517 = vmatpush1.xpose.msra.mxu0 0.0
        %1518 = vmatprep.subr.mxu0 0.0
        %1519 = vmatpush1.xpose.msra.mxu0 0.0
        %1520 = vmatprep.subr.mxu0 0.0
        %1521 = vmatpush1.xpose.msra.mxu0 0.0
        %1522 = vmatprep.subr.mxu0 0.0
        %1523 = vmatpush1.xpose.msra.mxu0 0.0
        %1524 = vmatprep.subr.mxu0 0.0
        %1525 = vmatpush1.xpose.msra.mxu0 0.0
        %1526 = vmatprep.subr.mxu0 0.0
        %1527 = vmatpush1.xpose.msra.mxu0 0.0
        %1528 = vmatprep.subr.mxu0 0.0
        %1529 = vmatpush1.xpose.msra.mxu0 0.0
        %1530 = vmatprep.subr.mxu0 0.0
        %1531 = vmatpush1.xpose.msra.mxu0 0.0
        %1532 = vmatprep.subr.mxu0 0.0
        %1533 = vmatpush1.xpose.msra.mxu0 0.0
        %1534 = vmatprep.subr.mxu0 0.0
        %1535 = vmatpush1.xpose.msra.mxu0 0.0
        %1536 = vmatprep.subr.mxu0 0.0
        %1537 = vmatpush1.xpose.msra.mxu0 0.0
        %1538 = vmatprep.subr.mxu0 0.0
        %1539 = vmatpush1.xpose.msra.mxu0 0.0
        %1540 = vmatprep.subr.mxu0 0.0
        %1541 = vmatpush1.xpose.msra.mxu0 0.0
        %1542 = vmatprep.subr.mxu0 0.0
        %1543 = vmatpush1.xpose.msra.mxu0 0.0
        %1544 = vmatprep.subr.mxu0 0.0
        %1545 = vmatpush1.xpose.msra.mxu0 0.0
        %1546 = vmatprep.subr.mxu0 0.0
        %1547 = vmatpush1.xpose.msra.mxu0 0.0
        %1548 = vmatprep.subr.mxu0 0.0
        %1549 = vmatpush1.xpose.msra.mxu0 0.0
        %1550 = vmatprep.subr.mxu0 0.0
        %1551 = vmatpush1.xpose.msra.mxu0 0.0
        %1552 = vmatprep.subr.mxu0 0.0
        %1553 = vmatpush1.xpose.msra.mxu0 0.0
        %1554 = vmatprep.subr.mxu0 0.0
        %1555 = vmatpush1.xpose.msra.mxu0 0.0
        %1556 = vmatprep.subr.mxu0 0.0
        %1557 = vmatpush1.xpose.msra.mxu0 0.0
        %1558 = vmatprep.subr.mxu0 0.0
        %1559 = vmatpush1.xpose.msra.mxu0 0.0
        %1560 = vmatprep.subr.mxu0 0.0
        %1561 = vmatpush1.xpose.msra.mxu0 0.0
        %1562 = vmatprep.subr.mxu0 0.0
        %1563 = vmatpush1.xpose.msra.mxu0 0.0
        %1564 = vmatprep.subr.mxu0 0.0
        %1565 = vmatpush1.xpose.msra.mxu0 0.0
        %1566 = vmatprep.subr.mxu0 0.0
        %1567 = vmatpush1.xpose.msra.mxu0 0.0
        %1568 = vmatprep.subr.mxu0 0.0
        %1569 = vmatpush1.xpose.msra.mxu0 0.0
        %1570 = vmatprep.mubr.f32.mxu0 0.0
        %v1571 = vand.u32 %v1275, 4294901760
        %v1572 = vsub.f32 %v1275, %v1571
        %v1573 = vand.u32 %v1572, 4294901760
        %1574 = vmatmul.mubr.f32.gmra.mrb[0].mxu0 %v1573
        %v1575 = vpop.f32.mrb[0].mxu0
        %v1576 = vadd.f32 %v1502, %v1575
        %v1577 = vpop.f32.mrb[0].mxu0
        %1578 = vdwg.mxu0
        %1579 = vmatprep.subr.mxu0 0.0
        %v1580 = vand.u32 %v1277, 4294901760
        %v1581 = vsub.f32 %v1277, %v1580
        %v1582 = vand.u32 %v1581, 4294901760
        %1583 = vmatpush1.xpose.msra.mxu0 %v1582
        %1584 = vmatprep.subr.mxu0 0.0
        %1585 = vmatpush1.xpose.msra.mxu0 0.0
        %1586 = vmatprep.subr.mxu0 0.0
        %1587 = vmatpush1.xpose.msra.mxu0 0.0
        %1588 = vmatprep.subr.mxu0 0.0
        %1589 = vmatpush1.xpose.msra.mxu0 0.0
        %1590 = vmatprep.subr.mxu0 0.0
        %1591 = vmatpush1.xpose.msra.mxu0 0.0
        %1592 = vmatprep.subr.mxu0 0.0
        %1593 = vmatpush1.xpose.msra.mxu0 0.0
        %1594 = vmatprep.subr.mxu0 0.0
        %1595 = vmatpush1.xpose.msra.mxu0 0.0
        %1596 = vmatprep.subr.mxu0 0.0
        %1597 = vmatpush1.xpose.msra.mxu0 0.0
        %1598 = vmatprep.subr.mxu0 0.0
        %1599 = vmatpush1.xpose.msra.mxu0 0.0
        %1600 = vmatprep.subr.mxu0 0.0
        %1601 = vmatpush1.xpose.msra.mxu0 0.0
        %1602 = vmatprep.subr.mxu0 0.0
        %1603 = vmatpush1.xpose.msra.mxu0 0.0
        %1604 = vmatprep.subr.mxu0 0.0
        %1605 = vmatpush1.xpose.msra.mxu0 0.0
        %1606 = vmatprep.subr.mxu0 0.0
        %1607 = vmatpush1.xpose.msra.mxu0 0.0
        %1608 = vmatprep.subr.mxu0 0.0
        %1609 = vmatpush1.xpose.msra.mxu0 0.0
        %1610 = vmatprep.subr.mxu0 0.0
        %1611 = vmatpush1.xpose.msra.mxu0 0.0
        %1612 = vmatprep.subr.mxu0 0.0
        %1613 = vmatpush1.xpose.msra.mxu0 0.0
        %1614 = vmatprep.subr.mxu0 0.0
        %1615 = vmatpush1.xpose.msra.mxu0 0.0
        %1616 = vmatprep.subr.mxu0 0.0
        %1617 = vmatpush1.xpose.msra.mxu0 0.0
        %1618 = vmatprep.subr.mxu0 0.0
        %1619 = vmatpush1.xpose.msra.mxu0 0.0
        %1620 = vmatprep.subr.mxu0 0.0
        %1621 = vmatpush1.xpose.msra.mxu0 0.0
        %1622 = vmatprep.subr.mxu0 0.0
        %1623 = vmatpush1.xpose.msra.mxu0 0.0
        %1624 = vmatprep.subr.mxu0 0.0
        %1625 = vmatpush1.xpose.msra.mxu0 0.0
        %1626 = vmatprep.subr.mxu0 0.0
        %1627 = vmatpush1.xpose.msra.mxu0 0.0
        %1628 = vmatprep.subr.mxu0 0.0
        %1629 = vmatpush1.xpose.msra.mxu0 0.0
        %1630 = vmatprep.subr.mxu0 0.0
        %1631 = vmatpush1.xpose.msra.mxu0 0.0
        %1632 = vmatprep.subr.mxu0 0.0
        %1633 = vmatpush1.xpose.msra.mxu0 0.0
        %1634 = vmatprep.subr.mxu0 0.0
        %1635 = vmatpush1.xpose.msra.mxu0 0.0
        %1636 = vmatprep.subr.mxu0 0.0
        %1637 = vmatpush1.xpose.msra.mxu0 0.0
        %1638 = vmatprep.subr.mxu0 0.0
        %1639 = vmatpush1.xpose.msra.mxu0 0.0
        %1640 = vmatprep.subr.mxu0 0.0
        %1641 = vmatpush1.xpose.msra.mxu0 0.0
        %1642 = vmatprep.subr.mxu0 0.0
        %1643 = vmatpush1.xpose.msra.mxu0 0.0
        %1644 = vmatprep.subr.mxu0 0.0
        %1645 = vmatpush1.xpose.msra.mxu0 0.0
        %1646 = vmatprep.mubr.f32.mxu0 0.0
        %v1647 = vand.u32 %v1275, 4294901760
        %1648 = vmatmul.mubr.f32.gmra.mrb[0].mxu0 %v1647
        %v1649 = vpop.f32.mrb[0].mxu0
        %v1650 = vadd.f32 %v1576, %v1649
        %v1651 = vpop.f32.mrb[0].mxu0
        %1652 = vdwg.mxu0
        %1653 = vmatprep.subr.mxu0 0.0
        %v1654 = vand.u32 %v1277, 4294901760
        %1655 = vmatpush1.xpose.msra.mxu0 %v1654
        %1656 = vmatprep.subr.mxu0 0.0
        %1657 = vmatpush1.xpose.msra.mxu0 0.0
        %1658 = vmatprep.subr.mxu0 0.0
        %1659 = vmatpush1.xpose.msra.mxu0 0.0
        %1660 = vmatprep.subr.mxu0 0.0
        %1661 = vmatpush1.xpose.msra.mxu0 0.0
        %1662 = vmatprep.subr.mxu0 0.0
        %1663 = vmatpush1.xpose.msra.mxu0 0.0
        %1664 = vmatprep.subr.mxu0 0.0
        %1665 = vmatpush1.xpose.msra.mxu0 0.0
        %1666 = vmatprep.subr.mxu0 0.0
        %1667 = vmatpush1.xpose.msra.mxu0 0.0
        %1668 = vmatprep.subr.mxu0 0.0
        %1669 = vmatpush1.xpose.msra.mxu0 0.0
        %1670 = vmatprep.subr.mxu0 0.0
        %1671 = vmatpush1.xpose.msra.mxu0 0.0
        %1672 = vmatprep.subr.mxu0 0.0
        %1673 = vmatpush1.xpose.msra.mxu0 0.0
        %1674 = vmatprep.subr.mxu0 0.0
        %1675 = vmatpush1.xpose.msra.mxu0 0.0
        %1676 = vmatprep.subr.mxu0 0.0
        %1677 = vmatpush1.xpose.msra.mxu0 0.0
        %1678 = vmatprep.subr.mxu0 0.0
        %1679 = vmatpush1.xpose.msra.mxu0 0.0
        %1680 = vmatprep.subr.mxu0 0.0
        %1681 = vmatpush1.xpose.msra.mxu0 0.0
        %1682 = vmatprep.subr.mxu0 0.0
        %1683 = vmatpush1.xpose.msra.mxu0 0.0
        %1684 = vmatprep.subr.mxu0 0.0
        %1685 = vmatpush1.xpose.msra.mxu0 0.0
        %1686 = vmatprep.subr.mxu0 0.0
        %1687 = vmatpush1.xpose.msra.mxu0 0.0
        %1688 = vmatprep.subr.mxu0 0.0
        %1689 = vmatpush1.xpose.msra.mxu0 0.0
        %1690 = vmatprep.subr.mxu0 0.0
        %1691 = vmatpush1.xpose.msra.mxu0 0.0
        %1692 = vmatprep.subr.mxu0 0.0
        %1693 = vmatpush1.xpose.msra.mxu0 0.0
        %1694 = vmatprep.subr.mxu0 0.0
        %1695 = vmatpush1.xpose.msra.mxu0 0.0
        %1696 = vmatprep.subr.mxu0 0.0
        %1697 = vmatpush1.xpose.msra.mxu0 0.0
        %1698 = vmatprep.subr.mxu0 0.0
        %1699 = vmatpush1.xpose.msra.mxu0 0.0
        %1700 = vmatprep.subr.mxu0 0.0
        %1701 = vmatpush1.xpose.msra.mxu0 0.0
        %1702 = vmatprep.subr.mxu0 0.0
        %1703 = vmatpush1.xpose.msra.mxu0 0.0
        %1704 = vmatprep.subr.mxu0 0.0
        %1705 = vmatpush1.xpose.msra.mxu0 0.0
        %1706 = vmatprep.subr.mxu0 0.0
        %1707 = vmatpush1.xpose.msra.mxu0 0.0
        %1708 = vmatprep.subr.mxu0 0.0
        %1709 = vmatpush1.xpose.msra.mxu0 0.0
        %1710 = vmatprep.subr.mxu0 0.0
        %1711 = vmatpush1.xpose.msra.mxu0 0.0
        %1712 = vmatprep.subr.mxu0 0.0
        %1713 = vmatpush1.xpose.msra.mxu0 0.0
        %1714 = vmatprep.subr.mxu0 0.0
        %1715 = vmatpush1.xpose.msra.mxu0 0.0
        %1716 = vmatprep.subr.mxu0 0.0
        %1717 = vmatpush1.xpose.msra.mxu0 0.0
        %1718 = vmatprep.mubr.f32.mxu0 0.0
        %v1719 = vand.u32 %v1275, 4294901760
        %1720 = vmatmul.mubr.f32.gmra.mrb[0].mxu0 %v1719
        %v1721 = vpop.f32.mrb[0].mxu0
        %v1722 = vadd.f32 %v1650, %v1721
        %v1723 = vpop.f32.mrb[0].mxu0
        %1724 = vdwg.mxu0
        %v1726 = vsel %vm371, %v370, 0
        %v1728 = vsel %vm371, %v356, 0
        %1730 = vmatprep.subr.mxu0 0.0
        %v1731 = vand.u32 %v1728, 4294901760
        %1732 = vmatpush1.xpose.msra.mxu0 %v1731
        %1733 = vmatprep.subr.mxu0 0.0
        %1734 = vmatpush1.xpose.msra.mxu0 0.0
        %1735 = vmatprep.subr.mxu0 0.0
        %1736 = vmatpush1.xpose.msra.mxu0 0.0
        %1737 = vmatprep.subr.mxu0 0.0
        %1738 = vmatpush1.xpose.msra.mxu0 0.0
        %1739 = vmatprep.subr.mxu0 0.0
        %1740 = vmatpush1.xpose.msra.mxu0 0.0
        %1741 = vmatprep.subr.mxu0 0.0
        %1742 = vmatpush1.xpose.msra.mxu0 0.0
        %1743 = vmatprep.subr.mxu0 0.0
        %1744 = vmatpush1.xpose.msra.mxu0 0.0
        %1745 = vmatprep.subr.mxu0 0.0
        %1746 = vmatpush1.xpose.msra.mxu0 0.0
        %1747 = vmatprep.subr.mxu0 0.0
        %1748 = vmatpush1.xpose.msra.mxu0 0.0
        %1749 = vmatprep.subr.mxu0 0.0
        %1750 = vmatpush1.xpose.msra.mxu0 0.0
        %1751 = vmatprep.subr.mxu0 0.0
        %1752 = vmatpush1.xpose.msra.mxu0 0.0
        %1753 = vmatprep.subr.mxu0 0.0
        %1754 = vmatpush1.xpose.msra.mxu0 0.0
        %1755 = vmatprep.subr.mxu0 0.0
        %1756 = vmatpush1.xpose.msra.mxu0 0.0
        %1757 = vmatprep.subr.mxu0 0.0
        %1758 = vmatpush1.xpose.msra.mxu0 0.0
        %1759 = vmatprep.subr.mxu0 0.0
        %1760 = vmatpush1.xpose.msra.mxu0 0.0
        %1761 = vmatprep.subr.mxu0 0.0
        %1762 = vmatpush1.xpose.msra.mxu0 0.0
        %1763 = vmatprep.subr.mxu0 0.0
        %1764 = vmatpush1.xpose.msra.mxu0 0.0
        %1765 = vmatprep.subr.mxu0 0.0
        %1766 = vmatpush1.xpose.msra.mxu0 0.0
        %1767 = vmatprep.subr.mxu0 0.0
        %1768 = vmatpush1.xpose.msra.mxu0 0.0
        %1769 = vmatprep.subr.mxu0 0.0
        %1770 = vmatpush1.xpose.msra.mxu0 0.0
        %1771 = vmatprep.subr.mxu0 0.0
        %1772 = vmatpush1.xpose.msra.mxu0 0.0
        %1773 = vmatprep.subr.mxu0 0.0
        %1774 = vmatpush1.xpose.msra.mxu0 0.0
        %1775 = vmatprep.subr.mxu0 0.0
        %1776 = vmatpush1.xpose.msra.mxu0 0.0
        %1777 = vmatprep.subr.mxu0 0.0
        %1778 = vmatpush1.xpose.msra.mxu0 0.0
        %1779 = vmatprep.subr.mxu0 0.0
        %1780 = vmatpush1.xpose.msra.mxu0 0.0
        %1781 = vmatprep.subr.mxu0 0.0
        %1782 = vmatpush1.xpose.msra.mxu0 0.0
        %1783 = vmatprep.subr.mxu0 0.0
        %1784 = vmatpush1.xpose.msra.mxu0 0.0
        %1785 = vmatprep.subr.mxu0 0.0
        %1786 = vmatpush1.xpose.msra.mxu0 0.0
        %1787 = vmatprep.subr.mxu0 0.0
        %1788 = vmatpush1.xpose.msra.mxu0 0.0
        %1789 = vmatprep.subr.mxu0 0.0
        %1790 = vmatpush1.xpose.msra.mxu0 0.0
        %1791 = vmatprep.subr.mxu0 0.0
        %1792 = vmatpush1.xpose.msra.mxu0 0.0
        %1793 = vmatprep.subr.mxu0 0.0
        %1794 = vmatpush1.xpose.msra.mxu0 0.0
        %1795 = vmatprep.mubr.f32.mxu0 0.0
        %v1796 = vand.u32 %v1726, 4294901760
        %v1797 = vsub.f32 %v1726, %v1796
        %v1798 = vand.u32 %v1797, 4294901760
        %v1799 = vsub.f32 %v1797, %v1798
        %v1800 = vand.u32 %v1799, 4294901760
        %1801 = vmatmul.mubr.f32.gmra.mrb[0].mxu0 %v1800
        %v1802 = vpop.f32.mrb[0].mxu0
        %v1803 = vadd.f32 0.0, %v1802
        %v1804 = vpop.f32.mrb[0].mxu0
        %1805 = vdwg.mxu0
        %1806 = vmatprep.subr.mxu0 0.0
        %v1807 = vand.u32 %v1728, 4294901760
        %v1808 = vsub.f32 %v1728, %v1807
        %v1809 = vand.u32 %v1808, 4294901760
        %v1810 = vsub.f32 %v1808, %v1809
        %v1811 = vand.u32 %v1810, 4294901760
        %1812 = vmatpush1.xpose.msra.mxu0 %v1811
        %1813 = vmatprep.subr.mxu0 0.0
        %1814 = vmatpush1.xpose.msra.mxu0 0.0
        %1815 = vmatprep.subr.mxu0 0.0
        %1816 = vmatpush1.xpose.msra.mxu0 0.0
        %1817 = vmatprep.subr.mxu0 0.0
        %1818 = vmatpush1.xpose.msra.mxu0 0.0
        %1819 = vmatprep.subr.mxu0 0.0
        %1820 = vmatpush1.xpose.msra.mxu0 0.0
        %1821 = vmatprep.subr.mxu0 0.0
        %1822 = vmatpush1.xpose.msra.mxu0 0.0
        %1823 = vmatprep.subr.mxu0 0.0
        %1824 = vmatpush1.xpose.msra.mxu0 0.0
        %1825 = vmatprep.subr.mxu0 0.0
        %1826 = vmatpush1.xpose.msra.mxu0 0.0
        %1827 = vmatprep.subr.mxu0 0.0
        %1828 = vmatpush1.xpose.msra.mxu0 0.0
        %1829 = vmatprep.subr.mxu0 0.0
        %1830 = vmatpush1.xpose.msra.mxu0 0.0
        %1831 = vmatprep.subr.mxu0 0.0
        %1832 = vmatpush1.xpose.msra.mxu0 0.0
        %1833 = vmatprep.subr.mxu0 0.0
        %1834 = vmatpush1.xpose.msra.mxu0 0.0
        %1835 = vmatprep.subr.mxu0 0.0
        %1836 = vmatpush1.xpose.msra.mxu0 0.0
        %1837 = vmatprep.subr.mxu0 0.0
        %1838 = vmatpush1.xpose.msra.mxu0 0.0
        %1839 = vmatprep.subr.mxu0 0.0
        %1840 = vmatpush1.xpose.msra.mxu0 0.0
        %1841 = vmatprep.subr.mxu0 0.0
        %1842 = vmatpush1.xpose.msra.mxu0 0.0
        %1843 = vmatprep.subr.mxu0 0.0
        %1844 = vmatpush1.xpose.msra.mxu0 0.0
        %1845 = vmatprep.subr.mxu0 0.0
        %1846 = vmatpush1.xpose.msra.mxu0 0.0
        %1847 = vmatprep.subr.mxu0 0.0
        %1848 = vmatpush1.xpose.msra.mxu0 0.0
        %1849 = vmatprep.subr.mxu0 0.0
        %1850 = vmatpush1.xpose.msra.mxu0 0.0
        %1851 = vmatprep.subr.mxu0 0.0
        %1852 = vmatpush1.xpose.msra.mxu0 0.0
        %1853 = vmatprep.subr.mxu0 0.0
        %1854 = vmatpush1.xpose.msra.mxu0 0.0
        %1855 = vmatprep.subr.mxu0 0.0
        %1856 = vmatpush1.xpose.msra.mxu0 0.0
        %1857 = vmatprep.subr.mxu0 0.0
        %1858 = vmatpush1.xpose.msra.mxu0 0.0
        %1859 = vmatprep.subr.mxu0 0.0
        %1860 = vmatpush1.xpose.msra.mxu0 0.0
        %1861 = vmatprep.subr.mxu0 0.0
        %1862 = vmatpush1.xpose.msra.mxu0 0.0
        %1863 = vmatprep.subr.mxu0 0.0
        %1864 = vmatpush1.xpose.msra.mxu0 0.0
        %1865 = vmatprep.subr.mxu0 0.0
        %1866 = vmatpush1.xpose.msra.mxu0 0.0
        %1867 = vmatprep.subr.mxu0 0.0
        %1868 = vmatpush1.xpose.msra.mxu0 0.0
        %1869 = vmatprep.subr.mxu0 0.0
        %1870 = vmatpush1.xpose.msra.mxu0 0.0
        %1871 = vmatprep.subr.mxu0 0.0
        %1872 = vmatpush1.xpose.msra.mxu0 0.0
        %1873 = vmatprep.subr.mxu0 0.0
        %1874 = vmatpush1.xpose.msra.mxu0 0.0
        %1875 = vmatprep.mubr.f32.mxu0 0.0
        %v1876 = vand.u32 %v1726, 4294901760
        %1877 = vmatmul.mubr.f32.gmra.mrb[0].mxu0 %v1876
        %v1878 = vpop.f32.mrb[0].mxu0
        %v1879 = vadd.f32 %v1803, %v1878
        %v1880 = vpop.f32.mrb[0].mxu0
        %1881 = vdwg.mxu0
        %1882 = vmatprep.subr.mxu0 0.0
        %v1883 = vand.u32 %v1728, 4294901760
        %v1884 = vsub.f32 %v1728, %v1883
        %1885 = vmatpush1.xpose.msra.mxu0 %v1884
        %1886 = vmatprep.subr.mxu0 0.0
        %1887 = vmatpush1.xpose.msra.mxu0 0.0
        %1888 = vmatprep.subr.mxu0 0.0
        %1889 = vmatpush1.xpose.msra.mxu0 0.0
        %1890 = vmatprep.subr.mxu0 0.0
        %1891 = vmatpush1.xpose.msra.mxu0 0.0
        %1892 = vmatprep.subr.mxu0 0.0
        %1893 = vmatpush1.xpose.msra.mxu0 0.0
        %1894 = vmatprep.subr.mxu0 0.0
        %1895 = vmatpush1.xpose.msra.mxu0 0.0
        %1896 = vmatprep.subr.mxu0 0.0
        %1897 = vmatpush1.xpose.msra.mxu0 0.0
        %1898 = vmatprep.subr.mxu0 0.0
        %1899 = vmatpush1.xpose.msra.mxu0 0.0
        %1900 = vmatprep.subr.mxu0 0.0
        %1901 = vmatpush1.xpose.msra.mxu0 0.0
        %1902 = vmatprep.subr.mxu0 0.0
        %1903 = vmatpush1.xpose.msra.mxu0 0.0
        %1904 = vmatprep.subr.mxu0 0.0
        %1905 = vmatpush1.xpose.msra.mxu0 0.0
        %1906 = vmatprep.subr.mxu0 0.0
        %1907 = vmatpush1.xpose.msra.mxu0 0.0
        %1908 = vmatprep.subr.mxu0 0.0
        %1909 = vmatpush1.xpose.msra.mxu0 0.0
        %1910 = vmatprep.subr.mxu0 0.0
        %1911 = vmatpush1.xpose.msra.mxu0 0.0
        %1912 = vmatprep.subr.mxu0 0.0
        %1913 = vmatpush1.xpose.msra.mxu0 0.0
        %1914 = vmatprep.subr.mxu0 0.0
        %1915 = vmatpush1.xpose.msra.mxu0 0.0
        %1916 = vmatprep.subr.mxu0 0.0
        %1917 = vmatpush1.xpose.msra.mxu0 0.0
        %1918 = vmatprep.subr.mxu0 0.0
        %1919 = vmatpush1.xpose.msra.mxu0 0.0
        %1920 = vmatprep.subr.mxu0 0.0
        %1921 = vmatpush1.xpose.msra.mxu0 0.0
        %1922 = vmatprep.subr.mxu0 0.0
        %1923 = vmatpush1.xpose.msra.mxu0 0.0
        %1924 = vmatprep.subr.mxu0 0.0
        %1925 = vmatpush1.xpose.msra.mxu0 0.0
        %1926 = vmatprep.subr.mxu0 0.0
        %1927 = vmatpush1.xpose.msra.mxu0 0.0
        %1928 = vmatprep.subr.mxu0 0.0
        %1929 = vmatpush1.xpose.msra.mxu0 0.0
        %1930 = vmatprep.subr.mxu0 0.0
        %1931 = vmatpush1.xpose.msra.mxu0 0.0
        %1932 = vmatprep.subr.mxu0 0.0
        %1933 = vmatpush1.xpose.msra.mxu0 0.0
        %1934 = vmatprep.subr.mxu0 0.0
        %1935 = vmatpush1.xpose.msra.mxu0 0.0
        %1936 = vmatprep.subr.mxu0 0.0
        %1937 = vmatpush1.xpose.msra.mxu0 0.0
        %1938 = vmatprep.subr.mxu0 0.0
        %1939 = vmatpush1.xpose.msra.mxu0 0.0
        %1940 = vmatprep.subr.mxu0 0.0
        %1941 = vmatpush1.xpose.msra.mxu0 0.0
        %1942 = vmatprep.subr.mxu0 0.0
        %1943 = vmatpush1.xpose.msra.mxu0 0.0
        %1944 = vmatprep.subr.mxu0 0.0
        %1945 = vmatpush1.xpose.msra.mxu0 0.0
        %1946 = vmatprep.subr.mxu0 0.0
        %1947 = vmatpush1.xpose.msra.mxu0 0.0
        %1948 = vmatprep.mubr.f32.mxu0 0.0
        %v1949 = vand.u32 %v1726, 4294901760
        %v1950 = vsub.f32 %v1726, %v1949
        %1951 = vmatmul.mubr.f32.gmra.mrb[0].mxu0 %v1950
        %v1952 = vpop.f32.mrb[0].mxu0
        %v1953 = vadd.f32 %v1879, %v1952
        %v1954 = vpop.f32.mrb[0].mxu0
        %1955 = vdwg.mxu0
        %1956 = vmatprep.subr.mxu0 0.0
        %v1957 = vand.u32 %v1728, 4294901760
        %1958 = vmatpush1.xpose.msra.mxu0 %v1957
        %1959 = vmatprep.subr.mxu0 0.0
        %1960 = vmatpush1.xpose.msra.mxu0 0.0
        %1961 = vmatprep.subr.mxu0 0.0
        %1962 = vmatpush1.xpose.msra.mxu0 0.0
        %1963 = vmatprep.subr.mxu0 0.0
        %1964 = vmatpush1.xpose.msra.mxu0 0.0
        %1965 = vmatprep.subr.mxu0 0.0
        %1966 = vmatpush1.xpose.msra.mxu0 0.0
        %1967 = vmatprep.subr.mxu0 0.0
        %1968 = vmatpush1.xpose.msra.mxu0 0.0
        %1969 = vmatprep.subr.mxu0 0.0
        %1970 = vmatpush1.xpose.msra.mxu0 0.0
        %1971 = vmatprep.subr.mxu0 0.0
        %1972 = vmatpush1.xpose.msra.mxu0 0.0
        %1973 = vmatprep.subr.mxu0 0.0
        %1974 = vmatpush1.xpose.msra.mxu0 0.0
        %1975 = vmatprep.subr.mxu0 0.0
        %1976 = vmatpush1.xpose.msra.mxu0 0.0
        %1977 = vmatprep.subr.mxu0 0.0
        %1978 = vmatpush1.xpose.msra.mxu0 0.0
        %1979 = vmatprep.subr.mxu0 0.0
        %1980 = vmatpush1.xpose.msra.mxu0 0.0
        %1981 = vmatprep.subr.mxu0 0.0
        %1982 = vmatpush1.xpose.msra.mxu0 0.0
        %1983 = vmatprep.subr.mxu0 0.0
        %1984 = vmatpush1.xpose.msra.mxu0 0.0
        %1985 = vmatprep.subr.mxu0 0.0
        %1986 = vmatpush1.xpose.msra.mxu0 0.0
        %1987 = vmatprep.subr.mxu0 0.0
        %1988 = vmatpush1.xpose.msra.mxu0 0.0
        %1989 = vmatprep.subr.mxu0 0.0
        %1990 = vmatpush1.xpose.msra.mxu0 0.0
        %1991 = vmatprep.subr.mxu0 0.0
        %1992 = vmatpush1.xpose.msra.mxu0 0.0
        %1993 = vmatprep.subr.mxu0 0.0
        %1994 = vmatpush1.xpose.msra.mxu0 0.0
        %1995 = vmatprep.subr.mxu0 0.0
        %1996 = vmatpush1.xpose.msra.mxu0 0.0
        %1997 = vmatprep.subr.mxu0 0.0
        %1998 = vmatpush1.xpose.msra.mxu0 0.0
        %1999 = vmatprep.subr.mxu0 0.0
        %2000 = vmatpush1.xpose.msra.mxu0 0.0
        %2001 = vmatprep.subr.mxu0 0.0
        %2002 = vmatpush1.xpose.msra.mxu0 0.0
        %2003 = vmatprep.subr.mxu0 0.0
        %2004 = vmatpush1.xpose.msra.mxu0 0.0
        %2005 = vmatprep.subr.mxu0 0.0
        %2006 = vmatpush1.xpose.msra.mxu0 0.0
        %2007 = vmatprep.subr.mxu0 0.0
        %2008 = vmatpush1.xpose.msra.mxu0 0.0
        %2009 = vmatprep.subr.mxu0 0.0
        %2010 = vmatpush1.xpose.msra.mxu0 0.0
        %2011 = vmatprep.subr.mxu0 0.0
        %2012 = vmatpush1.xpose.msra.mxu0 0.0
        %2013 = vmatprep.subr.mxu0 0.0
        %2014 = vmatpush1.xpose.msra.mxu0 0.0
        %2015 = vmatprep.subr.mxu0 0.0
        %2016 = vmatpush1.xpose.msra.mxu0 0.0
        %2017 = vmatprep.subr.mxu0 0.0
        %2018 = vmatpush1.xpose.msra.mxu0 0.0
        %2019 = vmatprep.subr.mxu0 0.0
        %2020 = vmatpush1.xpose.msra.mxu0 0.0
        %2021 = vmatprep.mubr.f32.mxu0 0.0
        %v2022 = vand.u32 %v1726, 4294901760
        %v2023 = vsub.f32 %v1726, %v2022
        %v2024 = vand.u32 %v2023, 4294901760
        %2025 = vmatmul.mubr.f32.gmra.mrb[0].mxu0 %v2024
        %v2026 = vpop.f32.mrb[0].mxu0
        %v2027 = vadd.f32 %v1953, %v2026
        %v2028 = vpop.f32.mrb[0].mxu0
        %2029 = vdwg.mxu0
        %2030 = vmatprep.subr.mxu0 0.0
        %v2031 = vand.u32 %v1728, 4294901760
        %v2032 = vsub.f32 %v1728, %v2031
        %v2033 = vand.u32 %v2032, 4294901760
        %2034 = vmatpush1.xpose.msra.mxu0 %v2033
        %2035 = vmatprep.subr.mxu0 0.0
        %2036 = vmatpush1.xpose.msra.mxu0 0.0
        %2037 = vmatprep.subr.mxu0 0.0
        %2038 = vmatpush1.xpose.msra.mxu0 0.0
        %2039 = vmatprep.subr.mxu0 0.0
        %2040 = vmatpush1.xpose.msra.mxu0 0.0
        %2041 = vmatprep.subr.mxu0 0.0
        %2042 = vmatpush1.xpose.msra.mxu0 0.0
        %2043 = vmatprep.subr.mxu0 0.0
        %2044 = vmatpush1.xpose.msra.mxu0 0.0
        %2045 = vmatprep.subr.mxu0 0.0
        %2046 = vmatpush1.xpose.msra.mxu0 0.0
        %2047 = vmatprep.subr.mxu0 0.0
        %2048 = vmatpush1.xpose.msra.mxu0 0.0
        %2049 = vmatprep.subr.mxu0 0.0
        %2050 = vmatpush1.xpose.msra.mxu0 0.0
        %2051 = vmatprep.subr.mxu0 0.0
        %2052 = vmatpush1.xpose.msra.mxu0 0.0
        %2053 = vmatprep.subr.mxu0 0.0
        %2054 = vmatpush1.xpose.msra.mxu0 0.0
        %2055 = vmatprep.subr.mxu0 0.0
        %2056 = vmatpush1.xpose.msra.mxu0 0.0
        %2057 = vmatprep.subr.mxu0 0.0
        %2058 = vmatpush1.xpose.msra.mxu0 0.0
        %2059 = vmatprep.subr.mxu0 0.0
        %2060 = vmatpush1.xpose.msra.mxu0 0.0
        %2061 = vmatprep.subr.mxu0 0.0
        %2062 = vmatpush1.xpose.msra.mxu0 0.0
        %2063 = vmatprep.subr.mxu0 0.0
        %2064 = vmatpush1.xpose.msra.mxu0 0.0
        %2065 = vmatprep.subr.mxu0 0.0
        %2066 = vmatpush1.xpose.msra.mxu0 0.0
        %2067 = vmatprep.subr.mxu0 0.0
        %2068 = vmatpush1.xpose.msra.mxu0 0.0
        %2069 = vmatprep.subr.mxu0 0.0
        %2070 = vmatpush1.xpose.msra.mxu0 0.0
        %2071 = vmatprep.subr.mxu0 0.0
        %2072 = vmatpush1.xpose.msra.mxu0 0.0
        %2073 = vmatprep.subr.mxu0 0.0
        %2074 = vmatpush1.xpose.msra.mxu0 0.0
        %2075 = vmatprep.subr.mxu0 0.0
        %2076 = vmatpush1.xpose.msra.mxu0 0.0
        %2077 = vmatprep.subr.mxu0 0.0
        %2078 = vmatpush1.xpose.msra.mxu0 0.0
        %2079 = vmatprep.subr.mxu0 0.0
        %2080 = vmatpush1.xpose.msra.mxu0 0.0
        %2081 = vmatprep.subr.mxu0 0.0
        %2082 = vmatpush1.xpose.msra.mxu0 0.0
        %2083 = vmatprep.subr.mxu0 0.0
        %2084 = vmatpush1.xpose.msra.mxu0 0.0
        %2085 = vmatprep.subr.mxu0 0.0
        %2086 = vmatpush1.xpose.msra.mxu0 0.0
        %2087 = vmatprep.subr.mxu0 0.0
        %2088 = vmatpush1.xpose.msra.mxu0 0.0
        %2089 = vmatprep.subr.mxu0 0.0
        %2090 = vmatpush1.xpose.msra.mxu0 0.0
        %2091 = vmatprep.subr.mxu0 0.0
        %2092 = vmatpush1.xpose.msra.mxu0 0.0
        %2093 = vmatprep.subr.mxu0 0.0
        %2094 = vmatpush1.xpose.msra.mxu0 0.0
        %2095 = vmatprep.subr.mxu0 0.0
        %2096 = vmatpush1.xpose.msra.mxu0 0.0
        %2097 = vmatprep.mubr.f32.mxu0 0.0
        %v2098 = vand.u32 %v1726, 4294901760
        %2099 = vmatmul.mubr.f32.gmra.mrb[0].mxu0 %v2098
        %v2100 = vpop.f32.mrb[0].mxu0
        %v2101 = vadd.f32 %v2027, %v2100
        %v2102 = vpop.f32.mrb[0].mxu0
        %2103 = vdwg.mxu0
        %2104 = vmatprep.subr.mxu0 0.0
        %v2105 = vand.u32 %v1728, 4294901760
        %2106 = vmatpush1.xpose.msra.mxu0 %v2105
        %2107 = vmatprep.subr.mxu0 0.0
        %2108 = vmatpush1.xpose.msra.mxu0 0.0
        %2109 = vmatprep.subr.mxu0 0.0
        %2110 = vmatpush1.xpose.msra.mxu0 0.0
        %2111 = vmatprep.subr.mxu0 0.0
        %2112 = vmatpush1.xpose.msra.mxu0 0.0
        %2113 = vmatprep.subr.mxu0 0.0
        %2114 = vmatpush1.xpose.msra.mxu0 0.0
        %2115 = vmatprep.subr.mxu0 0.0
        %2116 = vmatpush1.xpose.msra.mxu0 0.0
        %2117 = vmatprep.subr.mxu0 0.0
        %2118 = vmatpush1.xpose.msra.mxu0 0.0
        %2119 = vmatprep.subr.mxu0 0.0
        %2120 = vmatpush1.xpose.msra.mxu0 0.0
        %2121 = vmatprep.subr.mxu0 0.0
        %2122 = vmatpush1.xpose.msra.mxu0 0.0
        %2123 = vmatprep.subr.mxu0 0.0
        %2124 = vmatpush1.xpose.msra.mxu0 0.0
        %2125 = vmatprep.subr.mxu0 0.0
        %2126 = vmatpush1.xpose.msra.mxu0 0.0
        %2127 = vmatprep.subr.mxu0 0.0
        %2128 = vmatpush1.xpose.msra.mxu0 0.0
        %2129 = vmatprep.subr.mxu0 0.0
        %2130 = vmatpush1.xpose.msra.mxu0 0.0
        %2131 = vmatprep.subr.mxu0 0.0
        %2132 = vmatpush1.xpose.msra.mxu0 0.0
        %2133 = vmatprep.subr.mxu0 0.0
        %2134 = vmatpush1.xpose.msra.mxu0 0.0
        %2135 = vmatprep.subr.mxu0 0.0
        %2136 = vmatpush1.xpose.msra.mxu0 0.0
        %2137 = vmatprep.subr.mxu0 0.0
        %2138 = vmatpush1.xpose.msra.mxu0 0.0
        %2139 = vmatprep.subr.mxu0 0.0
        %2140 = vmatpush1.xpose.msra.mxu0 0.0
        %2141 = vmatprep.subr.mxu0 0.0
        %2142 = vmatpush1.xpose.msra.mxu0 0.0
        %2143 = vmatprep.subr.mxu0 0.0
        %2144 = vmatpush1.xpose.msra.mxu0 0.0
        %2145 = vmatprep.subr.mxu0 0.0
        %2146 = vmatpush1.xpose.msra.mxu0 0.0
        %2147 = vmatprep.subr.mxu0 0.0
        %2148 = vmatpush1.xpose.msra.mxu0 0.0
        %2149 = vmatprep.subr.mxu0 0.0
        %2150 = vmatpush1.xpose.msra.mxu0 0.0
        %2151 = vmatprep.subr.mxu0 0.0
        %2152 = vmatpush1.xpose.msra.mxu0 0.0
        %2153 = vmatprep.subr.mxu0 0.0
        %2154 = vmatpush1.xpose.msra.mxu0 0.0
        %2155 = vmatprep.subr.mxu0 0.0
        %2156 = vmatpush1.xpose.msra.mxu0 0.0
        %2157 = vmatprep.subr.mxu0 0.0
        %2158 = vmatpush1.xpose.msra.mxu0 0.0
        %2159 = vmatprep.subr.mxu0 0.0
        %2160 = vmatpush1.xpose.msra.mxu0 0.0
        %2161 = vmatprep.subr.mxu0 0.0
        %2162 = vmatpush1.xpose.msra.mxu0 0.0
        %2163 = vmatprep.subr.mxu0 0.0
        %2164 = vmatpush1.xpose.msra.mxu0 0.0
        %2165 = vmatprep.subr.mxu0 0.0
        %2166 = vmatpush1.xpose.msra.mxu0 0.0
        %2167 = vmatprep.subr.mxu0 0.0
        %2168 = vmatpush1.xpose.msra.mxu0 0.0
        %2169 = vmatprep.mubr.f32.mxu0 0.0
        %v2170 = vand.u32 %v1726, 4294901760
        %2171 = vmatmul.mubr.f32.gmra.mrb[0].mxu0 %v2170
        %v2172 = vpop.f32.mrb[0].mxu0
        %v2173 = vadd.f32 %v2101, %v2172
        %v2174 = vpop.f32.mrb[0].mxu0
        %2175 = vdwg.mxu0
        %v2176 = vld [vmem:[#allocation2] sm:$0xff]
        %v2177 = vld [vmem:[#allocation2 + $0x8] sm:$0xff]
        %v2178 = vld [vmem:[#allocation2 + $0x10] sm:$0xff]
        %v2179 = vld [vmem:[#allocation2 + $0x18] sm:$0xff]
        %v2180 = vsel %vm371, %v820, -inf
        %2181 = vmax.xlane.f32.xlu0 %v2180
        %v2182 = vpop.xlane.xlu0 %2181
        %v2183 = vsel %vm371, %v1271, -inf
        %2184 = vmax.xlane.f32.xlu0 %v2183
        %v2185 = vpop.xlane.xlu0 %2184
        %v2186 = vsel %vm371, %v1722, -inf
        %2187 = vmax.xlane.f32.xlu0 %v2186
        %v2188 = vpop.xlane.xlu0 %2187
        %v2189 = vsel %vm371, %v2173, -inf
        %2190 = vmax.xlane.f32.xlu0 %v2189
        %v2191 = vpop.xlane.xlu0 %2190
        %v2192 = vmax.f32 %v2176, %v2182
        %v2193 = vmax.f32 %v2177, %v2185
        %v2194 = vmax.f32 %v2178, %v2188
        %v2195 = vmax.f32 %v2179, %v2191
        %v2196 = vsub.f32 %v2176, %v2192
        %v2197 = vsub.f32 %v2177, %v2193
        %v2198 = vsub.f32 %v2178, %v2194
        %v2199 = vsub.f32 %v2179, %v2195
        %v2200 = vmul.f32 %v2196, 1.442695
        %v2201 = vpow.pop %v2200
        %v2202 = vmul.f32 %v2197, 1.442695
        %v2203 = vpow.pop %v2202
        %v2204 = vmul.f32 %v2198, 1.442695
        %v2205 = vpow.pop %v2204
        %v2206 = vmul.f32 %v2199, 1.442695
        %v2207 = vpow.pop %v2206
        %2209 = vset.pattern.permute.xlu0 0
        %2210 = vperm.xlu0 %2209, %v2192
        %v2211 = vpop.permute.xlu0 %2210
        %2214 = vset.pattern.permute.xlu0 0
        %2215 = vperm.xlu0 %2214, %v2193
        %v2216 = vpop.permute.xlu0 %2215
        %2219 = vset.pattern.permute.xlu0 0
        %2220 = vperm.xlu0 %2219, %v2194
        %v2221 = vpop.permute.xlu0 %2220
        %2224 = vset.pattern.permute.xlu0 0
        %2225 = vperm.xlu0 %2224, %v2195
        %v2226 = vpop.permute.xlu0 %2225
        %v2228 = vsub.f32 %v820, %v2211
        %v2229 = vsub.f32 %v1271, %v2216
        %v2230 = vsub.f32 %v1722, %v2221
        %v2231 = vsub.f32 %v2173, %v2226
        %v2232 = vmul.f32 %v2228, 1.442695
        %v2233 = vpow.pop %v2232
        %v2234 = vmul.f32 %v2229, 1.442695
        %v2235 = vpow.pop %v2234
        %v2236 = vmul.f32 %v2230, 1.442695
        %v2237 = vpow.pop %v2236
        %v2238 = vmul.f32 %v2231, 1.442695
        %v2239 = vpow.pop %v2238
        %v2240 = vld [vmem:[#allocation3] sm:$0xff]
        %v2241 = vld [vmem:[#allocation3 + $0x8] sm:$0xff]
        %v2242 = vld [vmem:[#allocation3 + $0x10] sm:$0xff]
        %v2243 = vld [vmem:[#allocation3 + $0x18] sm:$0xff]
        %v2244 = vmul.f32 %v2201, %v2240
        %v2245 = vmul.f32 %v2203, %v2241
        %v2246 = vmul.f32 %v2205, %v2242
        %v2247 = vmul.f32 %v2207, %v2243
        %v2248 = vsel %vm371, %v2233, 0.0
        %2249 = vadd.xlane.f32.xlu0 %v2248
        %v2250 = vpop.xlane.xlu0 %2249
        %v2251 = vsel %vm371, %v2235, 0.0
        %2252 = vadd.xlane.f32.xlu0 %v2251
        %v2253 = vpop.xlane.xlu0 %2252
        %v2254 = vsel %vm371, %v2237, 0.0
        %2255 = vadd.xlane.f32.xlu0 %v2254
        %v2256 = vpop.xlane.xlu0 %2255
        %v2257 = vsel %vm371, %v2239, 0.0
        %2258 = vadd.xlane.f32.xlu0 %v2257
        %v2259 = vpop.xlane.xlu0 %2258
        %v2260 = vadd.f32 %v2244, %v2250
        %v2261 = vadd.f32 %v2245, %v2253
        %v2262 = vadd.f32 %v2246, %v2256
        %v2263 = vadd.f32 %v2247, %v2259
        %vm2264 = vcmask 7168
        %2265 = vst.msk [vmem:[#allocation3] sm:$0xff] %vm2264, %v2260
        %2266 = vst.msk [vmem:[#allocation3 + $0x8] sm:$0xff] %vm2264, %v2261
        %2267 = vst.msk [vmem:[#allocation3 + $0x10] sm:$0xff] %vm2264, %v2262
        %2268 = vst.msk [vmem:[#allocation3 + $0x18] sm:$0xff] %vm2264, %v2263
        %v2270 = vsel %vm371, %v2233, 0
        %2272 = vmatprep.subr.mxu0 0.0
        %v2273 = vand.u32 %v349, 4294901760
        %2274 = vmatpush1.msra.mxu0 %v2273
        %2275 = vmatprep.subr.mxu0 0.0
        %2276 = vmatpush1.msra.mxu0 0.0
        %2277 = vmatprep.subr.mxu0 0.0
        %2278 = vmatpush1.msra.mxu0 0.0
        %2279 = vmatprep.subr.mxu0 0.0
        %2280 = vmatpush1.msra.mxu0 0.0
        %2281 = vmatprep.subr.mxu0 0.0
        %2282 = vmatpush1.msra.mxu0 0.0
        %2283 = vmatprep.subr.mxu0 0.0
        %2284 = vmatpush1.msra.mxu0 0.0
        %2285 = vmatprep.subr.mxu0 0.0
        %2286 = vmatpush1.msra.mxu0 0.0
        %2287 = vmatprep.subr.mxu0 0.0
        %2288 = vmatpush1.msra.mxu0 0.0
        %2289 = vmatprep.subr.mxu0 0.0
        %2290 = vmatpush1.msra.mxu0 0.0
        %2291 = vmatprep.subr.mxu0 0.0
        %2292 = vmatpush1.msra.mxu0 0.0
        %2293 = vmatprep.subr.mxu0 0.0
        %2294 = vmatpush1.msra.mxu0 0.0
        %2295 = vmatprep.subr.mxu0 0.0
        %2296 = vmatpush1.msra.mxu0 0.0
        %2297 = vmatprep.subr.mxu0 0.0
        %2298 = vmatpush1.msra.mxu0 0.0
        %2299 = vmatprep.subr.mxu0 0.0
        %2300 = vmatpush1.msra.mxu0 0.0
        %2301 = vmatprep.subr.mxu0 0.0
        %2302 = vmatpush1.msra.mxu0 0.0
        %2303 = vmatprep.subr.mxu0 0.0
        %2304 = vmatpush1.msra.mxu0 0.0
        %2305 = vmatprep.subr.mxu0 0.0
        %2306 = vmatpush1.msra.mxu0 0.0
        %2307 = vmatprep.subr.mxu0 0.0
        %2308 = vmatpush1.msra.mxu0 0.0
        %2309 = vmatprep.subr.mxu0 0.0
        %2310 = vmatpush1.msra.mxu0 0.0
        %2311 = vmatprep.subr.mxu0 0.0
        %2312 = vmatpush1.msra.mxu0 0.0
        %2313 = vmatprep.subr.mxu0 0.0
        %2314 = vmatpush1.msra.mxu0 0.0
        %2315 = vmatprep.subr.mxu0 0.0
        %2316 = vmatpush1.msra.mxu0 0.0
        %2317 = vmatprep.subr.mxu0 0.0
        %2318 = vmatpush1.msra.mxu0 0.0
        %2319 = vmatprep.subr.mxu0 0.0
        %2320 = vmatpush1.msra.mxu0 0.0
        %2321 = vmatprep.subr.mxu0 0.0
        %2322 = vmatpush1.msra.mxu0 0.0
        %2323 = vmatprep.subr.mxu0 0.0
        %2324 = vmatpush1.msra.mxu0 0.0
        %2325 = vmatprep.subr.mxu0 0.0
        %2326 = vmatpush1.msra.mxu0 0.0
        %2327 = vmatprep.subr.mxu0 0.0
        %2328 = vmatpush1.msra.mxu0 0.0
        %2329 = vmatprep.subr.mxu0 0.0
        %2330 = vmatpush1.msra.mxu0 0.0
        %2331 = vmatprep.subr.mxu0 0.0
        %2332 = vmatpush1.msra.mxu0 0.0
        %2333 = vmatprep.subr.mxu0 0.0
        %2334 = vmatpush1.msra.mxu0 0.0
        %2335 = vmatprep.subr.mxu0 0.0
        %2336 = vmatpush1.msra.mxu0 0.0
        %2337 = vmatprep.mubr.f32.mxu0 0.0
        %v2338 = vand.u32 %v2270, 4294901760
        %v2339 = vsub.f32 %v2270, %v2338
        %v2340 = vand.u32 %v2339, 4294901760
        %v2341 = vsub.f32 %v2339, %v2340
        %v2342 = vand.u32 %v2341, 4294901760
        %2343 = vmatmul.mubr.f32.gmra.mrb[0].mxu0 %v2342
        %v2344 = vpop.f32.mrb[0].mxu0
        %v2345 = vadd.f32 0.0, %v2344
        %v2346 = vpop.f32.mrb[0].mxu0
        %2347 = vdwg.mxu0
        %2348 = vmatprep.subr.mxu0 0.0
        %v2349 = vand.u32 %v349, 4294901760
        %v2350 = vsub.f32 %v349, %v2349
        %v2351 = vand.u32 %v2350, 4294901760
        %v2352 = vsub.f32 %v2350, %v2351
        %v2353 = vand.u32 %v2352, 4294901760
        %2354 = vmatpush1.msra.mxu0 %v2353
        %2355 = vmatprep.subr.mxu0 0.0
        %2356 = vmatpush1.msra.mxu0 0.0
        %2357 = vmatprep.subr.mxu0 0.0
        %2358 = vmatpush1.msra.mxu0 0.0
        %2359 = vmatprep.subr.mxu0 0.0
        %2360 = vmatpush1.msra.mxu0 0.0
        %2361 = vmatprep.subr.mxu0 0.0
        %2362 = vmatpush1.msra.mxu0 0.0
        %2363 = vmatprep.subr.mxu0 0.0
        %2364 = vmatpush1.msra.mxu0 0.0
        %2365 = vmatprep.subr.mxu0 0.0
        %2366 = vmatpush1.msra.mxu0 0.0
        %2367 = vmatprep.subr.mxu0 0.0
        %2368 = vmatpush1.msra.mxu0 0.0
        %2369 = vmatprep.subr.mxu0 0.0
        %2370 = vmatpush1.msra.mxu0 0.0
        %2371 = vmatprep.subr.mxu0 0.0
        %2372 = vmatpush1.msra.mxu0 0.0
        %2373 = vmatprep.subr.mxu0 0.0
        %2374 = vmatpush1.msra.mxu0 0.0
        %2375 = vmatprep.subr.mxu0 0.0
        %2376 = vmatpush1.msra.mxu0 0.0
        %2377 = vmatprep.subr.mxu0 0.0
        %2378 = vmatpush1.msra.mxu0 0.0
        %2379 = vmatprep.subr.mxu0 0.0
        %2380 = vmatpush1.msra.mxu0 0.0
        %2381 = vmatprep.subr.mxu0 0.0
        %2382 = vmatpush1.msra.mxu0 0.0
        %2383 = vmatprep.subr.mxu0 0.0
        %2384 = vmatpush1.msra.mxu0 0.0
        %2385 = vmatprep.subr.mxu0 0.0
        %2386 = vmatpush1.msra.mxu0 0.0
        %2387 = vmatprep.subr.mxu0 0.0
        %2388 = vmatpush1.msra.mxu0 0.0
        %2389 = vmatprep.subr.mxu0 0.0
        %2390 = vmatpush1.msra.mxu0 0.0
        %2391 = vmatprep.subr.mxu0 0.0
        %2392 = vmatpush1.msra.mxu0 0.0
        %2393 = vmatprep.subr.mxu0 0.0
        %2394 = vmatpush1.msra.mxu0 0.0
        %2395 = vmatprep.subr.mxu0 0.0
        %2396 = vmatpush1.msra.mxu0 0.0
        %2397 = vmatprep.subr.mxu0 0.0
        %2398 = vmatpush1.msra.mxu0 0.0
        %2399 = vmatprep.subr.mxu0 0.0
        %2400 = vmatpush1.msra.mxu0 0.0
        %2401 = vmatprep.subr.mxu0 0.0
        %2402 = vmatpush1.msra.mxu0 0.0
        %2403 = vmatprep.subr.mxu0 0.0
        %2404 = vmatpush1.msra.mxu0 0.0
        %2405 = vmatprep.subr.mxu0 0.0
        %2406 = vmatpush1.msra.mxu0 0.0
        %2407 = vmatprep.subr.mxu0 0.0
        %2408 = vmatpush1.msra.mxu0 0.0
        %2409 = vmatprep.subr.mxu0 0.0
        %2410 = vmatpush1.msra.mxu0 0.0
        %2411 = vmatprep.subr.mxu0 0.0
        %2412 = vmatpush1.msra.mxu0 0.0
        %2413 = vmatprep.subr.mxu0 0.0
        %2414 = vmatpush1.msra.mxu0 0.0
        %2415 = vmatprep.subr.mxu0 0.0
        %2416 = vmatpush1.msra.mxu0 0.0
        %2417 = vmatprep.mubr.f32.mxu0 0.0
        %v2418 = vand.u32 %v2270, 4294901760
        %2419 = vmatmul.mubr.f32.gmra.mrb[0].mxu0 %v2418
        %v2420 = vpop.f32.mrb[0].mxu0
        %v2421 = vadd.f32 %v2345, %v2420
        %v2422 = vpop.f32.mrb[0].mxu0
        %2423 = vdwg.mxu0
        %2424 = vmatprep.subr.mxu0 0.0
        %v2425 = vand.u32 %v349, 4294901760
        %v2426 = vsub.f32 %v349, %v2425
        %2427 = vmatpush1.msra.mxu0 %v2426
        %2428 = vmatprep.subr.mxu0 0.0
        %2429 = vmatpush1.msra.mxu0 0.0
        %2430 = vmatprep.subr.mxu0 0.0
        %2431 = vmatpush1.msra.mxu0 0.0
        %2432 = vmatprep.subr.mxu0 0.0
        %2433 = vmatpush1.msra.mxu0 0.0
        %2434 = vmatprep.subr.mxu0 0.0
        %2435 = vmatpush1.msra.mxu0 0.0
        %2436 = vmatprep.subr.mxu0 0.0
        %2437 = vmatpush1.msra.mxu0 0.0
        %2438 = vmatprep.subr.mxu0 0.0
        %2439 = vmatpush1.msra.mxu0 0.0
        %2440 = vmatprep.subr.mxu0 0.0
        %2441 = vmatpush1.msra.mxu0 0.0
        %2442 = vmatprep.subr.mxu0 0.0
        %2443 = vmatpush1.msra.mxu0 0.0
        %2444 = vmatprep.subr.mxu0 0.0
        %2445 = vmatpush1.msra.mxu0 0.0
        %2446 = vmatprep.subr.mxu0 0.0
        %2447 = vmatpush1.msra.mxu0 0.0
        %2448 = vmatprep.subr.mxu0 0.0
        %2449 = vmatpush1.msra.mxu0 0.0
        %2450 = vmatprep.subr.mxu0 0.0
        %2451 = vmatpush1.msra.mxu0 0.0
        %2452 = vmatprep.subr.mxu0 0.0
        %2453 = vmatpush1.msra.mxu0 0.0
        %2454 = vmatprep.subr.mxu0 0.0
        %2455 = vmatpush1.msra.mxu0 0.0
        %2456 = vmatprep.subr.mxu0 0.0
        %2457 = vmatpush1.msra.mxu0 0.0
        %2458 = vmatprep.subr.mxu0 0.0
        %2459 = vmatpush1.msra.mxu0 0.0
        %2460 = vmatprep.subr.mxu0 0.0
        %2461 = vmatpush1.msra.mxu0 0.0
        %2462 = vmatprep.subr.mxu0 0.0
        %2463 = vmatpush1.msra.mxu0 0.0
        %2464 = vmatprep.subr.mxu0 0.0
        %2465 = vmatpush1.msra.mxu0 0.0
        %2466 = vmatprep.subr.mxu0 0.0
        %2467 = vmatpush1.msra.mxu0 0.0
        %2468 = vmatprep.subr.mxu0 0.0
        %2469 = vmatpush1.msra.mxu0 0.0
        %2470 = vmatprep.subr.mxu0 0.0
        %2471 = vmatpush1.msra.mxu0 0.0
        %2472 = vmatprep.subr.mxu0 0.0
        %2473 = vmatpush1.msra.mxu0 0.0
        %2474 = vmatprep.subr.mxu0 0.0
        %2475 = vmatpush1.msra.mxu0 0.0
        %2476 = vmatprep.subr.mxu0 0.0
        %2477 = vmatpush1.msra.mxu0 0.0
        %2478 = vmatprep.subr.mxu0 0.0
        %2479 = vmatpush1.msra.mxu0 0.0
        %2480 = vmatprep.subr.mxu0 0.0
        %2481 = vmatpush1.msra.mxu0 0.0
        %2482 = vmatprep.subr.mxu0 0.0
        %2483 = vmatpush1.msra.mxu0 0.0
        %2484 = vmatprep.subr.mxu0 0.0
        %2485 = vmatpush1.msra.mxu0 0.0
        %2486 = vmatprep.subr.mxu0 0.0
        %2487 = vmatpush1.msra.mxu0 0.0
        %2488 = vmatprep.subr.mxu0 0.0
        %2489 = vmatpush1.msra.mxu0 0.0
        %2490 = vmatprep.mubr.f32.mxu0 0.0
        %v2491 = vand.u32 %v2270, 4294901760
        %v2492 = vsub.f32 %v2270, %v2491
        %2493 = vmatmul.mubr.f32.gmra.mrb[0].mxu0 %v2492
        %v2494 = vpop.f32.mrb[0].mxu0
        %v2495 = vadd.f32 %v2421, %v2494
        %v2496 = vpop.f32.mrb[0].mxu0
        %2497 = vdwg.mxu0
        %2498 = vmatprep.subr.mxu0 0.0
        %v2499 = vand.u32 %v349, 4294901760
        %2500 = vmatpush1.msra.mxu0 %v2499
        %2501 = vmatprep.subr.mxu0 0.0
        %2502 = vmatpush1.msra.mxu0 0.0
        %2503 = vmatprep.subr.mxu0 0.0
        %2504 = vmatpush1.msra.mxu0 0.0
        %2505 = vmatprep.subr.mxu0 0.0
        %2506 = vmatpush1.msra.mxu0 0.0
        %2507 = vmatprep.subr.mxu0 0.0
        %2508 = vmatpush1.msra.mxu0 0.0
        %2509 = vmatprep.subr.mxu0 0.0
        %2510 = vmatpush1.msra.mxu0 0.0
        %2511 = vmatprep.subr.mxu0 0.0
        %2512 = vmatpush1.msra.mxu0 0.0
        %2513 = vmatprep.subr.mxu0 0.0
        %2514 = vmatpush1.msra.mxu0 0.0
        %2515 = vmatprep.subr.mxu0 0.0
        %2516 = vmatpush1.msra.mxu0 0.0
        %2517 = vmatprep.subr.mxu0 0.0
        %2518 = vmatpush1.msra.mxu0 0.0
        %2519 = vmatprep.subr.mxu0 0.0
        %2520 = vmatpush1.msra.mxu0 0.0
        %2521 = vmatprep.subr.mxu0 0.0
        %2522 = vmatpush1.msra.mxu0 0.0
        %2523 = vmatprep.subr.mxu0 0.0
        %2524 = vmatpush1.msra.mxu0 0.0
        %2525 = vmatprep.subr.mxu0 0.0
        %2526 = vmatpush1.msra.mxu0 0.0
        %2527 = vmatprep.subr.mxu0 0.0
        %2528 = vmatpush1.msra.mxu0 0.0
        %2529 = vmatprep.subr.mxu0 0.0
        %2530 = vmatpush1.msra.mxu0 0.0
        %2531 = vmatprep.subr.mxu0 0.0
        %2532 = vmatpush1.msra.mxu0 0.0
        %2533 = vmatprep.subr.mxu0 0.0
        %2534 = vmatpush1.msra.mxu0 0.0
        %2535 = vmatprep.subr.mxu0 0.0
        %2536 = vmatpush1.msra.mxu0 0.0
        %2537 = vmatprep.subr.mxu0 0.0
        %2538 = vmatpush1.msra.mxu0 0.0
        %2539 = vmatprep.subr.mxu0 0.0
        %2540 = vmatpush1.msra.mxu0 0.0
        %2541 = vmatprep.subr.mxu0 0.0
        %2542 = vmatpush1.msra.mxu0 0.0
        %2543 = vmatprep.subr.mxu0 0.0
        %2544 = vmatpush1.msra.mxu0 0.0
        %2545 = vmatprep.subr.mxu0 0.0
        %2546 = vmatpush1.msra.mxu0 0.0
        %2547 = vmatprep.subr.mxu0 0.0
        %2548 = vmatpush1.msra.mxu0 0.0
        %2549 = vmatprep.subr.mxu0 0.0
        %2550 = vmatpush1.msra.mxu0 0.0
        %2551 = vmatprep.subr.mxu0 0.0
        %2552 = vmatpush1.msra.mxu0 0.0
        %2553 = vmatprep.subr.mxu0 0.0
        %2554 = vmatpush1.msra.mxu0 0.0
        %2555 = vmatprep.subr.mxu0 0.0
        %2556 = vmatpush1.msra.mxu0 0.0
        %2557 = vmatprep.subr.mxu0 0.0
        %2558 = vmatpush1.msra.mxu0 0.0
        %2559 = vmatprep.subr.mxu0 0.0
        %2560 = vmatpush1.msra.mxu0 0.0
        %2561 = vmatprep.subr.mxu0 0.0
        %2562 = vmatpush1.msra.mxu0 0.0
        %2563 = vmatprep.mubr.f32.mxu0 0.0
        %v2564 = vand.u32 %v2270, 4294901760
        %v2565 = vsub.f32 %v2270, %v2564
        %v2566 = vand.u32 %v2565, 4294901760
        %2567 = vmatmul.mubr.f32.gmra.mrb[0].mxu0 %v2566
        %v2568 = vpop.f32.mrb[0].mxu0
        %v2569 = vadd.f32 %v2495, %v2568
        %v2570 = vpop.f32.mrb[0].mxu0
        %2571 = vdwg.mxu0
        %2572 = vmatprep.subr.mxu0 0.0
        %v2573 = vand.u32 %v349, 4294901760
        %v2574 = vsub.f32 %v349, %v2573
        %v2575 = vand.u32 %v2574, 4294901760
        %2576 = vmatpush1.msra.mxu0 %v2575
        %2577 = vmatprep.subr.mxu0 0.0
        %2578 = vmatpush1.msra.mxu0 0.0
        %2579 = vmatprep.subr.mxu0 0.0
        %2580 = vmatpush1.msra.mxu0 0.0
        %2581 = vmatprep.subr.mxu0 0.0
        %2582 = vmatpush1.msra.mxu0 0.0
        %2583 = vmatprep.subr.mxu0 0.0
        %2584 = vmatpush1.msra.mxu0 0.0
        %2585 = vmatprep.subr.mxu0 0.0
        %2586 = vmatpush1.msra.mxu0 0.0
        %2587 = vmatprep.subr.mxu0 0.0
        %2588 = vmatpush1.msra.mxu0 0.0
        %2589 = vmatprep.subr.mxu0 0.0
        %2590 = vmatpush1.msra.mxu0 0.0
        %2591 = vmatprep.subr.mxu0 0.0
        %2592 = vmatpush1.msra.mxu0 0.0
        %2593 = vmatprep.subr.mxu0 0.0
        %2594 = vmatpush1.msra.mxu0 0.0
        %2595 = vmatprep.subr.mxu0 0.0
        %2596 = vmatpush1.msra.mxu0 0.0
        %2597 = vmatprep.subr.mxu0 0.0
        %2598 = vmatpush1.msra.mxu0 0.0
        %2599 = vmatprep.subr.mxu0 0.0
        %2600 = vmatpush1.msra.mxu0 0.0
        %2601 = vmatprep.subr.mxu0 0.0
        %2602 = vmatpush1.msra.mxu0 0.0
        %2603 = vmatprep.subr.mxu0 0.0
        %2604 = vmatpush1.msra.mxu0 0.0
        %2605 = vmatprep.subr.mxu0 0.0
        %2606 = vmatpush1.msra.mxu0 0.0
        %2607 = vmatprep.subr.mxu0 0.0
        %2608 = vmatpush1.msra.mxu0 0.0
        %2609 = vmatprep.subr.mxu0 0.0
        %2610 = vmatpush1.msra.mxu0 0.0
        %2611 = vmatprep.subr.mxu0 0.0
        %2612 = vmatpush1.msra.mxu0 0.0
        %2613 = vmatprep.subr.mxu0 0.0
        %2614 = vmatpush1.msra.mxu0 0.0
        %2615 = vmatprep.subr.mxu0 0.0
        %2616 = vmatpush1.msra.mxu0 0.0
        %2617 = vmatprep.subr.mxu0 0.0
        %2618 = vmatpush1.msra.mxu0 0.0
        %2619 = vmatprep.subr.mxu0 0.0
        %2620 = vmatpush1.msra.mxu0 0.0
        %2621 = vmatprep.subr.mxu0 0.0
        %2622 = vmatpush1.msra.mxu0 0.0
        %2623 = vmatprep.subr.mxu0 0.0
        %2624 = vmatpush1.msra.mxu0 0.0
        %2625 = vmatprep.subr.mxu0 0.0
        %2626 = vmatpush1.msra.mxu0 0.0
        %2627 = vmatprep.subr.mxu0 0.0
        %2628 = vmatpush1.msra.mxu0 0.0
        %2629 = vmatprep.subr.mxu0 0.0
        %2630 = vmatpush1.msra.mxu0 0.0
        %2631 = vmatprep.subr.mxu0 0.0
        %2632 = vmatpush1.msra.mxu0 0.0
        %2633 = vmatprep.subr.mxu0 0.0
        %2634 = vmatpush1.msra.mxu0 0.0
        %2635 = vmatprep.subr.mxu0 0.0
        %2636 = vmatpush1.msra.mxu0 0.0
        %2637 = vmatprep.subr.mxu0 0.0
        %2638 = vmatpush1.msra.mxu0 0.0
        %2639 = vmatprep.mubr.f32.mxu0 0.0
        %v2640 = vand.u32 %v2270, 4294901760
        %2641 = vmatmul.mubr.f32.gmra.mrb[0].mxu0 %v2640
        %v2642 = vpop.f32.mrb[0].mxu0
        %v2643 = vadd.f32 %v2569, %v2642
        %v2644 = vpop.f32.mrb[0].mxu0
        %2645 = vdwg.mxu0
        %2646 = vmatprep.subr.mxu0 0.0
        %v2647 = vand.u32 %v349, 4294901760
        %2648 = vmatpush1.msra.mxu0 %v2647
        %2649 = vmatprep.subr.mxu0 0.0
        %2650 = vmatpush1.msra.mxu0 0.0
        %2651 = vmatprep.subr.mxu0 0.0
        %2652 = vmatpush1.msra.mxu0 0.0
        %2653 = vmatprep.subr.mxu0 0.0
        %2654 = vmatpush1.msra.mxu0 0.0
        %2655 = vmatprep.subr.mxu0 0.0
        %2656 = vmatpush1.msra.mxu0 0.0
        %2657 = vmatprep.subr.mxu0 0.0
        %2658 = vmatpush1.msra.mxu0 0.0
        %2659 = vmatprep.subr.mxu0 0.0
        %2660 = vmatpush1.msra.mxu0 0.0
        %2661 = vmatprep.subr.mxu0 0.0
        %2662 = vmatpush1.msra.mxu0 0.0
        %2663 = vmatprep.subr.mxu0 0.0
        %2664 = vmatpush1.msra.mxu0 0.0
        %2665 = vmatprep.subr.mxu0 0.0
        %2666 = vmatpush1.msra.mxu0 0.0
        %2667 = vmatprep.subr.mxu0 0.0
        %2668 = vmatpush1.msra.mxu0 0.0
        %2669 = vmatprep.subr.mxu0 0.0
        %2670 = vmatpush1.msra.mxu0 0.0
        %2671 = vmatprep.subr.mxu0 0.0
        %2672 = vmatpush1.msra.mxu0 0.0
        %2673 = vmatprep.subr.mxu0 0.0
        %2674 = vmatpush1.msra.mxu0 0.0
        %2675 = vmatprep.subr.mxu0 0.0
        %2676 = vmatpush1.msra.mxu0 0.0
        %2677 = vmatprep.subr.mxu0 0.0
        %2678 = vmatpush1.msra.mxu0 0.0
        %2679 = vmatprep.subr.mxu0 0.0
        %2680 = vmatpush1.msra.mxu0 0.0
        %2681 = vmatprep.subr.mxu0 0.0
        %2682 = vmatpush1.msra.mxu0 0.0
        %2683 = vmatprep.subr.mxu0 0.0
        %2684 = vmatpush1.msra.mxu0 0.0
        %2685 = vmatprep.subr.mxu0 0.0
        %2686 = vmatpush1.msra.mxu0 0.0
        %2687 = vmatprep.subr.mxu0 0.0
        %2688 = vmatpush1.msra.mxu0 0.0
        %2689 = vmatprep.subr.mxu0 0.0
        %2690 = vmatpush1.msra.mxu0 0.0
        %2691 = vmatprep.subr.mxu0 0.0
        %2692 = vmatpush1.msra.mxu0 0.0
        %2693 = vmatprep.subr.mxu0 0.0
        %2694 = vmatpush1.msra.mxu0 0.0
        %2695 = vmatprep.subr.mxu0 0.0
        %2696 = vmatpush1.msra.mxu0 0.0
        %2697 = vmatprep.subr.mxu0 0.0
        %2698 = vmatpush1.msra.mxu0 0.0
        %2699 = vmatprep.subr.mxu0 0.0
        %2700 = vmatpush1.msra.mxu0 0.0
        %2701 = vmatprep.subr.mxu0 0.0
        %2702 = vmatpush1.msra.mxu0 0.0
        %2703 = vmatprep.subr.mxu0 0.0
        %2704 = vmatpush1.msra.mxu0 0.0
        %2705 = vmatprep.subr.mxu0 0.0
        %2706 = vmatpush1.msra.mxu0 0.0
        %2707 = vmatprep.subr.mxu0 0.0
        %2708 = vmatpush1.msra.mxu0 0.0
        %2709 = vmatprep.subr.mxu0 0.0
        %2710 = vmatpush1.msra.mxu0 0.0
        %2711 = vmatprep.mubr.f32.mxu0 0.0
        %v2712 = vand.u32 %v2270, 4294901760
        %2713 = vmatmul.mubr.f32.gmra.mrb[0].mxu0 %v2712
        %v2714 = vpop.f32.mrb[0].mxu0
        %v2715 = vadd.f32 %v2643, %v2714
        %v2716 = vpop.f32.mrb[0].mxu0
        %2717 = vdwg.mxu0
        %v2719 = vsel %vm371, %v2235, 0
        %2721 = vmatprep.subr.mxu0 0.0
        %v2722 = vand.u32 %v359, 4294901760
        %2723 = vmatpush1.msra.mxu0 %v2722
        %2724 = vmatprep.subr.mxu0 0.0
        %2725 = vmatpush1.msra.mxu0 0.0
        %2726 = vmatprep.subr.mxu0 0.0
        %2727 = vmatpush1.msra.mxu0 0.0
        %2728 = vmatprep.subr.mxu0 0.0
        %2729 = vmatpush1.msra.mxu0 0.0
        %2730 = vmatprep.subr.mxu0 0.0
        %2731 = vmatpush1.msra.mxu0 0.0
        %2732 = vmatprep.subr.mxu0 0.0
        %2733 = vmatpush1.msra.mxu0 0.0
        %2734 = vmatprep.subr.mxu0 0.0
        %2735 = vmatpush1.msra.mxu0 0.0
        %2736 = vmatprep.subr.mxu0 0.0
        %2737 = vmatpush1.msra.mxu0 0.0
        %2738 = vmatprep.subr.mxu0 0.0
        %2739 = vmatpush1.msra.mxu0 0.0
        %2740 = vmatprep.subr.mxu0 0.0
        %2741 = vmatpush1.msra.mxu0 0.0
        %2742 = vmatprep.subr.mxu0 0.0
        %2743 = vmatpush1.msra.mxu0 0.0
        %2744 = vmatprep.subr.mxu0 0.0
        %2745 = vmatpush1.msra.mxu0 0.0
        %2746 = vmatprep.subr.mxu0 0.0
        %2747 = vmatpush1.msra.mxu0 0.0
        %2748 = vmatprep.subr.mxu0 0.0
        %2749 = vmatpush1.msra.mxu0 0.0
        %2750 = vmatprep.subr.mxu0 0.0
        %2751 = vmatpush1.msra.mxu0 0.0
        %2752 = vmatprep.subr.mxu0 0.0
        %2753 = vmatpush1.msra.mxu0 0.0
        %2754 = vmatprep.subr.mxu0 0.0
        %2755 = vmatpush1.msra.mxu0 0.0
        %2756 = vmatprep.subr.mxu0 0.0
        %2757 = vmatpush1.msra.mxu0 0.0
        %2758 = vmatprep.subr.mxu0 0.0
        %2759 = vmatpush1.msra.mxu0 0.0
        %2760 = vmatprep.subr.mxu0 0.0
        %2761 = vmatpush1.msra.mxu0 0.0
        %2762 = vmatprep.subr.mxu0 0.0
        %2763 = vmatpush1.msra.mxu0 0.0
        %2764 = vmatprep.subr.mxu0 0.0
        %2765 = vmatpush1.msra.mxu0 0.0
        %2766 = vmatprep.subr.mxu0 0.0
        %2767 = vmatpush1.msra.mxu0 0.0
        %2768 = vmatprep.subr.mxu0 0.0
        %2769 = vmatpush1.msra.mxu0 0.0
        %2770 = vmatprep.subr.mxu0 0.0
        %2771 = vmatpush1.msra.mxu0 0.0
        %2772 = vmatprep.subr.mxu0 0.0
        %2773 = vmatpush1.msra.mxu0 0.0
        %2774 = vmatprep.subr.mxu0 0.0
        %2775 = vmatpush1.msra.mxu0 0.0
        %2776 = vmatprep.subr.mxu0 0.0
        %2777 = vmatpush1.msra.mxu0 0.0
        %2778 = vmatprep.subr.mxu0 0.0
        %2779 = vmatpush1.msra.mxu0 0.0
        %2780 = vmatprep.subr.mxu0 0.0
        %2781 = vmatpush1.msra.mxu0 0.0
        %2782 = vmatprep.subr.mxu0 0.0
        %2783 = vmatpush1.msra.mxu0 0.0
        %2784 = vmatprep.subr.mxu0 0.0
        %2785 = vmatpush1.msra.mxu0 0.0
        %2786 = vmatprep.mubr.f32.mxu0 0.0
        %v2787 = vand.u32 %v2719, 4294901760
        %v2788 = vsub.f32 %v2719, %v2787
        %v2789 = vand.u32 %v2788, 4294901760
        %v2790 = vsub.f32 %v2788, %v2789
        %v2791 = vand.u32 %v2790, 4294901760
        %2792 = vmatmul.mubr.f32.gmra.mrb[0].mxu0 %v2791
        %v2793 = vpop.f32.mrb[0].mxu0
        %v2794 = vadd.f32 0.0, %v2793
        %v2795 = vpop.f32.mrb[0].mxu0
        %2796 = vdwg.mxu0
        %2797 = vmatprep.subr.mxu0 0.0
        %v2798 = vand.u32 %v359, 4294901760
        %v2799 = vsub.f32 %v359, %v2798
        %v2800 = vand.u32 %v2799, 4294901760
        %v2801 = vsub.f32 %v2799, %v2800
        %v2802 = vand.u32 %v2801, 4294901760
        %2803 = vmatpush1.msra.mxu0 %v2802
        %2804 = vmatprep.subr.mxu0 0.0
        %2805 = vmatpush1.msra.mxu0 0.0
        %2806 = vmatprep.subr.mxu0 0.0
        %2807 = vmatpush1.msra.mxu0 0.0
        %2808 = vmatprep.subr.mxu0 0.0
        %2809 = vmatpush1.msra.mxu0 0.0
        %2810 = vmatprep.subr.mxu0 0.0
        %2811 = vmatpush1.msra.mxu0 0.0
        %2812 = vmatprep.subr.mxu0 0.0
        %2813 = vmatpush1.msra.mxu0 0.0
        %2814 = vmatprep.subr.mxu0 0.0
        %2815 = vmatpush1.msra.mxu0 0.0
        %2816 = vmatprep.subr.mxu0 0.0
        %2817 = vmatpush1.msra.mxu0 0.0
        %2818 = vmatprep.subr.mxu0 0.0
        %2819 = vmatpush1.msra.mxu0 0.0
        %2820 = vmatprep.subr.mxu0 0.0
        %2821 = vmatpush1.msra.mxu0 0.0
        %2822 = vmatprep.subr.mxu0 0.0
        %2823 = vmatpush1.msra.mxu0 0.0
        %2824 = vmatprep.subr.mxu0 0.0
        %2825 = vmatpush1.msra.mxu0 0.0
        %2826 = vmatprep.subr.mxu0 0.0
        %2827 = vmatpush1.msra.mxu0 0.0
        %2828 = vmatprep.subr.mxu0 0.0
        %2829 = vmatpush1.msra.mxu0 0.0
        %2830 = vmatprep.subr.mxu0 0.0
        %2831 = vmatpush1.msra.mxu0 0.0
        %2832 = vmatprep.subr.mxu0 0.0
        %2833 = vmatpush1.msra.mxu0 0.0
        %2834 = vmatprep.subr.mxu0 0.0
        %2835 = vmatpush1.msra.mxu0 0.0
        %2836 = vmatprep.subr.mxu0 0.0
        %2837 = vmatpush1.msra.mxu0 0.0
        %2838 = vmatprep.subr.mxu0 0.0
        %2839 = vmatpush1.msra.mxu0 0.0
        %2840 = vmatprep.subr.mxu0 0.0
        %2841 = vmatpush1.msra.mxu0 0.0
        %2842 = vmatprep.subr.mxu0 0.0
        %2843 = vmatpush1.msra.mxu0 0.0
        %2844 = vmatprep.subr.mxu0 0.0
        %2845 = vmatpush1.msra.mxu0 0.0
        %2846 = vmatprep.subr.mxu0 0.0
        %2847 = vmatpush1.msra.mxu0 0.0
        %2848 = vmatprep.subr.mxu0 0.0
        %2849 = vmatpush1.msra.mxu0 0.0
        %2850 = vmatprep.subr.mxu0 0.0
        %2851 = vmatpush1.msra.mxu0 0.0
        %2852 = vmatprep.subr.mxu0 0.0
        %2853 = vmatpush1.msra.mxu0 0.0
        %2854 = vmatprep.subr.mxu0 0.0
        %2855 = vmatpush1.msra.mxu0 0.0
        %2856 = vmatprep.subr.mxu0 0.0
        %2857 = vmatpush1.msra.mxu0 0.0
        %2858 = vmatprep.subr.mxu0 0.0
        %2859 = vmatpush1.msra.mxu0 0.0
        %2860 = vmatprep.subr.mxu0 0.0
        %2861 = vmatpush1.msra.mxu0 0.0
        %2862 = vmatprep.subr.mxu0 0.0
        %2863 = vmatpush1.msra.mxu0 0.0
        %2864 = vmatprep.subr.mxu0 0.0
        %2865 = vmatpush1.msra.mxu0 0.0
        %2866 = vmatprep.mubr.f32.mxu0 0.0
        %v2867 = vand.u32 %v2719, 4294901760
        %2868 = vmatmul.mubr.f32.gmra.mrb[0].mxu0 %v2867
        %v2869 = vpop.f32.mrb[0].mxu0
        %v2870 = vadd.f32 %v2794, %v2869
        %v2871 = vpop.f32.mrb[0].mxu0
        %2872 = vdwg.mxu0
        %2873 = vmatprep.subr.mxu0 0.0
        %v2874 = vand.u32 %v359, 4294901760
        %v2875 = vsub.f32 %v359, %v2874
        %2876 = vmatpush1.msra.mxu0 %v2875
        %2877 = vmatprep.subr.mxu0 0.0
        %2878 = vmatpush1.msra.mxu0 0.0
        %2879 = vmatprep.subr.mxu0 0.0
        %2880 = vmatpush1.msra.mxu0 0.0
        %2881 = vmatprep.subr.mxu0 0.0
        %2882 = vmatpush1.msra.mxu0 0.0
        %2883 = vmatprep.subr.mxu0 0.0
        %2884 = vmatpush1.msra.mxu0 0.0
        %2885 = vmatprep.subr.mxu0 0.0
        %2886 = vmatpush1.msra.mxu0 0.0
        %2887 = vmatprep.subr.mxu0 0.0
        %2888 = vmatpush1.msra.mxu0 0.0
        %2889 = vmatprep.subr.mxu0 0.0
        %2890 = vmatpush1.msra.mxu0 0.0
        %2891 = vmatprep.subr.mxu0 0.0
        %2892 = vmatpush1.msra.mxu0 0.0
        %2893 = vmatprep.subr.mxu0 0.0
        %2894 = vmatpush1.msra.mxu0 0.0
        %2895 = vmatprep.subr.mxu0 0.0
        %2896 = vmatpush1.msra.mxu0 0.0
        %2897 = vmatprep.subr.mxu0 0.0
        %2898 = vmatpush1.msra.mxu0 0.0
        %2899 = vmatprep.subr.mxu0 0.0
        %2900 = vmatpush1.msra.mxu0 0.0
        %2901 = vmatprep.subr.mxu0 0.0
        %2902 = vmatpush1.msra.mxu0 0.0
        %2903 = vmatprep.subr.mxu0 0.0
        %2904 = vmatpush1.msra.mxu0 0.0
        %2905 = vmatprep.subr.mxu0 0.0
        %2906 = vmatpush1.msra.mxu0 0.0
        %2907 = vmatprep.subr.mxu0 0.0
        %2908 = vmatpush1.msra.mxu0 0.0
        %2909 = vmatprep.subr.mxu0 0.0
        %2910 = vmatpush1.msra.mxu0 0.0
        %2911 = vmatprep.subr.mxu0 0.0
        %2912 = vmatpush1.msra.mxu0 0.0
        %2913 = vmatprep.subr.mxu0 0.0
        %2914 = vmatpush1.msra.mxu0 0.0
        %2915 = vmatprep.subr.mxu0 0.0
        %2916 = vmatpush1.msra.mxu0 0.0
        %2917 = vmatprep.subr.mxu0 0.0
        %2918 = vmatpush1.msra.mxu0 0.0
        %2919 = vmatprep.subr.mxu0 0.0
        %2920 = vmatpush1.msra.mxu0 0.0
        %2921 = vmatprep.subr.mxu0 0.0
        %2922 = vmatpush1.msra.mxu0 0.0
        %2923 = vmatprep.subr.mxu0 0.0
        %2924 = vmatpush1.msra.mxu0 0.0
        %2925 = vmatprep.subr.mxu0 0.0
        %2926 = vmatpush1.msra.mxu0 0.0
        %2927 = vmatprep.subr.mxu0 0.0
        %2928 = vmatpush1.msra.mxu0 0.0
        %2929 = vmatprep.subr.mxu0 0.0
        %2930 = vmatpush1.msra.mxu0 0.0
        %2931 = vmatprep.subr.mxu0 0.0
        %2932 = vmatpush1.msra.mxu0 0.0
        %2933 = vmatprep.subr.mxu0 0.0
        %2934 = vmatpush1.msra.mxu0 0.0
        %2935 = vmatprep.subr.mxu0 0.0
        %2936 = vmatpush1.msra.mxu0 0.0
        %2937 = vmatprep.subr.mxu0 0.0
        %2938 = vmatpush1.msra.mxu0 0.0
        %2939 = vmatprep.mubr.f32.mxu0 0.0
        %v2940 = vand.u32 %v2719, 4294901760
        %v2941 = vsub.f32 %v2719, %v2940
        %2942 = vmatmul.mubr.f32.gmra.mrb[0].mxu0 %v2941
        %v2943 = vpop.f32.mrb[0].mxu0
        %v2944 = vadd.f32 %v2870, %v2943
        %v2945 = vpop.f32.mrb[0].mxu0
        %2946 = vdwg.mxu0
        %2947 = vmatprep.subr.mxu0 0.0
        %v2948 = vand.u32 %v359, 4294901760
        %2949 = vmatpush1.msra.mxu0 %v2948
        %2950 = vmatprep.subr.mxu0 0.0
        %2951 = vmatpush1.msra.mxu0 0.0
        %2952 = vmatprep.subr.mxu0 0.0
        %2953 = vmatpush1.msra.mxu0 0.0
        %2954 = vmatprep.subr.mxu0 0.0
        %2955 = vmatpush1.msra.mxu0 0.0
        %2956 = vmatprep.subr.mxu0 0.0
        %2957 = vmatpush1.msra.mxu0 0.0
        %2958 = vmatprep.subr.mxu0 0.0
        %2959 = vmatpush1.msra.mxu0 0.0
        %2960 = vmatprep.subr.mxu0 0.0
        %2961 = vmatpush1.msra.mxu0 0.0
        %2962 = vmatprep.subr.mxu0 0.0
        %2963 = vmatpush1.msra.mxu0 0.0
        %2964 = vmatprep.subr.mxu0 0.0
        %2965 = vmatpush1.msra.mxu0 0.0
        %2966 = vmatprep.subr.mxu0 0.0
        %2967 = vmatpush1.msra.mxu0 0.0
        %2968 = vmatprep.subr.mxu0 0.0
        %2969 = vmatpush1.msra.mxu0 0.0
        %2970 = vmatprep.subr.mxu0 0.0
        %2971 = vmatpush1.msra.mxu0 0.0
        %2972 = vmatprep.subr.mxu0 0.0
        %2973 = vmatpush1.msra.mxu0 0.0
        %2974 = vmatprep.subr.mxu0 0.0
        %2975 = vmatpush1.msra.mxu0 0.0
        %2976 = vmatprep.subr.mxu0 0.0
        %2977 = vmatpush1.msra.mxu0 0.0
        %2978 = vmatprep.subr.mxu0 0.0
        %2979 = vmatpush1.msra.mxu0 0.0
        %2980 = vmatprep.subr.mxu0 0.0
        %2981 = vmatpush1.msra.mxu0 0.0
        %2982 = vmatprep.subr.mxu0 0.0
        %2983 = vmatpush1.msra.mxu0 0.0
        %2984 = vmatprep.subr.mxu0 0.0
        %2985 = vmatpush1.msra.mxu0 0.0
        %2986 = vmatprep.subr.mxu0 0.0
        %2987 = vmatpush1.msra.mxu0 0.0
        %2988 = vmatprep.subr.mxu0 0.0
        %2989 = vmatpush1.msra.mxu0 0.0
        %2990 = vmatprep.subr.mxu0 0.0
        %2991 = vmatpush1.msra.mxu0 0.0
        %2992 = vmatprep.subr.mxu0 0.0
        %2993 = vmatpush1.msra.mxu0 0.0
        %2994 = vmatprep.subr.mxu0 0.0
        %2995 = vmatpush1.msra.mxu0 0.0
        %2996 = vmatprep.subr.mxu0 0.0
        %2997 = vmatpush1.msra.mxu0 0.0
        %2998 = vmatprep.subr.mxu0 0.0
        %2999 = vmatpush1.msra.mxu0 0.0
        %3000 = vmatprep.subr.mxu0 0.0
        %3001 = vmatpush1.msra.mxu0 0.0
        %3002 = vmatprep.subr.mxu0 0.0
        %3003 = vmatpush1.msra.mxu0 0.0
        %3004 = vmatprep.subr.mxu0 0.0
        %3005 = vmatpush1.msra.mxu0 0.0
        %3006 = vmatprep.subr.mxu0 0.0
        %3007 = vmatpush1.msra.mxu0 0.0
        %3008 = vmatprep.subr.mxu0 0.0
        %3009 = vmatpush1.msra.mxu0 0.0
        %3010 = vmatprep.subr.mxu0 0.0
        %3011 = vmatpush1.msra.mxu0 0.0
        %3012 = vmatprep.mubr.f32.mxu0 0.0
        %v3013 = vand.u32 %v2719, 4294901760
        %v3014 = vsub.f32 %v2719, %v3013
        %v3015 = vand.u32 %v3014, 4294901760
        %3016 = vmatmul.mubr.f32.gmra.mrb[0].mxu0 %v3015
        %v3017 = vpop.f32.mrb[0].mxu0
        %v3018 = vadd.f32 %v2944, %v3017
        %v3019 = vpop.f32.mrb[0].mxu0
        %3020 = vdwg.mxu0
        %3021 = vmatprep.subr.mxu0 0.0
        %v3022 = vand.u32 %v359, 4294901760
        %v3023 = vsub.f32 %v359, %v3022
        %v3024 = vand.u32 %v3023, 4294901760
        %3025 = vmatpush1.msra.mxu0 %v3024
        %3026 = vmatprep.subr.mxu0 0.0
        %3027 = vmatpush1.msra.mxu0 0.0
        %3028 = vmatprep.subr.mxu0 0.0
        %3029 = vmatpush1.msra.mxu0 0.0
        %3030 = vmatprep.subr.mxu0 0.0
        %3031 = vmatpush1.msra.mxu0 0.0
        %3032 = vmatprep.subr.mxu0 0.0
        %3033 = vmatpush1.msra.mxu0 0.0
        %3034 = vmatprep.subr.mxu0 0.0
        %3035 = vmatpush1.msra.mxu0 0.0
        %3036 = vmatprep.subr.mxu0 0.0
        %3037 = vmatpush1.msra.mxu0 0.0
        %3038 = vmatprep.subr.mxu0 0.0
        %3039 = vmatpush1.msra.mxu0 0.0
        %3040 = vmatprep.subr.mxu0 0.0
        %3041 = vmatpush1.msra.mxu0 0.0
        %3042 = vmatprep.subr.mxu0 0.0
        %3043 = vmatpush1.msra.mxu0 0.0
        %3044 = vmatprep.subr.mxu0 0.0
        %3045 = vmatpush1.msra.mxu0 0.0
        %3046 = vmatprep.subr.mxu0 0.0
        %3047 = vmatpush1.msra.mxu0 0.0
        %3048 = vmatprep.subr.mxu0 0.0
        %3049 = vmatpush1.msra.mxu0 0.0
        %3050 = vmatprep.subr.mxu0 0.0
        %3051 = vmatpush1.msra.mxu0 0.0
        %3052 = vmatprep.subr.mxu0 0.0
        %3053 = vmatpush1.msra.mxu0 0.0
        %3054 = vmatprep.subr.mxu0 0.0
        %3055 = vmatpush1.msra.mxu0 0.0
        %3056 = vmatprep.subr.mxu0 0.0
        %3057 = vmatpush1.msra.mxu0 0.0
        %3058 = vmatprep.subr.mxu0 0.0
        %3059 = vmatpush1.msra.mxu0 0.0
        %3060 = vmatprep.subr.mxu0 0.0
        %3061 = vmatpush1.msra.mxu0 0.0
        %3062 = vmatprep.subr.mxu0 0.0
        %3063 = vmatpush1.msra.mxu0 0.0
        %3064 = vmatprep.subr.mxu0 0.0
        %3065 = vmatpush1.msra.mxu0 0.0
        %3066 = vmatprep.subr.mxu0 0.0
        %3067 = vmatpush1.msra.mxu0 0.0
        %3068 = vmatprep.subr.mxu0 0.0
        %3069 = vmatpush1.msra.mxu0 0.0
        %3070 = vmatprep.subr.mxu0 0.0
        %3071 = vmatpush1.msra.mxu0 0.0
        %3072 = vmatprep.subr.mxu0 0.0
        %3073 = vmatpush1.msra.mxu0 0.0
        %3074 = vmatprep.subr.mxu0 0.0
        %3075 = vmatpush1.msra.mxu0 0.0
        %3076 = vmatprep.subr.mxu0 0.0
        %3077 = vmatpush1.msra.mxu0 0.0
        %3078 = vmatprep.subr.mxu0 0.0
        %3079 = vmatpush1.msra.mxu0 0.0
        %3080 = vmatprep.subr.mxu0 0.0
        %3081 = vmatpush1.msra.mxu0 0.0
        %3082 = vmatprep.subr.mxu0 0.0
        %3083 = vmatpush1.msra.mxu0 0.0
        %3084 = vmatprep.subr.mxu0 0.0
        %3085 = vmatpush1.msra.mxu0 0.0
        %3086 = vmatprep.subr.mxu0 0.0
        %3087 = vmatpush1.msra.mxu0 0.0
        %3088 = vmatprep.mubr.f32.mxu0 0.0
        %v3089 = vand.u32 %v2719, 4294901760
        %3090 = vmatmul.mubr.f32.gmra.mrb[0].mxu0 %v3089
        %v3091 = vpop.f32.mrb[0].mxu0
        %v3092 = vadd.f32 %v3018, %v3091
        %v3093 = vpop.f32.mrb[0].mxu0
        %3094 = vdwg.mxu0
        %3095 = vmatprep.subr.mxu0 0.0
        %v3096 = vand.u32 %v359, 4294901760
        %3097 = vmatpush1.msra.mxu0 %v3096
        %3098 = vmatprep.subr.mxu0 0.0
        %3099 = vmatpush1.msra.mxu0 0.0
        %3100 = vmatprep.subr.mxu0 0.0
        %3101 = vmatpush1.msra.mxu0 0.0
        %3102 = vmatprep.subr.mxu0 0.0
        %3103 = vmatpush1.msra.mxu0 0.0
        %3104 = vmatprep.subr.mxu0 0.0
        %3105 = vmatpush1.msra.mxu0 0.0
        %3106 = vmatprep.subr.mxu0 0.0
        %3107 = vmatpush1.msra.mxu0 0.0
        %3108 = vmatprep.subr.mxu0 0.0
        %3109 = vmatpush1.msra.mxu0 0.0
        %3110 = vmatprep.subr.mxu0 0.0
        %3111 = vmatpush1.msra.mxu0 0.0
        %3112 = vmatprep.subr.mxu0 0.0
        %3113 = vmatpush1.msra.mxu0 0.0
        %3114 = vmatprep.subr.mxu0 0.0
        %3115 = vmatpush1.msra.mxu0 0.0
        %3116 = vmatprep.subr.mxu0 0.0
        %3117 = vmatpush1.msra.mxu0 0.0
        %3118 = vmatprep.subr.mxu0 0.0
        %3119 = vmatpush1.msra.mxu0 0.0
        %3120 = vmatprep.subr.mxu0 0.0
        %3121 = vmatpush1.msra.mxu0 0.0
        %3122 = vmatprep.subr.mxu0 0.0
        %3123 = vmatpush1.msra.mxu0 0.0
        %3124 = vmatprep.subr.mxu0 0.0
        %3125 = vmatpush1.msra.mxu0 0.0
        %3126 = vmatprep.subr.mxu0 0.0
        %3127 = vmatpush1.msra.mxu0 0.0
        %3128 = vmatprep.subr.mxu0 0.0
        %3129 = vmatpush1.msra.mxu0 0.0
        %3130 = vmatprep.subr.mxu0 0.0
        %3131 = vmatpush1.msra.mxu0 0.0
        %3132 = vmatprep.subr.mxu0 0.0
        %3133 = vmatpush1.msra.mxu0 0.0
        %3134 = vmatprep.subr.mxu0 0.0
        %3135 = vmatpush1.msra.mxu0 0.0
        %3136 = vmatprep.subr.mxu0 0.0
        %3137 = vmatpush1.msra.mxu0 0.0
        %3138 = vmatprep.subr.mxu0 0.0
        %3139 = vmatpush1.msra.mxu0 0.0
        %3140 = vmatprep.subr.mxu0 0.0
        %3141 = vmatpush1.msra.mxu0 0.0
        %3142 = vmatprep.subr.mxu0 0.0
        %3143 = vmatpush1.msra.mxu0 0.0
        %3144 = vmatprep.subr.mxu0 0.0
        %3145 = vmatpush1.msra.mxu0 0.0
        %3146 = vmatprep.subr.mxu0 0.0
        %3147 = vmatpush1.msra.mxu0 0.0
        %3148 = vmatprep.subr.mxu0 0.0
        %3149 = vmatpush1.msra.mxu0 0.0
        %3150 = vmatprep.subr.mxu0 0.0
        %3151 = vmatpush1.msra.mxu0 0.0
        %3152 = vmatprep.subr.mxu0 0.0
        %3153 = vmatpush1.msra.mxu0 0.0
        %3154 = vmatprep.subr.mxu0 0.0
        %3155 = vmatpush1.msra.mxu0 0.0
        %3156 = vmatprep.subr.mxu0 0.0
        %3157 = vmatpush1.msra.mxu0 0.0
        %3158 = vmatprep.subr.mxu0 0.0
        %3159 = vmatpush1.msra.mxu0 0.0
        %3160 = vmatprep.mubr.f32.mxu0 0.0
        %v3161 = vand.u32 %v2719, 4294901760
        %3162 = vmatmul.mubr.f32.gmra.mrb[0].mxu0 %v3161
        %v3163 = vpop.f32.mrb[0].mxu0
        %v3164 = vadd.f32 %v3092, %v3163
        %v3165 = vpop.f32.mrb[0].mxu0
        %3166 = vdwg.mxu0
        %v3168 = vsel %vm371, %v2237, 0
        %3170 = vmatprep.subr.mxu0 0.0
        %v3171 = vand.u32 %v362, 4294901760
        %3172 = vmatpush1.msra.mxu0 %v3171
        %3173 = vmatprep.subr.mxu0 0.0
        %3174 = vmatpush1.msra.mxu0 0.0
        %3175 = vmatprep.subr.mxu0 0.0
        %3176 = vmatpush1.msra.mxu0 0.0
        %3177 = vmatprep.subr.mxu0 0.0
        %3178 = vmatpush1.msra.mxu0 0.0
        %3179 = vmatprep.subr.mxu0 0.0
        %3180 = vmatpush1.msra.mxu0 0.0
        %3181 = vmatprep.subr.mxu0 0.0
        %3182 = vmatpush1.msra.mxu0 0.0
        %3183 = vmatprep.subr.mxu0 0.0
        %3184 = vmatpush1.msra.mxu0 0.0
        %3185 = vmatprep.subr.mxu0 0.0
        %3186 = vmatpush1.msra.mxu0 0.0
        %3187 = vmatprep.subr.mxu0 0.0
        %3188 = vmatpush1.msra.mxu0 0.0
        %3189 = vmatprep.subr.mxu0 0.0
        %3190 = vmatpush1.msra.mxu0 0.0
        %3191 = vmatprep.subr.mxu0 0.0
        %3192 = vmatpush1.msra.mxu0 0.0
        %3193 = vmatprep.subr.mxu0 0.0
        %3194 = vmatpush1.msra.mxu0 0.0
        %3195 = vmatprep.subr.mxu0 0.0
        %3196 = vmatpush1.msra.mxu0 0.0
        %3197 = vmatprep.subr.mxu0 0.0
        %3198 = vmatpush1.msra.mxu0 0.0
        %3199 = vmatprep.subr.mxu0 0.0
        %3200 = vmatpush1.msra.mxu0 0.0
        %3201 = vmatprep.subr.mxu0 0.0
        %3202 = vmatpush1.msra.mxu0 0.0
        %3203 = vmatprep.subr.mxu0 0.0
        %3204 = vmatpush1.msra.mxu0 0.0
        %3205 = vmatprep.subr.mxu0 0.0
        %3206 = vmatpush1.msra.mxu0 0.0
        %3207 = vmatprep.subr.mxu0 0.0
        %3208 = vmatpush1.msra.mxu0 0.0
        %3209 = vmatprep.subr.mxu0 0.0
        %3210 = vmatpush1.msra.mxu0 0.0
        %3211 = vmatprep.subr.mxu0 0.0
        %3212 = vmatpush1.msra.mxu0 0.0
        %3213 = vmatprep.subr.mxu0 0.0
        %3214 = vmatpush1.msra.mxu0 0.0
        %3215 = vmatprep.subr.mxu0 0.0
        %3216 = vmatpush1.msra.mxu0 0.0
        %3217 = vmatprep.subr.mxu0 0.0
        %3218 = vmatpush1.msra.mxu0 0.0
        %3219 = vmatprep.subr.mxu0 0.0
        %3220 = vmatpush1.msra.mxu0 0.0
        %3221 = vmatprep.subr.mxu0 0.0
        %3222 = vmatpush1.msra.mxu0 0.0
        %3223 = vmatprep.subr.mxu0 0.0
        %3224 = vmatpush1.msra.mxu0 0.0
        %3225 = vmatprep.subr.mxu0 0.0
        %3226 = vmatpush1.msra.mxu0 0.0
        %3227 = vmatprep.subr.mxu0 0.0
        %3228 = vmatpush1.msra.mxu0 0.0
        %3229 = vmatprep.subr.mxu0 0.0
        %3230 = vmatpush1.msra.mxu0 0.0
        %3231 = vmatprep.subr.mxu0 0.0
        %3232 = vmatpush1.msra.mxu0 0.0
        %3233 = vmatprep.subr.mxu0 0.0
        %3234 = vmatpush1.msra.mxu0 0.0
        %3235 = vmatprep.mubr.f32.mxu0 0.0
        %v3236 = vand.u32 %v3168, 4294901760
        %v3237 = vsub.f32 %v3168, %v3236
        %v3238 = vand.u32 %v3237, 4294901760
        %v3239 = vsub.f32 %v3237, %v3238
        %v3240 = vand.u32 %v3239, 4294901760
        %3241 = vmatmul.mubr.f32.gmra.mrb[0].mxu0 %v3240
        %v3242 = vpop.f32.mrb[0].mxu0
        %v3243 = vadd.f32 0.0, %v3242
        %v3244 = vpop.f32.mrb[0].mxu0
        %3245 = vdwg.mxu0
        %3246 = vmatprep.subr.mxu0 0.0
        %v3247 = vand.u32 %v362, 4294901760
        %v3248 = vsub.f32 %v362, %v3247
        %v3249 = vand.u32 %v3248, 4294901760
        %v3250 = vsub.f32 %v3248, %v3249
        %v3251 = vand.u32 %v3250, 4294901760
        %3252 = vmatpush1.msra.mxu0 %v3251
        %3253 = vmatprep.subr.mxu0 0.0
        %3254 = vmatpush1.msra.mxu0 0.0
        %3255 = vmatprep.subr.mxu0 0.0
        %3256 = vmatpush1.msra.mxu0 0.0
        %3257 = vmatprep.subr.mxu0 0.0
        %3258 = vmatpush1.msra.mxu0 0.0
        %3259 = vmatprep.subr.mxu0 0.0
        %3260 = vmatpush1.msra.mxu0 0.0
        %3261 = vmatprep.subr.mxu0 0.0
        %3262 = vmatpush1.msra.mxu0 0.0
        %3263 = vmatprep.subr.mxu0 0.0
        %3264 = vmatpush1.msra.mxu0 0.0
        %3265 = vmatprep.subr.mxu0 0.0
        %3266 = vmatpush1.msra.mxu0 0.0
        %3267 = vmatprep.subr.mxu0 0.0
        %3268 = vmatpush1.msra.mxu0 0.0
        %3269 = vmatprep.subr.mxu0 0.0
        %3270 = vmatpush1.msra.mxu0 0.0
        %3271 = vmatprep.subr.mxu0 0.0
        %3272 = vmatpush1.msra.mxu0 0.0
        %3273 = vmatprep.subr.mxu0 0.0
        %3274 = vmatpush1.msra.mxu0 0.0
        %3275 = vmatprep.subr.mxu0 0.0
        %3276 = vmatpush1.msra.mxu0 0.0
        %3277 = vmatprep.subr.mxu0 0.0
        %3278 = vmatpush1.msra.mxu0 0.0
        %3279 = vmatprep.subr.mxu0 0.0
        %3280 = vmatpush1.msra.mxu0 0.0
        %3281 = vmatprep.subr.mxu0 0.0
        %3282 = vmatpush1.msra.mxu0 0.0
        %3283 = vmatprep.subr.mxu0 0.0
        %3284 = vmatpush1.msra.mxu0 0.0
        %3285 = vmatprep.subr.mxu0 0.0
        %3286 = vmatpush1.msra.mxu0 0.0
        %3287 = vmatprep.subr.mxu0 0.0
        %3288 = vmatpush1.msra.mxu0 0.0
        %3289 = vmatprep.subr.mxu0 0.0
        %3290 = vmatpush1.msra.mxu0 0.0
        %3291 = vmatprep.subr.mxu0 0.0
        %3292 = vmatpush1.msra.mxu0 0.0
        %3293 = vmatprep.subr.mxu0 0.0
        %3294 = vmatpush1.msra.mxu0 0.0
        %3295 = vmatprep.subr.mxu0 0.0
        %3296 = vmatpush1.msra.mxu0 0.0
        %3297 = vmatprep.subr.mxu0 0.0
        %3298 = vmatpush1.msra.mxu0 0.0
        %3299 = vmatprep.subr.mxu0 0.0
        %3300 = vmatpush1.msra.mxu0 0.0
        %3301 = vmatprep.subr.mxu0 0.0
        %3302 = vmatpush1.msra.mxu0 0.0
        %3303 = vmatprep.subr.mxu0 0.0
        %3304 = vmatpush1.msra.mxu0 0.0
        %3305 = vmatprep.subr.mxu0 0.0
        %3306 = vmatpush1.msra.mxu0 0.0
        %3307 = vmatprep.subr.mxu0 0.0
        %3308 = vmatpush1.msra.mxu0 0.0
        %3309 = vmatprep.subr.mxu0 0.0
        %3310 = vmatpush1.msra.mxu0 0.0
        %3311 = vmatprep.subr.mxu0 0.0
        %3312 = vmatpush1.msra.mxu0 0.0
        %3313 = vmatprep.subr.mxu0 0.0
        %3314 = vmatpush1.msra.mxu0 0.0
        %3315 = vmatprep.mubr.f32.mxu0 0.0
        %v3316 = vand.u32 %v3168, 4294901760
        %3317 = vmatmul.mubr.f32.gmra.mrb[0].mxu0 %v3316
        %v3318 = vpop.f32.mrb[0].mxu0
        %v3319 = vadd.f32 %v3243, %v3318
        %v3320 = vpop.f32.mrb[0].mxu0
        %3321 = vdwg.mxu0
        %3322 = vmatprep.subr.mxu0 0.0
        %v3323 = vand.u32 %v362, 4294901760
        %v3324 = vsub.f32 %v362, %v3323
        %3325 = vmatpush1.msra.mxu0 %v3324
        %3326 = vmatprep.subr.mxu0 0.0
        %3327 = vmatpush1.msra.mxu0 0.0
        %3328 = vmatprep.subr.mxu0 0.0
        %3329 = vmatpush1.msra.mxu0 0.0
        %3330 = vmatprep.subr.mxu0 0.0
        %3331 = vmatpush1.msra.mxu0 0.0
        %3332 = vmatprep.subr.mxu0 0.0
        %3333 = vmatpush1.msra.mxu0 0.0
        %3334 = vmatprep.subr.mxu0 0.0
        %3335 = vmatpush1.msra.mxu0 0.0
        %3336 = vmatprep.subr.mxu0 0.0
        %3337 = vmatpush1.msra.mxu0 0.0
        %3338 = vmatprep.subr.mxu0 0.0
        %3339 = vmatpush1.msra.mxu0 0.0
        %3340 = vmatprep.subr.mxu0 0.0
        %3341 = vmatpush1.msra.mxu0 0.0
        %3342 = vmatprep.subr.mxu0 0.0
        %3343 = vmatpush1.msra.mxu0 0.0
        %3344 = vmatprep.subr.mxu0 0.0
        %3345 = vmatpush1.msra.mxu0 0.0
        %3346 = vmatprep.subr.mxu0 0.0
        %3347 = vmatpush1.msra.mxu0 0.0
        %3348 = vmatprep.subr.mxu0 0.0
        %3349 = vmatpush1.msra.mxu0 0.0
        %3350 = vmatprep.subr.mxu0 0.0
        %3351 = vmatpush1.msra.mxu0 0.0
        %3352 = vmatprep.subr.mxu0 0.0
        %3353 = vmatpush1.msra.mxu0 0.0
        %3354 = vmatprep.subr.mxu0 0.0
        %3355 = vmatpush1.msra.mxu0 0.0
        %3356 = vmatprep.subr.mxu0 0.0
        %3357 = vmatpush1.msra.mxu0 0.0
        %3358 = vmatprep.subr.mxu0 0.0
        %3359 = vmatpush1.msra.mxu0 0.0
        %3360 = vmatprep.subr.mxu0 0.0
        %3361 = vmatpush1.msra.mxu0 0.0
        %3362 = vmatprep.subr.mxu0 0.0
        %3363 = vmatpush1.msra.mxu0 0.0
        %3364 = vmatprep.subr.mxu0 0.0
        %3365 = vmatpush1.msra.mxu0 0.0
        %3366 = vmatprep.subr.mxu0 0.0
        %3367 = vmatpush1.msra.mxu0 0.0
        %3368 = vmatprep.subr.mxu0 0.0
        %3369 = vmatpush1.msra.mxu0 0.0
        %3370 = vmatprep.subr.mxu0 0.0
        %3371 = vmatpush1.msra.mxu0 0.0
        %3372 = vmatprep.subr.mxu0 0.0
        %3373 = vmatpush1.msra.mxu0 0.0
        %3374 = vmatprep.subr.mxu0 0.0
        %3375 = vmatpush1.msra.mxu0 0.0
        %3376 = vmatprep.subr.mxu0 0.0
        %3377 = vmatpush1.msra.mxu0 0.0
        %3378 = vmatprep.subr.mxu0 0.0
        %3379 = vmatpush1.msra.mxu0 0.0
        %3380 = vmatprep.subr.mxu0 0.0
        %3381 = vmatpush1.msra.mxu0 0.0
        %3382 = vmatprep.subr.mxu0 0.0
        %3383 = vmatpush1.msra.mxu0 0.0
        %3384 = vmatprep.subr.mxu0 0.0
        %3385 = vmatpush1.msra.mxu0 0.0
        %3386 = vmatprep.subr.mxu0 0.0
        %3387 = vmatpush1.msra.mxu0 0.0
        %3388 = vmatprep.mubr.f32.mxu0 0.0
        %v3389 = vand.u32 %v3168, 4294901760
        %v3390 = vsub.f32 %v3168, %v3389
        %3391 = vmatmul.mubr.f32.gmra.mrb[0].mxu0 %v3390
        %v3392 = vpop.f32.mrb[0].mxu0
        %v3393 = vadd.f32 %v3319, %v3392
        %v3394 = vpop.f32.mrb[0].mxu0
        %3395 = vdwg.mxu0
        %3396 = vmatprep.subr.mxu0 0.0
        %v3397 = vand.u32 %v362, 4294901760
        %3398 = vmatpush1.msra.mxu0 %v3397
        %3399 = vmatprep.subr.mxu0 0.0
        %3400 = vmatpush1.msra.mxu0 0.0
        %3401 = vmatprep.subr.mxu0 0.0
        %3402 = vmatpush1.msra.mxu0 0.0
        %3403 = vmatprep.subr.mxu0 0.0
        %3404 = vmatpush1.msra.mxu0 0.0
        %3405 = vmatprep.subr.mxu0 0.0
        %3406 = vmatpush1.msra.mxu0 0.0
        %3407 = vmatprep.subr.mxu0 0.0
        %3408 = vmatpush1.msra.mxu0 0.0
        %3409 = vmatprep.subr.mxu0 0.0
        %3410 = vmatpush1.msra.mxu0 0.0
        %3411 = vmatprep.subr.mxu0 0.0
        %3412 = vmatpush1.msra.mxu0 0.0
        %3413 = vmatprep.subr.mxu0 0.0
        %3414 = vmatpush1.msra.mxu0 0.0
        %3415 = vmatprep.subr.mxu0 0.0
        %3416 = vmatpush1.msra.mxu0 0.0
        %3417 = vmatprep.subr.mxu0 0.0
        %3418 = vmatpush1.msra.mxu0 0.0
        %3419 = vmatprep.subr.mxu0 0.0
        %3420 = vmatpush1.msra.mxu0 0.0
        %3421 = vmatprep.subr.mxu0 0.0
        %3422 = vmatpush1.msra.mxu0 0.0
        %3423 = vmatprep.subr.mxu0 0.0
        %3424 = vmatpush1.msra.mxu0 0.0
        %3425 = vmatprep.subr.mxu0 0.0
        %3426 = vmatpush1.msra.mxu0 0.0
        %3427 = vmatprep.subr.mxu0 0.0
        %3428 = vmatpush1.msra.mxu0 0.0
        %3429 = vmatprep.subr.mxu0 0.0
        %3430 = vmatpush1.msra.mxu0 0.0
        %3431 = vmatprep.subr.mxu0 0.0
        %3432 = vmatpush1.msra.mxu0 0.0
        %3433 = vmatprep.subr.mxu0 0.0
        %3434 = vmatpush1.msra.mxu0 0.0
        %3435 = vmatprep.subr.mxu0 0.0
        %3436 = vmatpush1.msra.mxu0 0.0
        %3437 = vmatprep.subr.mxu0 0.0
        %3438 = vmatpush1.msra.mxu0 0.0
        %3439 = vmatprep.subr.mxu0 0.0
        %3440 = vmatpush1.msra.mxu0 0.0
        %3441 = vmatprep.subr.mxu0 0.0
        %3442 = vmatpush1.msra.mxu0 0.0
        %3443 = vmatprep.subr.mxu0 0.0
        %3444 = vmatpush1.msra.mxu0 0.0
        %3445 = vmatprep.subr.mxu0 0.0
        %3446 = vmatpush1.msra.mxu0 0.0
        %3447 = vmatprep.subr.mxu0 0.0
        %3448 = vmatpush1.msra.mxu0 0.0
        %3449 = vmatprep.subr.mxu0 0.0
        %3450 = vmatpush1.msra.mxu0 0.0
        %3451 = vmatprep.subr.mxu0 0.0
        %3452 = vmatpush1.msra.mxu0 0.0
        %3453 = vmatprep.subr.mxu0 0.0
        %3454 = vmatpush1.msra.mxu0 0.0
        %3455 = vmatprep.subr.mxu0 0.0
        %3456 = vmatpush1.msra.mxu0 0.0
        %3457 = vmatprep.subr.mxu0 0.0
        %3458 = vmatpush1.msra.mxu0 0.0
        %3459 = vmatprep.subr.mxu0 0.0
        %3460 = vmatpush1.msra.mxu0 0.0
        %3461 = vmatprep.mubr.f32.mxu0 0.0
        %v3462 = vand.u32 %v3168, 4294901760
        %v3463 = vsub.f32 %v3168, %v3462
        %v3464 = vand.u32 %v3463, 4294901760
        %3465 = vmatmul.mubr.f32.gmra.mrb[0].mxu0 %v3464
        %v3466 = vpop.f32.mrb[0].mxu0
        %v3467 = vadd.f32 %v3393, %v3466
        %v3468 = vpop.f32.mrb[0].mxu0
        %3469 = vdwg.mxu0
        %3470 = vmatprep.subr.mxu0 0.0
        %v3471 = vand.u32 %v362, 4294901760
        %v3472 = vsub.f32 %v362, %v3471
        %v3473 = vand.u32 %v3472, 4294901760
        %3474 = vmatpush1.msra.mxu0 %v3473
        %3475 = vmatprep.subr.mxu0 0.0
        %3476 = vmatpush1.msra.mxu0 0.0
        %3477 = vmatprep.subr.mxu0 0.0
        %3478 = vmatpush1.msra.mxu0 0.0
        %3479 = vmatprep.subr.mxu0 0.0
        %3480 = vmatpush1.msra.mxu0 0.0
        %3481 = vmatprep.subr.mxu0 0.0
        %3482 = vmatpush1.msra.mxu0 0.0
        %3483 = vmatprep.subr.mxu0 0.0
        %3484 = vmatpush1.msra.mxu0 0.0
        %3485 = vmatprep.subr.mxu0 0.0
        %3486 = vmatpush1.msra.mxu0 0.0
        %3487 = vmatprep.subr.mxu0 0.0
        %3488 = vmatpush1.msra.mxu0 0.0
        %3489 = vmatprep.subr.mxu0 0.0
        %3490 = vmatpush1.msra.mxu0 0.0
        %3491 = vmatprep.subr.mxu0 0.0
        %3492 = vmatpush1.msra.mxu0 0.0
        %3493 = vmatprep.subr.mxu0 0.0
        %3494 = vmatpush1.msra.mxu0 0.0
        %3495 = vmatprep.subr.mxu0 0.0
        %3496 = vmatpush1.msra.mxu0 0.0
        %3497 = vmatprep.subr.mxu0 0.0
        %3498 = vmatpush1.msra.mxu0 0.0
        %3499 = vmatprep.subr.mxu0 0.0
        %3500 = vmatpush1.msra.mxu0 0.0
        %3501 = vmatprep.subr.mxu0 0.0
        %3502 = vmatpush1.msra.mxu0 0.0
        %3503 = vmatprep.subr.mxu0 0.0
        %3504 = vmatpush1.msra.mxu0 0.0
        %3505 = vmatprep.subr.mxu0 0.0
        %3506 = vmatpush1.msra.mxu0 0.0
        %3507 = vmatprep.subr.mxu0 0.0
        %3508 = vmatpush1.msra.mxu0 0.0
        %3509 = vmatprep.subr.mxu0 0.0
        %3510 = vmatpush1.msra.mxu0 0.0
        %3511 = vmatprep.subr.mxu0 0.0
        %3512 = vmatpush1.msra.mxu0 0.0
        %3513 = vmatprep.subr.mxu0 0.0
        %3514 = vmatpush1.msra.mxu0 0.0
        %3515 = vmatprep.subr.mxu0 0.0
        %3516 = vmatpush1.msra.mxu0 0.0
        %3517 = vmatprep.subr.mxu0 0.0
        %3518 = vmatpush1.msra.mxu0 0.0
        %3519 = vmatprep.subr.mxu0 0.0
        %3520 = vmatpush1.msra.mxu0 0.0
        %3521 = vmatprep.subr.mxu0 0.0
        %3522 = vmatpush1.msra.mxu0 0.0
        %3523 = vmatprep.subr.mxu0 0.0
        %3524 = vmatpush1.msra.mxu0 0.0
        %3525 = vmatprep.subr.mxu0 0.0
        %3526 = vmatpush1.msra.mxu0 0.0
        %3527 = vmatprep.subr.mxu0 0.0
        %3528 = vmatpush1.msra.mxu0 0.0
        %3529 = vmatprep.subr.mxu0 0.0
        %3530 = vmatpush1.msra.mxu0 0.0
        %3531 = vmatprep.subr.mxu0 0.0
        %3532 = vmatpush1.msra.mxu0 0.0
        %3533 = vmatprep.subr.mxu0 0.0
        %3534 = vmatpush1.msra.mxu0 0.0
        %3535 = vmatprep.subr.mxu0 0.0
        %3536 = vmatpush1.msra.mxu0 0.0
        %3537 = vmatprep.mubr.f32.mxu0 0.0
        %v3538 = vand.u32 %v3168, 4294901760
        %3539 = vmatmul.mubr.f32.gmra.mrb[0].mxu0 %v3538
        %v3540 = vpop.f32.mrb[0].mxu0
        %v3541 = vadd.f32 %v3467, %v3540
        %v3542 = vpop.f32.mrb[0].mxu0
        %3543 = vdwg.mxu0
        %3544 = vmatprep.subr.mxu0 0.0
        %v3545 = vand.u32 %v362, 4294901760
        %3546 = vmatpush1.msra.mxu0 %v3545
        %3547 = vmatprep.subr.mxu0 0.0
        %3548 = vmatpush1.msra.mxu0 0.0
        %3549 = vmatprep.subr.mxu0 0.0
        %3550 = vmatpush1.msra.mxu0 0.0
        %3551 = vmatprep.subr.mxu0 0.0
        %3552 = vmatpush1.msra.mxu0 0.0
        %3553 = vmatprep.subr.mxu0 0.0
        %3554 = vmatpush1.msra.mxu0 0.0
        %3555 = vmatprep.subr.mxu0 0.0
        %3556 = vmatpush1.msra.mxu0 0.0
        %3557 = vmatprep.subr.mxu0 0.0
        %3558 = vmatpush1.msra.mxu0 0.0
        %3559 = vmatprep.subr.mxu0 0.0
        %3560 = vmatpush1.msra.mxu0 0.0
        %3561 = vmatprep.subr.mxu0 0.0
        %3562 = vmatpush1.msra.mxu0 0.0
        %3563 = vmatprep.subr.mxu0 0.0
        %3564 = vmatpush1.msra.mxu0 0.0
        %3565 = vmatprep.subr.mxu0 0.0
        %3566 = vmatpush1.msra.mxu0 0.0
        %3567 = vmatprep.subr.mxu0 0.0
        %3568 = vmatpush1.msra.mxu0 0.0
        %3569 = vmatprep.subr.mxu0 0.0
        %3570 = vmatpush1.msra.mxu0 0.0
        %3571 = vmatprep.subr.mxu0 0.0
        %3572 = vmatpush1.msra.mxu0 0.0
        %3573 = vmatprep.subr.mxu0 0.0
        %3574 = vmatpush1.msra.mxu0 0.0
        %3575 = vmatprep.subr.mxu0 0.0
        %3576 = vmatpush1.msra.mxu0 0.0
        %3577 = vmatprep.subr.mxu0 0.0
        %3578 = vmatpush1.msra.mxu0 0.0
        %3579 = vmatprep.subr.mxu0 0.0
        %3580 = vmatpush1.msra.mxu0 0.0
        %3581 = vmatprep.subr.mxu0 0.0
        %3582 = vmatpush1.msra.mxu0 0.0
        %3583 = vmatprep.subr.mxu0 0.0
        %3584 = vmatpush1.msra.mxu0 0.0
        %3585 = vmatprep.subr.mxu0 0.0
        %3586 = vmatpush1.msra.mxu0 0.0
        %3587 = vmatprep.subr.mxu0 0.0
        %3588 = vmatpush1.msra.mxu0 0.0
        %3589 = vmatprep.subr.mxu0 0.0
        %3590 = vmatpush1.msra.mxu0 0.0
        %3591 = vmatprep.subr.mxu0 0.0
        %3592 = vmatpush1.msra.mxu0 0.0
        %3593 = vmatprep.subr.mxu0 0.0
        %3594 = vmatpush1.msra.mxu0 0.0
        %3595 = vmatprep.subr.mxu0 0.0
        %3596 = vmatpush1.msra.mxu0 0.0
        %3597 = vmatprep.subr.mxu0 0.0
        %3598 = vmatpush1.msra.mxu0 0.0
        %3599 = vmatprep.subr.mxu0 0.0
        %3600 = vmatpush1.msra.mxu0 0.0
        %3601 = vmatprep.subr.mxu0 0.0
        %3602 = vmatpush1.msra.mxu0 0.0
        %3603 = vmatprep.subr.mxu0 0.0
        %3604 = vmatpush1.msra.mxu0 0.0
        %3605 = vmatprep.subr.mxu0 0.0
        %3606 = vmatpush1.msra.mxu0 0.0
        %3607 = vmatprep.subr.mxu0 0.0
        %3608 = vmatpush1.msra.mxu0 0.0
        %3609 = vmatprep.mubr.f32.mxu0 0.0
        %v3610 = vand.u32 %v3168, 4294901760
        %3611 = vmatmul.mubr.f32.gmra.mrb[0].mxu0 %v3610
        %v3612 = vpop.f32.mrb[0].mxu0
        %v3613 = vadd.f32 %v3541, %v3612
        %v3614 = vpop.f32.mrb[0].mxu0
        %3615 = vdwg.mxu0
        %v3617 = vsel %vm371, %v2239, 0
        %3619 = vmatprep.subr.mxu0 0.0
        %v3620 = vand.u32 %v365, 4294901760
        %3621 = vmatpush1.msra.mxu0 %v3620
        %3622 = vmatprep.subr.mxu0 0.0
        %3623 = vmatpush1.msra.mxu0 0.0
        %3624 = vmatprep.subr.mxu0 0.0
        %3625 = vmatpush1.msra.mxu0 0.0
        %3626 = vmatprep.subr.mxu0 0.0
        %3627 = vmatpush1.msra.mxu0 0.0
        %3628 = vmatprep.subr.mxu0 0.0
        %3629 = vmatpush1.msra.mxu0 0.0
        %3630 = vmatprep.subr.mxu0 0.0
        %3631 = vmatpush1.msra.mxu0 0.0
        %3632 = vmatprep.subr.mxu0 0.0
        %3633 = vmatpush1.msra.mxu0 0.0
        %3634 = vmatprep.subr.mxu0 0.0
        %3635 = vmatpush1.msra.mxu0 0.0
        %3636 = vmatprep.subr.mxu0 0.0
        %3637 = vmatpush1.msra.mxu0 0.0
        %3638 = vmatprep.subr.mxu0 0.0
        %3639 = vmatpush1.msra.mxu0 0.0
        %3640 = vmatprep.subr.mxu0 0.0
        %3641 = vmatpush1.msra.mxu0 0.0
        %3642 = vmatprep.subr.mxu0 0.0
        %3643 = vmatpush1.msra.mxu0 0.0
        %3644 = vmatprep.subr.mxu0 0.0
        %3645 = vmatpush1.msra.mxu0 0.0
        %3646 = vmatprep.subr.mxu0 0.0
        %3647 = vmatpush1.msra.mxu0 0.0
        %3648 = vmatprep.subr.mxu0 0.0
        %3649 = vmatpush1.msra.mxu0 0.0
        %3650 = vmatprep.subr.mxu0 0.0
        %3651 = vmatpush1.msra.mxu0 0.0
        %3652 = vmatprep.subr.mxu0 0.0
        %3653 = vmatpush1.msra.mxu0 0.0
        %3654 = vmatprep.subr.mxu0 0.0
        %3655 = vmatpush1.msra.mxu0 0.0
        %3656 = vmatprep.subr.mxu0 0.0
        %3657 = vmatpush1.msra.mxu0 0.0
        %3658 = vmatprep.subr.mxu0 0.0
        %3659 = vmatpush1.msra.mxu0 0.0
        %3660 = vmatprep.subr.mxu0 0.0
        %3661 = vmatpush1.msra.mxu0 0.0
        %3662 = vmatprep.subr.mxu0 0.0
        %3663 = vmatpush1.msra.mxu0 0.0
        %3664 = vmatprep.subr.mxu0 0.0
        %3665 = vmatpush1.msra.mxu0 0.0
        %3666 = vmatprep.subr.mxu0 0.0
        %3667 = vmatpush1.msra.mxu0 0.0
        %3668 = vmatprep.subr.mxu0 0.0
        %3669 = vmatpush1.msra.mxu0 0.0
        %3670 = vmatprep.subr.mxu0 0.0
        %3671 = vmatpush1.msra.mxu0 0.0
        %3672 = vmatprep.subr.mxu0 0.0
        %3673 = vmatpush1.msra.mxu0 0.0
        %3674 = vmatprep.subr.mxu0 0.0
        %3675 = vmatpush1.msra.mxu0 0.0
        %3676 = vmatprep.subr.mxu0 0.0
        %3677 = vmatpush1.msra.mxu0 0.0
        %3678 = vmatprep.subr.mxu0 0.0
        %3679 = vmatpush1.msra.mxu0 0.0
        %3680 = vmatprep.subr.mxu0 0.0
        %3681 = vmatpush1.msra.mxu0 0.0
        %3682 = vmatprep.subr.mxu0 0.0
        %3683 = vmatpush1.msra.mxu0 0.0
        %3684 = vmatprep.mubr.f32.mxu0 0.0
        %v3685 = vand.u32 %v3617, 4294901760
        %v3686 = vsub.f32 %v3617, %v3685
        %v3687 = vand.u32 %v3686, 4294901760
        %v3688 = vsub.f32 %v3686, %v3687
        %v3689 = vand.u32 %v3688, 4294901760
        %3690 = vmatmul.mubr.f32.gmra.mrb[0].mxu0 %v3689
        %v3691 = vpop.f32.mrb[0].mxu0
        %v3692 = vadd.f32 0.0, %v3691
        %v3693 = vpop.f32.mrb[0].mxu0
        %3694 = vdwg.mxu0
        %3695 = vmatprep.subr.mxu0 0.0
        %v3696 = vand.u32 %v365, 4294901760
        %v3697 = vsub.f32 %v365, %v3696
        %v3698 = vand.u32 %v3697, 4294901760
        %v3699 = vsub.f32 %v3697, %v3698
        %v3700 = vand.u32 %v3699, 4294901760
        %3701 = vmatpush1.msra.mxu0 %v3700
        %3702 = vmatprep.subr.mxu0 0.0
        %3703 = vmatpush1.msra.mxu0 0.0
        %3704 = vmatprep.subr.mxu0 0.0
        %3705 = vmatpush1.msra.mxu0 0.0
        %3706 = vmatprep.subr.mxu0 0.0
        %3707 = vmatpush1.msra.mxu0 0.0
        %3708 = vmatprep.subr.mxu0 0.0
        %3709 = vmatpush1.msra.mxu0 0.0
        %3710 = vmatprep.subr.mxu0 0.0
        %3711 = vmatpush1.msra.mxu0 0.0
        %3712 = vmatprep.subr.mxu0 0.0
        %3713 = vmatpush1.msra.mxu0 0.0
        %3714 = vmatprep.subr.mxu0 0.0
        %3715 = vmatpush1.msra.mxu0 0.0
        %3716 = vmatprep.subr.mxu0 0.0
        %3717 = vmatpush1.msra.mxu0 0.0
        %3718 = vmatprep.subr.mxu0 0.0
        %3719 = vmatpush1.msra.mxu0 0.0
        %3720 = vmatprep.subr.mxu0 0.0
        %3721 = vmatpush1.msra.mxu0 0.0
        %3722 = vmatprep.subr.mxu0 0.0
        %3723 = vmatpush1.msra.mxu0 0.0
        %3724 = vmatprep.subr.mxu0 0.0
        %3725 = vmatpush1.msra.mxu0 0.0
        %3726 = vmatprep.subr.mxu0 0.0
        %3727 = vmatpush1.msra.mxu0 0.0
        %3728 = vmatprep.subr.mxu0 0.0
        %3729 = vmatpush1.msra.mxu0 0.0
        %3730 = vmatprep.subr.mxu0 0.0
        %3731 = vmatpush1.msra.mxu0 0.0
        %3732 = vmatprep.subr.mxu0 0.0
        %3733 = vmatpush1.msra.mxu0 0.0
        %3734 = vmatprep.subr.mxu0 0.0
        %3735 = vmatpush1.msra.mxu0 0.0
        %3736 = vmatprep.subr.mxu0 0.0
        %3737 = vmatpush1.msra.mxu0 0.0
        %3738 = vmatprep.subr.mxu0 0.0
        %3739 = vmatpush1.msra.mxu0 0.0
        %3740 = vmatprep.subr.mxu0 0.0
        %3741 = vmatpush1.msra.mxu0 0.0
        %3742 = vmatprep.subr.mxu0 0.0
        %3743 = vmatpush1.msra.mxu0 0.0
        %3744 = vmatprep.subr.mxu0 0.0
        %3745 = vmatpush1.msra.mxu0 0.0
        %3746 = vmatprep.subr.mxu0 0.0
        %3747 = vmatpush1.msra.mxu0 0.0
        %3748 = vmatprep.subr.mxu0 0.0
        %3749 = vmatpush1.msra.mxu0 0.0
        %3750 = vmatprep.subr.mxu0 0.0
        %3751 = vmatpush1.msra.mxu0 0.0
        %3752 = vmatprep.subr.mxu0 0.0
        %3753 = vmatpush1.msra.mxu0 0.0
        %3754 = vmatprep.subr.mxu0 0.0
        %3755 = vmatpush1.msra.mxu0 0.0
        %3756 = vmatprep.subr.mxu0 0.0
        %3757 = vmatpush1.msra.mxu0 0.0
        %3758 = vmatprep.subr.mxu0 0.0
        %3759 = vmatpush1.msra.mxu0 0.0
        %3760 = vmatprep.subr.mxu0 0.0
        %3761 = vmatpush1.msra.mxu0 0.0
        %3762 = vmatprep.subr.mxu0 0.0
        %3763 = vmatpush1.msra.mxu0 0.0
        %3764 = vmatprep.mubr.f32.mxu0 0.0
        %v3765 = vand.u32 %v3617, 4294901760
        %3766 = vmatmul.mubr.f32.gmra.mrb[0].mxu0 %v3765
        %v3767 = vpop.f32.mrb[0].mxu0
        %v3768 = vadd.f32 %v3692, %v3767
        %v3769 = vpop.f32.mrb[0].mxu0
        %3770 = vdwg.mxu0
        %3771 = vmatprep.subr.mxu0 0.0
        %v3772 = vand.u32 %v365, 4294901760
        %v3773 = vsub.f32 %v365, %v3772
        %3774 = vmatpush1.msra.mxu0 %v3773
        %3775 = vmatprep.subr.mxu0 0.0
        %3776 = vmatpush1.msra.mxu0 0.0
        %3777 = vmatprep.subr.mxu0 0.0
        %3778 = vmatpush1.msra.mxu0 0.0
        %3779 = vmatprep.subr.mxu0 0.0
        %3780 = vmatpush1.msra.mxu0 0.0
        %3781 = vmatprep.subr.mxu0 0.0
        %3782 = vmatpush1.msra.mxu0 0.0
        %3783 = vmatprep.subr.mxu0 0.0
        %3784 = vmatpush1.msra.mxu0 0.0
        %3785 = vmatprep.subr.mxu0 0.0
        %3786 = vmatpush1.msra.mxu0 0.0
        %3787 = vmatprep.subr.mxu0 0.0
        %3788 = vmatpush1.msra.mxu0 0.0
        %3789 = vmatprep.subr.mxu0 0.0
        %3790 = vmatpush1.msra.mxu0 0.0
        %3791 = vmatprep.subr.mxu0 0.0
        %3792 = vmatpush1.msra.mxu0 0.0
        %3793 = vmatprep.subr.mxu0 0.0
        %3794 = vmatpush1.msra.mxu0 0.0
        %3795 = vmatprep.subr.mxu0 0.0
        %3796 = vmatpush1.msra.mxu0 0.0
        %3797 = vmatprep.subr.mxu0 0.0
        %3798 = vmatpush1.msra.mxu0 0.0
        %3799 = vmatprep.subr.mxu0 0.0
        %3800 = vmatpush1.msra.mxu0 0.0
        %3801 = vmatprep.subr.mxu0 0.0
        %3802 = vmatpush1.msra.mxu0 0.0
        %3803 = vmatprep.subr.mxu0 0.0
        %3804 = vmatpush1.msra.mxu0 0.0
        %3805 = vmatprep.subr.mxu0 0.0
        %3806 = vmatpush1.msra.mxu0 0.0
        %3807 = vmatprep.subr.mxu0 0.0
        %3808 = vmatpush1.msra.mxu0 0.0
        %3809 = vmatprep.subr.mxu0 0.0
        %3810 = vmatpush1.msra.mxu0 0.0
        %3811 = vmatprep.subr.mxu0 0.0
        %3812 = vmatpush1.msra.mxu0 0.0
        %3813 = vmatprep.subr.mxu0 0.0
        %3814 = vmatpush1.msra.mxu0 0.0
        %3815 = vmatprep.subr.mxu0 0.0
        %3816 = vmatpush1.msra.mxu0 0.0
        %3817 = vmatprep.subr.mxu0 0.0
        %3818 = vmatpush1.msra.mxu0 0.0
        %3819 = vmatprep.subr.mxu0 0.0
        %3820 = vmatpush1.msra.mxu0 0.0
        %3821 = vmatprep.subr.mxu0 0.0
        %3822 = vmatpush1.msra.mxu0 0.0
        %3823 = vmatprep.subr.mxu0 0.0
        %3824 = vmatpush1.msra.mxu0 0.0
        %3825 = vmatprep.subr.mxu0 0.0
        %3826 = vmatpush1.msra.mxu0 0.0
        %3827 = vmatprep.subr.mxu0 0.0
        %3828 = vmatpush1.msra.mxu0 0.0
        %3829 = vmatprep.subr.mxu0 0.0
        %3830 = vmatpush1.msra.mxu0 0.0
        %3831 = vmatprep.subr.mxu0 0.0
        %3832 = vmatpush1.msra.mxu0 0.0
        %3833 = vmatprep.subr.mxu0 0.0
        %3834 = vmatpush1.msra.mxu0 0.0
        %3835 = vmatprep.subr.mxu0 0.0
        %3836 = vmatpush1.msra.mxu0 0.0
        %3837 = vmatprep.mubr.f32.mxu0 0.0
        %v3838 = vand.u32 %v3617, 4294901760
        %v3839 = vsub.f32 %v3617, %v3838
        %3840 = vmatmul.mubr.f32.gmra.mrb[0].mxu0 %v3839
        %v3841 = vpop.f32.mrb[0].mxu0
        %v3842 = vadd.f32 %v3768, %v3841
        %v3843 = vpop.f32.mrb[0].mxu0
        %3844 = vdwg.mxu0
        %3845 = vmatprep.subr.mxu0 0.0
        %v3846 = vand.u32 %v365, 4294901760
        %3847 = vmatpush1.msra.mxu0 %v3846
        %3848 = vmatprep.subr.mxu0 0.0
        %3849 = vmatpush1.msra.mxu0 0.0
        %3850 = vmatprep.subr.mxu0 0.0
        %3851 = vmatpush1.msra.mxu0 0.0
        %3852 = vmatprep.subr.mxu0 0.0
        %3853 = vmatpush1.msra.mxu0 0.0
        %3854 = vmatprep.subr.mxu0 0.0
        %3855 = vmatpush1.msra.mxu0 0.0
        %3856 = vmatprep.subr.mxu0 0.0
        %3857 = vmatpush1.msra.mxu0 0.0
        %3858 = vmatprep.subr.mxu0 0.0
        %3859 = vmatpush1.msra.mxu0 0.0
        %3860 = vmatprep.subr.mxu0 0.0
        %3861 = vmatpush1.msra.mxu0 0.0
        %3862 = vmatprep.subr.mxu0 0.0
        %3863 = vmatpush1.msra.mxu0 0.0
        %3864 = vmatprep.subr.mxu0 0.0
        %3865 = vmatpush1.msra.mxu0 0.0
        %3866 = vmatprep.subr.mxu0 0.0
        %3867 = vmatpush1.msra.mxu0 0.0
        %3868 = vmatprep.subr.mxu0 0.0
        %3869 = vmatpush1.msra.mxu0 0.0
        %3870 = vmatprep.subr.mxu0 0.0
        %3871 = vmatpush1.msra.mxu0 0.0
        %3872 = vmatprep.subr.mxu0 0.0
        %3873 = vmatpush1.msra.mxu0 0.0
        %3874 = vmatprep.subr.mxu0 0.0
        %3875 = vmatpush1.msra.mxu0 0.0
        %3876 = vmatprep.subr.mxu0 0.0
        %3877 = vmatpush1.msra.mxu0 0.0
        %3878 = vmatprep.subr.mxu0 0.0
        %3879 = vmatpush1.msra.mxu0 0.0
        %3880 = vmatprep.subr.mxu0 0.0
        %3881 = vmatpush1.msra.mxu0 0.0
        %3882 = vmatprep.subr.mxu0 0.0
        %3883 = vmatpush1.msra.mxu0 0.0
        %3884 = vmatprep.subr.mxu0 0.0
        %3885 = vmatpush1.msra.mxu0 0.0
        %3886 = vmatprep.subr.mxu0 0.0
        %3887 = vmatpush1.msra.mxu0 0.0
        %3888 = vmatprep.subr.mxu0 0.0
        %3889 = vmatpush1.msra.mxu0 0.0
        %3890 = vmatprep.subr.mxu0 0.0
        %3891 = vmatpush1.msra.mxu0 0.0
        %3892 = vmatprep.subr.mxu0 0.0
        %3893 = vmatpush1.msra.mxu0 0.0
        %3894 = vmatprep.subr.mxu0 0.0
        %3895 = vmatpush1.msra.mxu0 0.0
        %3896 = vmatprep.subr.mxu0 0.0
        %3897 = vmatpush1.msra.mxu0 0.0
        %3898 = vmatprep.subr.mxu0 0.0
        %3899 = vmatpush1.msra.mxu0 0.0
        %3900 = vmatprep.subr.mxu0 0.0
        %3901 = vmatpush1.msra.mxu0 0.0
        %3902 = vmatprep.subr.mxu0 0.0
        %3903 = vmatpush1.msra.mxu0 0.0
        %3904 = vmatprep.subr.mxu0 0.0
        %3905 = vmatpush1.msra.mxu0 0.0
        %3906 = vmatprep.subr.mxu0 0.0
        %3907 = vmatpush1.msra.mxu0 0.0
        %3908 = vmatprep.subr.mxu0 0.0
        %3909 = vmatpush1.msra.mxu0 0.0
        %3910 = vmatprep.mubr.f32.mxu0 0.0
        %v3911 = vand.u32 %v3617, 4294901760
        %v3912 = vsub.f32 %v3617, %v3911
        %v3913 = vand.u32 %v3912, 4294901760
        %3914 = vmatmul.mubr.f32.gmra.mrb[0].mxu0 %v3913
        %v3915 = vpop.f32.mrb[0].mxu0
        %v3916 = vadd.f32 %v3842, %v3915
        %v3917 = vpop.f32.mrb[0].mxu0
        %3918 = vdwg.mxu0
        %3919 = vmatprep.subr.mxu0 0.0
        %v3920 = vand.u32 %v365, 4294901760
        %v3921 = vsub.f32 %v365, %v3920
        %v3922 = vand.u32 %v3921, 4294901760
        %3923 = vmatpush1.msra.mxu0 %v3922
        %3924 = vmatprep.subr.mxu0 0.0
        %3925 = vmatpush1.msra.mxu0 0.0
        %3926 = vmatprep.subr.mxu0 0.0
        %3927 = vmatpush1.msra.mxu0 0.0
        %3928 = vmatprep.subr.mxu0 0.0
        %3929 = vmatpush1.msra.mxu0 0.0
        %3930 = vmatprep.subr.mxu0 0.0
        %3931 = vmatpush1.msra.mxu0 0.0
        %3932 = vmatprep.subr.mxu0 0.0
        %3933 = vmatpush1.msra.mxu0 0.0
        %3934 = vmatprep.subr.mxu0 0.0
        %3935 = vmatpush1.msra.mxu0 0.0
        %3936 = vmatprep.subr.mxu0 0.0
        %3937 = vmatpush1.msra.mxu0 0.0
        %3938 = vmatprep.subr.mxu0 0.0
        %3939 = vmatpush1.msra.mxu0 0.0
        %3940 = vmatprep.subr.mxu0 0.0
        %3941 = vmatpush1.msra.mxu0 0.0
        %3942 = vmatprep.subr.mxu0 0.0
        %3943 = vmatpush1.msra.mxu0 0.0
        %3944 = vmatprep.subr.mxu0 0.0
        %3945 = vmatpush1.msra.mxu0 0.0
        %3946 = vmatprep.subr.mxu0 0.0
        %3947 = vmatpush1.msra.mxu0 0.0
        %3948 = vmatprep.subr.mxu0 0.0
        %3949 = vmatpush1.msra.mxu0 0.0
        %3950 = vmatprep.subr.mxu0 0.0
        %3951 = vmatpush1.msra.mxu0 0.0
        %3952 = vmatprep.subr.mxu0 0.0
        %3953 = vmatpush1.msra.mxu0 0.0
        %3954 = vmatprep.subr.mxu0 0.0
        %3955 = vmatpush1.msra.mxu0 0.0
        %3956 = vmatprep.subr.mxu0 0.0
        %3957 = vmatpush1.msra.mxu0 0.0
        %3958 = vmatprep.subr.mxu0 0.0
        %3959 = vmatpush1.msra.mxu0 0.0
        %3960 = vmatprep.subr.mxu0 0.0
        %3961 = vmatpush1.msra.mxu0 0.0
        %3962 = vmatprep.subr.mxu0 0.0
        %3963 = vmatpush1.msra.mxu0 0.0
        %3964 = vmatprep.subr.mxu0 0.0
        %3965 = vmatpush1.msra.mxu0 0.0
        %3966 = vmatprep.subr.mxu0 0.0
        %3967 = vmatpush1.msra.mxu0 0.0
        %3968 = vmatprep.subr.mxu0 0.0
        %3969 = vmatpush1.msra.mxu0 0.0
        %3970 = vmatprep.subr.mxu0 0.0
        %3971 = vmatpush1.msra.mxu0 0.0
        %3972 = vmatprep.subr.mxu0 0.0
        %3973 = vmatpush1.msra.mxu0 0.0
        %3974 = vmatprep.subr.mxu0 0.0
        %3975 = vmatpush1.msra.mxu0 0.0
        %3976 = vmatprep.subr.mxu0 0.0
        %3977 = vmatpush1.msra.mxu0 0.0
        %3978 = vmatprep.subr.mxu0 0.0
        %3979 = vmatpush1.msra.mxu0 0.0
        %3980 = vmatprep.subr.mxu0 0.0
        %3981 = vmatpush1.msra.mxu0 0.0
        %3982 = vmatprep.subr.mxu0 0.0
        %3983 = vmatpush1.msra.mxu0 0.0
        %3984 = vmatprep.subr.mxu0 0.0
        %3985 = vmatpush1.msra.mxu0 0.0
        %3986 = vmatprep.mubr.f32.mxu0 0.0
        %v3987 = vand.u32 %v3617, 4294901760
        %3988 = vmatmul.mubr.f32.gmra.mrb[0].mxu0 %v3987
        %v3989 = vpop.f32.mrb[0].mxu0
        %v3990 = vadd.f32 %v3916, %v3989
        %v3991 = vpop.f32.mrb[0].mxu0
        %3992 = vdwg.mxu0
        %3993 = vmatprep.subr.mxu0 0.0
        %v3994 = vand.u32 %v365, 4294901760
        %3995 = vmatpush1.msra.mxu0 %v3994
        %3996 = vmatprep.subr.mxu0 0.0
        %3997 = vmatpush1.msra.mxu0 0.0
        %3998 = vmatprep.subr.mxu0 0.0
        %3999 = vmatpush1.msra.mxu0 0.0
        %4000 = vmatprep.subr.mxu0 0.0
        %4001 = vmatpush1.msra.mxu0 0.0
        %4002 = vmatprep.subr.mxu0 0.0
        %4003 = vmatpush1.msra.mxu0 0.0
        %4004 = vmatprep.subr.mxu0 0.0
        %4005 = vmatpush1.msra.mxu0 0.0
        %4006 = vmatprep.subr.mxu0 0.0
        %4007 = vmatpush1.msra.mxu0 0.0
        %4008 = vmatprep.subr.mxu0 0.0
        %4009 = vmatpush1.msra.mxu0 0.0
        %4010 = vmatprep.subr.mxu0 0.0
        %4011 = vmatpush1.msra.mxu0 0.0
        %4012 = vmatprep.subr.mxu0 0.0
        %4013 = vmatpush1.msra.mxu0 0.0
        %4014 = vmatprep.subr.mxu0 0.0
        %4015 = vmatpush1.msra.mxu0 0.0
        %4016 = vmatprep.subr.mxu0 0.0
        %4017 = vmatpush1.msra.mxu0 0.0
        %4018 = vmatprep.subr.mxu0 0.0
        %4019 = vmatpush1.msra.mxu0 0.0
        %4020 = vmatprep.subr.mxu0 0.0
        %4021 = vmatpush1.msra.mxu0 0.0
        %4022 = vmatprep.subr.mxu0 0.0
        %4023 = vmatpush1.msra.mxu0 0.0
        %4024 = vmatprep.subr.mxu0 0.0
        %4025 = vmatpush1.msra.mxu0 0.0
        %4026 = vmatprep.subr.mxu0 0.0
        %4027 = vmatpush1.msra.mxu0 0.0
        %4028 = vmatprep.subr.mxu0 0.0
        %4029 = vmatpush1.msra.mxu0 0.0
        %4030 = vmatprep.subr.mxu0 0.0
        %4031 = vmatpush1.msra.mxu0 0.0
        %4032 = vmatprep.subr.mxu0 0.0
        %4033 = vmatpush1.msra.mxu0 0.0
        %4034 = vmatprep.subr.mxu0 0.0
        %4035 = vmatpush1.msra.mxu0 0.0
        %4036 = vmatprep.subr.mxu0 0.0
        %4037 = vmatpush1.msra.mxu0 0.0
        %4038 = vmatprep.subr.mxu0 0.0
        %4039 = vmatpush1.msra.mxu0 0.0
        %4040 = vmatprep.subr.mxu0 0.0
        %4041 = vmatpush1.msra.mxu0 0.0
        %4042 = vmatprep.subr.mxu0 0.0
        %4043 = vmatpush1.msra.mxu0 0.0
        %4044 = vmatprep.subr.mxu0 0.0
        %4045 = vmatpush1.msra.mxu0 0.0
        %4046 = vmatprep.subr.mxu0 0.0
        %4047 = vmatpush1.msra.mxu0 0.0
        %4048 = vmatprep.subr.mxu0 0.0
        %4049 = vmatpush1.msra.mxu0 0.0
        %4050 = vmatprep.subr.mxu0 0.0
        %4051 = vmatpush1.msra.mxu0 0.0
        %4052 = vmatprep.subr.mxu0 0.0
        %4053 = vmatpush1.msra.mxu0 0.0
        %4054 = vmatprep.subr.mxu0 0.0
        %4055 = vmatpush1.msra.mxu0 0.0
        %4056 = vmatprep.subr.mxu0 0.0
        %4057 = vmatpush1.msra.mxu0 0.0
        %4058 = vmatprep.mubr.f32.mxu0 0.0
        %v4059 = vand.u32 %v3617, 4294901760
        %4060 = vmatmul.mubr.f32.gmra.mrb[0].mxu0 %v4059
        %v4061 = vpop.f32.mrb[0].mxu0
        %v4062 = vadd.f32 %v3990, %v4061
        %v4063 = vpop.f32.mrb[0].mxu0
        %4064 = vdwg.mxu0
        %v4065 = vld [vmem:[#allocation4] sm:$0xff]
        %v4066 = vld [vmem:[#allocation4 + $0x8] sm:$0xff]
        %v4067 = vld [vmem:[#allocation4 + $0x10] sm:$0xff]
        %v4068 = vld [vmem:[#allocation4 + $0x18] sm:$0xff]
        %4070 = vset.pattern.permute.xlu0 0
        %4071 = vperm.xlu0 %4070, %v2201
        %v4072 = vpop.permute.xlu0 %4071
        %4075 = vset.pattern.permute.xlu0 0
        %4076 = vperm.xlu0 %4075, %v2203
        %v4077 = vpop.permute.xlu0 %4076
        %4080 = vset.pattern.permute.xlu0 0
        %4081 = vperm.xlu0 %4080, %v2205
        %v4082 = vpop.permute.xlu0 %4081
        %4085 = vset.pattern.permute.xlu0 0
        %4086 = vperm.xlu0 %4085, %v2207
        %v4087 = vpop.permute.xlu0 %4086
        %v4089 = vmul.f32 %v4072, %v4065
        %v4090 = vmul.f32 %v4077, %v4066
        %v4091 = vmul.f32 %v4082, %v4067
        %v4092 = vmul.f32 %v4087, %v4068
        %v4093 = vadd.f32 %v4089, %v2715
        %v4094 = vadd.f32 %v4090, %v3164
        %v4095 = vadd.f32 %v4091, %v3613
        %v4096 = vadd.f32 %v4092, %v4062
        %4097 = vst.msk [vmem:[#allocation4] sm:$0xff] %vm371, %v4093
        %4098 = vst.msk [vmem:[#allocation4 + $0x8] sm:$0xff] %vm371, %v4094
        %4099 = vst.msk [vmem:[#allocation4 + $0x10] sm:$0xff] %vm371, %v4095
        %4100 = vst.msk [vmem:[#allocation4 + $0x18] sm:$0xff] %vm371, %v4096
        %4101 = vst.msk [vmem:[#allocation2] sm:$0xff] %vm2264, %v2192
        %4102 = vst.msk [vmem:[#allocation2 + $0x8] sm:$0xff] %vm2264, %v2193
        %4103 = vst.msk [vmem:[#allocation2 + $0x10] sm:$0xff] %vm2264, %v2194
        %4104 = vst.msk [vmem:[#allocation2 + $0x18] sm:$0xff] %vm2264, %v2195
        // Predicated region
        $region45: #{mha_forward.3} parent=39 // pred_check
          %p4105 = pneg %p314
        $region46: #{mha_forward.3} parent=39 // pred_check_branch
          %4107 = sbr.rel (%p4105) target = $region48
        $region47: #{mha_forward.3} parent=39 // pred_region
          %v4108 = vld [vmem:[#allocation3] sm:$0xff]
          %v4109 = vld [vmem:[#allocation3 + $0x8] sm:$0xff]
          %v4110 = vld [vmem:[#allocation3 + $0x10] sm:$0xff]
          %v4111 = vld [vmem:[#allocation3 + $0x18] sm:$0xff]
          %v4112 = vrcp.pop %v4108
          %v4113 = vrcp.pop %v4109
          %v4114 = vrcp.pop %v4110
          %v4115 = vrcp.pop %v4111
          %v4116 = vld [vmem:[%s4] sm:$0x1]
          %v4117 = vld [vmem:[#allocation4] sm:$0xff]
          %4119 = vset.pattern.permute.xlu0 0
          %4120 = vperm.xlu0 %4119, %v4112
          %v4121 = vpop.permute.xlu0 %4120
          %v4123 = vmul.f32 %v4117, %v4121
          %v4124 = vld [vmem:[%s3] sm:$0xff]
          %v4126 = vsel %vm371, %v4123, 0
          %4128 = vmatprep.subr.mxu0 0.0
          %v4129 = vand.u32 %v4124, 4294901760
          %4130 = vmatpush1.msra.mxu0 %v4129
          %4131 = vmatprep.subr.mxu0 0.0
          %4132 = vmatpush1.msra.mxu0 0.0
          %4133 = vmatprep.subr.mxu0 0.0
          %4134 = vmatpush1.msra.mxu0 0.0
          %4135 = vmatprep.subr.mxu0 0.0
          %4136 = vmatpush1.msra.mxu0 0.0
          %4137 = vmatprep.subr.mxu0 0.0
          %4138 = vmatpush1.msra.mxu0 0.0
          %4139 = vmatprep.subr.mxu0 0.0
          %4140 = vmatpush1.msra.mxu0 0.0
          %4141 = vmatprep.subr.mxu0 0.0
          %4142 = vmatpush1.msra.mxu0 0.0
          %4143 = vmatprep.subr.mxu0 0.0
          %4144 = vmatpush1.msra.mxu0 0.0
          %4145 = vmatprep.subr.mxu0 0.0
          %4146 = vmatpush1.msra.mxu0 0.0
          %4147 = vmatprep.subr.mxu0 0.0
          %4148 = vmatpush1.msra.mxu0 0.0
          %4149 = vmatprep.subr.mxu0 0.0
          %4150 = vmatpush1.msra.mxu0 0.0
          %4151 = vmatprep.subr.mxu0 0.0
          %4152 = vmatpush1.msra.mxu0 0.0
          %4153 = vmatprep.subr.mxu0 0.0
          %4154 = vmatpush1.msra.mxu0 0.0
          %4155 = vmatprep.subr.mxu0 0.0
          %4156 = vmatpush1.msra.mxu0 0.0
          %4157 = vmatprep.subr.mxu0 0.0
          %4158 = vmatpush1.msra.mxu0 0.0
          %4159 = vmatprep.subr.mxu0 0.0
          %4160 = vmatpush1.msra.mxu0 0.0
          %4161 = vmatprep.subr.mxu0 0.0
          %4162 = vmatpush1.msra.mxu0 0.0
          %4163 = vmatprep.subr.mxu0 0.0
          %4164 = vmatpush1.msra.mxu0 0.0
          %4165 = vmatprep.subr.mxu0 0.0
          %4166 = vmatpush1.msra.mxu0 0.0
          %4167 = vmatprep.subr.mxu0 0.0
          %4168 = vmatpush1.msra.mxu0 0.0
          %4169 = vmatprep.subr.mxu0 0.0
          %4170 = vmatpush1.msra.mxu0 0.0
          %4171 = vmatprep.subr.mxu0 0.0
          %4172 = vmatpush1.msra.mxu0 0.0
          %4173 = vmatprep.subr.mxu0 0.0
          %4174 = vmatpush1.msra.mxu0 0.0
          %4175 = vmatprep.subr.mxu0 0.0
          %4176 = vmatpush1.msra.mxu0 0.0
          %4177 = vmatprep.subr.mxu0 0.0
          %4178 = vmatpush1.msra.mxu0 0.0
          %4179 = vmatprep.subr.mxu0 0.0
          %4180 = vmatpush1.msra.mxu0 0.0
          %4181 = vmatprep.subr.mxu0 0.0
          %4182 = vmatpush1.msra.mxu0 0.0
          %4183 = vmatprep.subr.mxu0 0.0
          %4184 = vmatpush1.msra.mxu0 0.0
          %4185 = vmatprep.subr.mxu0 0.0
          %4186 = vmatpush1.msra.mxu0 0.0
          %4187 = vmatprep.subr.mxu0 0.0
          %4188 = vmatpush1.msra.mxu0 0.0
          %4189 = vmatprep.subr.mxu0 0.0
          %4190 = vmatpush1.msra.mxu0 0.0
          %4191 = vmatprep.subr.mxu0 0.0
          %4192 = vmatpush1.msra.mxu0 0.0
          %4193 = vmatprep.mubr.f32.mxu0 0.0
          %v4194 = vand.u32 %v4126, 4294901760
          %v4195 = vsub.f32 %v4126, %v4194
          %v4196 = vand.u32 %v4195, 4294901760
          %v4197 = vsub.f32 %v4195, %v4196
          %v4198 = vand.u32 %v4197, 4294901760
          %4199 = vmatmul.mubr.f32.gmra.mrb[0].mxu0 %v4198
          %v4200 = vpop.f32.mrb[0].mxu0
          %v4201 = vadd.f32 0.0, %v4200
          %v4202 = vpop.f32.mrb[0].mxu0
          %4203 = vdwg.mxu0
          %4204 = vmatprep.subr.mxu0 0.0
          %v4205 = vand.u32 %v4124, 4294901760
          %v4206 = vsub.f32 %v4124, %v4205
          %v4207 = vand.u32 %v4206, 4294901760
          %v4208 = vsub.f32 %v4206, %v4207
          %v4209 = vand.u32 %v4208, 4294901760
          %4210 = vmatpush1.msra.mxu0 %v4209
          %4211 = vmatprep.subr.mxu0 0.0
          %4212 = vmatpush1.msra.mxu0 0.0
          %4213 = vmatprep.subr.mxu0 0.0
          %4214 = vmatpush1.msra.mxu0 0.0
          %4215 = vmatprep.subr.mxu0 0.0
          %4216 = vmatpush1.msra.mxu0 0.0
          %4217 = vmatprep.subr.mxu0 0.0
          %4218 = vmatpush1.msra.mxu0 0.0
          %4219 = vmatprep.subr.mxu0 0.0
          %4220 = vmatpush1.msra.mxu0 0.0
          %4221 = vmatprep.subr.mxu0 0.0
          %4222 = vmatpush1.msra.mxu0 0.0
          %4223 = vmatprep.subr.mxu0 0.0
          %4224 = vmatpush1.msra.mxu0 0.0
          %4225 = vmatprep.subr.mxu0 0.0
          %4226 = vmatpush1.msra.mxu0 0.0
          %4227 = vmatprep.subr.mxu0 0.0
          %4228 = vmatpush1.msra.mxu0 0.0
          %4229 = vmatprep.subr.mxu0 0.0
          %4230 = vmatpush1.msra.mxu0 0.0
          %4231 = vmatprep.subr.mxu0 0.0
          %4232 = vmatpush1.msra.mxu0 0.0
          %4233 = vmatprep.subr.mxu0 0.0
          %4234 = vmatpush1.msra.mxu0 0.0
          %4235 = vmatprep.subr.mxu0 0.0
          %4236 = vmatpush1.msra.mxu0 0.0
          %4237 = vmatprep.subr.mxu0 0.0
          %4238 = vmatpush1.msra.mxu0 0.0
          %4239 = vmatprep.subr.mxu0 0.0
          %4240 = vmatpush1.msra.mxu0 0.0
          %4241 = vmatprep.subr.mxu0 0.0
          %4242 = vmatpush1.msra.mxu0 0.0
          %4243 = vmatprep.subr.mxu0 0.0
          %4244 = vmatpush1.msra.mxu0 0.0
          %4245 = vmatprep.subr.mxu0 0.0
          %4246 = vmatpush1.msra.mxu0 0.0
          %4247 = vmatprep.subr.mxu0 0.0
          %4248 = vmatpush1.msra.mxu0 0.0
          %4249 = vmatprep.subr.mxu0 0.0
          %4250 = vmatpush1.msra.mxu0 0.0
          %4251 = vmatprep.subr.mxu0 0.0
          %4252 = vmatpush1.msra.mxu0 0.0
          %4253 = vmatprep.subr.mxu0 0.0
          %4254 = vmatpush1.msra.mxu0 0.0
          %4255 = vmatprep.subr.mxu0 0.0
          %4256 = vmatpush1.msra.mxu0 0.0
          %4257 = vmatprep.subr.mxu0 0.0
          %4258 = vmatpush1.msra.mxu0 0.0
          %4259 = vmatprep.subr.mxu0 0.0
          %4260 = vmatpush1.msra.mxu0 0.0
          %4261 = vmatprep.subr.mxu0 0.0
          %4262 = vmatpush1.msra.mxu0 0.0
          %4263 = vmatprep.subr.mxu0 0.0
          %4264 = vmatpush1.msra.mxu0 0.0
          %4265 = vmatprep.subr.mxu0 0.0
          %4266 = vmatpush1.msra.mxu0 0.0
          %4267 = vmatprep.subr.mxu0 0.0
          %4268 = vmatpush1.msra.mxu0 0.0
          %4269 = vmatprep.subr.mxu0 0.0
          %4270 = vmatpush1.msra.mxu0 0.0
          %4271 = vmatprep.subr.mxu0 0.0
          %4272 = vmatpush1.msra.mxu0 0.0
          %4273 = vmatprep.mubr.f32.mxu0 0.0
          %v4274 = vand.u32 %v4126, 4294901760
          %4275 = vmatmul.mubr.f32.gmra.mrb[0].mxu0 %v4274
          %v4276 = vpop.f32.mrb[0].mxu0
          %v4277 = vadd.f32 %v4201, %v4276
          %v4278 = vpop.f32.mrb[0].mxu0
          %4279 = vdwg.mxu0
          %4280 = vmatprep.subr.mxu0 0.0
          %v4281 = vand.u32 %v4124, 4294901760
          %v4282 = vsub.f32 %v4124, %v4281
          %4283 = vmatpush1.msra.mxu0 %v4282
          %4284 = vmatprep.subr.mxu0 0.0
          %4285 = vmatpush1.msra.mxu0 0.0
          %4286 = vmatprep.subr.mxu0 0.0
          %4287 = vmatpush1.msra.mxu0 0.0
          %4288 = vmatprep.subr.mxu0 0.0
          %4289 = vmatpush1.msra.mxu0 0.0
          %4290 = vmatprep.subr.mxu0 0.0
          %4291 = vmatpush1.msra.mxu0 0.0
          %4292 = vmatprep.subr.mxu0 0.0
          %4293 = vmatpush1.msra.mxu0 0.0
          %4294 = vmatprep.subr.mxu0 0.0
          %4295 = vmatpush1.msra.mxu0 0.0
          %4296 = vmatprep.subr.mxu0 0.0
          %4297 = vmatpush1.msra.mxu0 0.0
          %4298 = vmatprep.subr.mxu0 0.0
          %4299 = vmatpush1.msra.mxu0 0.0
          %4300 = vmatprep.subr.mxu0 0.0
          %4301 = vmatpush1.msra.mxu0 0.0
          %4302 = vmatprep.subr.mxu0 0.0
          %4303 = vmatpush1.msra.mxu0 0.0
          %4304 = vmatprep.subr.mxu0 0.0
          %4305 = vmatpush1.msra.mxu0 0.0
          %4306 = vmatprep.subr.mxu0 0.0
          %4307 = vmatpush1.msra.mxu0 0.0
          %4308 = vmatprep.subr.mxu0 0.0
          %4309 = vmatpush1.msra.mxu0 0.0
          %4310 = vmatprep.subr.mxu0 0.0
          %4311 = vmatpush1.msra.mxu0 0.0
          %4312 = vmatprep.subr.mxu0 0.0
          %4313 = vmatpush1.msra.mxu0 0.0
          %4314 = vmatprep.subr.mxu0 0.0
          %4315 = vmatpush1.msra.mxu0 0.0
          %4316 = vmatprep.subr.mxu0 0.0
          %4317 = vmatpush1.msra.mxu0 0.0
          %4318 = vmatprep.subr.mxu0 0.0
          %4319 = vmatpush1.msra.mxu0 0.0
          %4320 = vmatprep.subr.mxu0 0.0
          %4321 = vmatpush1.msra.mxu0 0.0
          %4322 = vmatprep.subr.mxu0 0.0
          %4323 = vmatpush1.msra.mxu0 0.0
          %4324 = vmatprep.subr.mxu0 0.0
          %4325 = vmatpush1.msra.mxu0 0.0
          %4326 = vmatprep.subr.mxu0 0.0
          %4327 = vmatpush1.msra.mxu0 0.0
          %4328 = vmatprep.subr.mxu0 0.0
          %4329 = vmatpush1.msra.mxu0 0.0
          %4330 = vmatprep.subr.mxu0 0.0
          %4331 = vmatpush1.msra.mxu0 0.0
          %4332 = vmatprep.subr.mxu0 0.0
          %4333 = vmatpush1.msra.mxu0 0.0
          %4334 = vmatprep.subr.mxu0 0.0
          %4335 = vmatpush1.msra.mxu0 0.0
          %4336 = vmatprep.subr.mxu0 0.0
          %4337 = vmatpush1.msra.mxu0 0.0
          %4338 = vmatprep.subr.mxu0 0.0
          %4339 = vmatpush1.msra.mxu0 0.0
          %4340 = vmatprep.subr.mxu0 0.0
          %4341 = vmatpush1.msra.mxu0 0.0
          %4342 = vmatprep.subr.mxu0 0.0
          %4343 = vmatpush1.msra.mxu0 0.0
          %4344 = vmatprep.subr.mxu0 0.0
          %4345 = vmatpush1.msra.mxu0 0.0
          %4346 = vmatprep.mubr.f32.mxu0 0.0
          %v4347 = vand.u32 %v4126, 4294901760
          %v4348 = vsub.f32 %v4126, %v4347
          %4349 = vmatmul.mubr.f32.gmra.mrb[0].mxu0 %v4348
          %v4350 = vpop.f32.mrb[0].mxu0
          %v4351 = vadd.f32 %v4277, %v4350
          %v4352 = vpop.f32.mrb[0].mxu0
          %4353 = vdwg.mxu0
          %4354 = vmatprep.subr.mxu0 0.0
          %v4355 = vand.u32 %v4124, 4294901760
          %4356 = vmatpush1.msra.mxu0 %v4355
          %4357 = vmatprep.subr.mxu0 0.0
          %4358 = vmatpush1.msra.mxu0 0.0
          %4359 = vmatprep.subr.mxu0 0.0
          %4360 = vmatpush1.msra.mxu0 0.0
          %4361 = vmatprep.subr.mxu0 0.0
          %4362 = vmatpush1.msra.mxu0 0.0
          %4363 = vmatprep.subr.mxu0 0.0
          %4364 = vmatpush1.msra.mxu0 0.0
          %4365 = vmatprep.subr.mxu0 0.0
          %4366 = vmatpush1.msra.mxu0 0.0
          %4367 = vmatprep.subr.mxu0 0.0
          %4368 = vmatpush1.msra.mxu0 0.0
          %4369 = vmatprep.subr.mxu0 0.0
          %4370 = vmatpush1.msra.mxu0 0.0
          %4371 = vmatprep.subr.mxu0 0.0
          %4372 = vmatpush1.msra.mxu0 0.0
          %4373 = vmatprep.subr.mxu0 0.0
          %4374 = vmatpush1.msra.mxu0 0.0
          %4375 = vmatprep.subr.mxu0 0.0
          %4376 = vmatpush1.msra.mxu0 0.0
          %4377 = vmatprep.subr.mxu0 0.0
          %4378 = vmatpush1.msra.mxu0 0.0
          %4379 = vmatprep.subr.mxu0 0.0
          %4380 = vmatpush1.msra.mxu0 0.0
          %4381 = vmatprep.subr.mxu0 0.0
          %4382 = vmatpush1.msra.mxu0 0.0
          %4383 = vmatprep.subr.mxu0 0.0
          %4384 = vmatpush1.msra.mxu0 0.0
          %4385 = vmatprep.subr.mxu0 0.0
          %4386 = vmatpush1.msra.mxu0 0.0
          %4387 = vmatprep.subr.mxu0 0.0
          %4388 = vmatpush1.msra.mxu0 0.0
          %4389 = vmatprep.subr.mxu0 0.0
          %4390 = vmatpush1.msra.mxu0 0.0
          %4391 = vmatprep.subr.mxu0 0.0
          %4392 = vmatpush1.msra.mxu0 0.0
          %4393 = vmatprep.subr.mxu0 0.0
          %4394 = vmatpush1.msra.mxu0 0.0
          %4395 = vmatprep.subr.mxu0 0.0
          %4396 = vmatpush1.msra.mxu0 0.0
          %4397 = vmatprep.subr.mxu0 0.0
          %4398 = vmatpush1.msra.mxu0 0.0
          %4399 = vmatprep.subr.mxu0 0.0
          %4400 = vmatpush1.msra.mxu0 0.0
          %4401 = vmatprep.subr.mxu0 0.0
          %4402 = vmatpush1.msra.mxu0 0.0
          %4403 = vmatprep.subr.mxu0 0.0
          %4404 = vmatpush1.msra.mxu0 0.0
          %4405 = vmatprep.subr.mxu0 0.0
          %4406 = vmatpush1.msra.mxu0 0.0
          %4407 = vmatprep.subr.mxu0 0.0
          %4408 = vmatpush1.msra.mxu0 0.0
          %4409 = vmatprep.subr.mxu0 0.0
          %4410 = vmatpush1.msra.mxu0 0.0
          %4411 = vmatprep.subr.mxu0 0.0
          %4412 = vmatpush1.msra.mxu0 0.0
          %4413 = vmatprep.subr.mxu0 0.0
          %4414 = vmatpush1.msra.mxu0 0.0
          %4415 = vmatprep.subr.mxu0 0.0
          %4416 = vmatpush1.msra.mxu0 0.0
          %4417 = vmatprep.subr.mxu0 0.0
          %4418 = vmatpush1.msra.mxu0 0.0
          %4419 = vmatprep.mubr.f32.mxu0 0.0
          %v4420 = vand.u32 %v4126, 4294901760
          %v4421 = vsub.f32 %v4126, %v4420
          %v4422 = vand.u32 %v4421, 4294901760
          %4423 = vmatmul.mubr.f32.gmra.mrb[0].mxu0 %v4422
          %v4424 = vpop.f32.mrb[0].mxu0
          %v4425 = vadd.f32 %v4351, %v4424
          %v4426 = vpop.f32.mrb[0].mxu0
          %4427 = vdwg.mxu0
          %4428 = vmatprep.subr.mxu0 0.0
          %v4429 = vand.u32 %v4124, 4294901760
          %v4430 = vsub.f32 %v4124, %v4429
          %v4431 = vand.u32 %v4430, 4294901760
          %4432 = vmatpush1.msra.mxu0 %v4431
          %4433 = vmatprep.subr.mxu0 0.0
          %4434 = vmatpush1.msra.mxu0 0.0
          %4435 = vmatprep.subr.mxu0 0.0
          %4436 = vmatpush1.msra.mxu0 0.0
          %4437 = vmatprep.subr.mxu0 0.0
          %4438 = vmatpush1.msra.mxu0 0.0
          %4439 = vmatprep.subr.mxu0 0.0
          %4440 = vmatpush1.msra.mxu0 0.0
          %4441 = vmatprep.subr.mxu0 0.0
          %4442 = vmatpush1.msra.mxu0 0.0
          %4443 = vmatprep.subr.mxu0 0.0
          %4444 = vmatpush1.msra.mxu0 0.0
          %4445 = vmatprep.subr.mxu0 0.0
          %4446 = vmatpush1.msra.mxu0 0.0
          %4447 = vmatprep.subr.mxu0 0.0
          %4448 = vmatpush1.msra.mxu0 0.0
          %4449 = vmatprep.subr.mxu0 0.0
          %4450 = vmatpush1.msra.mxu0 0.0
          %4451 = vmatprep.subr.mxu0 0.0
          %4452 = vmatpush1.msra.mxu0 0.0
          %4453 = vmatprep.subr.mxu0 0.0
          %4454 = vmatpush1.msra.mxu0 0.0
          %4455 = vmatprep.subr.mxu0 0.0
          %4456 = vmatpush1.msra.mxu0 0.0
          %4457 = vmatprep.subr.mxu0 0.0
          %4458 = vmatpush1.msra.mxu0 0.0
          %4459 = vmatprep.subr.mxu0 0.0
          %4460 = vmatpush1.msra.mxu0 0.0
          %4461 = vmatprep.subr.mxu0 0.0
          %4462 = vmatpush1.msra.mxu0 0.0
          %4463 = vmatprep.subr.mxu0 0.0
          %4464 = vmatpush1.msra.mxu0 0.0
          %4465 = vmatprep.subr.mxu0 0.0
          %4466 = vmatpush1.msra.mxu0 0.0
          %4467 = vmatprep.subr.mxu0 0.0
          %4468 = vmatpush1.msra.mxu0 0.0
          %4469 = vmatprep.subr.mxu0 0.0
          %4470 = vmatpush1.msra.mxu0 0.0
          %4471 = vmatprep.subr.mxu0 0.0
          %4472 = vmatpush1.msra.mxu0 0.0
          %4473 = vmatprep.subr.mxu0 0.0
          %4474 = vmatpush1.msra.mxu0 0.0
          %4475 = vmatprep.subr.mxu0 0.0
          %4476 = vmatpush1.msra.mxu0 0.0
          %4477 = vmatprep.subr.mxu0 0.0
          %4478 = vmatpush1.msra.mxu0 0.0
          %4479 = vmatprep.subr.mxu0 0.0
          %4480 = vmatpush1.msra.mxu0 0.0
          %4481 = vmatprep.subr.mxu0 0.0
          %4482 = vmatpush1.msra.mxu0 0.0
          %4483 = vmatprep.subr.mxu0 0.0
          %4484 = vmatpush1.msra.mxu0 0.0
          %4485 = vmatprep.subr.mxu0 0.0
          %4486 = vmatpush1.msra.mxu0 0.0
          %4487 = vmatprep.subr.mxu0 0.0
          %4488 = vmatpush1.msra.mxu0 0.0
          %4489 = vmatprep.subr.mxu0 0.0
          %4490 = vmatpush1.msra.mxu0 0.0
          %4491 = vmatprep.subr.mxu0 0.0
          %4492 = vmatpush1.msra.mxu0 0.0
          %4493 = vmatprep.subr.mxu0 0.0
          %4494 = vmatpush1.msra.mxu0 0.0
          %4495 = vmatprep.mubr.f32.mxu0 0.0
          %v4496 = vand.u32 %v4126, 4294901760
          %4497 = vmatmul.mubr.f32.gmra.mrb[0].mxu0 %v4496
          %v4498 = vpop.f32.mrb[0].mxu0
          %v4499 = vadd.f32 %v4425, %v4498
          %v4500 = vpop.f32.mrb[0].mxu0
          %4501 = vdwg.mxu0
          %4502 = vmatprep.subr.mxu0 0.0
          %v4503 = vand.u32 %v4124, 4294901760
          %4504 = vmatpush1.msra.mxu0 %v4503
          %4505 = vmatprep.subr.mxu0 0.0
          %4506 = vmatpush1.msra.mxu0 0.0
          %4507 = vmatprep.subr.mxu0 0.0
          %4508 = vmatpush1.msra.mxu0 0.0
          %4509 = vmatprep.subr.mxu0 0.0
          %4510 = vmatpush1.msra.mxu0 0.0
          %4511 = vmatprep.subr.mxu0 0.0
          %4512 = vmatpush1.msra.mxu0 0.0
          %4513 = vmatprep.subr.mxu0 0.0
          %4514 = vmatpush1.msra.mxu0 0.0
          %4515 = vmatprep.subr.mxu0 0.0
          %4516 = vmatpush1.msra.mxu0 0.0
          %4517 = vmatprep.subr.mxu0 0.0
          %4518 = vmatpush1.msra.mxu0 0.0
          %4519 = vmatprep.subr.mxu0 0.0
          %4520 = vmatpush1.msra.mxu0 0.0
          %4521 = vmatprep.subr.mxu0 0.0
          %4522 = vmatpush1.msra.mxu0 0.0
          %4523 = vmatprep.subr.mxu0 0.0
          %4524 = vmatpush1.msra.mxu0 0.0
          %4525 = vmatprep.subr.mxu0 0.0
          %4526 = vmatpush1.msra.mxu0 0.0
          %4527 = vmatprep.subr.mxu0 0.0
          %4528 = vmatpush1.msra.mxu0 0.0
          %4529 = vmatprep.subr.mxu0 0.0
          %4530 = vmatpush1.msra.mxu0 0.0
          %4531 = vmatprep.subr.mxu0 0.0
          %4532 = vmatpush1.msra.mxu0 0.0
          %4533 = vmatprep.subr.mxu0 0.0
          %4534 = vmatpush1.msra.mxu0 0.0
          %4535 = vmatprep.subr.mxu0 0.0
          %4536 = vmatpush1.msra.mxu0 0.0
          %4537 = vmatprep.subr.mxu0 0.0
          %4538 = vmatpush1.msra.mxu0 0.0
          %4539 = vmatprep.subr.mxu0 0.0
          %4540 = vmatpush1.msra.mxu0 0.0
          %4541 = vmatprep.subr.mxu0 0.0
          %4542 = vmatpush1.msra.mxu0 0.0
          %4543 = vmatprep.subr.mxu0 0.0
          %4544 = vmatpush1.msra.mxu0 0.0
          %4545 = vmatprep.subr.mxu0 0.0
          %4546 = vmatpush1.msra.mxu0 0.0
          %4547 = vmatprep.subr.mxu0 0.0
          %4548 = vmatpush1.msra.mxu0 0.0
          %4549 = vmatprep.subr.mxu0 0.0
          %4550 = vmatpush1.msra.mxu0 0.0
          %4551 = vmatprep.subr.mxu0 0.0
          %4552 = vmatpush1.msra.mxu0 0.0
          %4553 = vmatprep.subr.mxu0 0.0
          %4554 = vmatpush1.msra.mxu0 0.0
          %4555 = vmatprep.subr.mxu0 0.0
          %4556 = vmatpush1.msra.mxu0 0.0
          %4557 = vmatprep.subr.mxu0 0.0
          %4558 = vmatpush1.msra.mxu0 0.0
          %4559 = vmatprep.subr.mxu0 0.0
          %4560 = vmatpush1.msra.mxu0 0.0
          %4561 = vmatprep.subr.mxu0 0.0
          %4562 = vmatpush1.msra.mxu0 0.0
          %4563 = vmatprep.subr.mxu0 0.0
          %4564 = vmatpush1.msra.mxu0 0.0
          %4565 = vmatprep.subr.mxu0 0.0
          %4566 = vmatpush1.msra.mxu0 0.0
          %4567 = vmatprep.mubr.f32.mxu0 0.0
          %v4568 = vand.u32 %v4126, 4294901760
          %4569 = vmatmul.mubr.f32.gmra.mrb[0].mxu0 %v4568
          %v4570 = vpop.f32.mrb[0].mxu0
          %v4571 = vadd.f32 %v4499, %v4570
          %v4572 = vpop.f32.mrb[0].mxu0
          %4573 = vdwg.mxu0
          %v4575 = vlaneseq
          %v4576 = vshrl.u32 %v4575, 7
          %v4577 = vsub.s32 0, %v4576
          %v4578 = vrot.slane %v4116, %v4577
          %v4580 = vadd.f32 %v4578, %v4571
          %s4581 = scalar_lea.vmem [#allocation4], 8
          %v4582 = vld [vmem:[%s4581] sm:$0xff]
          %4584 = vset.pattern.permute.xlu0 0
          %4585 = vperm.xlu0 %4584, %v4113
          %v4586 = vpop.permute.xlu0 %4585
          %v4588 = vmul.f32 %v4582, %v4586
          %v4589 = vld [vmem:[%s3 + $0x8] sm:$0xff]
          %v4591 = vsel %vm371, %v4588, 0
          %4593 = vmatprep.subr.mxu0 0.0
          %v4594 = vand.u32 %v4589, 4294901760
          %4595 = vmatpush1.msra.mxu0 %v4594
          %4596 = vmatprep.subr.mxu0 0.0
          %4597 = vmatpush1.msra.mxu0 0.0
          %4598 = vmatprep.subr.mxu0 0.0
          %4599 = vmatpush1.msra.mxu0 0.0
          %4600 = vmatprep.subr.mxu0 0.0
          %4601 = vmatpush1.msra.mxu0 0.0
          %4602 = vmatprep.subr.mxu0 0.0
          %4603 = vmatpush1.msra.mxu0 0.0
          %4604 = vmatprep.subr.mxu0 0.0
          %4605 = vmatpush1.msra.mxu0 0.0
          %4606 = vmatprep.subr.mxu0 0.0
          %4607 = vmatpush1.msra.mxu0 0.0
          %4608 = vmatprep.subr.mxu0 0.0
          %4609 = vmatpush1.msra.mxu0 0.0
          %4610 = vmatprep.subr.mxu0 0.0
          %4611 = vmatpush1.msra.mxu0 0.0
          %4612 = vmatprep.subr.mxu0 0.0
          %4613 = vmatpush1.msra.mxu0 0.0
          %4614 = vmatprep.subr.mxu0 0.0
          %4615 = vmatpush1.msra.mxu0 0.0
          %4616 = vmatprep.subr.mxu0 0.0
          %4617 = vmatpush1.msra.mxu0 0.0
          %4618 = vmatprep.subr.mxu0 0.0
          %4619 = vmatpush1.msra.mxu0 0.0
          %4620 = vmatprep.subr.mxu0 0.0
          %4621 = vmatpush1.msra.mxu0 0.0
          %4622 = vmatprep.subr.mxu0 0.0
          %4623 = vmatpush1.msra.mxu0 0.0
          %4624 = vmatprep.subr.mxu0 0.0
          %4625 = vmatpush1.msra.mxu0 0.0
          %4626 = vmatprep.subr.mxu0 0.0
          %4627 = vmatpush1.msra.mxu0 0.0
          %4628 = vmatprep.subr.mxu0 0.0
          %4629 = vmatpush1.msra.mxu0 0.0
          %4630 = vmatprep.subr.mxu0 0.0
          %4631 = vmatpush1.msra.mxu0 0.0
          %4632 = vmatprep.subr.mxu0 0.0
          %4633 = vmatpush1.msra.mxu0 0.0
          %4634 = vmatprep.subr.mxu0 0.0
          %4635 = vmatpush1.msra.mxu0 0.0
          %4636 = vmatprep.subr.mxu0 0.0
          %4637 = vmatpush1.msra.mxu0 0.0
          %4638 = vmatprep.subr.mxu0 0.0
          %4639 = vmatpush1.msra.mxu0 0.0
          %4640 = vmatprep.subr.mxu0 0.0
          %4641 = vmatpush1.msra.mxu0 0.0
          %4642 = vmatprep.subr.mxu0 0.0
          %4643 = vmatpush1.msra.mxu0 0.0
          %4644 = vmatprep.subr.mxu0 0.0
          %4645 = vmatpush1.msra.mxu0 0.0
          %4646 = vmatprep.subr.mxu0 0.0
          %4647 = vmatpush1.msra.mxu0 0.0
          %4648 = vmatprep.subr.mxu0 0.0
          %4649 = vmatpush1.msra.mxu0 0.0
          %4650 = vmatprep.subr.mxu0 0.0
          %4651 = vmatpush1.msra.mxu0 0.0
          %4652 = vmatprep.subr.mxu0 0.0
          %4653 = vmatpush1.msra.mxu0 0.0
          %4654 = vmatprep.subr.mxu0 0.0
          %4655 = vmatpush1.msra.mxu0 0.0
          %4656 = vmatprep.subr.mxu0 0.0
          %4657 = vmatpush1.msra.mxu0 0.0
          %4658 = vmatprep.mubr.f32.mxu0 0.0
          %v4659 = vand.u32 %v4591, 4294901760
          %v4660 = vsub.f32 %v4591, %v4659
          %v4661 = vand.u32 %v4660, 4294901760
          %v4662 = vsub.f32 %v4660, %v4661
          %v4663 = vand.u32 %v4662, 4294901760
          %4664 = vmatmul.mubr.f32.gmra.mrb[0].mxu0 %v4663
          %v4665 = vpop.f32.mrb[0].mxu0
          %v4666 = vadd.f32 0.0, %v4665
          %v4667 = vpop.f32.mrb[0].mxu0
          %4668 = vdwg.mxu0
          %4669 = vmatprep.subr.mxu0 0.0
          %v4670 = vand.u32 %v4589, 4294901760
          %v4671 = vsub.f32 %v4589, %v4670
          %v4672 = vand.u32 %v4671, 4294901760
          %v4673 = vsub.f32 %v4671, %v4672
          %v4674 = vand.u32 %v4673, 4294901760
          %4675 = vmatpush1.msra.mxu0 %v4674
          %4676 = vmatprep.subr.mxu0 0.0
          %4677 = vmatpush1.msra.mxu0 0.0
          %4678 = vmatprep.subr.mxu0 0.0
          %4679 = vmatpush1.msra.mxu0 0.0
          %4680 = vmatprep.subr.mxu0 0.0
          %4681 = vmatpush1.msra.mxu0 0.0
          %4682 = vmatprep.subr.mxu0 0.0
          %4683 = vmatpush1.msra.mxu0 0.0
          %4684 = vmatprep.subr.mxu0 0.0
          %4685 = vmatpush1.msra.mxu0 0.0
          %4686 = vmatprep.subr.mxu0 0.0
          %4687 = vmatpush1.msra.mxu0 0.0
          %4688 = vmatprep.subr.mxu0 0.0
          %4689 = vmatpush1.msra.mxu0 0.0
          %4690 = vmatprep.subr.mxu0 0.0
          %4691 = vmatpush1.msra.mxu0 0.0
          %4692 = vmatprep.subr.mxu0 0.0
          %4693 = vmatpush1.msra.mxu0 0.0
          %4694 = vmatprep.subr.mxu0 0.0
          %4695 = vmatpush1.msra.mxu0 0.0
          %4696 = vmatprep.subr.mxu0 0.0
          %4697 = vmatpush1.msra.mxu0 0.0
          %4698 = vmatprep.subr.mxu0 0.0
          %4699 = vmatpush1.msra.mxu0 0.0
          %4700 = vmatprep.subr.mxu0 0.0
          %4701 = vmatpush1.msra.mxu0 0.0
          %4702 = vmatprep.subr.mxu0 0.0
          %4703 = vmatpush1.msra.mxu0 0.0
          %4704 = vmatprep.subr.mxu0 0.0
          %4705 = vmatpush1.msra.mxu0 0.0
          %4706 = vmatprep.subr.mxu0 0.0
          %4707 = vmatpush1.msra.mxu0 0.0
          %4708 = vmatprep.subr.mxu0 0.0
          %4709 = vmatpush1.msra.mxu0 0.0
          %4710 = vmatprep.subr.mxu0 0.0
          %4711 = vmatpush1.msra.mxu0 0.0
          %4712 = vmatprep.subr.mxu0 0.0
          %4713 = vmatpush1.msra.mxu0 0.0
          %4714 = vmatprep.subr.mxu0 0.0
          %4715 = vmatpush1.msra.mxu0 0.0
          %4716 = vmatprep.subr.mxu0 0.0
          %4717 = vmatpush1.msra.mxu0 0.0
          %4718 = vmatprep.subr.mxu0 0.0
          %4719 = vmatpush1.msra.mxu0 0.0
          %4720 = vmatprep.subr.mxu0 0.0
          %4721 = vmatpush1.msra.mxu0 0.0
          %4722 = vmatprep.subr.mxu0 0.0
          %4723 = vmatpush1.msra.mxu0 0.0
          %4724 = vmatprep.subr.mxu0 0.0
          %4725 = vmatpush1.msra.mxu0 0.0
          %4726 = vmatprep.subr.mxu0 0.0
          %4727 = vmatpush1.msra.mxu0 0.0
          %4728 = vmatprep.subr.mxu0 0.0
          %4729 = vmatpush1.msra.mxu0 0.0
          %4730 = vmatprep.subr.mxu0 0.0
          %4731 = vmatpush1.msra.mxu0 0.0
          %4732 = vmatprep.subr.mxu0 0.0
          %4733 = vmatpush1.msra.mxu0 0.0
          %4734 = vmatprep.subr.mxu0 0.0
          %4735 = vmatpush1.msra.mxu0 0.0
          %4736 = vmatprep.subr.mxu0 0.0
          %4737 = vmatpush1.msra.mxu0 0.0
          %4738 = vmatprep.mubr.f32.mxu0 0.0
          %v4739 = vand.u32 %v4591, 4294901760
          %4740 = vmatmul.mubr.f32.gmra.mrb[0].mxu0 %v4739
          %v4741 = vpop.f32.mrb[0].mxu0
          %v4742 = vadd.f32 %v4666, %v4741
          %v4743 = vpop.f32.mrb[0].mxu0
          %4744 = vdwg.mxu0
          %4745 = vmatprep.subr.mxu0 0.0
          %v4746 = vand.u32 %v4589, 4294901760
          %v4747 = vsub.f32 %v4589, %v4746
          %4748 = vmatpush1.msra.mxu0 %v4747
          %4749 = vmatprep.subr.mxu0 0.0
          %4750 = vmatpush1.msra.mxu0 0.0
          %4751 = vmatprep.subr.mxu0 0.0
          %4752 = vmatpush1.msra.mxu0 0.0
          %4753 = vmatprep.subr.mxu0 0.0
          %4754 = vmatpush1.msra.mxu0 0.0
          %4755 = vmatprep.subr.mxu0 0.0
          %4756 = vmatpush1.msra.mxu0 0.0
          %4757 = vmatprep.subr.mxu0 0.0
          %4758 = vmatpush1.msra.mxu0 0.0
          %4759 = vmatprep.subr.mxu0 0.0
          %4760 = vmatpush1.msra.mxu0 0.0
          %4761 = vmatprep.subr.mxu0 0.0
          %4762 = vmatpush1.msra.mxu0 0.0
          %4763 = vmatprep.subr.mxu0 0.0
          %4764 = vmatpush1.msra.mxu0 0.0
          %4765 = vmatprep.subr.mxu0 0.0
          %4766 = vmatpush1.msra.mxu0 0.0
          %4767 = vmatprep.subr.mxu0 0.0
          %4768 = vmatpush1.msra.mxu0 0.0
          %4769 = vmatprep.subr.mxu0 0.0
          %4770 = vmatpush1.msra.mxu0 0.0
          %4771 = vmatprep.subr.mxu0 0.0
          %4772 = vmatpush1.msra.mxu0 0.0
          %4773 = vmatprep.subr.mxu0 0.0
          %4774 = vmatpush1.msra.mxu0 0.0
          %4775 = vmatprep.subr.mxu0 0.0
          %4776 = vmatpush1.msra.mxu0 0.0
          %4777 = vmatprep.subr.mxu0 0.0
          %4778 = vmatpush1.msra.mxu0 0.0
          %4779 = vmatprep.subr.mxu0 0.0
          %4780 = vmatpush1.msra.mxu0 0.0
          %4781 = vmatprep.subr.mxu0 0.0
          %4782 = vmatpush1.msra.mxu0 0.0
          %4783 = vmatprep.subr.mxu0 0.0
          %4784 = vmatpush1.msra.mxu0 0.0
          %4785 = vmatprep.subr.mxu0 0.0
          %4786 = vmatpush1.msra.mxu0 0.0
          %4787 = vmatprep.subr.mxu0 0.0
          %4788 = vmatpush1.msra.mxu0 0.0
          %4789 = vmatprep.subr.mxu0 0.0
          %4790 = vmatpush1.msra.mxu0 0.0
          %4791 = vmatprep.subr.mxu0 0.0
          %4792 = vmatpush1.msra.mxu0 0.0
          %4793 = vmatprep.subr.mxu0 0.0
          %4794 = vmatpush1.msra.mxu0 0.0
          %4795 = vmatprep.subr.mxu0 0.0
          %4796 = vmatpush1.msra.mxu0 0.0
          %4797 = vmatprep.subr.mxu0 0.0
          %4798 = vmatpush1.msra.mxu0 0.0
          %4799 = vmatprep.subr.mxu0 0.0
          %4800 = vmatpush1.msra.mxu0 0.0
          %4801 = vmatprep.subr.mxu0 0.0
          %4802 = vmatpush1.msra.mxu0 0.0
          %4803 = vmatprep.subr.mxu0 0.0
          %4804 = vmatpush1.msra.mxu0 0.0
          %4805 = vmatprep.subr.mxu0 0.0
          %4806 = vmatpush1.msra.mxu0 0.0
          %4807 = vmatprep.subr.mxu0 0.0
          %4808 = vmatpush1.msra.mxu0 0.0
          %4809 = vmatprep.subr.mxu0 0.0
          %4810 = vmatpush1.msra.mxu0 0.0
          %4811 = vmatprep.mubr.f32.mxu0 0.0
          %v4812 = vand.u32 %v4591, 4294901760
          %v4813 = vsub.f32 %v4591, %v4812
          %4814 = vmatmul.mubr.f32.gmra.mrb[0].mxu0 %v4813
          %v4815 = vpop.f32.mrb[0].mxu0
          %v4816 = vadd.f32 %v4742, %v4815
          %v4817 = vpop.f32.mrb[0].mxu0
          %4818 = vdwg.mxu0
          %4819 = vmatprep.subr.mxu0 0.0
          %v4820 = vand.u32 %v4589, 4294901760
          %4821 = vmatpush1.msra.mxu0 %v4820
          %4822 = vmatprep.subr.mxu0 0.0
          %4823 = vmatpush1.msra.mxu0 0.0
          %4824 = vmatprep.subr.mxu0 0.0
          %4825 = vmatpush1.msra.mxu0 0.0
          %4826 = vmatprep.subr.mxu0 0.0
          %4827 = vmatpush1.msra.mxu0 0.0
          %4828 = vmatprep.subr.mxu0 0.0
          %4829 = vmatpush1.msra.mxu0 0.0
          %4830 = vmatprep.subr.mxu0 0.0
          %4831 = vmatpush1.msra.mxu0 0.0
          %4832 = vmatprep.subr.mxu0 0.0
          %4833 = vmatpush1.msra.mxu0 0.0
          %4834 = vmatprep.subr.mxu0 0.0
          %4835 = vmatpush1.msra.mxu0 0.0
          %4836 = vmatprep.subr.mxu0 0.0
          %4837 = vmatpush1.msra.mxu0 0.0
          %4838 = vmatprep.subr.mxu0 0.0
          %4839 = vmatpush1.msra.mxu0 0.0
          %4840 = vmatprep.subr.mxu0 0.0
          %4841 = vmatpush1.msra.mxu0 0.0
          %4842 = vmatprep.subr.mxu0 0.0
          %4843 = vmatpush1.msra.mxu0 0.0
          %4844 = vmatprep.subr.mxu0 0.0
          %4845 = vmatpush1.msra.mxu0 0.0
          %4846 = vmatprep.subr.mxu0 0.0
          %4847 = vmatpush1.msra.mxu0 0.0
          %4848 = vmatprep.subr.mxu0 0.0
          %4849 = vmatpush1.msra.mxu0 0.0
          %4850 = vmatprep.subr.mxu0 0.0
          %4851 = vmatpush1.msra.mxu0 0.0
          %4852 = vmatprep.subr.mxu0 0.0
          %4853 = vmatpush1.msra.mxu0 0.0
          %4854 = vmatprep.subr.mxu0 0.0
          %4855 = vmatpush1.msra.mxu0 0.0
          %4856 = vmatprep.subr.mxu0 0.0
          %4857 = vmatpush1.msra.mxu0 0.0
          %4858 = vmatprep.subr.mxu0 0.0
          %4859 = vmatpush1.msra.mxu0 0.0
          %4860 = vmatprep.subr.mxu0 0.0
          %4861 = vmatpush1.msra.mxu0 0.0
          %4862 = vmatprep.subr.mxu0 0.0
          %4863 = vmatpush1.msra.mxu0 0.0
          %4864 = vmatprep.subr.mxu0 0.0
          %4865 = vmatpush1.msra.mxu0 0.0
          %4866 = vmatprep.subr.mxu0 0.0
          %4867 = vmatpush1.msra.mxu0 0.0
          %4868 = vmatprep.subr.mxu0 0.0
          %4869 = vmatpush1.msra.mxu0 0.0
          %4870 = vmatprep.subr.mxu0 0.0
          %4871 = vmatpush1.msra.mxu0 0.0
          %4872 = vmatprep.subr.mxu0 0.0
          %4873 = vmatpush1.msra.mxu0 0.0
          %4874 = vmatprep.subr.mxu0 0.0
          %4875 = vmatpush1.msra.mxu0 0.0
          %4876 = vmatprep.subr.mxu0 0.0
          %4877 = vmatpush1.msra.mxu0 0.0
          %4878 = vmatprep.subr.mxu0 0.0
          %4879 = vmatpush1.msra.mxu0 0.0
          %4880 = vmatprep.subr.mxu0 0.0
          %4881 = vmatpush1.msra.mxu0 0.0
          %4882 = vmatprep.subr.mxu0 0.0
          %4883 = vmatpush1.msra.mxu0 0.0
          %4884 = vmatprep.mubr.f32.mxu0 0.0
          %v4885 = vand.u32 %v4591, 4294901760
          %v4886 = vsub.f32 %v4591, %v4885
          %v4887 = vand.u32 %v4886, 4294901760
          %4888 = vmatmul.mubr.f32.gmra.mrb[0].mxu0 %v4887
          %v4889 = vpop.f32.mrb[0].mxu0
          %v4890 = vadd.f32 %v4816, %v4889
          %v4891 = vpop.f32.mrb[0].mxu0
          %4892 = vdwg.mxu0
          %4893 = vmatprep.subr.mxu0 0.0
          %v4894 = vand.u32 %v4589, 4294901760
          %v4895 = vsub.f32 %v4589, %v4894
          %v4896 = vand.u32 %v4895, 4294901760
          %4897 = vmatpush1.msra.mxu0 %v4896
          %4898 = vmatprep.subr.mxu0 0.0
          %4899 = vmatpush1.msra.mxu0 0.0
          %4900 = vmatprep.subr.mxu0 0.0
          %4901 = vmatpush1.msra.mxu0 0.0
          %4902 = vmatprep.subr.mxu0 0.0
          %4903 = vmatpush1.msra.mxu0 0.0
          %4904 = vmatprep.subr.mxu0 0.0
          %4905 = vmatpush1.msra.mxu0 0.0
          %4906 = vmatprep.subr.mxu0 0.0
          %4907 = vmatpush1.msra.mxu0 0.0
          %4908 = vmatprep.subr.mxu0 0.0
          %4909 = vmatpush1.msra.mxu0 0.0
          %4910 = vmatprep.subr.mxu0 0.0
          %4911 = vmatpush1.msra.mxu0 0.0
          %4912 = vmatprep.subr.mxu0 0.0
          %4913 = vmatpush1.msra.mxu0 0.0
          %4914 = vmatprep.subr.mxu0 0.0
          %4915 = vmatpush1.msra.mxu0 0.0
          %4916 = vmatprep.subr.mxu0 0.0
          %4917 = vmatpush1.msra.mxu0 0.0
          %4918 = vmatprep.subr.mxu0 0.0
          %4919 = vmatpush1.msra.mxu0 0.0
          %4920 = vmatprep.subr.mxu0 0.0
          %4921 = vmatpush1.msra.mxu0 0.0
          %4922 = vmatprep.subr.mxu0 0.0
          %4923 = vmatpush1.msra.mxu0 0.0
          %4924 = vmatprep.subr.mxu0 0.0
          %4925 = vmatpush1.msra.mxu0 0.0
          %4926 = vmatprep.subr.mxu0 0.0
          %4927 = vmatpush1.msra.mxu0 0.0
          %4928 = vmatprep.subr.mxu0 0.0
          %4929 = vmatpush1.msra.mxu0 0.0
          %4930 = vmatprep.subr.mxu0 0.0
          %4931 = vmatpush1.msra.mxu0 0.0
          %4932 = vmatprep.subr.mxu0 0.0
          %4933 = vmatpush1.msra.mxu0 0.0
          %4934 = vmatprep.subr.mxu0 0.0
          %4935 = vmatpush1.msra.mxu0 0.0
          %4936 = vmatprep.subr.mxu0 0.0
          %4937 = vmatpush1.msra.mxu0 0.0
          %4938 = vmatprep.subr.mxu0 0.0
          %4939 = vmatpush1.msra.mxu0 0.0
          %4940 = vmatprep.subr.mxu0 0.0
          %4941 = vmatpush1.msra.mxu0 0.0
          %4942 = vmatprep.subr.mxu0 0.0
          %4943 = vmatpush1.msra.mxu0 0.0
          %4944 = vmatprep.subr.mxu0 0.0
          %4945 = vmatpush1.msra.mxu0 0.0
          %4946 = vmatprep.subr.mxu0 0.0
          %4947 = vmatpush1.msra.mxu0 0.0
          %4948 = vmatprep.subr.mxu0 0.0
          %4949 = vmatpush1.msra.mxu0 0.0
          %4950 = vmatprep.subr.mxu0 0.0
          %4951 = vmatpush1.msra.mxu0 0.0
          %4952 = vmatprep.subr.mxu0 0.0
          %4953 = vmatpush1.msra.mxu0 0.0
          %4954 = vmatprep.subr.mxu0 0.0
          %4955 = vmatpush1.msra.mxu0 0.0
          %4956 = vmatprep.subr.mxu0 0.0
          %4957 = vmatpush1.msra.mxu0 0.0
          %4958 = vmatprep.subr.mxu0 0.0
          %4959 = vmatpush1.msra.mxu0 0.0
          %4960 = vmatprep.mubr.f32.mxu0 0.0
          %v4961 = vand.u32 %v4591, 4294901760
          %4962 = vmatmul.mubr.f32.gmra.mrb[0].mxu0 %v4961
          %v4963 = vpop.f32.mrb[0].mxu0
          %v4964 = vadd.f32 %v4890, %v4963
          %v4965 = vpop.f32.mrb[0].mxu0
          %4966 = vdwg.mxu0
          %4967 = vmatprep.subr.mxu0 0.0
          %v4968 = vand.u32 %v4589, 4294901760
          %4969 = vmatpush1.msra.mxu0 %v4968
          %4970 = vmatprep.subr.mxu0 0.0
          %4971 = vmatpush1.msra.mxu0 0.0
          %4972 = vmatprep.subr.mxu0 0.0
          %4973 = vmatpush1.msra.mxu0 0.0
          %4974 = vmatprep.subr.mxu0 0.0
          %4975 = vmatpush1.msra.mxu0 0.0
          %4976 = vmatprep.subr.mxu0 0.0
          %4977 = vmatpush1.msra.mxu0 0.0
          %4978 = vmatprep.subr.mxu0 0.0
          %4979 = vmatpush1.msra.mxu0 0.0
          %4980 = vmatprep.subr.mxu0 0.0
          %4981 = vmatpush1.msra.mxu0 0.0
          %4982 = vmatprep.subr.mxu0 0.0
          %4983 = vmatpush1.msra.mxu0 0.0
          %4984 = vmatprep.subr.mxu0 0.0
          %4985 = vmatpush1.msra.mxu0 0.0
          %4986 = vmatprep.subr.mxu0 0.0
          %4987 = vmatpush1.msra.mxu0 0.0
          %4988 = vmatprep.subr.mxu0 0.0
          %4989 = vmatpush1.msra.mxu0 0.0
          %4990 = vmatprep.subr.mxu0 0.0
          %4991 = vmatpush1.msra.mxu0 0.0
          %4992 = vmatprep.subr.mxu0 0.0
          %4993 = vmatpush1.msra.mxu0 0.0
          %4994 = vmatprep.subr.mxu0 0.0
          %4995 = vmatpush1.msra.mxu0 0.0
          %4996 = vmatprep.subr.mxu0 0.0
          %4997 = vmatpush1.msra.mxu0 0.0
          %4998 = vmatprep.subr.mxu0 0.0
          %4999 = vmatpush1.msra.mxu0 0.0
          %5000 = vmatprep.subr.mxu0 0.0
          %5001 = vmatpush1.msra.mxu0 0.0
          %5002 = vmatprep.subr.mxu0 0.0
          %5003 = vmatpush1.msra.mxu0 0.0
          %5004 = vmatprep.subr.mxu0 0.0
          %5005 = vmatpush1.msra.mxu0 0.0
          %5006 = vmatprep.subr.mxu0 0.0
          %5007 = vmatpush1.msra.mxu0 0.0
          %5008 = vmatprep.subr.mxu0 0.0
          %5009 = vmatpush1.msra.mxu0 0.0
          %5010 = vmatprep.subr.mxu0 0.0
          %5011 = vmatpush1.msra.mxu0 0.0
          %5012 = vmatprep.subr.mxu0 0.0
          %5013 = vmatpush1.msra.mxu0 0.0
          %5014 = vmatprep.subr.mxu0 0.0
          %5015 = vmatpush1.msra.mxu0 0.0
          %5016 = vmatprep.subr.mxu0 0.0
          %5017 = vmatpush1.msra.mxu0 0.0
          %5018 = vmatprep.subr.mxu0 0.0
          %5019 = vmatpush1.msra.mxu0 0.0
          %5020 = vmatprep.subr.mxu0 0.0
          %5021 = vmatpush1.msra.mxu0 0.0
          %5022 = vmatprep.subr.mxu0 0.0
          %5023 = vmatpush1.msra.mxu0 0.0
          %5024 = vmatprep.subr.mxu0 0.0
          %5025 = vmatpush1.msra.mxu0 0.0
          %5026 = vmatprep.subr.mxu0 0.0
          %5027 = vmatpush1.msra.mxu0 0.0
          %5028 = vmatprep.subr.mxu0 0.0
          %5029 = vmatpush1.msra.mxu0 0.0
          %5030 = vmatprep.subr.mxu0 0.0
          %5031 = vmatpush1.msra.mxu0 0.0
          %5032 = vmatprep.mubr.f32.mxu0 0.0
          %v5033 = vand.u32 %v4591, 4294901760
          %5034 = vmatmul.mubr.f32.gmra.mrb[0].mxu0 %v5033
          %v5035 = vpop.f32.mrb[0].mxu0
          %v5036 = vadd.f32 %v4964, %v5035
          %v5037 = vpop.f32.mrb[0].mxu0
          %5038 = vdwg.mxu0
          %v5039 = vadd.f32 %v4580, %v5036
          %s5040 = scalar_lea.vmem [#allocation4], 16
          %v5041 = vld [vmem:[%s5040] sm:$0xff]
          %5043 = vset.pattern.permute.xlu0 0
          %5044 = vperm.xlu0 %5043, %v4114
          %v5045 = vpop.permute.xlu0 %5044
          %v5047 = vmul.f32 %v5041, %v5045
          %v5048 = vld [vmem:[%s3 + $0x10] sm:$0xff]
          %v5050 = vsel %vm371, %v5047, 0
          %5052 = vmatprep.subr.mxu0 0.0
          %v5053 = vand.u32 %v5048, 4294901760
          %5054 = vmatpush1.msra.mxu0 %v5053
          %5055 = vmatprep.subr.mxu0 0.0
          %5056 = vmatpush1.msra.mxu0 0.0
          %5057 = vmatprep.subr.mxu0 0.0
          %5058 = vmatpush1.msra.mxu0 0.0
          %5059 = vmatprep.subr.mxu0 0.0
          %5060 = vmatpush1.msra.mxu0 0.0
          %5061 = vmatprep.subr.mxu0 0.0
          %5062 = vmatpush1.msra.mxu0 0.0
          %5063 = vmatprep.subr.mxu0 0.0
          %5064 = vmatpush1.msra.mxu0 0.0
          %5065 = vmatprep.subr.mxu0 0.0
          %5066 = vmatpush1.msra.mxu0 0.0
          %5067 = vmatprep.subr.mxu0 0.0
          %5068 = vmatpush1.msra.mxu0 0.0
          %5069 = vmatprep.subr.mxu0 0.0
          %5070 = vmatpush1.msra.mxu0 0.0
          %5071 = vmatprep.subr.mxu0 0.0
          %5072 = vmatpush1.msra.mxu0 0.0
          %5073 = vmatprep.subr.mxu0 0.0
          %5074 = vmatpush1.msra.mxu0 0.0
          %5075 = vmatprep.subr.mxu0 0.0
          %5076 = vmatpush1.msra.mxu0 0.0
          %5077 = vmatprep.subr.mxu0 0.0
          %5078 = vmatpush1.msra.mxu0 0.0
          %5079 = vmatprep.subr.mxu0 0.0
          %5080 = vmatpush1.msra.mxu0 0.0
          %5081 = vmatprep.subr.mxu0 0.0
          %5082 = vmatpush1.msra.mxu0 0.0
          %5083 = vmatprep.subr.mxu0 0.0
          %5084 = vmatpush1.msra.mxu0 0.0
          %5085 = vmatprep.subr.mxu0 0.0
          %5086 = vmatpush1.msra.mxu0 0.0
          %5087 = vmatprep.subr.mxu0 0.0
          %5088 = vmatpush1.msra.mxu0 0.0
          %5089 = vmatprep.subr.mxu0 0.0
          %5090 = vmatpush1.msra.mxu0 0.0
          %5091 = vmatprep.subr.mxu0 0.0
          %5092 = vmatpush1.msra.mxu0 0.0
          %5093 = vmatprep.subr.mxu0 0.0
          %5094 = vmatpush1.msra.mxu0 0.0
          %5095 = vmatprep.subr.mxu0 0.0
          %5096 = vmatpush1.msra.mxu0 0.0
          %5097 = vmatprep.subr.mxu0 0.0
          %5098 = vmatpush1.msra.mxu0 0.0
          %5099 = vmatprep.subr.mxu0 0.0
          %5100 = vmatpush1.msra.mxu0 0.0
          %5101 = vmatprep.subr.mxu0 0.0
          %5102 = vmatpush1.msra.mxu0 0.0
          %5103 = vmatprep.subr.mxu0 0.0
          %5104 = vmatpush1.msra.mxu0 0.0
          %5105 = vmatprep.subr.mxu0 0.0
          %5106 = vmatpush1.msra.mxu0 0.0
          %5107 = vmatprep.subr.mxu0 0.0
          %5108 = vmatpush1.msra.mxu0 0.0
          %5109 = vmatprep.subr.mxu0 0.0
          %5110 = vmatpush1.msra.mxu0 0.0
          %5111 = vmatprep.subr.mxu0 0.0
          %5112 = vmatpush1.msra.mxu0 0.0
          %5113 = vmatprep.subr.mxu0 0.0
          %5114 = vmatpush1.msra.mxu0 0.0
          %5115 = vmatprep.subr.mxu0 0.0
          %5116 = vmatpush1.msra.mxu0 0.0
          %5117 = vmatprep.mubr.f32.mxu0 0.0
          %v5118 = vand.u32 %v5050, 4294901760
          %v5119 = vsub.f32 %v5050, %v5118
          %v5120 = vand.u32 %v5119, 4294901760
          %v5121 = vsub.f32 %v5119, %v5120
          %v5122 = vand.u32 %v5121, 4294901760
          %5123 = vmatmul.mubr.f32.gmra.mrb[0].mxu0 %v5122
          %v5124 = vpop.f32.mrb[0].mxu0
          %v5125 = vadd.f32 0.0, %v5124
          %v5126 = vpop.f32.mrb[0].mxu0
          %5127 = vdwg.mxu0
          %5128 = vmatprep.subr.mxu0 0.0
          %v5129 = vand.u32 %v5048, 4294901760
          %v5130 = vsub.f32 %v5048, %v5129
          %v5131 = vand.u32 %v5130, 4294901760
          %v5132 = vsub.f32 %v5130, %v5131
          %v5133 = vand.u32 %v5132, 4294901760
          %5134 = vmatpush1.msra.mxu0 %v5133
          %5135 = vmatprep.subr.mxu0 0.0
          %5136 = vmatpush1.msra.mxu0 0.0
          %5137 = vmatprep.subr.mxu0 0.0
          %5138 = vmatpush1.msra.mxu0 0.0
          %5139 = vmatprep.subr.mxu0 0.0
          %5140 = vmatpush1.msra.mxu0 0.0
          %5141 = vmatprep.subr.mxu0 0.0
          %5142 = vmatpush1.msra.mxu0 0.0
          %5143 = vmatprep.subr.mxu0 0.0
          %5144 = vmatpush1.msra.mxu0 0.0
          %5145 = vmatprep.subr.mxu0 0.0
          %5146 = vmatpush1.msra.mxu0 0.0
          %5147 = vmatprep.subr.mxu0 0.0
          %5148 = vmatpush1.msra.mxu0 0.0
          %5149 = vmatprep.subr.mxu0 0.0
          %5150 = vmatpush1.msra.mxu0 0.0
          %5151 = vmatprep.subr.mxu0 0.0
          %5152 = vmatpush1.msra.mxu0 0.0
          %5153 = vmatprep.subr.mxu0 0.0
          %5154 = vmatpush1.msra.mxu0 0.0
          %5155 = vmatprep.subr.mxu0 0.0
          %5156 = vmatpush1.msra.mxu0 0.0
          %5157 = vmatprep.subr.mxu0 0.0
          %5158 = vmatpush1.msra.mxu0 0.0
          %5159 = vmatprep.subr.mxu0 0.0
          %5160 = vmatpush1.msra.mxu0 0.0
          %5161 = vmatprep.subr.mxu0 0.0
          %5162 = vmatpush1.msra.mxu0 0.0
          %5163 = vmatprep.subr.mxu0 0.0
          %5164 = vmatpush1.msra.mxu0 0.0
          %5165 = vmatprep.subr.mxu0 0.0
          %5166 = vmatpush1.msra.mxu0 0.0
          %5167 = vmatprep.subr.mxu0 0.0
          %5168 = vmatpush1.msra.mxu0 0.0
          %5169 = vmatprep.subr.mxu0 0.0
          %5170 = vmatpush1.msra.mxu0 0.0
          %5171 = vmatprep.subr.mxu0 0.0
          %5172 = vmatpush1.msra.mxu0 0.0
          %5173 = vmatprep.subr.mxu0 0.0
          %5174 = vmatpush1.msra.mxu0 0.0
          %5175 = vmatprep.subr.mxu0 0.0
          %5176 = vmatpush1.msra.mxu0 0.0
          %5177 = vmatprep.subr.mxu0 0.0
          %5178 = vmatpush1.msra.mxu0 0.0
          %5179 = vmatprep.subr.mxu0 0.0
          %5180 = vmatpush1.msra.mxu0 0.0
          %5181 = vmatprep.subr.mxu0 0.0
          %5182 = vmatpush1.msra.mxu0 0.0
          %5183 = vmatprep.subr.mxu0 0.0
          %5184 = vmatpush1.msra.mxu0 0.0
          %5185 = vmatprep.subr.mxu0 0.0
          %5186 = vmatpush1.msra.mxu0 0.0
          %5187 = vmatprep.subr.mxu0 0.0
          %5188 = vmatpush1.msra.mxu0 0.0
          %5189 = vmatprep.subr.mxu0 0.0
          %5190 = vmatpush1.msra.mxu0 0.0
          %5191 = vmatprep.subr.mxu0 0.0
          %5192 = vmatpush1.msra.mxu0 0.0
          %5193 = vmatprep.subr.mxu0 0.0
          %5194 = vmatpush1.msra.mxu0 0.0
          %5195 = vmatprep.subr.mxu0 0.0
          %5196 = vmatpush1.msra.mxu0 0.0
          %5197 = vmatprep.mubr.f32.mxu0 0.0
          %v5198 = vand.u32 %v5050, 4294901760
          %5199 = vmatmul.mubr.f32.gmra.mrb[0].mxu0 %v5198
          %v5200 = vpop.f32.mrb[0].mxu0
          %v5201 = vadd.f32 %v5125, %v5200
          %v5202 = vpop.f32.mrb[0].mxu0
          %5203 = vdwg.mxu0
          %5204 = vmatprep.subr.mxu0 0.0
          %v5205 = vand.u32 %v5048, 4294901760
          %v5206 = vsub.f32 %v5048, %v5205
          %5207 = vmatpush1.msra.mxu0 %v5206
          %5208 = vmatprep.subr.mxu0 0.0
          %5209 = vmatpush1.msra.mxu0 0.0
          %5210 = vmatprep.subr.mxu0 0.0
          %5211 = vmatpush1.msra.mxu0 0.0
          %5212 = vmatprep.subr.mxu0 0.0
          %5213 = vmatpush1.msra.mxu0 0.0
          %5214 = vmatprep.subr.mxu0 0.0
          %5215 = vmatpush1.msra.mxu0 0.0
          %5216 = vmatprep.subr.mxu0 0.0
          %5217 = vmatpush1.msra.mxu0 0.0
          %5218 = vmatprep.subr.mxu0 0.0
          %5219 = vmatpush1.msra.mxu0 0.0
          %5220 = vmatprep.subr.mxu0 0.0
          %5221 = vmatpush1.msra.mxu0 0.0
          %5222 = vmatprep.subr.mxu0 0.0
          %5223 = vmatpush1.msra.mxu0 0.0
          %5224 = vmatprep.subr.mxu0 0.0
          %5225 = vmatpush1.msra.mxu0 0.0
          %5226 = vmatprep.subr.mxu0 0.0
          %5227 = vmatpush1.msra.mxu0 0.0
          %5228 = vmatprep.subr.mxu0 0.0
          %5229 = vmatpush1.msra.mxu0 0.0
          %5230 = vmatprep.subr.mxu0 0.0
          %5231 = vmatpush1.msra.mxu0 0.0
          %5232 = vmatprep.subr.mxu0 0.0
          %5233 = vmatpush1.msra.mxu0 0.0
          %5234 = vmatprep.subr.mxu0 0.0
          %5235 = vmatpush1.msra.mxu0 0.0
          %5236 = vmatprep.subr.mxu0 0.0
          %5237 = vmatpush1.msra.mxu0 0.0
          %5238 = vmatprep.subr.mxu0 0.0
          %5239 = vmatpush1.msra.mxu0 0.0
          %5240 = vmatprep.subr.mxu0 0.0
          %5241 = vmatpush1.msra.mxu0 0.0
          %5242 = vmatprep.subr.mxu0 0.0
          %5243 = vmatpush1.msra.mxu0 0.0
          %5244 = vmatprep.subr.mxu0 0.0
          %5245 = vmatpush1.msra.mxu0 0.0
          %5246 = vmatprep.subr.mxu0 0.0
          %5247 = vmatpush1.msra.mxu0 0.0
          %5248 = vmatprep.subr.mxu0 0.0
          %5249 = vmatpush1.msra.mxu0 0.0
          %5250 = vmatprep.subr.mxu0 0.0
          %5251 = vmatpush1.msra.mxu0 0.0
          %5252 = vmatprep.subr.mxu0 0.0
          %5253 = vmatpush1.msra.mxu0 0.0
          %5254 = vmatprep.subr.mxu0 0.0
          %5255 = vmatpush1.msra.mxu0 0.0
          %5256 = vmatprep.subr.mxu0 0.0
          %5257 = vmatpush1.msra.mxu0 0.0
          %5258 = vmatprep.subr.mxu0 0.0
          %5259 = vmatpush1.msra.mxu0 0.0
          %5260 = vmatprep.subr.mxu0 0.0
          %5261 = vmatpush1.msra.mxu0 0.0
          %5262 = vmatprep.subr.mxu0 0.0
          %5263 = vmatpush1.msra.mxu0 0.0
          %5264 = vmatprep.subr.mxu0 0.0
          %5265 = vmatpush1.msra.mxu0 0.0
          %5266 = vmatprep.subr.mxu0 0.0
          %5267 = vmatpush1.msra.mxu0 0.0
          %5268 = vmatprep.subr.mxu0 0.0
          %5269 = vmatpush1.msra.mxu0 0.0
          %5270 = vmatprep.mubr.f32.mxu0 0.0
          %v5271 = vand.u32 %v5050, 4294901760
          %v5272 = vsub.f32 %v5050, %v5271
          %5273 = vmatmul.mubr.f32.gmra.mrb[0].mxu0 %v5272
          %v5274 = vpop.f32.mrb[0].mxu0
          %v5275 = vadd.f32 %v5201, %v5274
          %v5276 = vpop.f32.mrb[0].mxu0
          %5277 = vdwg.mxu0
          %5278 = vmatprep.subr.mxu0 0.0
          %v5279 = vand.u32 %v5048, 4294901760
          %5280 = vmatpush1.msra.mxu0 %v5279
          %5281 = vmatprep.subr.mxu0 0.0
          %5282 = vmatpush1.msra.mxu0 0.0
          %5283 = vmatprep.subr.mxu0 0.0
          %5284 = vmatpush1.msra.mxu0 0.0
          %5285 = vmatprep.subr.mxu0 0.0
          %5286 = vmatpush1.msra.mxu0 0.0
          %5287 = vmatprep.subr.mxu0 0.0
          %5288 = vmatpush1.msra.mxu0 0.0
          %5289 = vmatprep.subr.mxu0 0.0
          %5290 = vmatpush1.msra.mxu0 0.0
          %5291 = vmatprep.subr.mxu0 0.0
          %5292 = vmatpush1.msra.mxu0 0.0
          %5293 = vmatprep.subr.mxu0 0.0
          %5294 = vmatpush1.msra.mxu0 0.0
          %5295 = vmatprep.subr.mxu0 0.0
          %5296 = vmatpush1.msra.mxu0 0.0
          %5297 = vmatprep.subr.mxu0 0.0
          %5298 = vmatpush1.msra.mxu0 0.0
          %5299 = vmatprep.subr.mxu0 0.0
          %5300 = vmatpush1.msra.mxu0 0.0
          %5301 = vmatprep.subr.mxu0 0.0
          %5302 = vmatpush1.msra.mxu0 0.0
          %5303 = vmatprep.subr.mxu0 0.0
          %5304 = vmatpush1.msra.mxu0 0.0
          %5305 = vmatprep.subr.mxu0 0.0
          %5306 = vmatpush1.msra.mxu0 0.0
          %5307 = vmatprep.subr.mxu0 0.0
          %5308 = vmatpush1.msra.mxu0 0.0
          %5309 = vmatprep.subr.mxu0 0.0
          %5310 = vmatpush1.msra.mxu0 0.0
          %5311 = vmatprep.subr.mxu0 0.0
          %5312 = vmatpush1.msra.mxu0 0.0
          %5313 = vmatprep.subr.mxu0 0.0
          %5314 = vmatpush1.msra.mxu0 0.0
          %5315 = vmatprep.subr.mxu0 0.0
          %5316 = vmatpush1.msra.mxu0 0.0
          %5317 = vmatprep.subr.mxu0 0.0
          %5318 = vmatpush1.msra.mxu0 0.0
          %5319 = vmatprep.subr.mxu0 0.0
          %5320 = vmatpush1.msra.mxu0 0.0
          %5321 = vmatprep.subr.mxu0 0.0
          %5322 = vmatpush1.msra.mxu0 0.0
          %5323 = vmatprep.subr.mxu0 0.0
          %5324 = vmatpush1.msra.mxu0 0.0
          %5325 = vmatprep.subr.mxu0 0.0
          %5326 = vmatpush1.msra.mxu0 0.0
          %5327 = vmatprep.subr.mxu0 0.0
          %5328 = vmatpush1.msra.mxu0 0.0
          %5329 = vmatprep.subr.mxu0 0.0
          %5330 = vmatpush1.msra.mxu0 0.0
          %5331 = vmatprep.subr.mxu0 0.0
          %5332 = vmatpush1.msra.mxu0 0.0
          %5333 = vmatprep.subr.mxu0 0.0
          %5334 = vmatpush1.msra.mxu0 0.0
          %5335 = vmatprep.subr.mxu0 0.0
          %5336 = vmatpush1.msra.mxu0 0.0
          %5337 = vmatprep.subr.mxu0 0.0
          %5338 = vmatpush1.msra.mxu0 0.0
          %5339 = vmatprep.subr.mxu0 0.0
          %5340 = vmatpush1.msra.mxu0 0.0
          %5341 = vmatprep.subr.mxu0 0.0
          %5342 = vmatpush1.msra.mxu0 0.0
          %5343 = vmatprep.mubr.f32.mxu0 0.0
          %v5344 = vand.u32 %v5050, 4294901760
          %v5345 = vsub.f32 %v5050, %v5344
          %v5346 = vand.u32 %v5345, 4294901760
          %5347 = vmatmul.mubr.f32.gmra.mrb[0].mxu0 %v5346
          %v5348 = vpop.f32.mrb[0].mxu0
          %v5349 = vadd.f32 %v5275, %v5348
          %v5350 = vpop.f32.mrb[0].mxu0
          %5351 = vdwg.mxu0
          %5352 = vmatprep.subr.mxu0 0.0
          %v5353 = vand.u32 %v5048, 4294901760
          %v5354 = vsub.f32 %v5048, %v5353
          %v5355 = vand.u32 %v5354, 4294901760
          %5356 = vmatpush1.msra.mxu0 %v5355
          %5357 = vmatprep.subr.mxu0 0.0
          %5358 = vmatpush1.msra.mxu0 0.0
          %5359 = vmatprep.subr.mxu0 0.0
          %5360 = vmatpush1.msra.mxu0 0.0
          %5361 = vmatprep.subr.mxu0 0.0
          %5362 = vmatpush1.msra.mxu0 0.0
          %5363 = vmatprep.subr.mxu0 0.0
          %5364 = vmatpush1.msra.mxu0 0.0
          %5365 = vmatprep.subr.mxu0 0.0
          %5366 = vmatpush1.msra.mxu0 0.0
          %5367 = vmatprep.subr.mxu0 0.0
          %5368 = vmatpush1.msra.mxu0 0.0
          %5369 = vmatprep.subr.mxu0 0.0
          %5370 = vmatpush1.msra.mxu0 0.0
          %5371 = vmatprep.subr.mxu0 0.0
          %5372 = vmatpush1.msra.mxu0 0.0
          %5373 = vmatprep.subr.mxu0 0.0
          %5374 = vmatpush1.msra.mxu0 0.0
          %5375 = vmatprep.subr.mxu0 0.0
          %5376 = vmatpush1.msra.mxu0 0.0
          %5377 = vmatprep.subr.mxu0 0.0
          %5378 = vmatpush1.msra.mxu0 0.0
          %5379 = vmatprep.subr.mxu0 0.0
          %5380 = vmatpush1.msra.mxu0 0.0
          %5381 = vmatprep.subr.mxu0 0.0
          %5382 = vmatpush1.msra.mxu0 0.0
          %5383 = vmatprep.subr.mxu0 0.0
          %5384 = vmatpush1.msra.mxu0 0.0
          %5385 = vmatprep.subr.mxu0 0.0
          %5386 = vmatpush1.msra.mxu0 0.0
          %5387 = vmatprep.subr.mxu0 0.0
          %5388 = vmatpush1.msra.mxu0 0.0
          %5389 = vmatprep.subr.mxu0 0.0
          %5390 = vmatpush1.msra.mxu0 0.0
          %5391 = vmatprep.subr.mxu0 0.0
          %5392 = vmatpush1.msra.mxu0 0.0
          %5393 = vmatprep.subr.mxu0 0.0
          %5394 = vmatpush1.msra.mxu0 0.0
          %5395 = vmatprep.subr.mxu0 0.0
          %5396 = vmatpush1.msra.mxu0 0.0
          %5397 = vmatprep.subr.mxu0 0.0
          %5398 = vmatpush1.msra.mxu0 0.0
          %5399 = vmatprep.subr.mxu0 0.0
          %5400 = vmatpush1.msra.mxu0 0.0
          %5401 = vmatprep.subr.mxu0 0.0
          %5402 = vmatpush1.msra.mxu0 0.0
          %5403 = vmatprep.subr.mxu0 0.0
          %5404 = vmatpush1.msra.mxu0 0.0
          %5405 = vmatprep.subr.mxu0 0.0
          %5406 = vmatpush1.msra.mxu0 0.0
          %5407 = vmatprep.subr.mxu0 0.0
          %5408 = vmatpush1.msra.mxu0 0.0
          %5409 = vmatprep.subr.mxu0 0.0
          %5410 = vmatpush1.msra.mxu0 0.0
          %5411 = vmatprep.subr.mxu0 0.0
          %5412 = vmatpush1.msra.mxu0 0.0
          %5413 = vmatprep.subr.mxu0 0.0
          %5414 = vmatpush1.msra.mxu0 0.0
          %5415 = vmatprep.subr.mxu0 0.0
          %5416 = vmatpush1.msra.mxu0 0.0
          %5417 = vmatprep.subr.mxu0 0.0
          %5418 = vmatpush1.msra.mxu0 0.0
          %5419 = vmatprep.mubr.f32.mxu0 0.0
          %v5420 = vand.u32 %v5050, 4294901760
          %5421 = vmatmul.mubr.f32.gmra.mrb[0].mxu0 %v5420
          %v5422 = vpop.f32.mrb[0].mxu0
          %v5423 = vadd.f32 %v5349, %v5422
          %v5424 = vpop.f32.mrb[0].mxu0
          %5425 = vdwg.mxu0
          %5426 = vmatprep.subr.mxu0 0.0
          %v5427 = vand.u32 %v5048, 4294901760
          %5428 = vmatpush1.msra.mxu0 %v5427
          %5429 = vmatprep.subr.mxu0 0.0
          %5430 = vmatpush1.msra.mxu0 0.0
          %5431 = vmatprep.subr.mxu0 0.0
          %5432 = vmatpush1.msra.mxu0 0.0
          %5433 = vmatprep.subr.mxu0 0.0
          %5434 = vmatpush1.msra.mxu0 0.0
          %5435 = vmatprep.subr.mxu0 0.0
          %5436 = vmatpush1.msra.mxu0 0.0
          %5437 = vmatprep.subr.mxu0 0.0
          %5438 = vmatpush1.msra.mxu0 0.0
          %5439 = vmatprep.subr.mxu0 0.0
          %5440 = vmatpush1.msra.mxu0 0.0
          %5441 = vmatprep.subr.mxu0 0.0
          %5442 = vmatpush1.msra.mxu0 0.0
          %5443 = vmatprep.subr.mxu0 0.0
          %5444 = vmatpush1.msra.mxu0 0.0
          %5445 = vmatprep.subr.mxu0 0.0
          %5446 = vmatpush1.msra.mxu0 0.0
          %5447 = vmatprep.subr.mxu0 0.0
          %5448 = vmatpush1.msra.mxu0 0.0
          %5449 = vmatprep.subr.mxu0 0.0
          %5450 = vmatpush1.msra.mxu0 0.0
          %5451 = vmatprep.subr.mxu0 0.0
          %5452 = vmatpush1.msra.mxu0 0.0
          %5453 = vmatprep.subr.mxu0 0.0
          %5454 = vmatpush1.msra.mxu0 0.0
          %5455 = vmatprep.subr.mxu0 0.0
          %5456 = vmatpush1.msra.mxu0 0.0
          %5457 = vmatprep.subr.mxu0 0.0
          %5458 = vmatpush1.msra.mxu0 0.0
          %5459 = vmatprep.subr.mxu0 0.0
          %5460 = vmatpush1.msra.mxu0 0.0
          %5461 = vmatprep.subr.mxu0 0.0
          %5462 = vmatpush1.msra.mxu0 0.0
          %5463 = vmatprep.subr.mxu0 0.0
          %5464 = vmatpush1.msra.mxu0 0.0
          %5465 = vmatprep.subr.mxu0 0.0
          %5466 = vmatpush1.msra.mxu0 0.0
          %5467 = vmatprep.subr.mxu0 0.0
          %5468 = vmatpush1.msra.mxu0 0.0
          %5469 = vmatprep.subr.mxu0 0.0
          %5470 = vmatpush1.msra.mxu0 0.0
          %5471 = vmatprep.subr.mxu0 0.0
          %5472 = vmatpush1.msra.mxu0 0.0
          %5473 = vmatprep.subr.mxu0 0.0
          %5474 = vmatpush1.msra.mxu0 0.0
          %5475 = vmatprep.subr.mxu0 0.0
          %5476 = vmatpush1.msra.mxu0 0.0
          %5477 = vmatprep.subr.mxu0 0.0
          %5478 = vmatpush1.msra.mxu0 0.0
          %5479 = vmatprep.subr.mxu0 0.0
          %5480 = vmatpush1.msra.mxu0 0.0
          %5481 = vmatprep.subr.mxu0 0.0
          %5482 = vmatpush1.msra.mxu0 0.0
          %5483 = vmatprep.subr.mxu0 0.0
          %5484 = vmatpush1.msra.mxu0 0.0
          %5485 = vmatprep.subr.mxu0 0.0
          %5486 = vmatpush1.msra.mxu0 0.0
          %5487 = vmatprep.subr.mxu0 0.0
          %5488 = vmatpush1.msra.mxu0 0.0
          %5489 = vmatprep.subr.mxu0 0.0
          %5490 = vmatpush1.msra.mxu0 0.0
          %5491 = vmatprep.mubr.f32.mxu0 0.0
          %v5492 = vand.u32 %v5050, 4294901760
          %5493 = vmatmul.mubr.f32.gmra.mrb[0].mxu0 %v5492
          %v5494 = vpop.f32.mrb[0].mxu0
          %v5495 = vadd.f32 %v5423, %v5494
          %v5496 = vpop.f32.mrb[0].mxu0
          %5497 = vdwg.mxu0
          %v5498 = vadd.f32 %v5039, %v5495
          %s5499 = scalar_lea.vmem [#allocation4], 24
          %v5500 = vld [vmem:[%s5499] sm:$0xff]
          %5502 = vset.pattern.permute.xlu0 0
          %5503 = vperm.xlu0 %5502, %v4115
          %v5504 = vpop.permute.xlu0 %5503
          %v5506 = vmul.f32 %v5500, %v5504
          %v5507 = vld [vmem:[%s3 + $0x18] sm:$0xff]
          %v5509 = vsel %vm371, %v5506, 0
          %5511 = vmatprep.subr.mxu0 0.0
          %v5512 = vand.u32 %v5507, 4294901760
          %5513 = vmatpush1.msra.mxu0 %v5512
          %5514 = vmatprep.subr.mxu0 0.0
          %5515 = vmatpush1.msra.mxu0 0.0
          %5516 = vmatprep.subr.mxu0 0.0
          %5517 = vmatpush1.msra.mxu0 0.0
          %5518 = vmatprep.subr.mxu0 0.0
          %5519 = vmatpush1.msra.mxu0 0.0
          %5520 = vmatprep.subr.mxu0 0.0
          %5521 = vmatpush1.msra.mxu0 0.0
          %5522 = vmatprep.subr.mxu0 0.0
          %5523 = vmatpush1.msra.mxu0 0.0
          %5524 = vmatprep.subr.mxu0 0.0
          %5525 = vmatpush1.msra.mxu0 0.0
          %5526 = vmatprep.subr.mxu0 0.0
          %5527 = vmatpush1.msra.mxu0 0.0
          %5528 = vmatprep.subr.mxu0 0.0
          %5529 = vmatpush1.msra.mxu0 0.0
          %5530 = vmatprep.subr.mxu0 0.0
          %5531 = vmatpush1.msra.mxu0 0.0
          %5532 = vmatprep.subr.mxu0 0.0
          %5533 = vmatpush1.msra.mxu0 0.0
          %5534 = vmatprep.subr.mxu0 0.0
          %5535 = vmatpush1.msra.mxu0 0.0
          %5536 = vmatprep.subr.mxu0 0.0
          %5537 = vmatpush1.msra.mxu0 0.0
          %5538 = vmatprep.subr.mxu0 0.0
          %5539 = vmatpush1.msra.mxu0 0.0
          %5540 = vmatprep.subr.mxu0 0.0
          %5541 = vmatpush1.msra.mxu0 0.0
          %5542 = vmatprep.subr.mxu0 0.0
          %5543 = vmatpush1.msra.mxu0 0.0
          %5544 = vmatprep.subr.mxu0 0.0
          %5545 = vmatpush1.msra.mxu0 0.0
          %5546 = vmatprep.subr.mxu0 0.0
          %5547 = vmatpush1.msra.mxu0 0.0
          %5548 = vmatprep.subr.mxu0 0.0
          %5549 = vmatpush1.msra.mxu0 0.0
          %5550 = vmatprep.subr.mxu0 0.0
          %5551 = vmatpush1.msra.mxu0 0.0
          %5552 = vmatprep.subr.mxu0 0.0
          %5553 = vmatpush1.msra.mxu0 0.0
          %5554 = vmatprep.subr.mxu0 0.0
          %5555 = vmatpush1.msra.mxu0 0.0
          %5556 = vmatprep.subr.mxu0 0.0
          %5557 = vmatpush1.msra.mxu0 0.0
          %5558 = vmatprep.subr.mxu0 0.0
          %5559 = vmatpush1.msra.mxu0 0.0
          %5560 = vmatprep.subr.mxu0 0.0
          %5561 = vmatpush1.msra.mxu0 0.0
          %5562 = vmatprep.subr.mxu0 0.0
          %5563 = vmatpush1.msra.mxu0 0.0
          %5564 = vmatprep.subr.mxu0 0.0
          %5565 = vmatpush1.msra.mxu0 0.0
          %5566 = vmatprep.subr.mxu0 0.0
          %5567 = vmatpush1.msra.mxu0 0.0
          %5568 = vmatprep.subr.mxu0 0.0
          %5569 = vmatpush1.msra.mxu0 0.0
          %5570 = vmatprep.subr.mxu0 0.0
          %5571 = vmatpush1.msra.mxu0 0.0
          %5572 = vmatprep.subr.mxu0 0.0
          %5573 = vmatpush1.msra.mxu0 0.0
          %5574 = vmatprep.subr.mxu0 0.0
          %5575 = vmatpush1.msra.mxu0 0.0
          %5576 = vmatprep.mubr.f32.mxu0 0.0
          %v5577 = vand.u32 %v5509, 4294901760
          %v5578 = vsub.f32 %v5509, %v5577
          %v5579 = vand.u32 %v5578, 4294901760
          %v5580 = vsub.f32 %v5578, %v5579
          %v5581 = vand.u32 %v5580, 4294901760
          %5582 = vmatmul.mubr.f32.gmra.mrb[0].mxu0 %v5581
          %v5583 = vpop.f32.mrb[0].mxu0
          %v5584 = vadd.f32 0.0, %v5583
          %v5585 = vpop.f32.mrb[0].mxu0
          %5586 = vdwg.mxu0
          %5587 = vmatprep.subr.mxu0 0.0
          %v5588 = vand.u32 %v5507, 4294901760
          %v5589 = vsub.f32 %v5507, %v5588
          %v5590 = vand.u32 %v5589, 4294901760
          %v5591 = vsub.f32 %v5589, %v5590
          %v5592 = vand.u32 %v5591, 4294901760
          %5593 = vmatpush1.msra.mxu0 %v5592
          %5594 = vmatprep.subr.mxu0 0.0
          %5595 = vmatpush1.msra.mxu0 0.0
          %5596 = vmatprep.subr.mxu0 0.0
          %5597 = vmatpush1.msra.mxu0 0.0
          %5598 = vmatprep.subr.mxu0 0.0
          %5599 = vmatpush1.msra.mxu0 0.0
          %5600 = vmatprep.subr.mxu0 0.0
          %5601 = vmatpush1.msra.mxu0 0.0
          %5602 = vmatprep.subr.mxu0 0.0
          %5603 = vmatpush1.msra.mxu0 0.0
          %5604 = vmatprep.subr.mxu0 0.0
          %5605 = vmatpush1.msra.mxu0 0.0
          %5606 = vmatprep.subr.mxu0 0.0
          %5607 = vmatpush1.msra.mxu0 0.0
          %5608 = vmatprep.subr.mxu0 0.0
          %5609 = vmatpush1.msra.mxu0 0.0
          %5610 = vmatprep.subr.mxu0 0.0
          %5611 = vmatpush1.msra.mxu0 0.0
          %5612 = vmatprep.subr.mxu0 0.0
          %5613 = vmatpush1.msra.mxu0 0.0
          %5614 = vmatprep.subr.mxu0 0.0
          %5615 = vmatpush1.msra.mxu0 0.0
          %5616 = vmatprep.subr.mxu0 0.0
          %5617 = vmatpush1.msra.mxu0 0.0
          %5618 = vmatprep.subr.mxu0 0.0
          %5619 = vmatpush1.msra.mxu0 0.0
          %5620 = vmatprep.subr.mxu0 0.0
          %5621 = vmatpush1.msra.mxu0 0.0
          %5622 = vmatprep.subr.mxu0 0.0
          %5623 = vmatpush1.msra.mxu0 0.0
          %5624 = vmatprep.subr.mxu0 0.0
          %5625 = vmatpush1.msra.mxu0 0.0
          %5626 = vmatprep.subr.mxu0 0.0
          %5627 = vmatpush1.msra.mxu0 0.0
          %5628 = vmatprep.subr.mxu0 0.0
          %5629 = vmatpush1.msra.mxu0 0.0
          %5630 = vmatprep.subr.mxu0 0.0
          %5631 = vmatpush1.msra.mxu0 0.0
          %5632 = vmatprep.subr.mxu0 0.0
          %5633 = vmatpush1.msra.mxu0 0.0
          %5634 = vmatprep.subr.mxu0 0.0
          %5635 = vmatpush1.msra.mxu0 0.0
          %5636 = vmatprep.subr.mxu0 0.0
          %5637 = vmatpush1.msra.mxu0 0.0
          %5638 = vmatprep.subr.mxu0 0.0
          %5639 = vmatpush1.msra.mxu0 0.0
          %5640 = vmatprep.subr.mxu0 0.0
          %5641 = vmatpush1.msra.mxu0 0.0
          %5642 = vmatprep.subr.mxu0 0.0
          %5643 = vmatpush1.msra.mxu0 0.0
          %5644 = vmatprep.subr.mxu0 0.0
          %5645 = vmatpush1.msra.mxu0 0.0
          %5646 = vmatprep.subr.mxu0 0.0
          %5647 = vmatpush1.msra.mxu0 0.0
          %5648 = vmatprep.subr.mxu0 0.0
          %5649 = vmatpush1.msra.mxu0 0.0
          %5650 = vmatprep.subr.mxu0 0.0
          %5651 = vmatpush1.msra.mxu0 0.0
          %5652 = vmatprep.subr.mxu0 0.0
          %5653 = vmatpush1.msra.mxu0 0.0
          %5654 = vmatprep.subr.mxu0 0.0
          %5655 = vmatpush1.msra.mxu0 0.0
          %5656 = vmatprep.mubr.f32.mxu0 0.0
          %v5657 = vand.u32 %v5509, 4294901760
          %5658 = vmatmul.mubr.f32.gmra.mrb[0].mxu0 %v5657
          %v5659 = vpop.f32.mrb[0].mxu0
          %v5660 = vadd.f32 %v5584, %v5659
          %v5661 = vpop.f32.mrb[0].mxu0
          %5662 = vdwg.mxu0
          %5663 = vmatprep.subr.mxu0 0.0
          %v5664 = vand.u32 %v5507, 4294901760
          %v5665 = vsub.f32 %v5507, %v5664
          %5666 = vmatpush1.msra.mxu0 %v5665
          %5667 = vmatprep.subr.mxu0 0.0
          %5668 = vmatpush1.msra.mxu0 0.0
          %5669 = vmatprep.subr.mxu0 0.0
          %5670 = vmatpush1.msra.mxu0 0.0
          %5671 = vmatprep.subr.mxu0 0.0
          %5672 = vmatpush1.msra.mxu0 0.0
          %5673 = vmatprep.subr.mxu0 0.0
          %5674 = vmatpush1.msra.mxu0 0.0
          %5675 = vmatprep.subr.mxu0 0.0
          %5676 = vmatpush1.msra.mxu0 0.0
          %5677 = vmatprep.subr.mxu0 0.0
          %5678 = vmatpush1.msra.mxu0 0.0
          %5679 = vmatprep.subr.mxu0 0.0
          %5680 = vmatpush1.msra.mxu0 0.0
          %5681 = vmatprep.subr.mxu0 0.0
          %5682 = vmatpush1.msra.mxu0 0.0
          %5683 = vmatprep.subr.mxu0 0.0
          %5684 = vmatpush1.msra.mxu0 0.0
          %5685 = vmatprep.subr.mxu0 0.0
          %5686 = vmatpush1.msra.mxu0 0.0
          %5687 = vmatprep.subr.mxu0 0.0
          %5688 = vmatpush1.msra.mxu0 0.0
          %5689 = vmatprep.subr.mxu0 0.0
          %5690 = vmatpush1.msra.mxu0 0.0
          %5691 = vmatprep.subr.mxu0 0.0
          %5692 = vmatpush1.msra.mxu0 0.0
          %5693 = vmatprep.subr.mxu0 0.0
          %5694 = vmatpush1.msra.mxu0 0.0
          %5695 = vmatprep.subr.mxu0 0.0
          %5696 = vmatpush1.msra.mxu0 0.0
          %5697 = vmatprep.subr.mxu0 0.0
          %5698 = vmatpush1.msra.mxu0 0.0
          %5699 = vmatprep.subr.mxu0 0.0
          %5700 = vmatpush1.msra.mxu0 0.0
          %5701 = vmatprep.subr.mxu0 0.0
          %5702 = vmatpush1.msra.mxu0 0.0
          %5703 = vmatprep.subr.mxu0 0.0
          %5704 = vmatpush1.msra.mxu0 0.0
          %5705 = vmatprep.subr.mxu0 0.0
          %5706 = vmatpush1.msra.mxu0 0.0
          %5707 = vmatprep.subr.mxu0 0.0
          %5708 = vmatpush1.msra.mxu0 0.0
          %5709 = vmatprep.subr.mxu0 0.0
          %5710 = vmatpush1.msra.mxu0 0.0
          %5711 = vmatprep.subr.mxu0 0.0
          %5712 = vmatpush1.msra.mxu0 0.0
          %5713 = vmatprep.subr.mxu0 0.0
          %5714 = vmatpush1.msra.mxu0 0.0
          %5715 = vmatprep.subr.mxu0 0.0
          %5716 = vmatpush1.msra.mxu0 0.0
          %5717 = vmatprep.subr.mxu0 0.0
          %5718 = vmatpush1.msra.mxu0 0.0
          %5719 = vmatprep.subr.mxu0 0.0
          %5720 = vmatpush1.msra.mxu0 0.0
          %5721 = vmatprep.subr.mxu0 0.0
          %5722 = vmatpush1.msra.mxu0 0.0
          %5723 = vmatprep.subr.mxu0 0.0
          %5724 = vmatpush1.msra.mxu0 0.0
          %5725 = vmatprep.subr.mxu0 0.0
          %5726 = vmatpush1.msra.mxu0 0.0
          %5727 = vmatprep.subr.mxu0 0.0
          %5728 = vmatpush1.msra.mxu0 0.0
          %5729 = vmatprep.mubr.f32.mxu0 0.0
          %v5730 = vand.u32 %v5509, 4294901760
          %v5731 = vsub.f32 %v5509, %v5730
          %5732 = vmatmul.mubr.f32.gmra.mrb[0].mxu0 %v5731
          %v5733 = vpop.f32.mrb[0].mxu0
          %v5734 = vadd.f32 %v5660, %v5733
          %v5735 = vpop.f32.mrb[0].mxu0
          %5736 = vdwg.mxu0
          %5737 = vmatprep.subr.mxu0 0.0
          %v5738 = vand.u32 %v5507, 4294901760
          %5739 = vmatpush1.msra.mxu0 %v5738
          %5740 = vmatprep.subr.mxu0 0.0
          %5741 = vmatpush1.msra.mxu0 0.0
          %5742 = vmatprep.subr.mxu0 0.0
          %5743 = vmatpush1.msra.mxu0 0.0
          %5744 = vmatprep.subr.mxu0 0.0
          %5745 = vmatpush1.msra.mxu0 0.0
          %5746 = vmatprep.subr.mxu0 0.0
          %5747 = vmatpush1.msra.mxu0 0.0
          %5748 = vmatprep.subr.mxu0 0.0
          %5749 = vmatpush1.msra.mxu0 0.0
          %5750 = vmatprep.subr.mxu0 0.0
          %5751 = vmatpush1.msra.mxu0 0.0
          %5752 = vmatprep.subr.mxu0 0.0
          %5753 = vmatpush1.msra.mxu0 0.0
          %5754 = vmatprep.subr.mxu0 0.0
          %5755 = vmatpush1.msra.mxu0 0.0
          %5756 = vmatprep.subr.mxu0 0.0
          %5757 = vmatpush1.msra.mxu0 0.0
          %5758 = vmatprep.subr.mxu0 0.0
          %5759 = vmatpush1.msra.mxu0 0.0
          %5760 = vmatprep.subr.mxu0 0.0
          %5761 = vmatpush1.msra.mxu0 0.0
          %5762 = vmatprep.subr.mxu0 0.0
          %5763 = vmatpush1.msra.mxu0 0.0
          %5764 = vmatprep.subr.mxu0 0.0
          %5765 = vmatpush1.msra.mxu0 0.0
          %5766 = vmatprep.subr.mxu0 0.0
          %5767 = vmatpush1.msra.mxu0 0.0
          %5768 = vmatprep.subr.mxu0 0.0
          %5769 = vmatpush1.msra.mxu0 0.0
          %5770 = vmatprep.subr.mxu0 0.0
          %5771 = vmatpush1.msra.mxu0 0.0
          %5772 = vmatprep.subr.mxu0 0.0
          %5773 = vmatpush1.msra.mxu0 0.0
          %5774 = vmatprep.subr.mxu0 0.0
          %5775 = vmatpush1.msra.mxu0 0.0
          %5776 = vmatprep.subr.mxu0 0.0
          %5777 = vmatpush1.msra.mxu0 0.0
          %5778 = vmatprep.subr.mxu0 0.0
          %5779 = vmatpush1.msra.mxu0 0.0
          %5780 = vmatprep.subr.mxu0 0.0
          %5781 = vmatpush1.msra.mxu0 0.0
          %5782 = vmatprep.subr.mxu0 0.0
          %5783 = vmatpush1.msra.mxu0 0.0
          %5784 = vmatprep.subr.mxu0 0.0
          %5785 = vmatpush1.msra.mxu0 0.0
          %5786 = vmatprep.subr.mxu0 0.0
          %5787 = vmatpush1.msra.mxu0 0.0
          %5788 = vmatprep.subr.mxu0 0.0
          %5789 = vmatpush1.msra.mxu0 0.0
          %5790 = vmatprep.subr.mxu0 0.0
          %5791 = vmatpush1.msra.mxu0 0.0
          %5792 = vmatprep.subr.mxu0 0.0
          %5793 = vmatpush1.msra.mxu0 0.0
          %5794 = vmatprep.subr.mxu0 0.0
          %5795 = vmatpush1.msra.mxu0 0.0
          %5796 = vmatprep.subr.mxu0 0.0
          %5797 = vmatpush1.msra.mxu0 0.0
          %5798 = vmatprep.subr.mxu0 0.0
          %5799 = vmatpush1.msra.mxu0 0.0
          %5800 = vmatprep.subr.mxu0 0.0
          %5801 = vmatpush1.msra.mxu0 0.0
          %5802 = vmatprep.mubr.f32.mxu0 0.0
          %v5803 = vand.u32 %v5509, 4294901760
          %v5804 = vsub.f32 %v5509, %v5803
          %v5805 = vand.u32 %v5804, 4294901760
          %5806 = vmatmul.mubr.f32.gmra.mrb[0].mxu0 %v5805
          %v5807 = vpop.f32.mrb[0].mxu0
          %v5808 = vadd.f32 %v5734, %v5807
          %v5809 = vpop.f32.mrb[0].mxu0
          %5810 = vdwg.mxu0
          %5811 = vmatprep.subr.mxu0 0.0
          %v5812 = vand.u32 %v5507, 4294901760
          %v5813 = vsub.f32 %v5507, %v5812
          %v5814 = vand.u32 %v5813, 4294901760
          %5815 = vmatpush1.msra.mxu0 %v5814
          %5816 = vmatprep.subr.mxu0 0.0
          %5817 = vmatpush1.msra.mxu0 0.0
          %5818 = vmatprep.subr.mxu0 0.0
          %5819 = vmatpush1.msra.mxu0 0.0
          %5820 = vmatprep.subr.mxu0 0.0
          %5821 = vmatpush1.msra.mxu0 0.0
          %5822 = vmatprep.subr.mxu0 0.0
          %5823 = vmatpush1.msra.mxu0 0.0
          %5824 = vmatprep.subr.mxu0 0.0
          %5825 = vmatpush1.msra.mxu0 0.0
          %5826 = vmatprep.subr.mxu0 0.0
          %5827 = vmatpush1.msra.mxu0 0.0
          %5828 = vmatprep.subr.mxu0 0.0
          %5829 = vmatpush1.msra.mxu0 0.0
          %5830 = vmatprep.subr.mxu0 0.0
          %5831 = vmatpush1.msra.mxu0 0.0
          %5832 = vmatprep.subr.mxu0 0.0
          %5833 = vmatpush1.msra.mxu0 0.0
          %5834 = vmatprep.subr.mxu0 0.0
          %5835 = vmatpush1.msra.mxu0 0.0
          %5836 = vmatprep.subr.mxu0 0.0
          %5837 = vmatpush1.msra.mxu0 0.0
          %5838 = vmatprep.subr.mxu0 0.0
          %5839 = vmatpush1.msra.mxu0 0.0
          %5840 = vmatprep.subr.mxu0 0.0
          %5841 = vmatpush1.msra.mxu0 0.0
          %5842 = vmatprep.subr.mxu0 0.0
          %5843 = vmatpush1.msra.mxu0 0.0
          %5844 = vmatprep.subr.mxu0 0.0
          %5845 = vmatpush1.msra.mxu0 0.0
          %5846 = vmatprep.subr.mxu0 0.0
          %5847 = vmatpush1.msra.mxu0 0.0
          %5848 = vmatprep.subr.mxu0 0.0
          %5849 = vmatpush1.msra.mxu0 0.0
          %5850 = vmatprep.subr.mxu0 0.0
          %5851 = vmatpush1.msra.mxu0 0.0
          %5852 = vmatprep.subr.mxu0 0.0
          %5853 = vmatpush1.msra.mxu0 0.0
          %5854 = vmatprep.subr.mxu0 0.0
          %5855 = vmatpush1.msra.mxu0 0.0
          %5856 = vmatprep.subr.mxu0 0.0
          %5857 = vmatpush1.msra.mxu0 0.0
          %5858 = vmatprep.subr.mxu0 0.0
          %5859 = vmatpush1.msra.mxu0 0.0
          %5860 = vmatprep.subr.mxu0 0.0
          %5861 = vmatpush1.msra.mxu0 0.0
          %5862 = vmatprep.subr.mxu0 0.0
          %5863 = vmatpush1.msra.mxu0 0.0
          %5864 = vmatprep.subr.mxu0 0.0
          %5865 = vmatpush1.msra.mxu0 0.0
          %5866 = vmatprep.subr.mxu0 0.0
          %5867 = vmatpush1.msra.mxu0 0.0
          %5868 = vmatprep.subr.mxu0 0.0
          %5869 = vmatpush1.msra.mxu0 0.0
          %5870 = vmatprep.subr.mxu0 0.0
          %5871 = vmatpush1.msra.mxu0 0.0
          %5872 = vmatprep.subr.mxu0 0.0
          %5873 = vmatpush1.msra.mxu0 0.0
          %5874 = vmatprep.subr.mxu0 0.0
          %5875 = vmatpush1.msra.mxu0 0.0
          %5876 = vmatprep.subr.mxu0 0.0
          %5877 = vmatpush1.msra.mxu0 0.0
          %5878 = vmatprep.mubr.f32.mxu0 0.0
          %v5879 = vand.u32 %v5509, 4294901760
          %5880 = vmatmul.mubr.f32.gmra.mrb[0].mxu0 %v5879
          %v5881 = vpop.f32.mrb[0].mxu0
          %v5882 = vadd.f32 %v5808, %v5881
          %v5883 = vpop.f32.mrb[0].mxu0
          %5884 = vdwg.mxu0
          %5885 = vmatprep.subr.mxu0 0.0
          %v5886 = vand.u32 %v5507, 4294901760
          %5887 = vmatpush1.msra.mxu0 %v5886
          %5888 = vmatprep.subr.mxu0 0.0
          %5889 = vmatpush1.msra.mxu0 0.0
          %5890 = vmatprep.subr.mxu0 0.0
          %5891 = vmatpush1.msra.mxu0 0.0
          %5892 = vmatprep.subr.mxu0 0.0
          %5893 = vmatpush1.msra.mxu0 0.0
          %5894 = vmatprep.subr.mxu0 0.0
          %5895 = vmatpush1.msra.mxu0 0.0
          %5896 = vmatprep.subr.mxu0 0.0
          %5897 = vmatpush1.msra.mxu0 0.0
          %5898 = vmatprep.subr.mxu0 0.0
          %5899 = vmatpush1.msra.mxu0 0.0
          %5900 = vmatprep.subr.mxu0 0.0
          %5901 = vmatpush1.msra.mxu0 0.0
          %5902 = vmatprep.subr.mxu0 0.0
          %5903 = vmatpush1.msra.mxu0 0.0
          %5904 = vmatprep.subr.mxu0 0.0
          %5905 = vmatpush1.msra.mxu0 0.0
          %5906 = vmatprep.subr.mxu0 0.0
          %5907 = vmatpush1.msra.mxu0 0.0
          %5908 = vmatprep.subr.mxu0 0.0
          %5909 = vmatpush1.msra.mxu0 0.0
          %5910 = vmatprep.subr.mxu0 0.0
          %5911 = vmatpush1.msra.mxu0 0.0
          %5912 = vmatprep.subr.mxu0 0.0
          %5913 = vmatpush1.msra.mxu0 0.0
          %5914 = vmatprep.subr.mxu0 0.0
          %5915 = vmatpush1.msra.mxu0 0.0
          %5916 = vmatprep.subr.mxu0 0.0
          %5917 = vmatpush1.msra.mxu0 0.0
          %5918 = vmatprep.subr.mxu0 0.0
          %5919 = vmatpush1.msra.mxu0 0.0
          %5920 = vmatprep.subr.mxu0 0.0
          %5921 = vmatpush1.msra.mxu0 0.0
          %5922 = vmatprep.subr.mxu0 0.0
          %5923 = vmatpush1.msra.mxu0 0.0
          %5924 = vmatprep.subr.mxu0 0.0
          %5925 = vmatpush1.msra.mxu0 0.0
          %5926 = vmatprep.subr.mxu0 0.0
          %5927 = vmatpush1.msra.mxu0 0.0
          %5928 = vmatprep.subr.mxu0 0.0
          %5929 = vmatpush1.msra.mxu0 0.0
          %5930 = vmatprep.subr.mxu0 0.0
          %5931 = vmatpush1.msra.mxu0 0.0
          %5932 = vmatprep.subr.mxu0 0.0
          %5933 = vmatpush1.msra.mxu0 0.0
          %5934 = vmatprep.subr.mxu0 0.0
          %5935 = vmatpush1.msra.mxu0 0.0
          %5936 = vmatprep.subr.mxu0 0.0
          %5937 = vmatpush1.msra.mxu0 0.0
          %5938 = vmatprep.subr.mxu0 0.0
          %5939 = vmatpush1.msra.mxu0 0.0
          %5940 = vmatprep.subr.mxu0 0.0
          %5941 = vmatpush1.msra.mxu0 0.0
          %5942 = vmatprep.subr.mxu0 0.0
          %5943 = vmatpush1.msra.mxu0 0.0
          %5944 = vmatprep.subr.mxu0 0.0
          %5945 = vmatpush1.msra.mxu0 0.0
          %5946 = vmatprep.subr.mxu0 0.0
          %5947 = vmatpush1.msra.mxu0 0.0
          %5948 = vmatprep.subr.mxu0 0.0
          %5949 = vmatpush1.msra.mxu0 0.0
          %5950 = vmatprep.mubr.f32.mxu0 0.0
          %v5951 = vand.u32 %v5509, 4294901760
          %5952 = vmatmul.mubr.f32.gmra.mrb[0].mxu0 %v5951
          %v5953 = vpop.f32.mrb[0].mxu0
          %v5954 = vadd.f32 %v5882, %v5953
          %v5955 = vpop.f32.mrb[0].mxu0
          %5956 = vdwg.mxu0
          %v5957 = vadd.f32 %v5498, %v5954
          %vm5958 = vcmask 261120
          %5959 = vst.msk [vmem:[%s290] sm:$0xff] %vm5958, %v5957
        $region48: #{mha_forward.3} parent=39 // pred_fallthru
          _
        %s5960 = sand.u32 %s174, 1
        %s5961 = scalar_lea.sflag [#allocation7], %s5960
        %s5962 = sand.u32 %s174, 1
        %s5963 = smul.addr %s5962, 8
        %s5964 = scalar_lea.vmem [#allocation6], %s5963
        // Predicated region
        $region49: #{mha_forward.3} parent=39 // pred_check
          %p5965 = pneg %p184
        $region50: #{mha_forward.3} parent=39 // pred_check_branch
          %5967 = sbr.rel (%p5965) target = $region52
        $region51: #{mha_forward.3} parent=39 // pred_region
          %s5969 = ssub.s32 128, 128
          %5970 = vsyncadd %s5961, %s5969
          %s5971 = sadd.s32 %s25, %s24
          %s5972 = smul.addr %s5971, 128
          %s5973 = scalar_lea.hbm %s5, %s5972
          %s5975 = sshll.u32 %s5964, 4
          %s5976 = int_to_ptr.vmem [resolvable:$true] %s5975
          %5978 = dma.vmem_to_hbm [thread:$0]  %s5976, 128, %s5973, %s5961
        $region52: #{mha_forward.3} parent=39 // pred_fallthru
          _
      $region40: #{mha_forward.3} parent=5 // pred_fallthru
        _
      %p5979 = scmp.le.s32.totalorder 2, %s14
      // Predicated region
      $region53: #{mha_forward.3} parent=5 // pred_check
        %p5980 = pneg %p5979
      $region54: #{mha_forward.3} parent=5 // pred_check_branch
        %5982 = sbr.rel (%p5980) target = $region56
      $region55: #{mha_forward.3} parent=5 // pred_region
        %s5983 = ssub.s32 %s14, 2
        // Predicated region
        $region57: #{mha_forward.3} parent=55 // pred_check
          %p5984 = pneg %p190
        $region58: #{mha_forward.3} parent=55 // pred_check_branch
          %5986 = sbr.rel (%p5984) target = $region60
        $region59: #{mha_forward.3} parent=55 // pred_region
          %s5987 = sand.u32 %s175, 1
          %s5988 = scalar_lea.sflag [#allocation7], %s5987
          %s5989 = sand.u32 %s175, 1
          %s5990 = smul.addr %s5989, 8
          %s5991 = scalar_lea.vmem [#allocation6], %s5990
          %5992 = dma.done %s5988, 128
        $region60: #{mha_forward.3} parent=55 // pred_fallthru
          _
      $region56: #{mha_forward.3} parent=5 // pred_fallthru
        _
    $region6: #{mha_forward.3} parent=1 // loop_footer
      %s18 = sadd.s32 1, %s14
    $region7: #{mha_forward.3} parent=1 // loop_footer_branch
      %13 = sbr.rel target = $region3
    $region8: #{mha_forward.3} parent=1 // loop_exit
      _
    %5993 = vsyncpa [#allocation7], 1
    %s5994 = scalar_lea.sflag [#allocation7], 1
    %5995 = vsyncpa %s5994, 1

</llo_original>
